<compile_context>
chip_gen: v7x
topology: tpu7x:2x2x1
jax: 0.10.0
libtpu: 0.0.40
codegen_flags: <defaults>
</compile_context>

<pallas_src>
import jax
import jax.numpy as jnp
from jax.experimental import pallas as pl
from jax.experimental.pallas import tpu as pltpu

BN_EPS = 1e-5
MXU_INPUT_DTYPE = jnp.float32   # use jnp.bfloat16 on v6e/v7x at production scale


# ----------------------------------------------------------------------------
# Fused kernel: whole block in one invocation, all activations stay in VMEM.
# ----------------------------------------------------------------------------
def _unet_block_kernel(x_ref, w1_ref, b1_ref, g1_ref, bt1_ref,
                       w2_ref, b2_ref, g2_ref, bt2_ref,
                       o_ref, pad1_ref, pad2_ref):
    # x_ref   : (N, Cin, H, W)       NCHW input (consumed as-is)
    # w*_ref  : (Cout, 9*C)          transposed im2col weights [o, (dy*3+dx)*C + c]
    # b*/g*/bt*_ref : (1, Cout, 1)   conv bias / BN gamma / BN beta
    # o_ref   : (N, Cout, H*W)       lane-dense output slab
    # pad*_ref: (N, C, H+2, W+2)     VMEM halo scratch per conv
    N, Cin, H, W = x_ref.shape
    Cout = o_ref.shape[1]
    HW = H * W

    def conv3x3_relu(pad_ref, x_nchw, c_in, w_t, bias):
        # --- halo: zero ONLY the 1-px border, write the interior once --------
        zrow = jnp.zeros((N, c_in, 1, W + 2), jnp.float32)
        zcol = jnp.zeros((N, c_in, H, 1), jnp.float32)
        pad_ref[:, :, 0:1, :] = zrow
        pad_ref[:, :, H + 1:H + 2, :] = zrow
        pad_ref[:, :, 1:H + 1, 0:1] = zcol
        pad_ref[:, :, 1:H + 1, W + 1:W + 2] = zcol
        pad_ref[:, :, 1:H + 1, 1:W + 1] = x_nchw

        # --- per image: (Cout, 9C) @ (9C, H*W) -> (Cout, H*W) ----------------
        # The spatial dim (H*W = 256) is the MXU output dim and the lane axis.
        w_mxu = w_t.astype(MXU_INPUT_DTYPE)
        ys = []
        for n in range(N):   # N is tiny & static here; grid axis at prod scale
            patches = jnp.concatenate(
                [pad_ref[n, :, dy:dy + H, dx:dx + W].reshape(c_in, HW)
                 for dy in range(3) for dx in range(3)],
                axis=0)                                      # (9*c_in, HW)
            ys.append(jnp.dot(w_mxu, patches.astype(MXU_INPUT_DTYPE),
                              preferred_element_type=jnp.float32))
        y = jnp.stack(ys, axis=0) + bias                     # (N, Cout, HW)
        return jnp.maximum(y, 0.0)                           # ReLU

    def batchnorm(y, gamma, beta):
        # training-mode batch stats (biased variance) per channel over (N, HW);
        # lane-reduce first, then batch-reduce (equal group sizes -> exact mean)
        mean = jnp.mean(jnp.mean(y, axis=2, keepdims=True), axis=0, keepdims=True)
        centered = y - mean
        var = jnp.mean(jnp.mean(centered * centered, axis=2, keepdims=True),
                       axis=0, keepdims=True)
        scale = gamma * jax.lax.rsqrt(var + BN_EPS)          # fold BN into a
        shift = beta - mean * scale                          # single scale+shift
        return y * scale + shift

    h1 = batchnorm(conv3x3_relu(pad1_ref, x_ref[...].astype(jnp.float32),
                                Cin, w1_ref[...], b1_ref[...]),
                   g1_ref[...], bt1_ref[...])
    h2 = batchnorm(conv3x3_relu(pad2_ref, h1.reshape(N, Cout, H, W),
                                Cout, w2_ref[...], b2_ref[...]),
                   g2_ref[...], bt2_ref[...])

    o_ref[...] = h2.astype(o_ref.dtype)   # dense (Cout x 256-lane) store


# ----------------------------------------------------------------------------
# UNetBlock forward: NCHW in -> NCHW out (like the PyTorch module).
# ----------------------------------------------------------------------------
def unet_block_forward(x_nchw, params):
    N, Cin, H, W = x_nchw.shape
    Cout = params["w1"].shape[-1]

    # HWIO -> (Cout, 9*C) with column index (dy*3+dx)*C + c   (host-side, tiny)
    def wt(w, c):
        return jnp.transpose(w, (3, 0, 1, 2)).reshape(Cout, 9 * c).astype(jnp.float32)

    def col(v):
        return v.reshape(1, Cout, 1).astype(jnp.float32)

    vmem = pl.BlockSpec(memory_space=pltpu.MemorySpace.VMEM)

    out = pl.pallas_call(
        _unet_block_kernel,
        out_shape=jax.ShapeDtypeStruct((N, Cout, H * W), jnp.float32),
        in_specs=[vmem] * 9,
        out_specs=vmem,
        scratch_shapes=[
            pltpu.VMEM((N, Cin, H + 2, W + 2), jnp.float32),   # halo buf conv1
            pltpu.VMEM((N, Cout, H + 2, W + 2), jnp.float32),  # halo buf conv2
        ],
    )(x_nchw.astype(jnp.float32),
      wt(params["w1"], Cin), col(params["b1"]), col(params["g1"]), col(params["beta1"]),
      wt(params["w2"], Cout), col(params["b2"]), col(params["g2"]), col(params["beta2"]))

    # free row-major reshape back to NCHW (no transpose / extra HBM pass)
    return out.reshape(N, Cout, H, W)


# ----------------------------------------------------------------------------
# Pure-JAX reference (same math, XLA conv) for the correctness check.
# ----------------------------------------------------------------------------
def reference_forward(x_nchw, params):
    x = jnp.transpose(x_nchw, (0, 2, 3, 1)).astype(jnp.float32)   # NHWC for XLA conv

    def conv_relu(x, w, b):
        y = jax.lax.conv_general_dilated(
            x, w, window_strides=(1, 1), padding="SAME",
            dimension_numbers=("NHWC", "HWIO", "NHWC"),
            precision=jax.lax.Precision.HIGHEST)
        return jnp.maximum(y + b.reshape(1, 1, 1, -1), 0.0)

    def bn(x, g, be):
        mean = jnp.mean(x, axis=(0, 1, 2), keepdims=True)
        var = jnp.mean((x - mean) ** 2, axis=(0, 1, 2), keepdims=True)
        return (x - mean) / jnp.sqrt(var + BN_EPS) * g.reshape(1, 1, 1, -1) \
            + be.reshape(1, 1, 1, -1)

    x = bn(conv_relu(x, params["w1"], params["b1"]), params["g1"], params["beta1"])
    x = bn(conv_relu(x, params["w2"], params["b2"]), params["g2"], params["beta2"])
    return jnp.transpose(x, (0, 3, 1, 2))


if __name__ == "__main__":
    N, Cin, Cout, H, W = 2, 4, 8, 16, 16
    key = jax.random.PRNGKey(0)
    ks = jax.random.split(key, 9)
    params = {
        "w1": 0.2 * jax.random.normal(ks[0], (3, 3, Cin, Cout), jnp.float32),
        "b1": 0.1 * jax.random.normal(ks[1], (Cout,), jnp.float32),
        "g1": 1.0 + 0.1 * jax.random.normal(ks[2], (Cout,), jnp.float32),
        "beta1": 0.1 * jax.random.normal(ks[3], (Cout,), jnp.float32),
        "w2": 0.2 * jax.random.normal(ks[4], (3, 3, Cout, Cout), jnp.float32),
        "b2": 0.1 * jax.random.normal(ks[5], (Cout,), jnp.float32),
        "g2": 1.0 + 0.1 * jax.random.normal(ks[6], (Cout,), jnp.float32),
        "beta2": 0.1 * jax.random.normal(ks[7], (Cout,), jnp.float32),
    }
    x = jax.random.normal(ks[8], (N, Cin, H, W), jnp.float32)

    out = jax.block_until_ready(unet_block_forward(x, params))
    ref = jax.block_until_ready(reference_forward(x, params))
    assert out.shape == (N, Cout, H, W), out.shape

    max_err = float(jnp.max(jnp.abs(out - ref)))
    if max_err < 1e-3:
        print("KERNEL_OK")
    else:
        print(f"MISMATCH max_abs_err={max_err:.3e}")
</pallas_src>

<mosaic_0001>
module attributes {stable_mosaic.version = 11 : i64} {
  func.func @_unet_block_kernel(%arg0: memref<2x4x16x16xf32, #tpu.memory_space<vmem>>, %arg1: memref<8x36xf32, #tpu.memory_space<vmem>>, %arg2: memref<1x8x1xf32, #tpu.memory_space<vmem>>, %arg3: memref<1x8x1xf32, #tpu.memory_space<vmem>>, %arg4: memref<1x8x1xf32, #tpu.memory_space<vmem>>, %arg5: memref<8x72xf32, #tpu.memory_space<vmem>>, %arg6: memref<1x8x1xf32, #tpu.memory_space<vmem>>, %arg7: memref<1x8x1xf32, #tpu.memory_space<vmem>>, %arg8: memref<1x8x1xf32, #tpu.memory_space<vmem>>, %arg9: memref<2x8x256xf32, #tpu.memory_space<vmem>>, %arg10: memref<2x4x18x18xf32, #tpu.memory_space<vmem>>, %arg11: memref<2x8x18x18xf32, #tpu.memory_space<vmem>>) attributes {dimension_semantics = [], scalar_prefetch = 0 : i64, scratch_operands = 2 : i64, tpu.core_type = #tpu.core_type<tc>} {
    %c0 = arith.constant 0 : index
    %c0_0 = arith.constant 0 : index
    %c0_1 = arith.constant 0 : index
    %c0_2 = arith.constant 0 : index
    %0 = vector.load %arg0[%c0, %c0_0, %c0_1, %c0_2] : memref<2x4x16x16xf32, #tpu.memory_space<vmem>>, vector<2x4x16x16xf32>
    %c0_3 = arith.constant 0 : index
    %c0_4 = arith.constant 0 : index
    %1 = vector.load %arg1[%c0_3, %c0_4] : memref<8x36xf32, #tpu.memory_space<vmem>>, vector<8x36xf32>
    %c0_5 = arith.constant 0 : index
    %c0_6 = arith.constant 0 : index
    %c0_7 = arith.constant 0 : index
    %2 = vector.load %arg2[%c0_5, %c0_6, %c0_7] : memref<1x8x1xf32, #tpu.memory_space<vmem>>, vector<1x8x1xf32>
    %cst = arith.constant 0.000000e+00 : f32
    %3 = vector.broadcast %cst : f32 to vector<2x4x1x18xf32>
    %cst_8 = arith.constant 0.000000e+00 : f32
    %4 = vector.broadcast %cst_8 : f32 to vector<2x4x16x1xf32>
    %c0_9 = arith.constant 0 : index
    %c0_10 = arith.constant 0 : index
    %c0_11 = arith.constant 0 : index
    %c0_12 = arith.constant 0 : index
    %5 = vector.load %arg10[%c0_9, %c0_10, %c0_11, %c0_12] : memref<2x4x18x18xf32, #tpu.memory_space<vmem>>, vector<2x4x1x18xf32>
    tpu.vector_store %arg10[%c0_9, %c0_10, %c0_11, %c0_12], %3 {strides = array<i32>} : memref<2x4x18x18xf32, #tpu.memory_space<vmem>>, vector<2x4x1x18xf32>,
    %c0_13 = arith.constant 0 : index
    %c0_14 = arith.constant 0 : index
    %c17 = arith.constant 17 : index
    %c0_15 = arith.constant 0 : index
    %6 = vector.load %arg10[%c0_13, %c0_14, %c17, %c0_15] : memref<2x4x18x18xf32, #tpu.memory_space<vmem>>, vector<2x4x1x18xf32>
    tpu.vector_store %arg10[%c0_13, %c0_14, %c17, %c0_15], %3 {strides = array<i32>} : memref<2x4x18x18xf32, #tpu.memory_space<vmem>>, vector<2x4x1x18xf32>,
    %c0_16 = arith.constant 0 : index
    %c0_17 = arith.constant 0 : index
    %c1 = arith.constant 1 : index
    %c0_18 = arith.constant 0 : index
    %7 = vector.load %arg10[%c0_16, %c0_17, %c1, %c0_18] : memref<2x4x18x18xf32, #tpu.memory_space<vmem>>, vector<2x4x16x1xf32>
    tpu.vector_store %arg10[%c0_16, %c0_17, %c1, %c0_18], %4 {strides = array<i32>} : memref<2x4x18x18xf32, #tpu.memory_space<vmem>>, vector<2x4x16x1xf32>,
    %c0_19 = arith.constant 0 : index
    %c0_20 = arith.constant 0 : index
    %c1_21 = arith.constant 1 : index
    %c17_22 = arith.constant 17 : index
    %8 = vector.load %arg10[%c0_19, %c0_20, %c1_21, %c17_22] : memref<2x4x18x18xf32, #tpu.memory_space<vmem>>, vector<2x4x16x1xf32>
    tpu.vector_store %arg10[%c0_19, %c0_20, %c1_21, %c17_22], %4 {strides = array<i32>} : memref<2x4x18x18xf32, #tpu.memory_space<vmem>>, vector<2x4x16x1xf32>,
    %c0_23 = arith.constant 0 : index
    %c0_24 = arith.constant 0 : index
    %c1_25 = arith.constant 1 : index
    %c1_26 = arith.constant 1 : index
    %9 = vector.load %arg10[%c0_23, %c0_24, %c1_25, %c1_26] : memref<2x4x18x18xf32, #tpu.memory_space<vmem>>, vector<2x4x16x16xf32>
    tpu.vector_store %arg10[%c0_23, %c0_24, %c1_25, %c1_26], %0 {strides = array<i32>} : memref<2x4x18x18xf32, #tpu.memory_space<vmem>>, vector<2x4x16x16xf32>,
    %c0_27 = arith.constant 0 : index
    %c0_28 = arith.constant 0 : index
    %c0_29 = arith.constant 0 : index
    %c0_30 = arith.constant 0 : index
    %10 = vector.load %arg10[%c0_27, %c0_28, %c0_29, %c0_30] : memref<2x4x18x18xf32, #tpu.memory_space<vmem>>, vector<1x4x16x16xf32>
    %11 = vector.shape_cast %10 : vector<1x4x16x16xf32> to vector<4x16x16xf32>
    %12 = vector.shape_cast %11 : vector<4x16x16xf32> to vector<4x256xf32>
    %c0_31 = arith.constant 0 : index
    %c0_32 = arith.constant 0 : index
    %c0_33 = arith.constant 0 : index
    %c1_34 = arith.constant 1 : index
    %13 = vector.load %arg10[%c0_31, %c0_32, %c0_33, %c1_34] : memref<2x4x18x18xf32, #tpu.memory_space<vmem>>, vector<1x4x16x16xf32>
    %14 = vector.shape_cast %13 : vector<1x4x16x16xf32> to vector<4x16x16xf32>
    %15 = vector.shape_cast %14 : vector<4x16x16xf32> to vector<4x256xf32>
    %c0_35 = arith.constant 0 : index
    %c0_36 = arith.constant 0 : index
    %c0_37 = arith.constant 0 : index
    %c2 = arith.constant 2 : index
    %16 = vector.load %arg10[%c0_35, %c0_36, %c0_37, %c2] : memref<2x4x18x18xf32, #tpu.memory_space<vmem>>, vector<1x4x16x16xf32>
    %17 = vector.shape_cast %16 : vector<1x4x16x16xf32> to vector<4x16x16xf32>
    %18 = vector.shape_cast %17 : vector<4x16x16xf32> to vector<4x256xf32>
    %c0_38 = arith.constant 0 : index
    %c0_39 = arith.constant 0 : index
    %c1_40 = arith.constant 1 : index
    %c0_41 = arith.constant 0 : index
    %19 = vector.load %arg10[%c0_38, %c0_39, %c1_40, %c0_41] : memref<2x4x18x18xf32, #tpu.memory_space<vmem>>, vector<1x4x16x16xf32>
    %20 = vector.shape_cast %19 : vector<1x4x16x16xf32> to vector<4x16x16xf32>
    %21 = vector.shape_cast %20 : vector<4x16x16xf32> to vector<4x256xf32>
    %c0_42 = arith.constant 0 : index
    %c0_43 = arith.constant 0 : index
    %c1_44 = arith.constant 1 : index
    %c1_45 = arith.constant 1 : index
    %22 = vector.load %arg10[%c0_42, %c0_43, %c1_44, %c1_45] : memref<2x4x18x18xf32, #tpu.memory_space<vmem>>, vector<1x4x16x16xf32>
    %23 = vector.shape_cast %22 : vector<1x4x16x16xf32> to vector<4x16x16xf32>
    %24 = vector.shape_cast %23 : vector<4x16x16xf32> to vector<4x256xf32>
    %c0_46 = arith.constant 0 : index
    %c0_47 = arith.constant 0 : index
    %c1_48 = arith.constant 1 : index
    %c2_49 = arith.constant 2 : index
    %25 = vector.load %arg10[%c0_46, %c0_47, %c1_48, %c2_49] : memref<2x4x18x18xf32, #tpu.memory_space<vmem>>, vector<1x4x16x16xf32>
    %26 = vector.shape_cast %25 : vector<1x4x16x16xf32> to vector<4x16x16xf32>
    %27 = vector.shape_cast %26 : vector<4x16x16xf32> to vector<4x256xf32>
    %c0_50 = arith.constant 0 : index
    %c0_51 = arith.constant 0 : index
    %c2_52 = arith.constant 2 : index
    %c0_53 = arith.constant 0 : index
    %28 = vector.load %arg10[%c0_50, %c0_51, %c2_52, %c0_53] : memref<2x4x18x18xf32, #tpu.memory_space<vmem>>, vector<1x4x16x16xf32>
    %29 = vector.shape_cast %28 : vector<1x4x16x16xf32> to vector<4x16x16xf32>
    %30 = vector.shape_cast %29 : vector<4x16x16xf32> to vector<4x256xf32>
    %c0_54 = arith.constant 0 : index
    %c0_55 = arith.constant 0 : index
    %c2_56 = arith.constant 2 : index
    %c1_57 = arith.constant 1 : index
    %31 = vector.load %arg10[%c0_54, %c0_55, %c2_56, %c1_57] : memref<2x4x18x18xf32, #tpu.memory_space<vmem>>, vector<1x4x16x16xf32>
    %32 = vector.shape_cast %31 : vector<1x4x16x16xf32> to vector<4x16x16xf32>
    %33 = vector.shape_cast %32 : vector<4x16x16xf32> to vector<4x256xf32>
    %c0_58 = arith.constant 0 : index
    %c0_59 = arith.constant 0 : index
    %c2_60 = arith.constant 2 : index
    %c2_61 = arith.constant 2 : index
    %34 = vector.load %arg10[%c0_58, %c0_59, %c2_60, %c2_61] : memref<2x4x18x18xf32, #tpu.memory_space<vmem>>, vector<1x4x16x16xf32>
    %35 = vector.shape_cast %34 : vector<1x4x16x16xf32> to vector<4x16x16xf32>
    %36 = vector.shape_cast %35 : vector<4x16x16xf32> to vector<4x256xf32>
    %37 = tpu.concatenate %12, %15, %18, %21, %24, %27, %30, %33, %36 in 0 : vector<4x256xf32>, vector<4x256xf32>, vector<4x256xf32>, vector<4x256xf32>, vector<4x256xf32>, vector<4x256xf32>, vector<4x256xf32>, vector<4x256xf32>, vector<4x256xf32> -> vector<36x256xf32>
    %cst_62 = arith.constant dense<0.000000e+00> : vector<8x256xf32>
    %38 = tpu.matmul %1, %37, %cst_62 {dimension_numbers = #tpu.dot_dimension_numbers<[1], [0], [0], [1], [0, 0, 1, 1], [], []>} : vector<8x36xf32>, vector<36x256xf32>, vector<8x256xf32> -> vector<8x256xf32>
    %c1_63 = arith.constant 1 : index
    %c0_64 = arith.constant 0 : index
    %c0_65 = arith.constant 0 : index
    %c0_66 = arith.constant 0 : index
    %39 = vector.load %arg10[%c1_63, %c0_64, %c0_65, %c0_66] : memref<2x4x18x18xf32, #tpu.memory_space<vmem>>, vector<1x4x16x16xf32>
    %40 = vector.shape_cast %39 : vector<1x4x16x16xf32> to vector<4x16x16xf32>
    %41 = vector.shape_cast %40 : vector<4x16x16xf32> to vector<4x256xf32>
    %c1_67 = arith.constant 1 : index
    %c0_68 = arith.constant 0 : index
    %c0_69 = arith.constant 0 : index
    %c1_70 = arith.constant 1 : index
    %42 = vector.load %arg10[%c1_67, %c0_68, %c0_69, %c1_70] : memref<2x4x18x18xf32, #tpu.memory_space<vmem>>, vector<1x4x16x16xf32>
    %43 = vector.shape_cast %42 : vector<1x4x16x16xf32> to vector<4x16x16xf32>
    %44 = vector.shape_cast %43 : vector<4x16x16xf32> to vector<4x256xf32>
    %c1_71 = arith.constant 1 : index
    %c0_72 = arith.constant 0 : index
    %c0_73 = arith.constant 0 : index
    %c2_74 = arith.constant 2 : index
    %45 = vector.load %arg10[%c1_71, %c0_72, %c0_73, %c2_74] : memref<2x4x18x18xf32, #tpu.memory_space<vmem>>, vector<1x4x16x16xf32>
    %46 = vector.shape_cast %45 : vector<1x4x16x16xf32> to vector<4x16x16xf32>
    %47 = vector.shape_cast %46 : vector<4x16x16xf32> to vector<4x256xf32>
    %c1_75 = arith.constant 1 : index
    %c0_76 = arith.constant 0 : index
    %c1_77 = arith.constant 1 : index
    %c0_78 = arith.constant 0 : index
    %48 = vector.load %arg10[%c1_75, %c0_76, %c1_77, %c0_78] : memref<2x4x18x18xf32, #tpu.memory_space<vmem>>, vector<1x4x16x16xf32>
    %49 = vector.shape_cast %48 : vector<1x4x16x16xf32> to vector<4x16x16xf32>
    %50 = vector.shape_cast %49 : vector<4x16x16xf32> to vector<4x256xf32>
    %c1_79 = arith.constant 1 : index
    %c0_80 = arith.constant 0 : index
    %c1_81 = arith.constant 1 : index
    %c1_82 = arith.constant 1 : index
    %51 = vector.load %arg10[%c1_79, %c0_80, %c1_81, %c1_82] : memref<2x4x18x18xf32, #tpu.memory_space<vmem>>, vector<1x4x16x16xf32>
    %52 = vector.shape_cast %51 : vector<1x4x16x16xf32> to vector<4x16x16xf32>
    %53 = vector.shape_cast %52 : vector<4x16x16xf32> to vector<4x256xf32>
    %c1_83 = arith.constant 1 : index
    %c0_84 = arith.constant 0 : index
    %c1_85 = arith.constant 1 : index
    %c2_86 = arith.constant 2 : index
    %54 = vector.load %arg10[%c1_83, %c0_84, %c1_85, %c2_86] : memref<2x4x18x18xf32, #tpu.memory_space<vmem>>, vector<1x4x16x16xf32>
    %55 = vector.shape_cast %54 : vector<1x4x16x16xf32> to vector<4x16x16xf32>
    %56 = vector.shape_cast %55 : vector<4x16x16xf32> to vector<4x256xf32>
    %c1_87 = arith.constant 1 : index
    %c0_88 = arith.constant 0 : index
    %c2_89 = arith.constant 2 : index
    %c0_90 = arith.constant 0 : index
    %57 = vector.load %arg10[%c1_87, %c0_88, %c2_89, %c0_90] : memref<2x4x18x18xf32, #tpu.memory_space<vmem>>, vector<1x4x16x16xf32>
    %58 = vector.shape_cast %57 : vector<1x4x16x16xf32> to vector<4x16x16xf32>
    %59 = vector.shape_cast %58 : vector<4x16x16xf32> to vector<4x256xf32>
    %c1_91 = arith.constant 1 : index
    %c0_92 = arith.constant 0 : index
    %c2_93 = arith.constant 2 : index
    %c1_94 = arith.constant 1 : index
    %60 = vector.load %arg10[%c1_91, %c0_92, %c2_93, %c1_94] : memref<2x4x18x18xf32, #tpu.memory_space<vmem>>, vector<1x4x16x16xf32>
    %61 = vector.shape_cast %60 : vector<1x4x16x16xf32> to vector<4x16x16xf32>
    %62 = vector.shape_cast %61 : vector<4x16x16xf32> to vector<4x256xf32>
    %c1_95 = arith.constant 1 : index
    %c0_96 = arith.constant 0 : index
    %c2_97 = arith.constant 2 : index
    %c2_98 = arith.constant 2 : index
    %63 = vector.load %arg10[%c1_95, %c0_96, %c2_97, %c2_98] : memref<2x4x18x18xf32, #tpu.memory_space<vmem>>, vector<1x4x16x16xf32>
    %64 = vector.shape_cast %63 : vector<1x4x16x16xf32> to vector<4x16x16xf32>
    %65 = vector.shape_cast %64 : vector<4x16x16xf32> to vector<4x256xf32>
    %66 = tpu.concatenate %41, %44, %47, %50, %53, %56, %59, %62, %65 in 0 : vector<4x256xf32>, vector<4x256xf32>, vector<4x256xf32>, vector<4x256xf32>, vector<4x256xf32>, vector<4x256xf32>, vector<4x256xf32>, vector<4x256xf32>, vector<4x256xf32> -> vector<36x256xf32>
    %cst_99 = arith.constant dense<0.000000e+00> : vector<8x256xf32>
    %67 = tpu.matmul %1, %66, %cst_99 {dimension_numbers = #tpu.dot_dimension_numbers<[1], [0], [0], [1], [0, 0, 1, 1], [], []>} : vector<8x36xf32>, vector<36x256xf32>, vector<8x256xf32> -> vector<8x256xf32>
    %68 = vector.shape_cast %38 : vector<8x256xf32> to vector<1x8x256xf32>
    %69 = vector.shape_cast %67 : vector<8x256xf32> to vector<1x8x256xf32>
    %70 = tpu.concatenate %68, %69 in 0 : vector<1x8x256xf32>, vector<1x8x256xf32> -> vector<2x8x256xf32>
    %71 = vector.broadcast %2 : vector<1x8x1xf32> to vector<2x8x256xf32>
    %72 = arith.addf %70, %71 : vector<2x8x256xf32>
    %cst_100 = arith.constant 0.000000e+00 : f32
    %73 = vector.broadcast %cst_100 : f32 to vector<2x8x256xf32>
    %74 = arith.maximumf %72, %73 : vector<2x8x256xf32>
    %c0_101 = arith.constant 0 : index
    %c0_102 = arith.constant 0 : index
    %c0_103 = arith.constant 0 : index
    %75 = vector.load %arg3[%c0_101, %c0_102, %c0_103] : memref<1x8x1xf32, #tpu.memory_space<vmem>>, vector<1x8x1xf32>
    %c0_104 = arith.constant 0 : index
    %c0_105 = arith.constant 0 : index
    %c0_106 = arith.constant 0 : index
    %76 = vector.load %arg4[%c0_104, %c0_105, %c0_106] : memref<1x8x1xf32, #tpu.memory_space<vmem>>, vector<1x8x1xf32>
    %cst_107 = arith.constant dense<0.000000e+00> : vector<2x8xf32>
    %77 = vector.multi_reduction <add>, %74, %cst_107 [2] : vector<2x8x256xf32> to vector<2x8xf32>
    %78 = vector.shape_cast %77 : vector<2x8xf32> to vector<2x8x1xf32>
    %cst_108 = arith.constant 2.560000e+02 : f32
    %79 = vector.broadcast %cst_108 : f32 to vector<2x8x1xf32>
    %80 = arith.divf %78, %79 : vector<2x8x1xf32>
    %cst_109 = arith.constant dense<0.000000e+00> : vector<8x1xf32>
    %81 = vector.multi_reduction <add>, %80, %cst_109 [0] : vector<2x8x1xf32> to vector<8x1xf32>
    %82 = vector.shape_cast %81 : vector<8x1xf32> to vector<1x8x1xf32>
    %cst_110 = arith.constant 2.000000e+00 : f32
    %83 = vector.broadcast %cst_110 : f32 to vector<1x8x1xf32>
    %84 = arith.divf %82, %83 : vector<1x8x1xf32>
    %85 = vector.broadcast %84 : vector<1x8x1xf32> to vector<2x8x256xf32>
    %86 = arith.subf %74, %85 : vector<2x8x256xf32>
    %87 = arith.mulf %86, %86 : vector<2x8x256xf32>
    %cst_111 = arith.constant dense<0.000000e+00> : vector<2x8xf32>
    %88 = vector.multi_reduction <add>, %87, %cst_111 [2] : vector<2x8x256xf32> to vector<2x8xf32>
    %89 = vector.shape_cast %88 : vector<2x8xf32> to vector<2x8x1xf32>
    %cst_112 = arith.constant 2.560000e+02 : f32
    %90 = vector.broadcast %cst_112 : f32 to vector<2x8x1xf32>
    %91 = arith.divf %89, %90 : vector<2x8x1xf32>
    %cst_113 = arith.constant dense<0.000000e+00> : vector<8x1xf32>
    %92 = vector.multi_reduction <add>, %91, %cst_113 [0] : vector<2x8x1xf32> to vector<8x1xf32>
    %93 = vector.shape_cast %92 : vector<8x1xf32> to vector<1x8x1xf32>
    %cst_114 = arith.constant 2.000000e+00 : f32
    %94 = vector.broadcast %cst_114 : f32 to vector<1x8x1xf32>
    %95 = arith.divf %93, %94 : vector<1x8x1xf32>
    %cst_115 = arith.constant 9.99999974E-6 : f32
    %96 = vector.broadcast %cst_115 : f32 to vector<1x8x1xf32>
    %97 = arith.addf %95, %96 : vector<1x8x1xf32>
    %98 = math.rsqrt %97 : vector<1x8x1xf32>
    %99 = arith.mulf %75, %98 : vector<1x8x1xf32>
    %100 = arith.mulf %84, %99 : vector<1x8x1xf32>
    %101 = arith.subf %76, %100 : vector<1x8x1xf32>
    %102 = vector.broadcast %99 : vector<1x8x1xf32> to vector<2x8x256xf32>
    %103 = arith.mulf %74, %102 : vector<2x8x256xf32>
    %104 = vector.broadcast %101 : vector<1x8x1xf32> to vector<2x8x256xf32>
    %105 = arith.addf %103, %104 : vector<2x8x256xf32>
    %106 = vector.shape_cast %105 : vector<2x8x256xf32> to vector<2x8x16x16xf32>
    %c0_116 = arith.constant 0 : index
    %c0_117 = arith.constant 0 : index
    %107 = vector.load %arg5[%c0_116, %c0_117] : memref<8x72xf32, #tpu.memory_space<vmem>>, vector<8x72xf32>
    %c0_118 = arith.constant 0 : index
    %c0_119 = arith.constant 0 : index
    %c0_120 = arith.constant 0 : index
    %108 = vector.load %arg6[%c0_118, %c0_119, %c0_120] : memref<1x8x1xf32, #tpu.memory_space<vmem>>, vector<1x8x1xf32>
    %cst_121 = arith.constant 0.000000e+00 : f32
    %109 = vector.broadcast %cst_121 : f32 to vector<2x8x1x18xf32>
    %cst_122 = arith.constant 0.000000e+00 : f32
    %110 = vector.broadcast %cst_122 : f32 to vector<2x8x16x1xf32>
    %c0_123 = arith.constant 0 : index
    %c0_124 = arith.constant 0 : index
    %c0_125 = arith.constant 0 : index
    %c0_126 = arith.constant 0 : index
    %111 = vector.load %arg11[%c0_123, %c0_124, %c0_125, %c0_126] : memref<2x8x18x18xf32, #tpu.memory_space<vmem>>, vector<2x8x1x18xf32>
    tpu.vector_store %arg11[%c0_123, %c0_124, %c0_125, %c0_126], %109 {strides = array<i32>} : memref<2x8x18x18xf32, #tpu.memory_space<vmem>>, vector<2x8x1x18xf32>,
    %c0_127 = arith.constant 0 : index
    %c0_128 = arith.constant 0 : index
    %c17_129 = arith.constant 17 : index
    %c0_130 = arith.constant 0 : index
    %112 = vector.load %arg11[%c0_127, %c0_128, %c17_129, %c0_130] : memref<2x8x18x18xf32, #tpu.memory_space<vmem>>, vector<2x8x1x18xf32>
    tpu.vector_store %arg11[%c0_127, %c0_128, %c17_129, %c0_130], %109 {strides = array<i32>} : memref<2x8x18x18xf32, #tpu.memory_space<vmem>>, vector<2x8x1x18xf32>,
    %c0_131 = arith.constant 0 : index
    %c0_132 = arith.constant 0 : index
    %c1_133 = arith.constant 1 : index
    %c0_134 = arith.constant 0 : index
    %113 = vector.load %arg11[%c0_131, %c0_132, %c1_133, %c0_134] : memref<2x8x18x18xf32, #tpu.memory_space<vmem>>, vector<2x8x16x1xf32>
    tpu.vector_store %arg11[%c0_131, %c0_132, %c1_133, %c0_134], %110 {strides = array<i32>} : memref<2x8x18x18xf32, #tpu.memory_space<vmem>>, vector<2x8x16x1xf32>,
    %c0_135 = arith.constant 0 : index
    %c0_136 = arith.constant 0 : index
    %c1_137 = arith.constant 1 : index
    %c17_138 = arith.constant 17 : index
    %114 = vector.load %arg11[%c0_135, %c0_136, %c1_137, %c17_138] : memref<2x8x18x18xf32, #tpu.memory_space<vmem>>, vector<2x8x16x1xf32>
    tpu.vector_store %arg11[%c0_135, %c0_136, %c1_137, %c17_138], %110 {strides = array<i32>} : memref<2x8x18x18xf32, #tpu.memory_space<vmem>>, vector<2x8x16x1xf32>,
    %c0_139 = arith.constant 0 : index
    %c0_140 = arith.constant 0 : index
    %c1_141 = arith.constant 1 : index
    %c1_142 = arith.constant 1 : index
    %115 = vector.load %arg11[%c0_139, %c0_140, %c1_141, %c1_142] : memref<2x8x18x18xf32, #tpu.memory_space<vmem>>, vector<2x8x16x16xf32>
    tpu.vector_store %arg11[%c0_139, %c0_140, %c1_141, %c1_142], %106 {strides = array<i32>} : memref<2x8x18x18xf32, #tpu.memory_space<vmem>>, vector<2x8x16x16xf32>,
    %c0_143 = arith.constant 0 : index
    %c0_144 = arith.constant 0 : index
    %c0_145 = arith.constant 0 : index
    %c0_146 = arith.constant 0 : index
    %116 = vector.load %arg11[%c0_143, %c0_144, %c0_145, %c0_146] : memref<2x8x18x18xf32, #tpu.memory_space<vmem>>, vector<1x8x16x16xf32>
    %117 = vector.shape_cast %116 : vector<1x8x16x16xf32> to vector<8x16x16xf32>
    %118 = vector.shape_cast %117 : vector<8x16x16xf32> to vector<8x256xf32>
    %c0_147 = arith.constant 0 : index
    %c0_148 = arith.constant 0 : index
    %c0_149 = arith.constant 0 : index
    %c1_150 = arith.constant 1 : index
    %119 = vector.load %arg11[%c0_147, %c0_148, %c0_149, %c1_150] : memref<2x8x18x18xf32, #tpu.memory_space<vmem>>, vector<1x8x16x16xf32>
    %120 = vector.shape_cast %119 : vector<1x8x16x16xf32> to vector<8x16x16xf32>
    %121 = vector.shape_cast %120 : vector<8x16x16xf32> to vector<8x256xf32>
    %c0_151 = arith.constant 0 : index
    %c0_152 = arith.constant 0 : index
    %c0_153 = arith.constant 0 : index
    %c2_154 = arith.constant 2 : index
    %122 = vector.load %arg11[%c0_151, %c0_152, %c0_153, %c2_154] : memref<2x8x18x18xf32, #tpu.memory_space<vmem>>, vector<1x8x16x16xf32>
    %123 = vector.shape_cast %122 : vector<1x8x16x16xf32> to vector<8x16x16xf32>
    %124 = vector.shape_cast %123 : vector<8x16x16xf32> to vector<8x256xf32>
    %c0_155 = arith.constant 0 : index
    %c0_156 = arith.constant 0 : index
    %c1_157 = arith.constant 1 : index
    %c0_158 = arith.constant 0 : index
    %125 = vector.load %arg11[%c0_155, %c0_156, %c1_157, %c0_158] : memref<2x8x18x18xf32, #tpu.memory_space<vmem>>, vector<1x8x16x16xf32>
    %126 = vector.shape_cast %125 : vector<1x8x16x16xf32> to vector<8x16x16xf32>
    %127 = vector.shape_cast %126 : vector<8x16x16xf32> to vector<8x256xf32>
    %c0_159 = arith.constant 0 : index
    %c0_160 = arith.constant 0 : index
    %c1_161 = arith.constant 1 : index
    %c1_162 = arith.constant 1 : index
    %128 = vector.load %arg11[%c0_159, %c0_160, %c1_161, %c1_162] : memref<2x8x18x18xf32, #tpu.memory_space<vmem>>, vector<1x8x16x16xf32>
    %129 = vector.shape_cast %128 : vector<1x8x16x16xf32> to vector<8x16x16xf32>
    %130 = vector.shape_cast %129 : vector<8x16x16xf32> to vector<8x256xf32>
    %c0_163 = arith.constant 0 : index
    %c0_164 = arith.constant 0 : index
    %c1_165 = arith.constant 1 : index
    %c2_166 = arith.constant 2 : index
    %131 = vector.load %arg11[%c0_163, %c0_164, %c1_165, %c2_166] : memref<2x8x18x18xf32, #tpu.memory_space<vmem>>, vector<1x8x16x16xf32>
    %132 = vector.shape_cast %131 : vector<1x8x16x16xf32> to vector<8x16x16xf32>
    %133 = vector.shape_cast %132 : vector<8x16x16xf32> to vector<8x256xf32>
    %c0_167 = arith.constant 0 : index
    %c0_168 = arith.constant 0 : index
    %c2_169 = arith.constant 2 : index
    %c0_170 = arith.constant 0 : index
    %134 = vector.load %arg11[%c0_167, %c0_168, %c2_169, %c0_170] : memref<2x8x18x18xf32, #tpu.memory_space<vmem>>, vector<1x8x16x16xf32>
    %135 = vector.shape_cast %134 : vector<1x8x16x16xf32> to vector<8x16x16xf32>
    %136 = vector.shape_cast %135 : vector<8x16x16xf32> to vector<8x256xf32>
    %c0_171 = arith.constant 0 : index
    %c0_172 = arith.constant 0 : index
    %c2_173 = arith.constant 2 : index
    %c1_174 = arith.constant 1 : index
    %137 = vector.load %arg11[%c0_171, %c0_172, %c2_173, %c1_174] : memref<2x8x18x18xf32, #tpu.memory_space<vmem>>, vector<1x8x16x16xf32>
    %138 = vector.shape_cast %137 : vector<1x8x16x16xf32> to vector<8x16x16xf32>
    %139 = vector.shape_cast %138 : vector<8x16x16xf32> to vector<8x256xf32>
    %c0_175 = arith.constant 0 : index
    %c0_176 = arith.constant 0 : index
    %c2_177 = arith.constant 2 : index
    %c2_178 = arith.constant 2 : index
    %140 = vector.load %arg11[%c0_175, %c0_176, %c2_177, %c2_178] : memref<2x8x18x18xf32, #tpu.memory_space<vmem>>, vector<1x8x16x16xf32>
    %141 = vector.shape_cast %140 : vector<1x8x16x16xf32> to vector<8x16x16xf32>
    %142 = vector.shape_cast %141 : vector<8x16x16xf32> to vector<8x256xf32>
    %143 = tpu.concatenate %118, %121, %124, %127, %130, %133, %136, %139, %142 in 0 : vector<8x256xf32>, vector<8x256xf32>, vector<8x256xf32>, vector<8x256xf32>, vector<8x256xf32>, vector<8x256xf32>, vector<8x256xf32>, vector<8x256xf32>, vector<8x256xf32> -> vector<72x256xf32>
    %cst_179 = arith.constant dense<0.000000e+00> : vector<8x256xf32>
    %144 = tpu.matmul %107, %143, %cst_179 {dimension_numbers = #tpu.dot_dimension_numbers<[1], [0], [0], [1], [0, 0, 1, 1], [], []>} : vector<8x72xf32>, vector<72x256xf32>, vector<8x256xf32> -> vector<8x256xf32>
    %c1_180 = arith.constant 1 : index
    %c0_181 = arith.constant 0 : index
    %c0_182 = arith.constant 0 : index
    %c0_183 = arith.constant 0 : index
    %145 = vector.load %arg11[%c1_180, %c0_181, %c0_182, %c0_183] : memref<2x8x18x18xf32, #tpu.memory_space<vmem>>, vector<1x8x16x16xf32>
    %146 = vector.shape_cast %145 : vector<1x8x16x16xf32> to vector<8x16x16xf32>
    %147 = vector.shape_cast %146 : vector<8x16x16xf32> to vector<8x256xf32>
    %c1_184 = arith.constant 1 : index
    %c0_185 = arith.constant 0 : index
    %c0_186 = arith.constant 0 : index
    %c1_187 = arith.constant 1 : index
    %148 = vector.load %arg11[%c1_184, %c0_185, %c0_186, %c1_187] : memref<2x8x18x18xf32, #tpu.memory_space<vmem>>, vector<1x8x16x16xf32>
    %149 = vector.shape_cast %148 : vector<1x8x16x16xf32> to vector<8x16x16xf32>
    %150 = vector.shape_cast %149 : vector<8x16x16xf32> to vector<8x256xf32>
    %c1_188 = arith.constant 1 : index
    %c0_189 = arith.constant 0 : index
    %c0_190 = arith.constant 0 : index
    %c2_191 = arith.constant 2 : index
    %151 = vector.load %arg11[%c1_188, %c0_189, %c0_190, %c2_191] : memref<2x8x18x18xf32, #tpu.memory_space<vmem>>, vector<1x8x16x16xf32>
    %152 = vector.shape_cast %151 : vector<1x8x16x16xf32> to vector<8x16x16xf32>
    %153 = vector.shape_cast %152 : vector<8x16x16xf32> to vector<8x256xf32>
    %c1_192 = arith.constant 1 : index
    %c0_193 = arith.constant 0 : index
    %c1_194 = arith.constant 1 : index
    %c0_195 = arith.constant 0 : index
    %154 = vector.load %arg11[%c1_192, %c0_193, %c1_194, %c0_195] : memref<2x8x18x18xf32, #tpu.memory_space<vmem>>, vector<1x8x16x16xf32>
    %155 = vector.shape_cast %154 : vector<1x8x16x16xf32> to vector<8x16x16xf32>
    %156 = vector.shape_cast %155 : vector<8x16x16xf32> to vector<8x256xf32>
    %c1_196 = arith.constant 1 : index
    %c0_197 = arith.constant 0 : index
    %c1_198 = arith.constant 1 : index
    %c1_199 = arith.constant 1 : index
    %157 = vector.load %arg11[%c1_196, %c0_197, %c1_198, %c1_199] : memref<2x8x18x18xf32, #tpu.memory_space<vmem>>, vector<1x8x16x16xf32>
    %158 = vector.shape_cast %157 : vector<1x8x16x16xf32> to vector<8x16x16xf32>
    %159 = vector.shape_cast %158 : vector<8x16x16xf32> to vector<8x256xf32>
    %c1_200 = arith.constant 1 : index
    %c0_201 = arith.constant 0 : index
    %c1_202 = arith.constant 1 : index
    %c2_203 = arith.constant 2 : index
    %160 = vector.load %arg11[%c1_200, %c0_201, %c1_202, %c2_203] : memref<2x8x18x18xf32, #tpu.memory_space<vmem>>, vector<1x8x16x16xf32>
    %161 = vector.shape_cast %160 : vector<1x8x16x16xf32> to vector<8x16x16xf32>
    %162 = vector.shape_cast %161 : vector<8x16x16xf32> to vector<8x256xf32>
    %c1_204 = arith.constant 1 : index
    %c0_205 = arith.constant 0 : index
    %c2_206 = arith.constant 2 : index
    %c0_207 = arith.constant 0 : index
    %163 = vector.load %arg11[%c1_204, %c0_205, %c2_206, %c0_207] : memref<2x8x18x18xf32, #tpu.memory_space<vmem>>, vector<1x8x16x16xf32>
    %164 = vector.shape_cast %163 : vector<1x8x16x16xf32> to vector<8x16x16xf32>
    %165 = vector.shape_cast %164 : vector<8x16x16xf32> to vector<8x256xf32>
    %c1_208 = arith.constant 1 : index
    %c0_209 = arith.constant 0 : index
    %c2_210 = arith.constant 2 : index
    %c1_211 = arith.constant 1 : index
    %166 = vector.load %arg11[%c1_208, %c0_209, %c2_210, %c1_211] : memref<2x8x18x18xf32, #tpu.memory_space<vmem>>, vector<1x8x16x16xf32>
    %167 = vector.shape_cast %166 : vector<1x8x16x16xf32> to vector<8x16x16xf32>
    %168 = vector.shape_cast %167 : vector<8x16x16xf32> to vector<8x256xf32>
    %c1_212 = arith.constant 1 : index
    %c0_213 = arith.constant 0 : index
    %c2_214 = arith.constant 2 : index
    %c2_215 = arith.constant 2 : index
    %169 = vector.load %arg11[%c1_212, %c0_213, %c2_214, %c2_215] : memref<2x8x18x18xf32, #tpu.memory_space<vmem>>, vector<1x8x16x16xf32>
    %170 = vector.shape_cast %169 : vector<1x8x16x16xf32> to vector<8x16x16xf32>
    %171 = vector.shape_cast %170 : vector<8x16x16xf32> to vector<8x256xf32>
    %172 = tpu.concatenate %147, %150, %153, %156, %159, %162, %165, %168, %171 in 0 : vector<8x256xf32>, vector<8x256xf32>, vector<8x256xf32>, vector<8x256xf32>, vector<8x256xf32>, vector<8x256xf32>, vector<8x256xf32>, vector<8x256xf32>, vector<8x256xf32> -> vector<72x256xf32>
    %cst_216 = arith.constant dense<0.000000e+00> : vector<8x256xf32>
    %173 = tpu.matmul %107, %172, %cst_216 {dimension_numbers = #tpu.dot_dimension_numbers<[1], [0], [0], [1], [0, 0, 1, 1], [], []>} : vector<8x72xf32>, vector<72x256xf32>, vector<8x256xf32> -> vector<8x256xf32>
    %174 = vector.shape_cast %144 : vector<8x256xf32> to vector<1x8x256xf32>
    %175 = vector.shape_cast %173 : vector<8x256xf32> to vector<1x8x256xf32>
    %176 = tpu.concatenate %174, %175 in 0 : vector<1x8x256xf32>, vector<1x8x256xf32> -> vector<2x8x256xf32>
    %177 = vector.broadcast %108 : vector<1x8x1xf32> to vector<2x8x256xf32>
    %178 = arith.addf %176, %177 : vector<2x8x256xf32>
    %cst_217 = arith.constant 0.000000e+00 : f32
    %179 = vector.broadcast %cst_217 : f32 to vector<2x8x256xf32>
    %180 = arith.maximumf %178, %179 : vector<2x8x256xf32>
    %c0_218 = arith.constant 0 : index
    %c0_219 = arith.constant 0 : index
    %c0_220 = arith.constant 0 : index
    %181 = vector.load %arg7[%c0_218, %c0_219, %c0_220] : memref<1x8x1xf32, #tpu.memory_space<vmem>>, vector<1x8x1xf32>
    %c0_221 = arith.constant 0 : index
    %c0_222 = arith.constant 0 : index
    %c0_223 = arith.constant 0 : index
    %182 = vector.load %arg8[%c0_221, %c0_222, %c0_223] : memref<1x8x1xf32, #tpu.memory_space<vmem>>, vector<1x8x1xf32>
    %cst_224 = arith.constant dense<0.000000e+00> : vector<2x8xf32>
    %183 = vector.multi_reduction <add>, %180, %cst_224 [2] : vector<2x8x256xf32> to vector<2x8xf32>
    %184 = vector.shape_cast %183 : vector<2x8xf32> to vector<2x8x1xf32>
    %cst_225 = arith.constant 2.560000e+02 : f32
    %185 = vector.broadcast %cst_225 : f32 to vector<2x8x1xf32>
    %186 = arith.divf %184, %185 : vector<2x8x1xf32>
    %cst_226 = arith.constant dense<0.000000e+00> : vector<8x1xf32>
    %187 = vector.multi_reduction <add>, %186, %cst_226 [0] : vector<2x8x1xf32> to vector<8x1xf32>
    %188 = vector.shape_cast %187 : vector<8x1xf32> to vector<1x8x1xf32>
    %cst_227 = arith.constant 2.000000e+00 : f32
    %189 = vector.broadcast %cst_227 : f32 to vector<1x8x1xf32>
    %190 = arith.divf %188, %189 : vector<1x8x1xf32>
    %191 = vector.broadcast %190 : vector<1x8x1xf32> to vector<2x8x256xf32>
    %192 = arith.subf %180, %191 : vector<2x8x256xf32>
    %193 = arith.mulf %192, %192 : vector<2x8x256xf32>
    %cst_228 = arith.constant dense<0.000000e+00> : vector<2x8xf32>
    %194 = vector.multi_reduction <add>, %193, %cst_228 [2] : vector<2x8x256xf32> to vector<2x8xf32>
    %195 = vector.shape_cast %194 : vector<2x8xf32> to vector<2x8x1xf32>
    %cst_229 = arith.constant 2.560000e+02 : f32
    %196 = vector.broadcast %cst_229 : f32 to vector<2x8x1xf32>
    %197 = arith.divf %195, %196 : vector<2x8x1xf32>
    %cst_230 = arith.constant dense<0.000000e+00> : vector<8x1xf32>
    %198 = vector.multi_reduction <add>, %197, %cst_230 [0] : vector<2x8x1xf32> to vector<8x1xf32>
    %199 = vector.shape_cast %198 : vector<8x1xf32> to vector<1x8x1xf32>
    %cst_231 = arith.constant 2.000000e+00 : f32
    %200 = vector.broadcast %cst_231 : f32 to vector<1x8x1xf32>
    %201 = arith.divf %199, %200 : vector<1x8x1xf32>
    %cst_232 = arith.constant 9.99999974E-6 : f32
    %202 = vector.broadcast %cst_232 : f32 to vector<1x8x1xf32>
    %203 = arith.addf %201, %202 : vector<1x8x1xf32>
    %204 = math.rsqrt %203 : vector<1x8x1xf32>
    %205 = arith.mulf %181, %204 : vector<1x8x1xf32>
    %206 = arith.mulf %190, %205 : vector<1x8x1xf32>
    %207 = arith.subf %182, %206 : vector<1x8x1xf32>
    %208 = vector.broadcast %205 : vector<1x8x1xf32> to vector<2x8x256xf32>
    %209 = arith.mulf %180, %208 : vector<2x8x256xf32>
    %210 = vector.broadcast %207 : vector<1x8x1xf32> to vector<2x8x256xf32>
    %211 = arith.addf %209, %210 : vector<2x8x256xf32>
    %c0_233 = arith.constant 0 : index
    %c0_234 = arith.constant 0 : index
    %c0_235 = arith.constant 0 : index
    %212 = vector.load %arg9[%c0_233, %c0_234, %c0_235] : memref<2x8x256xf32, #tpu.memory_space<vmem>>, vector<2x8x256xf32>
    tpu.vector_store %arg9[%c0_233, %c0_234, %c0_235], %211 {strides = array<i32>} : memref<2x8x256xf32, #tpu.memory_space<vmem>>, vector<2x8x256xf32>,
    return
  }
}

</mosaic_0001>

<llo_original>
// kernel: tpu_custom_call.1
$region0: #{tpu_custom_call.1}
  #allocation0 [shape = 'u32[]', space=smem, size = 0x4, offset = 0x4, fixed_abs, tag = 'smem constant byte address 0x4 - core index']
  #allocation1 [shape = 'u32[144,128]{1,0:T(1,128)}', space=vmem, size = 0x12000, scoped, tag = 'internal scratch']
  #allocation2 [shape = 'f32[2,4,18,18]{3,2,1,0:T(8,128)}', space=vmem, size = 0x18000, scoped, tag = 'scratch operand']
  #allocation3 [shape = 'f32[2,8,18,18]{3,2,1,0:T(8,128)}', space=vmem, size = 0x30000, scoped, tag = 'scratch operand']
  %s0 = inlined_call_operand.hbm [shape: f32[2,4,16,16], index: 0, kind: input, shape index: {}]
  %s1 = inlined_call_operand.vmem [shape: f32[8,36], index: 1, kind: input, shape index: {}]
  %s2 = inlined_call_operand.vmem [shape: f32[1,8,1], index: 2, kind: input, shape index: {}]
  %s3 = inlined_call_operand.vmem [shape: f32[1,8,1], index: 3, kind: input, shape index: {}]
  %s4 = inlined_call_operand.vmem [shape: f32[1,8,1], index: 4, kind: input, shape index: {}]
  %s5 = inlined_call_operand.vmem [shape: f32[8,72], index: 5, kind: input, shape index: {}]
  %s6 = inlined_call_operand.vmem [shape: f32[1,8,1], index: 6, kind: input, shape index: {}]
  %s7 = inlined_call_operand.vmem [shape: f32[1,8,1], index: 7, kind: input, shape index: {}]
  %s8 = inlined_call_operand.vmem [shape: f32[1,8,1], index: 8, kind: input, shape index: {}]
  %s9 = inlined_call_operand.hbm [shape: f32[2,8,256], index: 9, kind: output, shape index: {}]
  %s10 = sld [smem:[#allocation0]]
  $region50: #{tpu_custom_call.1} parent=0
    _
  %s12 = ssub.s32 1, %s10
  %s13 = scalar_select 0, %s12, %s10
  $region1: #{tpu_custom_call.1} parent=0
    #allocation4 [shape = 'u8[65536]{0}', space=vmem, size = 0x10000, scoped, tag = 'input window, operand 0, single buffered']
    #allocation5 [shape = 's32[1]{0}', space=sflag, size = 0x4, scoped, tag = 'scoped memory for tpu_custom_call.1']
    #allocation6 [shape = 's32[1]{0}', space=sflag, size = 0x4, scoped, tag = 'scoped memory for tpu_custom_call.1']
    #allocation7 [shape = 'u8[16384]{0}', space=vmem, size = 0x4000, scoped, tag = 'output window, operand 0, single buffered']
    %14 = vsyncpa [#allocation5], 0
    %15 = vsyncpa [#allocation6], 0
    // Predicated region
    $region2: #{tpu_custom_call.1} parent=1 // pred_check
      _
    $region3: #{tpu_custom_call.1} parent=1 // pred_check_branch
      %17 = sbr.rel (0) target = $region5
    $region4: #{tpu_custom_call.1} parent=1 // pred_region
      %s19 = ssub.s32 2048, 2048
      %20 = vsyncadd [#allocation5], %s19
      %s21 = sshll.u32 [#allocation4], 4
      %s22 = int_to_ptr.vmem [resolvable:$true] %s21
      %27 = dma.hbm_to_vmem [thread:$0]  %s0, 2048, %s22, [#allocation5], 128, 128, 8
    $region5: #{tpu_custom_call.1} parent=1 // pred_fallthru
      _
    // Predicated region
    $region6: #{tpu_custom_call.1} parent=1 // pred_check
      _
    $region7: #{tpu_custom_call.1} parent=1 // pred_check_branch
      %29 = sbr.rel (0) target = $region9
    $region8: #{tpu_custom_call.1} parent=1 // pred_region
      _
    $region9: #{tpu_custom_call.1} parent=1 // pred_fallthru
      _
    // Predicated region
    $region10: #{tpu_custom_call.1} parent=1 // pred_check
      _
    $region11: #{tpu_custom_call.1} parent=1 // pred_check_branch
      %31 = sbr.rel (0) target = $region13
    $region12: #{tpu_custom_call.1} parent=1 // pred_region
      _
    $region13: #{tpu_custom_call.1} parent=1 // pred_fallthru
      _
    // Predicated region
    $region14: #{tpu_custom_call.1} parent=1 // pred_check
      _
    $region15: #{tpu_custom_call.1} parent=1 // pred_check_branch
      %33 = sbr.rel (0) target = $region17
    $region16: #{tpu_custom_call.1} parent=1 // pred_region
      _
    $region17: #{tpu_custom_call.1} parent=1 // pred_fallthru
      _
    // Predicated region
    $region18: #{tpu_custom_call.1} parent=1 // pred_check
      _
    $region19: #{tpu_custom_call.1} parent=1 // pred_check_branch
      %35 = sbr.rel (0) target = $region21
    $region20: #{tpu_custom_call.1} parent=1 // pred_region
      _
    $region21: #{tpu_custom_call.1} parent=1 // pred_fallthru
      _
    // Predicated region
    $region22: #{tpu_custom_call.1} parent=1 // pred_check
      _
    $region23: #{tpu_custom_call.1} parent=1 // pred_check_branch
      %37 = sbr.rel (0) target = $region25
    $region24: #{tpu_custom_call.1} parent=1 // pred_region
      _
    $region25: #{tpu_custom_call.1} parent=1 // pred_fallthru
      _
    // Predicated region
    $region26: #{tpu_custom_call.1} parent=1 // pred_check
      _
    $region27: #{tpu_custom_call.1} parent=1 // pred_check_branch
      %39 = sbr.rel (0) target = $region29
    $region28: #{tpu_custom_call.1} parent=1 // pred_region
      _
    $region29: #{tpu_custom_call.1} parent=1 // pred_fallthru
      _
    // Predicated region
    $region30: #{tpu_custom_call.1} parent=1 // pred_check
      _
    $region31: #{tpu_custom_call.1} parent=1 // pred_check_branch
      %41 = sbr.rel (0) target = $region33
    $region32: #{tpu_custom_call.1} parent=1 // pred_region
      _
    $region33: #{tpu_custom_call.1} parent=1 // pred_fallthru
      _
    // Predicated region
    $region34: #{tpu_custom_call.1} parent=1 // pred_check
      _
    $region35: #{tpu_custom_call.1} parent=1 // pred_check_branch
      %43 = sbr.rel (0) target = $region37
    $region36: #{tpu_custom_call.1} parent=1 // pred_region
      _
    $region37: #{tpu_custom_call.1} parent=1 // pred_fallthru
      _
    // Predicated region
    $region38: #{tpu_custom_call.1} parent=1 // pred_check
      _
    $region39: #{tpu_custom_call.1} parent=1 // pred_check_branch
      %45 = sbr.rel (0) target = $region41
    $region40: #{tpu_custom_call.1} parent=1 // pred_region
      %46 = dma.done [#allocation5], 2048
    $region41: #{tpu_custom_call.1} parent=1 // pred_fallthru
      _
    %v47 = vld [vmem:[#allocation4] sm:$0xff]
    %v48 = vld [vmem:[#allocation4 + $0x8] sm:$0xff]
    %v49 = vld [vmem:[#allocation4 + $0x10] sm:$0xff]
    %v50 = vld [vmem:[#allocation4 + $0x18] sm:$0xff]
    %v51 = vld [vmem:[#allocation4 + $0x20] sm:$0xff]
    %v52 = vld [vmem:[#allocation4 + $0x28] sm:$0xff]
    %v53 = vld [vmem:[#allocation4 + $0x30] sm:$0xff]
    %v54 = vld [vmem:[#allocation4 + $0x38] sm:$0xff]
    %v55 = vld [vmem:[#allocation4 + $0x40] sm:$0xff]
    %v56 = vld [vmem:[#allocation4 + $0x48] sm:$0xff]
    %v57 = vld [vmem:[#allocation4 + $0x50] sm:$0xff]
    %v58 = vld [vmem:[#allocation4 + $0x58] sm:$0xff]
    %v59 = vld [vmem:[#allocation4 + $0x60] sm:$0xff]
    %v60 = vld [vmem:[#allocation4 + $0x68] sm:$0xff]
    %v61 = vld [vmem:[#allocation4 + $0x70] sm:$0xff]
    %v62 = vld [vmem:[#allocation4 + $0x78] sm:$0xff]
    %v63 = vld [vmem:[%s1] sm:$0xff]
    %v64 = vld [vmem:[%s2] sm:$0xff]
    %vm65 = vcmask 139264
    %66 = vst.msk [vmem:[#allocation2] sm:$0x1] %vm65, 0.0
    %67 = vst.msk [vmem:[#allocation2 + $0x18] sm:$0x1] %vm65, 0.0
    %68 = vst.msk [vmem:[#allocation2 + $0x30] sm:$0x1] %vm65, 0.0
    %69 = vst.msk [vmem:[#allocation2 + $0x48] sm:$0x1] %vm65, 0.0
    %70 = vst.msk [vmem:[#allocation2 + $0x60] sm:$0x1] %vm65, 0.0
    %71 = vst.msk [vmem:[#allocation2 + $0x78] sm:$0x1] %vm65, 0.0
    %72 = vst.msk [vmem:[#allocation2 + $0x90] sm:$0x1] %vm65, 0.0
    %73 = vst.msk [vmem:[#allocation2 + $0xa8] sm:$0x1] %vm65, 0.0
    %74 = vst.msk [vmem:[#allocation2 + $0x11] sm:$0x1] %vm65, 0.0
    %75 = vst.msk [vmem:[#allocation2 + $0x29] sm:$0x1] %vm65, 0.0
    %76 = vst.msk [vmem:[#allocation2 + $0x41] sm:$0x1] %vm65, 0.0
    %77 = vst.msk [vmem:[#allocation2 + $0x59] sm:$0x1] %vm65, 0.0
    %78 = vst.msk [vmem:[#allocation2 + $0x71] sm:$0x1] %vm65, 0.0
    %79 = vst.msk [vmem:[#allocation2 + $0x89] sm:$0x1] %vm65, 0.0
    %80 = vst.msk [vmem:[#allocation2 + $0xa1] sm:$0x1] %vm65, 0.0
    %81 = vst.msk [vmem:[#allocation2 + $0xb9] sm:$0x1] %vm65, 0.0
    %vm82 = vcmask 7168
    %83 = vst.msk [vmem:[#allocation2 + $0x1] sm:$0xff] %vm82, 0.0
    %84 = vst.msk [vmem:[#allocation2 + $0x9] sm:$0xff] %vm82, 0.0
    %85 = vst.msk [vmem:[#allocation2 + $0x19] sm:$0xff] %vm82, 0.0
    %86 = vst.msk [vmem:[#allocation2 + $0x21] sm:$0xff] %vm82, 0.0
    %87 = vst.msk [vmem:[#allocation2 + $0x31] sm:$0xff] %vm82, 0.0
    %88 = vst.msk [vmem:[#allocation2 + $0x39] sm:$0xff] %vm82, 0.0
    %89 = vst.msk [vmem:[#allocation2 + $0x49] sm:$0xff] %vm82, 0.0
    %90 = vst.msk [vmem:[#allocation2 + $0x51] sm:$0xff] %vm82, 0.0
    %91 = vst.msk [vmem:[#allocation2 + $0x61] sm:$0xff] %vm82, 0.0
    %92 = vst.msk [vmem:[#allocation2 + $0x69] sm:$0xff] %vm82, 0.0
    %93 = vst.msk [vmem:[#allocation2 + $0x79] sm:$0xff] %vm82, 0.0
    %94 = vst.msk [vmem:[#allocation2 + $0x81] sm:$0xff] %vm82, 0.0
    %95 = vst.msk [vmem:[#allocation2 + $0x91] sm:$0xff] %vm82, 0.0
    %96 = vst.msk [vmem:[#allocation2 + $0x99] sm:$0xff] %vm82, 0.0
    %97 = vst.msk [vmem:[#allocation2 + $0xa9] sm:$0xff] %vm82, 0.0
    %98 = vst.msk [vmem:[#allocation2 + $0xb1] sm:$0xff] %vm82, 0.0
    %vm99 = vcmask 146568
    %100 = vst.msk [vmem:[#allocation2 + $0x1] sm:$0xff] %vm99, 0.0
    %101 = vst.msk [vmem:[#allocation2 + $0x9] sm:$0xff] %vm99, 0.0
    %102 = vst.msk [vmem:[#allocation2 + $0x19] sm:$0xff] %vm99, 0.0
    %103 = vst.msk [vmem:[#allocation2 + $0x21] sm:$0xff] %vm99, 0.0
    %104 = vst.msk [vmem:[#allocation2 + $0x31] sm:$0xff] %vm99, 0.0
    %105 = vst.msk [vmem:[#allocation2 + $0x39] sm:$0xff] %vm99, 0.0
    %106 = vst.msk [vmem:[#allocation2 + $0x49] sm:$0xff] %vm99, 0.0
    %107 = vst.msk [vmem:[#allocation2 + $0x51] sm:$0xff] %vm99, 0.0
    %108 = vst.msk [vmem:[#allocation2 + $0x61] sm:$0xff] %vm99, 0.0
    %109 = vst.msk [vmem:[#allocation2 + $0x69] sm:$0xff] %vm99, 0.0
    %110 = vst.msk [vmem:[#allocation2 + $0x79] sm:$0xff] %vm99, 0.0
    %111 = vst.msk [vmem:[#allocation2 + $0x81] sm:$0xff] %vm99, 0.0
    %112 = vst.msk [vmem:[#allocation2 + $0x91] sm:$0xff] %vm99, 0.0
    %113 = vst.msk [vmem:[#allocation2 + $0x99] sm:$0xff] %vm99, 0.0
    %114 = vst.msk [vmem:[#allocation2 + $0xa9] sm:$0xff] %vm99, 0.0
    %115 = vst.msk [vmem:[#allocation2 + $0xb1] sm:$0xff] %vm99, 0.0
    %132 = vrot.lane.b32.xlu0 %v47, 1
    %v133 = vpop.permute.xlu0 %132
    %134 = vrot.lane.b32.xlu0 %v48, 1
    %v135 = vpop.permute.xlu0 %134
    %136 = vrot.lane.b32.xlu0 %v49, 1
    %v137 = vpop.permute.xlu0 %136
    %138 = vrot.lane.b32.xlu0 %v50, 1
    %v139 = vpop.permute.xlu0 %138
    %140 = vrot.lane.b32.xlu0 %v51, 1
    %v141 = vpop.permute.xlu0 %140
    %142 = vrot.lane.b32.xlu0 %v52, 1
    %v143 = vpop.permute.xlu0 %142
    %144 = vrot.lane.b32.xlu0 %v53, 1
    %v145 = vpop.permute.xlu0 %144
    %146 = vrot.lane.b32.xlu0 %v54, 1
    %v147 = vpop.permute.xlu0 %146
    %148 = vrot.lane.b32.xlu0 %v55, 1
    %v149 = vpop.permute.xlu0 %148
    %150 = vrot.lane.b32.xlu0 %v56, 1
    %v151 = vpop.permute.xlu0 %150
    %152 = vrot.lane.b32.xlu0 %v57, 1
    %v153 = vpop.permute.xlu0 %152
    %154 = vrot.lane.b32.xlu0 %v58, 1
    %v155 = vpop.permute.xlu0 %154
    %156 = vrot.lane.b32.xlu0 %v59, 1
    %v157 = vpop.permute.xlu0 %156
    %158 = vrot.lane.b32.xlu0 %v60, 1
    %v159 = vpop.permute.xlu0 %158
    %160 = vrot.lane.b32.xlu0 %v61, 1
    %v161 = vpop.permute.xlu0 %160
    %162 = vrot.lane.b32.xlu0 %v62, 1
    %v163 = vpop.permute.xlu0 %162
    %vm180 = vcmask 138248
    %181 = vst.msk [vmem:[#allocation2 + $0x1] sm:$0xff] %vm180, %v133
    %182 = vst.msk [vmem:[#allocation2 + $0x9] sm:$0xff] %vm180, %v135
    %183 = vst.msk [vmem:[#allocation2 + $0x19] sm:$0xff] %vm180, %v137
    %184 = vst.msk [vmem:[#allocation2 + $0x21] sm:$0xff] %vm180, %v139
    %185 = vst.msk [vmem:[#allocation2 + $0x31] sm:$0xff] %vm180, %v141
    %186 = vst.msk [vmem:[#allocation2 + $0x39] sm:$0xff] %vm180, %v143
    %187 = vst.msk [vmem:[#allocation2 + $0x49] sm:$0xff] %vm180, %v145
    %188 = vst.msk [vmem:[#allocation2 + $0x51] sm:$0xff] %vm180, %v147
    %189 = vst.msk [vmem:[#allocation2 + $0x61] sm:$0xff] %vm180, %v149
    %190 = vst.msk [vmem:[#allocation2 + $0x69] sm:$0xff] %vm180, %v151
    %191 = vst.msk [vmem:[#allocation2 + $0x79] sm:$0xff] %vm180, %v153
    %192 = vst.msk [vmem:[#allocation2 + $0x81] sm:$0xff] %vm180, %v155
    %193 = vst.msk [vmem:[#allocation2 + $0x91] sm:$0xff] %vm180, %v157
    %194 = vst.msk [vmem:[#allocation2 + $0x99] sm:$0xff] %vm180, %v159
    %195 = vst.msk [vmem:[#allocation2 + $0xa9] sm:$0xff] %vm180, %v161
    %196 = vst.msk [vmem:[#allocation2 + $0xb1] sm:$0xff] %vm180, %v163
    %v197 = vld [vmem:[#allocation2] sm:$0xff]
    %v198 = vld [vmem:[#allocation2 + $0x8] sm:$0xff]
    %v199 = vld [vmem:[#allocation2 + $0x18] sm:$0xff]
    %v200 = vld [vmem:[#allocation2 + $0x20] sm:$0xff]
    %v201 = vld [vmem:[#allocation2 + $0x30] sm:$0xff]
    %v202 = vld [vmem:[#allocation2 + $0x38] sm:$0xff]
    %v203 = vld [vmem:[#allocation2 + $0x48] sm:$0xff]
    %v204 = vld [vmem:[#allocation2 + $0x50] sm:$0xff]
    %v205 = vcombine.low %v197, %v201
    %v206 = vcombine.high %v197, %v201
    %v208 = vunpack.c.l.s4 1983009808
    %v209 = vunpack.c.0.s8 %v208
    %v210 = vlaneseq
    %v211 = vshrl.u32 %v210, 7
    %v212 = vsub.s32 %v209, %v211
    %v213 = vrot.slane %v205, %v212
    %v215 = vunpack.c.l.s4 1983009808
    %v216 = vunpack.c.0.s8 %v215
    %v217 = vlaneseq
    %v218 = vshrl.u32 %v217, 7
    %v219 = vsub.s32 %v216, %v218
    %v220 = vrot.slane %v206, %v219
    %v221 = vcombine.low %v199, %v203
    %v222 = vcombine.high %v199, %v203
    %v224 = vunpack.c.l.s4 1983009808
    %v225 = vunpack.c.0.s8 %v224
    %v226 = vlaneseq
    %v227 = vshrl.u32 %v226, 7
    %v228 = vsub.s32 %v225, %v227
    %v229 = vrot.slane %v221, %v228
    %v231 = vunpack.c.l.s4 1983009808
    %v232 = vunpack.c.0.s8 %v231
    %v233 = vlaneseq
    %v234 = vshrl.u32 %v233, 7
    %v235 = vsub.s32 %v232, %v234
    %v236 = vrot.slane %v222, %v235
    %v237 = vcombine.low %v213, %v229
    %v238 = vcombine.high %v213, %v229
    %v240 = vunpack.c.l.s4 1934713408
    %v241 = vunpack.c.0.s8 %v240
    %v242 = vlaneseq
    %v243 = vshrl.u32 %v242, 7
    %v244 = vsub.s32 %v241, %v243
    %v245 = vrot.slane %v237, %v244
    %v247 = vunpack.c.l.s4 1934713408
    %v248 = vunpack.c.0.s8 %v247
    %v249 = vlaneseq
    %v250 = vshrl.u32 %v249, 7
    %v251 = vsub.s32 %v248, %v250
    %v252 = vrot.slane %v238, %v251
    %v253 = vcombine.low %v220, %v236
    %v254 = vcombine.high %v220, %v236
    %v256 = vunpack.c.l.s4 1934713408
    %v257 = vunpack.c.0.s8 %v256
    %v258 = vlaneseq
    %v259 = vshrl.u32 %v258, 7
    %v260 = vsub.s32 %v257, %v259
    %v261 = vrot.slane %v253, %v260
    %v263 = vunpack.c.l.s4 1934713408
    %v264 = vunpack.c.0.s8 %v263
    %v265 = vlaneseq
    %v266 = vshrl.u32 %v265, 7
    %v267 = vsub.s32 %v264, %v266
    %v268 = vrot.slane %v254, %v267
    %v269 = vcombine.high %v245, 0.0
    %v270 = vcombine.high %v252, 0.0
    %v271 = vcombine.high %v261, 0.0
    %v272 = vcombine.high %v268, 0.0
    %v273 = vcombine.low %v198, %v202
    %v274 = vcombine.high %v198, %v202
    %v276 = vunpack.c.l.s4 1983009808
    %v277 = vunpack.c.0.s8 %v276
    %v278 = vlaneseq
    %v279 = vshrl.u32 %v278, 7
    %v280 = vsub.s32 %v277, %v279
    %v281 = vrot.slane %v273, %v280
    %v283 = vunpack.c.l.s4 1983009808
    %v284 = vunpack.c.0.s8 %v283
    %v285 = vlaneseq
    %v286 = vshrl.u32 %v285, 7
    %v287 = vsub.s32 %v284, %v286
    %v288 = vrot.slane %v274, %v287
    %v289 = vcombine.low %v200, %v204
    %v290 = vcombine.high %v200, %v204
    %v292 = vunpack.c.l.s4 1983009808
    %v293 = vunpack.c.0.s8 %v292
    %v294 = vlaneseq
    %v295 = vshrl.u32 %v294, 7
    %v296 = vsub.s32 %v293, %v295
    %v297 = vrot.slane %v289, %v296
    %v299 = vunpack.c.l.s4 1983009808
    %v300 = vunpack.c.0.s8 %v299
    %v301 = vlaneseq
    %v302 = vshrl.u32 %v301, 7
    %v303 = vsub.s32 %v300, %v302
    %v304 = vrot.slane %v290, %v303
    %v305 = vcombine.low %v281, %v297
    %v306 = vcombine.high %v281, %v297
    %v308 = vunpack.c.l.s4 1934713408
    %v309 = vunpack.c.0.s8 %v308
    %v310 = vlaneseq
    %v311 = vshrl.u32 %v310, 7
    %v312 = vsub.s32 %v309, %v311
    %v313 = vrot.slane %v305, %v312
    %v315 = vunpack.c.l.s4 1934713408
    %v316 = vunpack.c.0.s8 %v315
    %v317 = vlaneseq
    %v318 = vshrl.u32 %v317, 7
    %v319 = vsub.s32 %v316, %v318
    %v320 = vrot.slane %v306, %v319
    %v321 = vcombine.low %v288, %v304
    %v322 = vcombine.high %v288, %v304
    %v324 = vunpack.c.l.s4 1934713408
    %v325 = vunpack.c.0.s8 %v324
    %v326 = vlaneseq
    %v327 = vshrl.u32 %v326, 7
    %v328 = vsub.s32 %v325, %v327
    %v329 = vrot.slane %v321, %v328
    %v331 = vunpack.c.l.s4 1934713408
    %v332 = vunpack.c.0.s8 %v331
    %v333 = vlaneseq
    %v334 = vshrl.u32 %v333, 7
    %v335 = vsub.s32 %v332, %v334
    %v336 = vrot.slane %v322, %v335
    %v337 = vcombine.high %v313, 0.0
    %v338 = vcombine.high %v320, 0.0
    %v339 = vcombine.high %v329, 0.0
    %v340 = vcombine.high %v336, 0.0
    %342 = vrot.lane.b32.xlu0 %v269, 16
    %v343 = vpop.permute.xlu0 %342
    %346 = vrot.lane.b32.xlu0 %v252, 32
    %v347 = vpop.permute.xlu0 %346
    %350 = vrot.lane.b32.xlu0 %v270, 48
    %v351 = vpop.permute.xlu0 %350
    %354 = vrot.lane.b32.xlu0 %v261, 64
    %v355 = vpop.permute.xlu0 %354
    %358 = vrot.lane.b32.xlu0 %v271, 80
    %v359 = vpop.permute.xlu0 %358
    %362 = vrot.lane.b32.xlu0 %v268, 96
    %v363 = vpop.permute.xlu0 %362
    %366 = vrot.lane.b32.xlu0 %v272, 112
    %v367 = vpop.permute.xlu0 %366
    %370 = vrot.lane.b32.xlu0 %v337, 16
    %v371 = vpop.permute.xlu0 %370
    %374 = vrot.lane.b32.xlu0 %v320, 32
    %v375 = vpop.permute.xlu0 %374
    %378 = vrot.lane.b32.xlu0 %v338, 48
    %v379 = vpop.permute.xlu0 %378
    %382 = vrot.lane.b32.xlu0 %v329, 64
    %v383 = vpop.permute.xlu0 %382
    %386 = vrot.lane.b32.xlu0 %v339, 80
    %v387 = vpop.permute.xlu0 %386
    %390 = vrot.lane.b32.xlu0 %v336, 96
    %v391 = vpop.permute.xlu0 %390
    %394 = vrot.lane.b32.xlu0 %v340, 112
    %v395 = vpop.permute.xlu0 %394
    %vm397 = vcmask 130048
    %v398 = vsel %vm397, %v245, %v343
    %vm399 = vcmask 261120
    %v400 = vsel %vm399, %v398, %v347
    %vm401 = vcmask 392192
    %v402 = vsel %vm401, %v400, %v351
    %vm403 = vcmask 523264
    %v404 = vsel %vm403, %v402, %v355
    %vm405 = vcmask 654336
    %v406 = vsel %vm405, %v404, %v359
    %vm407 = vcmask 785408
    %v408 = vsel %vm407, %v406, %v363
    %vm409 = vcmask 916480
    %v410 = vsel %vm409, %v408, %v367
    %v411 = vsel %vm397, %v313, %v371
    %v412 = vsel %vm399, %v411, %v375
    %v413 = vsel %vm401, %v412, %v379
    %v414 = vsel %vm403, %v413, %v383
    %v415 = vsel %vm405, %v414, %v387
    %v416 = vsel %vm407, %v415, %v391
    %v417 = vsel %vm409, %v416, %v395
    %426 = vrot.lane.b32.xlu0 %v197, 127
    %v427 = vpop.permute.xlu0 %426
    %428 = vrot.lane.b32.xlu0 %v198, 127
    %v429 = vpop.permute.xlu0 %428
    %430 = vrot.lane.b32.xlu0 %v199, 127
    %v431 = vpop.permute.xlu0 %430
    %432 = vrot.lane.b32.xlu0 %v200, 127
    %v433 = vpop.permute.xlu0 %432
    %434 = vrot.lane.b32.xlu0 %v201, 127
    %v435 = vpop.permute.xlu0 %434
    %436 = vrot.lane.b32.xlu0 %v202, 127
    %v437 = vpop.permute.xlu0 %436
    %438 = vrot.lane.b32.xlu0 %v203, 127
    %v439 = vpop.permute.xlu0 %438
    %440 = vrot.lane.b32.xlu0 %v204, 127
    %v441 = vpop.permute.xlu0 %440
    %v450 = vcombine.low %v427, %v435
    %v451 = vcombine.high %v427, %v435
    %v453 = vunpack.c.l.s4 1983009808
    %v454 = vunpack.c.0.s8 %v453
    %v455 = vlaneseq
    %v456 = vshrl.u32 %v455, 7
    %v457 = vsub.s32 %v454, %v456
    %v458 = vrot.slane %v450, %v457
    %v460 = vunpack.c.l.s4 1983009808
    %v461 = vunpack.c.0.s8 %v460
    %v462 = vlaneseq
    %v463 = vshrl.u32 %v462, 7
    %v464 = vsub.s32 %v461, %v463
    %v465 = vrot.slane %v451, %v464
    %v466 = vcombine.low %v431, %v439
    %v467 = vcombine.high %v431, %v439
    %v469 = vunpack.c.l.s4 1983009808
    %v470 = vunpack.c.0.s8 %v469
    %v471 = vlaneseq
    %v472 = vshrl.u32 %v471, 7
    %v473 = vsub.s32 %v470, %v472
    %v474 = vrot.slane %v466, %v473
    %v476 = vunpack.c.l.s4 1983009808
    %v477 = vunpack.c.0.s8 %v476
    %v478 = vlaneseq
    %v479 = vshrl.u32 %v478, 7
    %v480 = vsub.s32 %v477, %v479
    %v481 = vrot.slane %v467, %v480
    %v482 = vcombine.low %v458, %v474
    %v483 = vcombine.high %v458, %v474
    %v485 = vunpack.c.l.s4 1934713408
    %v486 = vunpack.c.0.s8 %v485
    %v487 = vlaneseq
    %v488 = vshrl.u32 %v487, 7
    %v489 = vsub.s32 %v486, %v488
    %v490 = vrot.slane %v482, %v489
    %v492 = vunpack.c.l.s4 1934713408
    %v493 = vunpack.c.0.s8 %v492
    %v494 = vlaneseq
    %v495 = vshrl.u32 %v494, 7
    %v496 = vsub.s32 %v493, %v495
    %v497 = vrot.slane %v483, %v496
    %v498 = vcombine.low %v465, %v481
    %v499 = vcombine.high %v465, %v481
    %v501 = vunpack.c.l.s4 1934713408
    %v502 = vunpack.c.0.s8 %v501
    %v503 = vlaneseq
    %v504 = vshrl.u32 %v503, 7
    %v505 = vsub.s32 %v502, %v504
    %v506 = vrot.slane %v498, %v505
    %v508 = vunpack.c.l.s4 1934713408
    %v509 = vunpack.c.0.s8 %v508
    %v510 = vlaneseq
    %v511 = vshrl.u32 %v510, 7
    %v512 = vsub.s32 %v509, %v511
    %v513 = vrot.slane %v499, %v512
    %v514 = vcombine.high %v490, 0.0
    %v515 = vcombine.high %v497, 0.0
    %v516 = vcombine.high %v506, 0.0
    %v517 = vcombine.high %v513, 0.0
    %v518 = vcombine.low %v429, %v437
    %v519 = vcombine.high %v429, %v437
    %v521 = vunpack.c.l.s4 1983009808
    %v522 = vunpack.c.0.s8 %v521
    %v523 = vlaneseq
    %v524 = vshrl.u32 %v523, 7
    %v525 = vsub.s32 %v522, %v524
    %v526 = vrot.slane %v518, %v525
    %v528 = vunpack.c.l.s4 1983009808
    %v529 = vunpack.c.0.s8 %v528
    %v530 = vlaneseq
    %v531 = vshrl.u32 %v530, 7
    %v532 = vsub.s32 %v529, %v531
    %v533 = vrot.slane %v519, %v532
    %v534 = vcombine.low %v433, %v441
    %v535 = vcombine.high %v433, %v441
    %v537 = vunpack.c.l.s4 1983009808
    %v538 = vunpack.c.0.s8 %v537
    %v539 = vlaneseq
    %v540 = vshrl.u32 %v539, 7
    %v541 = vsub.s32 %v538, %v540
    %v542 = vrot.slane %v534, %v541
    %v544 = vunpack.c.l.s4 1983009808
    %v545 = vunpack.c.0.s8 %v544
    %v546 = vlaneseq
    %v547 = vshrl.u32 %v546, 7
    %v548 = vsub.s32 %v545, %v547
    %v549 = vrot.slane %v535, %v548
    %v550 = vcombine.low %v526, %v542
    %v551 = vcombine.high %v526, %v542
    %v553 = vunpack.c.l.s4 1934713408
    %v554 = vunpack.c.0.s8 %v553
    %v555 = vlaneseq
    %v556 = vshrl.u32 %v555, 7
    %v557 = vsub.s32 %v554, %v556
    %v558 = vrot.slane %v550, %v557
    %v560 = vunpack.c.l.s4 1934713408
    %v561 = vunpack.c.0.s8 %v560
    %v562 = vlaneseq
    %v563 = vshrl.u32 %v562, 7
    %v564 = vsub.s32 %v561, %v563
    %v565 = vrot.slane %v551, %v564
    %v566 = vcombine.low %v533, %v549
    %v567 = vcombine.high %v533, %v549
    %v569 = vunpack.c.l.s4 1934713408
    %v570 = vunpack.c.0.s8 %v569
    %v571 = vlaneseq
    %v572 = vshrl.u32 %v571, 7
    %v573 = vsub.s32 %v570, %v572
    %v574 = vrot.slane %v566, %v573
    %v576 = vunpack.c.l.s4 1934713408
    %v577 = vunpack.c.0.s8 %v576
    %v578 = vlaneseq
    %v579 = vshrl.u32 %v578, 7
    %v580 = vsub.s32 %v577, %v579
    %v581 = vrot.slane %v567, %v580
    %v582 = vcombine.high %v558, 0.0
    %v583 = vcombine.high %v565, 0.0
    %v584 = vcombine.high %v574, 0.0
    %v585 = vcombine.high %v581, 0.0
    %587 = vrot.lane.b32.xlu0 %v514, 16
    %v588 = vpop.permute.xlu0 %587
    %591 = vrot.lane.b32.xlu0 %v497, 32
    %v592 = vpop.permute.xlu0 %591
    %595 = vrot.lane.b32.xlu0 %v515, 48
    %v596 = vpop.permute.xlu0 %595
    %599 = vrot.lane.b32.xlu0 %v506, 64
    %v600 = vpop.permute.xlu0 %599
    %603 = vrot.lane.b32.xlu0 %v516, 80
    %v604 = vpop.permute.xlu0 %603
    %607 = vrot.lane.b32.xlu0 %v513, 96
    %v608 = vpop.permute.xlu0 %607
    %611 = vrot.lane.b32.xlu0 %v517, 112
    %v612 = vpop.permute.xlu0 %611
    %615 = vrot.lane.b32.xlu0 %v582, 16
    %v616 = vpop.permute.xlu0 %615
    %619 = vrot.lane.b32.xlu0 %v565, 32
    %v620 = vpop.permute.xlu0 %619
    %623 = vrot.lane.b32.xlu0 %v583, 48
    %v624 = vpop.permute.xlu0 %623
    %627 = vrot.lane.b32.xlu0 %v574, 64
    %v628 = vpop.permute.xlu0 %627
    %631 = vrot.lane.b32.xlu0 %v584, 80
    %v632 = vpop.permute.xlu0 %631
    %635 = vrot.lane.b32.xlu0 %v581, 96
    %v636 = vpop.permute.xlu0 %635
    %639 = vrot.lane.b32.xlu0 %v585, 112
    %v640 = vpop.permute.xlu0 %639
    %v642 = vsel %vm397, %v490, %v588
    %v643 = vsel %vm399, %v642, %v592
    %v644 = vsel %vm401, %v643, %v596
    %v645 = vsel %vm403, %v644, %v600
    %v646 = vsel %vm405, %v645, %v604
    %v647 = vsel %vm407, %v646, %v608
    %v648 = vsel %vm409, %v647, %v612
    %v649 = vsel %vm397, %v558, %v616
    %v650 = vsel %vm399, %v649, %v620
    %v651 = vsel %vm401, %v650, %v624
    %v652 = vsel %vm403, %v651, %v628
    %v653 = vsel %vm405, %v652, %v632
    %v654 = vsel %vm407, %v653, %v636
    %v655 = vsel %vm409, %v654, %v640
    %656 = vrot.lane.b32.xlu0 %v197, 126
    %v657 = vpop.permute.xlu0 %656
    %658 = vrot.lane.b32.xlu0 %v198, 126
    %v659 = vpop.permute.xlu0 %658
    %660 = vrot.lane.b32.xlu0 %v199, 126
    %v661 = vpop.permute.xlu0 %660
    %662 = vrot.lane.b32.xlu0 %v200, 126
    %v663 = vpop.permute.xlu0 %662
    %664 = vrot.lane.b32.xlu0 %v201, 126
    %v665 = vpop.permute.xlu0 %664
    %666 = vrot.lane.b32.xlu0 %v202, 126
    %v667 = vpop.permute.xlu0 %666
    %668 = vrot.lane.b32.xlu0 %v203, 126
    %v669 = vpop.permute.xlu0 %668
    %670 = vrot.lane.b32.xlu0 %v204, 126
    %v671 = vpop.permute.xlu0 %670
    %v680 = vcombine.low %v657, %v665
    %v681 = vcombine.high %v657, %v665
    %v683 = vunpack.c.l.s4 1983009808
    %v684 = vunpack.c.0.s8 %v683
    %v685 = vlaneseq
    %v686 = vshrl.u32 %v685, 7
    %v687 = vsub.s32 %v684, %v686
    %v688 = vrot.slane %v680, %v687
    %v690 = vunpack.c.l.s4 1983009808
    %v691 = vunpack.c.0.s8 %v690
    %v692 = vlaneseq
    %v693 = vshrl.u32 %v692, 7
    %v694 = vsub.s32 %v691, %v693
    %v695 = vrot.slane %v681, %v694
    %v696 = vcombine.low %v661, %v669
    %v697 = vcombine.high %v661, %v669
    %v699 = vunpack.c.l.s4 1983009808
    %v700 = vunpack.c.0.s8 %v699
    %v701 = vlaneseq
    %v702 = vshrl.u32 %v701, 7
    %v703 = vsub.s32 %v700, %v702
    %v704 = vrot.slane %v696, %v703
    %v706 = vunpack.c.l.s4 1983009808
    %v707 = vunpack.c.0.s8 %v706
    %v708 = vlaneseq
    %v709 = vshrl.u32 %v708, 7
    %v710 = vsub.s32 %v707, %v709
    %v711 = vrot.slane %v697, %v710
    %v712 = vcombine.low %v688, %v704
    %v713 = vcombine.high %v688, %v704
    %v715 = vunpack.c.l.s4 1934713408
    %v716 = vunpack.c.0.s8 %v715
    %v717 = vlaneseq
    %v718 = vshrl.u32 %v717, 7
    %v719 = vsub.s32 %v716, %v718
    %v720 = vrot.slane %v712, %v719
    %v722 = vunpack.c.l.s4 1934713408
    %v723 = vunpack.c.0.s8 %v722
    %v724 = vlaneseq
    %v725 = vshrl.u32 %v724, 7
    %v726 = vsub.s32 %v723, %v725
    %v727 = vrot.slane %v713, %v726
    %v728 = vcombine.low %v695, %v711
    %v729 = vcombine.high %v695, %v711
    %v731 = vunpack.c.l.s4 1934713408
    %v732 = vunpack.c.0.s8 %v731
    %v733 = vlaneseq
    %v734 = vshrl.u32 %v733, 7
    %v735 = vsub.s32 %v732, %v734
    %v736 = vrot.slane %v728, %v735
    %v738 = vunpack.c.l.s4 1934713408
    %v739 = vunpack.c.0.s8 %v738
    %v740 = vlaneseq
    %v741 = vshrl.u32 %v740, 7
    %v742 = vsub.s32 %v739, %v741
    %v743 = vrot.slane %v729, %v742
    %v744 = vcombine.high %v720, 0.0
    %v745 = vcombine.high %v727, 0.0
    %v746 = vcombine.high %v736, 0.0
    %v747 = vcombine.high %v743, 0.0
    %v748 = vcombine.low %v659, %v667
    %v749 = vcombine.high %v659, %v667
    %v751 = vunpack.c.l.s4 1983009808
    %v752 = vunpack.c.0.s8 %v751
    %v753 = vlaneseq
    %v754 = vshrl.u32 %v753, 7
    %v755 = vsub.s32 %v752, %v754
    %v756 = vrot.slane %v748, %v755
    %v758 = vunpack.c.l.s4 1983009808
    %v759 = vunpack.c.0.s8 %v758
    %v760 = vlaneseq
    %v761 = vshrl.u32 %v760, 7
    %v762 = vsub.s32 %v759, %v761
    %v763 = vrot.slane %v749, %v762
    %v764 = vcombine.low %v663, %v671
    %v765 = vcombine.high %v663, %v671
    %v767 = vunpack.c.l.s4 1983009808
    %v768 = vunpack.c.0.s8 %v767
    %v769 = vlaneseq
    %v770 = vshrl.u32 %v769, 7
    %v771 = vsub.s32 %v768, %v770
    %v772 = vrot.slane %v764, %v771
    %v774 = vunpack.c.l.s4 1983009808
    %v775 = vunpack.c.0.s8 %v774
    %v776 = vlaneseq
    %v777 = vshrl.u32 %v776, 7
    %v778 = vsub.s32 %v775, %v777
    %v779 = vrot.slane %v765, %v778
    %v780 = vcombine.low %v756, %v772
    %v781 = vcombine.high %v756, %v772
    %v783 = vunpack.c.l.s4 1934713408
    %v784 = vunpack.c.0.s8 %v783
    %v785 = vlaneseq
    %v786 = vshrl.u32 %v785, 7
    %v787 = vsub.s32 %v784, %v786
    %v788 = vrot.slane %v780, %v787
    %v790 = vunpack.c.l.s4 1934713408
    %v791 = vunpack.c.0.s8 %v790
    %v792 = vlaneseq
    %v793 = vshrl.u32 %v792, 7
    %v794 = vsub.s32 %v791, %v793
    %v795 = vrot.slane %v781, %v794
    %v796 = vcombine.low %v763, %v779
    %v797 = vcombine.high %v763, %v779
    %v799 = vunpack.c.l.s4 1934713408
    %v800 = vunpack.c.0.s8 %v799
    %v801 = vlaneseq
    %v802 = vshrl.u32 %v801, 7
    %v803 = vsub.s32 %v800, %v802
    %v804 = vrot.slane %v796, %v803
    %v806 = vunpack.c.l.s4 1934713408
    %v807 = vunpack.c.0.s8 %v806
    %v808 = vlaneseq
    %v809 = vshrl.u32 %v808, 7
    %v810 = vsub.s32 %v807, %v809
    %v811 = vrot.slane %v797, %v810
    %v812 = vcombine.high %v788, 0.0
    %v813 = vcombine.high %v795, 0.0
    %v814 = vcombine.high %v804, 0.0
    %v815 = vcombine.high %v811, 0.0
    %817 = vrot.lane.b32.xlu0 %v744, 16
    %v818 = vpop.permute.xlu0 %817
    %821 = vrot.lane.b32.xlu0 %v727, 32
    %v822 = vpop.permute.xlu0 %821
    %825 = vrot.lane.b32.xlu0 %v745, 48
    %v826 = vpop.permute.xlu0 %825
    %829 = vrot.lane.b32.xlu0 %v736, 64
    %v830 = vpop.permute.xlu0 %829
    %833 = vrot.lane.b32.xlu0 %v746, 80
    %v834 = vpop.permute.xlu0 %833
    %837 = vrot.lane.b32.xlu0 %v743, 96
    %v838 = vpop.permute.xlu0 %837
    %841 = vrot.lane.b32.xlu0 %v747, 112
    %v842 = vpop.permute.xlu0 %841
    %845 = vrot.lane.b32.xlu0 %v812, 16
    %v846 = vpop.permute.xlu0 %845
    %849 = vrot.lane.b32.xlu0 %v795, 32
    %v850 = vpop.permute.xlu0 %849
    %853 = vrot.lane.b32.xlu0 %v813, 48
    %v854 = vpop.permute.xlu0 %853
    %857 = vrot.lane.b32.xlu0 %v804, 64
    %v858 = vpop.permute.xlu0 %857
    %861 = vrot.lane.b32.xlu0 %v814, 80
    %v862 = vpop.permute.xlu0 %861
    %865 = vrot.lane.b32.xlu0 %v811, 96
    %v866 = vpop.permute.xlu0 %865
    %869 = vrot.lane.b32.xlu0 %v815, 112
    %v870 = vpop.permute.xlu0 %869
    %v872 = vsel %vm397, %v720, %v818
    %v873 = vsel %vm399, %v872, %v822
    %v874 = vsel %vm401, %v873, %v826
    %v875 = vsel %vm403, %v874, %v830
    %v876 = vsel %vm405, %v875, %v834
    %v877 = vsel %vm407, %v876, %v838
    %v878 = vsel %vm409, %v877, %v842
    %v879 = vsel %vm397, %v788, %v846
    %v880 = vsel %vm399, %v879, %v850
    %v881 = vsel %vm401, %v880, %v854
    %v882 = vsel %vm403, %v881, %v858
    %v883 = vsel %vm405, %v882, %v862
    %v884 = vsel %vm407, %v883, %v866
    %v885 = vsel %vm409, %v884, %v870
    %v886 = vld [vmem:[#allocation2 + $0x1] sm:$0xff]
    %v887 = vld [vmem:[#allocation2 + $0x9] sm:$0xff]
    %v888 = vld [vmem:[#allocation2 + $0x19] sm:$0xff]
    %v889 = vld [vmem:[#allocation2 + $0x21] sm:$0xff]
    %v890 = vld [vmem:[#allocation2 + $0x31] sm:$0xff]
    %v891 = vld [vmem:[#allocation2 + $0x39] sm:$0xff]
    %v892 = vld [vmem:[#allocation2 + $0x49] sm:$0xff]
    %v893 = vld [vmem:[#allocation2 + $0x51] sm:$0xff]
    %v894 = vcombine.low %v886, %v890
    %v895 = vcombine.high %v886, %v890
    %v897 = vunpack.c.l.s4 1983009808
    %v898 = vunpack.c.0.s8 %v897
    %v899 = vlaneseq
    %v900 = vshrl.u32 %v899, 7
    %v901 = vsub.s32 %v898, %v900
    %v902 = vrot.slane %v894, %v901
    %v904 = vunpack.c.l.s4 1983009808
    %v905 = vunpack.c.0.s8 %v904
    %v906 = vlaneseq
    %v907 = vshrl.u32 %v906, 7
    %v908 = vsub.s32 %v905, %v907
    %v909 = vrot.slane %v895, %v908
    %v910 = vcombine.low %v888, %v892
    %v911 = vcombine.high %v888, %v892
    %v913 = vunpack.c.l.s4 1983009808
    %v914 = vunpack.c.0.s8 %v913
    %v915 = vlaneseq
    %v916 = vshrl.u32 %v915, 7
    %v917 = vsub.s32 %v914, %v916
    %v918 = vrot.slane %v910, %v917
    %v920 = vunpack.c.l.s4 1983009808
    %v921 = vunpack.c.0.s8 %v920
    %v922 = vlaneseq
    %v923 = vshrl.u32 %v922, 7
    %v924 = vsub.s32 %v921, %v923
    %v925 = vrot.slane %v911, %v924
    %v926 = vcombine.low %v902, %v918
    %v927 = vcombine.high %v902, %v918
    %v929 = vunpack.c.l.s4 1934713408
    %v930 = vunpack.c.0.s8 %v929
    %v931 = vlaneseq
    %v932 = vshrl.u32 %v931, 7
    %v933 = vsub.s32 %v930, %v932
    %v934 = vrot.slane %v926, %v933
    %v936 = vunpack.c.l.s4 1934713408
    %v937 = vunpack.c.0.s8 %v936
    %v938 = vlaneseq
    %v939 = vshrl.u32 %v938, 7
    %v940 = vsub.s32 %v937, %v939
    %v941 = vrot.slane %v927, %v940
    %v942 = vcombine.low %v909, %v925
    %v943 = vcombine.high %v909, %v925
    %v945 = vunpack.c.l.s4 1934713408
    %v946 = vunpack.c.0.s8 %v945
    %v947 = vlaneseq
    %v948 = vshrl.u32 %v947, 7
    %v949 = vsub.s32 %v946, %v948
    %v950 = vrot.slane %v942, %v949
    %v952 = vunpack.c.l.s4 1934713408
    %v953 = vunpack.c.0.s8 %v952
    %v954 = vlaneseq
    %v955 = vshrl.u32 %v954, 7
    %v956 = vsub.s32 %v953, %v955
    %v957 = vrot.slane %v943, %v956
    %v958 = vcombine.high %v934, 0.0
    %v959 = vcombine.high %v941, 0.0
    %v960 = vcombine.high %v950, 0.0
    %v961 = vcombine.high %v957, 0.0
    %v962 = vcombine.low %v887, %v891
    %v963 = vcombine.high %v887, %v891
    %v965 = vunpack.c.l.s4 1983009808
    %v966 = vunpack.c.0.s8 %v965
    %v967 = vlaneseq
    %v968 = vshrl.u32 %v967, 7
    %v969 = vsub.s32 %v966, %v968
    %v970 = vrot.slane %v962, %v969
    %v972 = vunpack.c.l.s4 1983009808
    %v973 = vunpack.c.0.s8 %v972
    %v974 = vlaneseq
    %v975 = vshrl.u32 %v974, 7
    %v976 = vsub.s32 %v973, %v975
    %v977 = vrot.slane %v963, %v976
    %v978 = vcombine.low %v889, %v893
    %v979 = vcombine.high %v889, %v893
    %v981 = vunpack.c.l.s4 1983009808
    %v982 = vunpack.c.0.s8 %v981
    %v983 = vlaneseq
    %v984 = vshrl.u32 %v983, 7
    %v985 = vsub.s32 %v982, %v984
    %v986 = vrot.slane %v978, %v985
    %v988 = vunpack.c.l.s4 1983009808
    %v989 = vunpack.c.0.s8 %v988
    %v990 = vlaneseq
    %v991 = vshrl.u32 %v990, 7
    %v992 = vsub.s32 %v989, %v991
    %v993 = vrot.slane %v979, %v992
    %v994 = vcombine.low %v970, %v986
    %v995 = vcombine.high %v970, %v986
    %v997 = vunpack.c.l.s4 1934713408
    %v998 = vunpack.c.0.s8 %v997
    %v999 = vlaneseq
    %v1000 = vshrl.u32 %v999, 7
    %v1001 = vsub.s32 %v998, %v1000
    %v1002 = vrot.slane %v994, %v1001
    %v1004 = vunpack.c.l.s4 1934713408
    %v1005 = vunpack.c.0.s8 %v1004
    %v1006 = vlaneseq
    %v1007 = vshrl.u32 %v1006, 7
    %v1008 = vsub.s32 %v1005, %v1007
    %v1009 = vrot.slane %v995, %v1008
    %v1010 = vcombine.low %v977, %v993
    %v1011 = vcombine.high %v977, %v993
    %v1013 = vunpack.c.l.s4 1934713408
    %v1014 = vunpack.c.0.s8 %v1013
    %v1015 = vlaneseq
    %v1016 = vshrl.u32 %v1015, 7
    %v1017 = vsub.s32 %v1014, %v1016
    %v1018 = vrot.slane %v1010, %v1017
    %v1020 = vunpack.c.l.s4 1934713408
    %v1021 = vunpack.c.0.s8 %v1020
    %v1022 = vlaneseq
    %v1023 = vshrl.u32 %v1022, 7
    %v1024 = vsub.s32 %v1021, %v1023
    %v1025 = vrot.slane %v1011, %v1024
    %v1026 = vcombine.high %v1002, 0.0
    %v1027 = vcombine.high %v1009, 0.0
    %v1028 = vcombine.high %v1018, 0.0
    %v1029 = vcombine.high %v1025, 0.0
    %1031 = vrot.lane.b32.xlu0 %v958, 16
    %v1032 = vpop.permute.xlu0 %1031
    %1035 = vrot.lane.b32.xlu0 %v941, 32
    %v1036 = vpop.permute.xlu0 %1035
    %1039 = vrot.lane.b32.xlu0 %v959, 48
    %v1040 = vpop.permute.xlu0 %1039
    %1043 = vrot.lane.b32.xlu0 %v950, 64
    %v1044 = vpop.permute.xlu0 %1043
    %1047 = vrot.lane.b32.xlu0 %v960, 80
    %v1048 = vpop.permute.xlu0 %1047
    %1051 = vrot.lane.b32.xlu0 %v957, 96
    %v1052 = vpop.permute.xlu0 %1051
    %1055 = vrot.lane.b32.xlu0 %v961, 112
    %v1056 = vpop.permute.xlu0 %1055
    %1059 = vrot.lane.b32.xlu0 %v1026, 16
    %v1060 = vpop.permute.xlu0 %1059
    %1063 = vrot.lane.b32.xlu0 %v1009, 32
    %v1064 = vpop.permute.xlu0 %1063
    %1067 = vrot.lane.b32.xlu0 %v1027, 48
    %v1068 = vpop.permute.xlu0 %1067
    %1071 = vrot.lane.b32.xlu0 %v1018, 64
    %v1072 = vpop.permute.xlu0 %1071
    %1075 = vrot.lane.b32.xlu0 %v1028, 80
    %v1076 = vpop.permute.xlu0 %1075
    %1079 = vrot.lane.b32.xlu0 %v1025, 96
    %v1080 = vpop.permute.xlu0 %1079
    %1083 = vrot.lane.b32.xlu0 %v1029, 112
    %v1084 = vpop.permute.xlu0 %1083
    %v1086 = vsel %vm397, %v934, %v1032
    %v1087 = vsel %vm399, %v1086, %v1036
    %v1088 = vsel %vm401, %v1087, %v1040
    %v1089 = vsel %vm403, %v1088, %v1044
    %v1090 = vsel %vm405, %v1089, %v1048
    %v1091 = vsel %vm407, %v1090, %v1052
    %v1092 = vsel %vm409, %v1091, %v1056
    %v1093 = vsel %vm397, %v1002, %v1060
    %v1094 = vsel %vm399, %v1093, %v1064
    %v1095 = vsel %vm401, %v1094, %v1068
    %v1096 = vsel %vm403, %v1095, %v1072
    %v1097 = vsel %vm405, %v1096, %v1076
    %v1098 = vsel %vm407, %v1097, %v1080
    %v1099 = vsel %vm409, %v1098, %v1084
    %1108 = vrot.lane.b32.xlu0 %v886, 127
    %v1109 = vpop.permute.xlu0 %1108
    %1110 = vrot.lane.b32.xlu0 %v887, 127
    %v1111 = vpop.permute.xlu0 %1110
    %1112 = vrot.lane.b32.xlu0 %v888, 127
    %v1113 = vpop.permute.xlu0 %1112
    %1114 = vrot.lane.b32.xlu0 %v889, 127
    %v1115 = vpop.permute.xlu0 %1114
    %1116 = vrot.lane.b32.xlu0 %v890, 127
    %v1117 = vpop.permute.xlu0 %1116
    %1118 = vrot.lane.b32.xlu0 %v891, 127
    %v1119 = vpop.permute.xlu0 %1118
    %1120 = vrot.lane.b32.xlu0 %v892, 127
    %v1121 = vpop.permute.xlu0 %1120
    %1122 = vrot.lane.b32.xlu0 %v893, 127
    %v1123 = vpop.permute.xlu0 %1122
    %v1132 = vcombine.low %v1109, %v1117
    %v1133 = vcombine.high %v1109, %v1117
    %v1135 = vunpack.c.l.s4 1983009808
    %v1136 = vunpack.c.0.s8 %v1135
    %v1137 = vlaneseq
    %v1138 = vshrl.u32 %v1137, 7
    %v1139 = vsub.s32 %v1136, %v1138
    %v1140 = vrot.slane %v1132, %v1139
    %v1142 = vunpack.c.l.s4 1983009808
    %v1143 = vunpack.c.0.s8 %v1142
    %v1144 = vlaneseq
    %v1145 = vshrl.u32 %v1144, 7
    %v1146 = vsub.s32 %v1143, %v1145
    %v1147 = vrot.slane %v1133, %v1146
    %v1148 = vcombine.low %v1113, %v1121
    %v1149 = vcombine.high %v1113, %v1121
    %v1151 = vunpack.c.l.s4 1983009808
    %v1152 = vunpack.c.0.s8 %v1151
    %v1153 = vlaneseq
    %v1154 = vshrl.u32 %v1153, 7
    %v1155 = vsub.s32 %v1152, %v1154
    %v1156 = vrot.slane %v1148, %v1155
    %v1158 = vunpack.c.l.s4 1983009808
    %v1159 = vunpack.c.0.s8 %v1158
    %v1160 = vlaneseq
    %v1161 = vshrl.u32 %v1160, 7
    %v1162 = vsub.s32 %v1159, %v1161
    %v1163 = vrot.slane %v1149, %v1162
    %v1164 = vcombine.low %v1140, %v1156
    %v1165 = vcombine.high %v1140, %v1156
    %v1167 = vunpack.c.l.s4 1934713408
    %v1168 = vunpack.c.0.s8 %v1167
    %v1169 = vlaneseq
    %v1170 = vshrl.u32 %v1169, 7
    %v1171 = vsub.s32 %v1168, %v1170
    %v1172 = vrot.slane %v1164, %v1171
    %v1174 = vunpack.c.l.s4 1934713408
    %v1175 = vunpack.c.0.s8 %v1174
    %v1176 = vlaneseq
    %v1177 = vshrl.u32 %v1176, 7
    %v1178 = vsub.s32 %v1175, %v1177
    %v1179 = vrot.slane %v1165, %v1178
    %v1180 = vcombine.low %v1147, %v1163
    %v1181 = vcombine.high %v1147, %v1163
    %v1183 = vunpack.c.l.s4 1934713408
    %v1184 = vunpack.c.0.s8 %v1183
    %v1185 = vlaneseq
    %v1186 = vshrl.u32 %v1185, 7
    %v1187 = vsub.s32 %v1184, %v1186
    %v1188 = vrot.slane %v1180, %v1187
    %v1190 = vunpack.c.l.s4 1934713408
    %v1191 = vunpack.c.0.s8 %v1190
    %v1192 = vlaneseq
    %v1193 = vshrl.u32 %v1192, 7
    %v1194 = vsub.s32 %v1191, %v1193
    %v1195 = vrot.slane %v1181, %v1194
    %v1196 = vcombine.high %v1172, 0.0
    %v1197 = vcombine.high %v1179, 0.0
    %v1198 = vcombine.high %v1188, 0.0
    %v1199 = vcombine.high %v1195, 0.0
    %v1200 = vcombine.low %v1111, %v1119
    %v1201 = vcombine.high %v1111, %v1119
    %v1203 = vunpack.c.l.s4 1983009808
    %v1204 = vunpack.c.0.s8 %v1203
    %v1205 = vlaneseq
    %v1206 = vshrl.u32 %v1205, 7
    %v1207 = vsub.s32 %v1204, %v1206
    %v1208 = vrot.slane %v1200, %v1207
    %v1210 = vunpack.c.l.s4 1983009808
    %v1211 = vunpack.c.0.s8 %v1210
    %v1212 = vlaneseq
    %v1213 = vshrl.u32 %v1212, 7
    %v1214 = vsub.s32 %v1211, %v1213
    %v1215 = vrot.slane %v1201, %v1214
    %v1216 = vcombine.low %v1115, %v1123
    %v1217 = vcombine.high %v1115, %v1123
    %v1219 = vunpack.c.l.s4 1983009808
    %v1220 = vunpack.c.0.s8 %v1219
    %v1221 = vlaneseq
    %v1222 = vshrl.u32 %v1221, 7
    %v1223 = vsub.s32 %v1220, %v1222
    %v1224 = vrot.slane %v1216, %v1223
    %v1226 = vunpack.c.l.s4 1983009808
    %v1227 = vunpack.c.0.s8 %v1226
    %v1228 = vlaneseq
    %v1229 = vshrl.u32 %v1228, 7
    %v1230 = vsub.s32 %v1227, %v1229
    %v1231 = vrot.slane %v1217, %v1230
    %v1232 = vcombine.low %v1208, %v1224
    %v1233 = vcombine.high %v1208, %v1224
    %v1235 = vunpack.c.l.s4 1934713408
    %v1236 = vunpack.c.0.s8 %v1235
    %v1237 = vlaneseq
    %v1238 = vshrl.u32 %v1237, 7
    %v1239 = vsub.s32 %v1236, %v1238
    %v1240 = vrot.slane %v1232, %v1239
    %v1242 = vunpack.c.l.s4 1934713408
    %v1243 = vunpack.c.0.s8 %v1242
    %v1244 = vlaneseq
    %v1245 = vshrl.u32 %v1244, 7
    %v1246 = vsub.s32 %v1243, %v1245
    %v1247 = vrot.slane %v1233, %v1246
    %v1248 = vcombine.low %v1215, %v1231
    %v1249 = vcombine.high %v1215, %v1231
    %v1251 = vunpack.c.l.s4 1934713408
    %v1252 = vunpack.c.0.s8 %v1251
    %v1253 = vlaneseq
    %v1254 = vshrl.u32 %v1253, 7
    %v1255 = vsub.s32 %v1252, %v1254
    %v1256 = vrot.slane %v1248, %v1255
    %v1258 = vunpack.c.l.s4 1934713408
    %v1259 = vunpack.c.0.s8 %v1258
    %v1260 = vlaneseq
    %v1261 = vshrl.u32 %v1260, 7
    %v1262 = vsub.s32 %v1259, %v1261
    %v1263 = vrot.slane %v1249, %v1262
    %v1264 = vcombine.high %v1240, 0.0
    %v1265 = vcombine.high %v1247, 0.0
    %v1266 = vcombine.high %v1256, 0.0
    %v1267 = vcombine.high %v1263, 0.0
    %1269 = vrot.lane.b32.xlu0 %v1196, 16
    %v1270 = vpop.permute.xlu0 %1269
    %1273 = vrot.lane.b32.xlu0 %v1179, 32
    %v1274 = vpop.permute.xlu0 %1273
    %1277 = vrot.lane.b32.xlu0 %v1197, 48
    %v1278 = vpop.permute.xlu0 %1277
    %1281 = vrot.lane.b32.xlu0 %v1188, 64
    %v1282 = vpop.permute.xlu0 %1281
    %1285 = vrot.lane.b32.xlu0 %v1198, 80
    %v1286 = vpop.permute.xlu0 %1285
    %1289 = vrot.lane.b32.xlu0 %v1195, 96
    %v1290 = vpop.permute.xlu0 %1289
    %1293 = vrot.lane.b32.xlu0 %v1199, 112
    %v1294 = vpop.permute.xlu0 %1293
    %1297 = vrot.lane.b32.xlu0 %v1264, 16
    %v1298 = vpop.permute.xlu0 %1297
    %1301 = vrot.lane.b32.xlu0 %v1247, 32
    %v1302 = vpop.permute.xlu0 %1301
    %1305 = vrot.lane.b32.xlu0 %v1265, 48
    %v1306 = vpop.permute.xlu0 %1305
    %1309 = vrot.lane.b32.xlu0 %v1256, 64
    %v1310 = vpop.permute.xlu0 %1309
    %1313 = vrot.lane.b32.xlu0 %v1266, 80
    %v1314 = vpop.permute.xlu0 %1313
    %1317 = vrot.lane.b32.xlu0 %v1263, 96
    %v1318 = vpop.permute.xlu0 %1317
    %1321 = vrot.lane.b32.xlu0 %v1267, 112
    %v1322 = vpop.permute.xlu0 %1321
    %v1324 = vsel %vm397, %v1172, %v1270
    %v1325 = vsel %vm399, %v1324, %v1274
    %v1326 = vsel %vm401, %v1325, %v1278
    %v1327 = vsel %vm403, %v1326, %v1282
    %v1328 = vsel %vm405, %v1327, %v1286
    %v1329 = vsel %vm407, %v1328, %v1290
    %v1330 = vsel %vm409, %v1329, %v1294
    %v1331 = vsel %vm397, %v1240, %v1298
    %v1332 = vsel %vm399, %v1331, %v1302
    %v1333 = vsel %vm401, %v1332, %v1306
    %v1334 = vsel %vm403, %v1333, %v1310
    %v1335 = vsel %vm405, %v1334, %v1314
    %v1336 = vsel %vm407, %v1335, %v1318
    %v1337 = vsel %vm409, %v1336, %v1322
    %1338 = vrot.lane.b32.xlu0 %v886, 126
    %v1339 = vpop.permute.xlu0 %1338
    %1340 = vrot.lane.b32.xlu0 %v887, 126
    %v1341 = vpop.permute.xlu0 %1340
    %1342 = vrot.lane.b32.xlu0 %v888, 126
    %v1343 = vpop.permute.xlu0 %1342
    %1344 = vrot.lane.b32.xlu0 %v889, 126
    %v1345 = vpop.permute.xlu0 %1344
    %1346 = vrot.lane.b32.xlu0 %v890, 126
    %v1347 = vpop.permute.xlu0 %1346
    %1348 = vrot.lane.b32.xlu0 %v891, 126
    %v1349 = vpop.permute.xlu0 %1348
    %1350 = vrot.lane.b32.xlu0 %v892, 126
    %v1351 = vpop.permute.xlu0 %1350
    %1352 = vrot.lane.b32.xlu0 %v893, 126
    %v1353 = vpop.permute.xlu0 %1352
    %v1362 = vcombine.low %v1339, %v1347
    %v1363 = vcombine.high %v1339, %v1347
    %v1365 = vunpack.c.l.s4 1983009808
    %v1366 = vunpack.c.0.s8 %v1365
    %v1367 = vlaneseq
    %v1368 = vshrl.u32 %v1367, 7
    %v1369 = vsub.s32 %v1366, %v1368
    %v1370 = vrot.slane %v1362, %v1369
    %v1372 = vunpack.c.l.s4 1983009808
    %v1373 = vunpack.c.0.s8 %v1372
    %v1374 = vlaneseq
    %v1375 = vshrl.u32 %v1374, 7
    %v1376 = vsub.s32 %v1373, %v1375
    %v1377 = vrot.slane %v1363, %v1376
    %v1378 = vcombine.low %v1343, %v1351
    %v1379 = vcombine.high %v1343, %v1351
    %v1381 = vunpack.c.l.s4 1983009808
    %v1382 = vunpack.c.0.s8 %v1381
    %v1383 = vlaneseq
    %v1384 = vshrl.u32 %v1383, 7
    %v1385 = vsub.s32 %v1382, %v1384
    %v1386 = vrot.slane %v1378, %v1385
    %v1388 = vunpack.c.l.s4 1983009808
    %v1389 = vunpack.c.0.s8 %v1388
    %v1390 = vlaneseq
    %v1391 = vshrl.u32 %v1390, 7
    %v1392 = vsub.s32 %v1389, %v1391
    %v1393 = vrot.slane %v1379, %v1392
    %v1394 = vcombine.low %v1370, %v1386
    %v1395 = vcombine.high %v1370, %v1386
    %v1397 = vunpack.c.l.s4 1934713408
    %v1398 = vunpack.c.0.s8 %v1397
    %v1399 = vlaneseq
    %v1400 = vshrl.u32 %v1399, 7
    %v1401 = vsub.s32 %v1398, %v1400
    %v1402 = vrot.slane %v1394, %v1401
    %v1404 = vunpack.c.l.s4 1934713408
    %v1405 = vunpack.c.0.s8 %v1404
    %v1406 = vlaneseq
    %v1407 = vshrl.u32 %v1406, 7
    %v1408 = vsub.s32 %v1405, %v1407
    %v1409 = vrot.slane %v1395, %v1408
    %v1410 = vcombine.low %v1377, %v1393
    %v1411 = vcombine.high %v1377, %v1393
    %v1413 = vunpack.c.l.s4 1934713408
    %v1414 = vunpack.c.0.s8 %v1413
    %v1415 = vlaneseq
    %v1416 = vshrl.u32 %v1415, 7
    %v1417 = vsub.s32 %v1414, %v1416
    %v1418 = vrot.slane %v1410, %v1417
    %v1420 = vunpack.c.l.s4 1934713408
    %v1421 = vunpack.c.0.s8 %v1420
    %v1422 = vlaneseq
    %v1423 = vshrl.u32 %v1422, 7
    %v1424 = vsub.s32 %v1421, %v1423
    %v1425 = vrot.slane %v1411, %v1424
    %v1426 = vcombine.high %v1402, 0.0
    %v1427 = vcombine.high %v1409, 0.0
    %v1428 = vcombine.high %v1418, 0.0
    %v1429 = vcombine.high %v1425, 0.0
    %v1430 = vcombine.low %v1341, %v1349
    %v1431 = vcombine.high %v1341, %v1349
    %v1433 = vunpack.c.l.s4 1983009808
    %v1434 = vunpack.c.0.s8 %v1433
    %v1435 = vlaneseq
    %v1436 = vshrl.u32 %v1435, 7
    %v1437 = vsub.s32 %v1434, %v1436
    %v1438 = vrot.slane %v1430, %v1437
    %v1440 = vunpack.c.l.s4 1983009808
    %v1441 = vunpack.c.0.s8 %v1440
    %v1442 = vlaneseq
    %v1443 = vshrl.u32 %v1442, 7
    %v1444 = vsub.s32 %v1441, %v1443
    %v1445 = vrot.slane %v1431, %v1444
    %v1446 = vcombine.low %v1345, %v1353
    %v1447 = vcombine.high %v1345, %v1353
    %v1449 = vunpack.c.l.s4 1983009808
    %v1450 = vunpack.c.0.s8 %v1449
    %v1451 = vlaneseq
    %v1452 = vshrl.u32 %v1451, 7
    %v1453 = vsub.s32 %v1450, %v1452
    %v1454 = vrot.slane %v1446, %v1453
    %v1456 = vunpack.c.l.s4 1983009808
    %v1457 = vunpack.c.0.s8 %v1456
    %v1458 = vlaneseq
    %v1459 = vshrl.u32 %v1458, 7
    %v1460 = vsub.s32 %v1457, %v1459
    %v1461 = vrot.slane %v1447, %v1460
    %v1462 = vcombine.low %v1438, %v1454
    %v1463 = vcombine.high %v1438, %v1454
    %v1465 = vunpack.c.l.s4 1934713408
    %v1466 = vunpack.c.0.s8 %v1465
    %v1467 = vlaneseq
    %v1468 = vshrl.u32 %v1467, 7
    %v1469 = vsub.s32 %v1466, %v1468
    %v1470 = vrot.slane %v1462, %v1469
    %v1472 = vunpack.c.l.s4 1934713408
    %v1473 = vunpack.c.0.s8 %v1472
    %v1474 = vlaneseq
    %v1475 = vshrl.u32 %v1474, 7
    %v1476 = vsub.s32 %v1473, %v1475
    %v1477 = vrot.slane %v1463, %v1476
    %v1478 = vcombine.low %v1445, %v1461
    %v1479 = vcombine.high %v1445, %v1461
    %v1481 = vunpack.c.l.s4 1934713408
    %v1482 = vunpack.c.0.s8 %v1481
    %v1483 = vlaneseq
    %v1484 = vshrl.u32 %v1483, 7
    %v1485 = vsub.s32 %v1482, %v1484
    %v1486 = vrot.slane %v1478, %v1485
    %v1488 = vunpack.c.l.s4 1934713408
    %v1489 = vunpack.c.0.s8 %v1488
    %v1490 = vlaneseq
    %v1491 = vshrl.u32 %v1490, 7
    %v1492 = vsub.s32 %v1489, %v1491
    %v1493 = vrot.slane %v1479, %v1492
    %v1494 = vcombine.high %v1470, 0.0
    %v1495 = vcombine.high %v1477, 0.0
    %v1496 = vcombine.high %v1486, 0.0
    %v1497 = vcombine.high %v1493, 0.0
    %1499 = vrot.lane.b32.xlu0 %v1426, 16
    %v1500 = vpop.permute.xlu0 %1499
    %1503 = vrot.lane.b32.xlu0 %v1409, 32
    %v1504 = vpop.permute.xlu0 %1503
    %1507 = vrot.lane.b32.xlu0 %v1427, 48
    %v1508 = vpop.permute.xlu0 %1507
    %1511 = vrot.lane.b32.xlu0 %v1418, 64
    %v1512 = vpop.permute.xlu0 %1511
    %1515 = vrot.lane.b32.xlu0 %v1428, 80
    %v1516 = vpop.permute.xlu0 %1515
    %1519 = vrot.lane.b32.xlu0 %v1425, 96
    %v1520 = vpop.permute.xlu0 %1519
    %1523 = vrot.lane.b32.xlu0 %v1429, 112
    %v1524 = vpop.permute.xlu0 %1523
    %1527 = vrot.lane.b32.xlu0 %v1494, 16
    %v1528 = vpop.permute.xlu0 %1527
    %1531 = vrot.lane.b32.xlu0 %v1477, 32
    %v1532 = vpop.permute.xlu0 %1531
    %1535 = vrot.lane.b32.xlu0 %v1495, 48
    %v1536 = vpop.permute.xlu0 %1535
    %1539 = vrot.lane.b32.xlu0 %v1486, 64
    %v1540 = vpop.permute.xlu0 %1539
    %1543 = vrot.lane.b32.xlu0 %v1496, 80
    %v1544 = vpop.permute.xlu0 %1543
    %1547 = vrot.lane.b32.xlu0 %v1493, 96
    %v1548 = vpop.permute.xlu0 %1547
    %1551 = vrot.lane.b32.xlu0 %v1497, 112
    %v1552 = vpop.permute.xlu0 %1551
    %v1554 = vsel %vm397, %v1402, %v1500
    %v1555 = vsel %vm399, %v1554, %v1504
    %v1556 = vsel %vm401, %v1555, %v1508
    %v1557 = vsel %vm403, %v1556, %v1512
    %v1558 = vsel %vm405, %v1557, %v1516
    %v1559 = vsel %vm407, %v1558, %v1520
    %v1560 = vsel %vm409, %v1559, %v1524
    %v1561 = vsel %vm397, %v1470, %v1528
    %v1562 = vsel %vm399, %v1561, %v1532
    %v1563 = vsel %vm401, %v1562, %v1536
    %v1564 = vsel %vm403, %v1563, %v1540
    %v1565 = vsel %vm405, %v1564, %v1544
    %v1566 = vsel %vm407, %v1565, %v1548
    %v1567 = vsel %vm409, %v1566, %v1552
    %v1568 = vld [vmem:[#allocation2 + $0x2] sm:$0xff]
    %v1569 = vld [vmem:[#allocation2 + $0xa] sm:$0xff]
    %v1570 = vld [vmem:[#allocation2 + $0x1a] sm:$0xff]
    %v1571 = vld [vmem:[#allocation2 + $0x22] sm:$0xff]
    %v1572 = vld [vmem:[#allocation2 + $0x32] sm:$0xff]
    %v1573 = vld [vmem:[#allocation2 + $0x3a] sm:$0xff]
    %v1574 = vld [vmem:[#allocation2 + $0x4a] sm:$0xff]
    %v1575 = vld [vmem:[#allocation2 + $0x52] sm:$0xff]
    %v1576 = vcombine.low %v1568, %v1572
    %v1577 = vcombine.high %v1568, %v1572
    %v1579 = vunpack.c.l.s4 1983009808
    %v1580 = vunpack.c.0.s8 %v1579
    %v1581 = vlaneseq
    %v1582 = vshrl.u32 %v1581, 7
    %v1583 = vsub.s32 %v1580, %v1582
    %v1584 = vrot.slane %v1576, %v1583
    %v1586 = vunpack.c.l.s4 1983009808
    %v1587 = vunpack.c.0.s8 %v1586
    %v1588 = vlaneseq
    %v1589 = vshrl.u32 %v1588, 7
    %v1590 = vsub.s32 %v1587, %v1589
    %v1591 = vrot.slane %v1577, %v1590
    %v1592 = vcombine.low %v1570, %v1574
    %v1593 = vcombine.high %v1570, %v1574
    %v1595 = vunpack.c.l.s4 1983009808
    %v1596 = vunpack.c.0.s8 %v1595
    %v1597 = vlaneseq
    %v1598 = vshrl.u32 %v1597, 7
    %v1599 = vsub.s32 %v1596, %v1598
    %v1600 = vrot.slane %v1592, %v1599
    %v1602 = vunpack.c.l.s4 1983009808
    %v1603 = vunpack.c.0.s8 %v1602
    %v1604 = vlaneseq
    %v1605 = vshrl.u32 %v1604, 7
    %v1606 = vsub.s32 %v1603, %v1605
    %v1607 = vrot.slane %v1593, %v1606
    %v1608 = vcombine.low %v1584, %v1600
    %v1609 = vcombine.high %v1584, %v1600
    %v1611 = vunpack.c.l.s4 1934713408
    %v1612 = vunpack.c.0.s8 %v1611
    %v1613 = vlaneseq
    %v1614 = vshrl.u32 %v1613, 7
    %v1615 = vsub.s32 %v1612, %v1614
    %v1616 = vrot.slane %v1608, %v1615
    %v1618 = vunpack.c.l.s4 1934713408
    %v1619 = vunpack.c.0.s8 %v1618
    %v1620 = vlaneseq
    %v1621 = vshrl.u32 %v1620, 7
    %v1622 = vsub.s32 %v1619, %v1621
    %v1623 = vrot.slane %v1609, %v1622
    %v1624 = vcombine.low %v1591, %v1607
    %v1625 = vcombine.high %v1591, %v1607
    %v1627 = vunpack.c.l.s4 1934713408
    %v1628 = vunpack.c.0.s8 %v1627
    %v1629 = vlaneseq
    %v1630 = vshrl.u32 %v1629, 7
    %v1631 = vsub.s32 %v1628, %v1630
    %v1632 = vrot.slane %v1624, %v1631
    %v1634 = vunpack.c.l.s4 1934713408
    %v1635 = vunpack.c.0.s8 %v1634
    %v1636 = vlaneseq
    %v1637 = vshrl.u32 %v1636, 7
    %v1638 = vsub.s32 %v1635, %v1637
    %v1639 = vrot.slane %v1625, %v1638
    %v1640 = vcombine.high %v1616, 0.0
    %v1641 = vcombine.high %v1623, 0.0
    %v1642 = vcombine.high %v1632, 0.0
    %v1643 = vcombine.high %v1639, 0.0
    %v1644 = vcombine.low %v1569, %v1573
    %v1645 = vcombine.high %v1569, %v1573
    %v1647 = vunpack.c.l.s4 1983009808
    %v1648 = vunpack.c.0.s8 %v1647
    %v1649 = vlaneseq
    %v1650 = vshrl.u32 %v1649, 7
    %v1651 = vsub.s32 %v1648, %v1650
    %v1652 = vrot.slane %v1644, %v1651
    %v1654 = vunpack.c.l.s4 1983009808
    %v1655 = vunpack.c.0.s8 %v1654
    %v1656 = vlaneseq
    %v1657 = vshrl.u32 %v1656, 7
    %v1658 = vsub.s32 %v1655, %v1657
    %v1659 = vrot.slane %v1645, %v1658
    %v1660 = vcombine.low %v1571, %v1575
    %v1661 = vcombine.high %v1571, %v1575
    %v1663 = vunpack.c.l.s4 1983009808
    %v1664 = vunpack.c.0.s8 %v1663
    %v1665 = vlaneseq
    %v1666 = vshrl.u32 %v1665, 7
    %v1667 = vsub.s32 %v1664, %v1666
    %v1668 = vrot.slane %v1660, %v1667
    %v1670 = vunpack.c.l.s4 1983009808
    %v1671 = vunpack.c.0.s8 %v1670
    %v1672 = vlaneseq
    %v1673 = vshrl.u32 %v1672, 7
    %v1674 = vsub.s32 %v1671, %v1673
    %v1675 = vrot.slane %v1661, %v1674
    %v1676 = vcombine.low %v1652, %v1668
    %v1677 = vcombine.high %v1652, %v1668
    %v1679 = vunpack.c.l.s4 1934713408
    %v1680 = vunpack.c.0.s8 %v1679
    %v1681 = vlaneseq
    %v1682 = vshrl.u32 %v1681, 7
    %v1683 = vsub.s32 %v1680, %v1682
    %v1684 = vrot.slane %v1676, %v1683
    %v1686 = vunpack.c.l.s4 1934713408
    %v1687 = vunpack.c.0.s8 %v1686
    %v1688 = vlaneseq
    %v1689 = vshrl.u32 %v1688, 7
    %v1690 = vsub.s32 %v1687, %v1689
    %v1691 = vrot.slane %v1677, %v1690
    %v1692 = vcombine.low %v1659, %v1675
    %v1693 = vcombine.high %v1659, %v1675
    %v1695 = vunpack.c.l.s4 1934713408
    %v1696 = vunpack.c.0.s8 %v1695
    %v1697 = vlaneseq
    %v1698 = vshrl.u32 %v1697, 7
    %v1699 = vsub.s32 %v1696, %v1698
    %v1700 = vrot.slane %v1692, %v1699
    %v1702 = vunpack.c.l.s4 1934713408
    %v1703 = vunpack.c.0.s8 %v1702
    %v1704 = vlaneseq
    %v1705 = vshrl.u32 %v1704, 7
    %v1706 = vsub.s32 %v1703, %v1705
    %v1707 = vrot.slane %v1693, %v1706
    %v1708 = vcombine.high %v1684, 0.0
    %v1709 = vcombine.high %v1691, 0.0
    %v1710 = vcombine.high %v1700, 0.0
    %v1711 = vcombine.high %v1707, 0.0
    %1713 = vrot.lane.b32.xlu0 %v1640, 16
    %v1714 = vpop.permute.xlu0 %1713
    %1717 = vrot.lane.b32.xlu0 %v1623, 32
    %v1718 = vpop.permute.xlu0 %1717
    %1721 = vrot.lane.b32.xlu0 %v1641, 48
    %v1722 = vpop.permute.xlu0 %1721
    %1725 = vrot.lane.b32.xlu0 %v1632, 64
    %v1726 = vpop.permute.xlu0 %1725
    %1729 = vrot.lane.b32.xlu0 %v1642, 80
    %v1730 = vpop.permute.xlu0 %1729
    %1733 = vrot.lane.b32.xlu0 %v1639, 96
    %v1734 = vpop.permute.xlu0 %1733
    %1737 = vrot.lane.b32.xlu0 %v1643, 112
    %v1738 = vpop.permute.xlu0 %1737
    %1741 = vrot.lane.b32.xlu0 %v1708, 16
    %v1742 = vpop.permute.xlu0 %1741
    %1745 = vrot.lane.b32.xlu0 %v1691, 32
    %v1746 = vpop.permute.xlu0 %1745
    %1749 = vrot.lane.b32.xlu0 %v1709, 48
    %v1750 = vpop.permute.xlu0 %1749
    %1753 = vrot.lane.b32.xlu0 %v1700, 64
    %v1754 = vpop.permute.xlu0 %1753
    %1757 = vrot.lane.b32.xlu0 %v1710, 80
    %v1758 = vpop.permute.xlu0 %1757
    %1761 = vrot.lane.b32.xlu0 %v1707, 96
    %v1762 = vpop.permute.xlu0 %1761
    %1765 = vrot.lane.b32.xlu0 %v1711, 112
    %v1766 = vpop.permute.xlu0 %1765
    %v1768 = vsel %vm397, %v1616, %v1714
    %v1769 = vsel %vm399, %v1768, %v1718
    %v1770 = vsel %vm401, %v1769, %v1722
    %v1771 = vsel %vm403, %v1770, %v1726
    %v1772 = vsel %vm405, %v1771, %v1730
    %v1773 = vsel %vm407, %v1772, %v1734
    %v1774 = vsel %vm409, %v1773, %v1738
    %v1775 = vsel %vm397, %v1684, %v1742
    %v1776 = vsel %vm399, %v1775, %v1746
    %v1777 = vsel %vm401, %v1776, %v1750
    %v1778 = vsel %vm403, %v1777, %v1754
    %v1779 = vsel %vm405, %v1778, %v1758
    %v1780 = vsel %vm407, %v1779, %v1762
    %v1781 = vsel %vm409, %v1780, %v1766
    %1790 = vrot.lane.b32.xlu0 %v1568, 127
    %v1791 = vpop.permute.xlu0 %1790
    %1792 = vrot.lane.b32.xlu0 %v1569, 127
    %v1793 = vpop.permute.xlu0 %1792
    %1794 = vrot.lane.b32.xlu0 %v1570, 127
    %v1795 = vpop.permute.xlu0 %1794
    %1796 = vrot.lane.b32.xlu0 %v1571, 127
    %v1797 = vpop.permute.xlu0 %1796
    %1798 = vrot.lane.b32.xlu0 %v1572, 127
    %v1799 = vpop.permute.xlu0 %1798
    %1800 = vrot.lane.b32.xlu0 %v1573, 127
    %v1801 = vpop.permute.xlu0 %1800
    %1802 = vrot.lane.b32.xlu0 %v1574, 127
    %v1803 = vpop.permute.xlu0 %1802
    %1804 = vrot.lane.b32.xlu0 %v1575, 127
    %v1805 = vpop.permute.xlu0 %1804
    %v1814 = vcombine.low %v1791, %v1799
    %v1815 = vcombine.high %v1791, %v1799
    %v1817 = vunpack.c.l.s4 1983009808
    %v1818 = vunpack.c.0.s8 %v1817
    %v1819 = vlaneseq
    %v1820 = vshrl.u32 %v1819, 7
    %v1821 = vsub.s32 %v1818, %v1820
    %v1822 = vrot.slane %v1814, %v1821
    %v1824 = vunpack.c.l.s4 1983009808
    %v1825 = vunpack.c.0.s8 %v1824
    %v1826 = vlaneseq
    %v1827 = vshrl.u32 %v1826, 7
    %v1828 = vsub.s32 %v1825, %v1827
    %v1829 = vrot.slane %v1815, %v1828
    %v1830 = vcombine.low %v1795, %v1803
    %v1831 = vcombine.high %v1795, %v1803
    %v1833 = vunpack.c.l.s4 1983009808
    %v1834 = vunpack.c.0.s8 %v1833
    %v1835 = vlaneseq
    %v1836 = vshrl.u32 %v1835, 7
    %v1837 = vsub.s32 %v1834, %v1836
    %v1838 = vrot.slane %v1830, %v1837
    %v1840 = vunpack.c.l.s4 1983009808
    %v1841 = vunpack.c.0.s8 %v1840
    %v1842 = vlaneseq
    %v1843 = vshrl.u32 %v1842, 7
    %v1844 = vsub.s32 %v1841, %v1843
    %v1845 = vrot.slane %v1831, %v1844
    %v1846 = vcombine.low %v1822, %v1838
    %v1847 = vcombine.high %v1822, %v1838
    %v1849 = vunpack.c.l.s4 1934713408
    %v1850 = vunpack.c.0.s8 %v1849
    %v1851 = vlaneseq
    %v1852 = vshrl.u32 %v1851, 7
    %v1853 = vsub.s32 %v1850, %v1852
    %v1854 = vrot.slane %v1846, %v1853
    %v1856 = vunpack.c.l.s4 1934713408
    %v1857 = vunpack.c.0.s8 %v1856
    %v1858 = vlaneseq
    %v1859 = vshrl.u32 %v1858, 7
    %v1860 = vsub.s32 %v1857, %v1859
    %v1861 = vrot.slane %v1847, %v1860
    %v1862 = vcombine.low %v1829, %v1845
    %v1863 = vcombine.high %v1829, %v1845
    %v1865 = vunpack.c.l.s4 1934713408
    %v1866 = vunpack.c.0.s8 %v1865
    %v1867 = vlaneseq
    %v1868 = vshrl.u32 %v1867, 7
    %v1869 = vsub.s32 %v1866, %v1868
    %v1870 = vrot.slane %v1862, %v1869
    %v1872 = vunpack.c.l.s4 1934713408
    %v1873 = vunpack.c.0.s8 %v1872
    %v1874 = vlaneseq
    %v1875 = vshrl.u32 %v1874, 7
    %v1876 = vsub.s32 %v1873, %v1875
    %v1877 = vrot.slane %v1863, %v1876
    %v1878 = vcombine.high %v1854, 0.0
    %v1879 = vcombine.high %v1861, 0.0
    %v1880 = vcombine.high %v1870, 0.0
    %v1881 = vcombine.high %v1877, 0.0
    %v1882 = vcombine.low %v1793, %v1801
    %v1883 = vcombine.high %v1793, %v1801
    %v1885 = vunpack.c.l.s4 1983009808
    %v1886 = vunpack.c.0.s8 %v1885
    %v1887 = vlaneseq
    %v1888 = vshrl.u32 %v1887, 7
    %v1889 = vsub.s32 %v1886, %v1888
    %v1890 = vrot.slane %v1882, %v1889
    %v1892 = vunpack.c.l.s4 1983009808
    %v1893 = vunpack.c.0.s8 %v1892
    %v1894 = vlaneseq
    %v1895 = vshrl.u32 %v1894, 7
    %v1896 = vsub.s32 %v1893, %v1895
    %v1897 = vrot.slane %v1883, %v1896
    %v1898 = vcombine.low %v1797, %v1805
    %v1899 = vcombine.high %v1797, %v1805
    %v1901 = vunpack.c.l.s4 1983009808
    %v1902 = vunpack.c.0.s8 %v1901
    %v1903 = vlaneseq
    %v1904 = vshrl.u32 %v1903, 7
    %v1905 = vsub.s32 %v1902, %v1904
    %v1906 = vrot.slane %v1898, %v1905
    %v1908 = vunpack.c.l.s4 1983009808
    %v1909 = vunpack.c.0.s8 %v1908
    %v1910 = vlaneseq
    %v1911 = vshrl.u32 %v1910, 7
    %v1912 = vsub.s32 %v1909, %v1911
    %v1913 = vrot.slane %v1899, %v1912
    %v1914 = vcombine.low %v1890, %v1906
    %v1915 = vcombine.high %v1890, %v1906
    %v1917 = vunpack.c.l.s4 1934713408
    %v1918 = vunpack.c.0.s8 %v1917
    %v1919 = vlaneseq
    %v1920 = vshrl.u32 %v1919, 7
    %v1921 = vsub.s32 %v1918, %v1920
    %v1922 = vrot.slane %v1914, %v1921
    %v1924 = vunpack.c.l.s4 1934713408
    %v1925 = vunpack.c.0.s8 %v1924
    %v1926 = vlaneseq
    %v1927 = vshrl.u32 %v1926, 7
    %v1928 = vsub.s32 %v1925, %v1927
    %v1929 = vrot.slane %v1915, %v1928
    %v1930 = vcombine.low %v1897, %v1913
    %v1931 = vcombine.high %v1897, %v1913
    %v1933 = vunpack.c.l.s4 1934713408
    %v1934 = vunpack.c.0.s8 %v1933
    %v1935 = vlaneseq
    %v1936 = vshrl.u32 %v1935, 7
    %v1937 = vsub.s32 %v1934, %v1936
    %v1938 = vrot.slane %v1930, %v1937
    %v1940 = vunpack.c.l.s4 1934713408
    %v1941 = vunpack.c.0.s8 %v1940
    %v1942 = vlaneseq
    %v1943 = vshrl.u32 %v1942, 7
    %v1944 = vsub.s32 %v1941, %v1943
    %v1945 = vrot.slane %v1931, %v1944
    %v1946 = vcombine.high %v1922, 0.0
    %v1947 = vcombine.high %v1929, 0.0
    %v1948 = vcombine.high %v1938, 0.0
    %v1949 = vcombine.high %v1945, 0.0
    %1951 = vrot.lane.b32.xlu0 %v1878, 16
    %v1952 = vpop.permute.xlu0 %1951
    %1955 = vrot.lane.b32.xlu0 %v1861, 32
    %v1956 = vpop.permute.xlu0 %1955
    %1959 = vrot.lane.b32.xlu0 %v1879, 48
    %v1960 = vpop.permute.xlu0 %1959
    %1963 = vrot.lane.b32.xlu0 %v1870, 64
    %v1964 = vpop.permute.xlu0 %1963
    %1967 = vrot.lane.b32.xlu0 %v1880, 80
    %v1968 = vpop.permute.xlu0 %1967
    %1971 = vrot.lane.b32.xlu0 %v1877, 96
    %v1972 = vpop.permute.xlu0 %1971
    %1975 = vrot.lane.b32.xlu0 %v1881, 112
    %v1976 = vpop.permute.xlu0 %1975
    %1979 = vrot.lane.b32.xlu0 %v1946, 16
    %v1980 = vpop.permute.xlu0 %1979
    %1983 = vrot.lane.b32.xlu0 %v1929, 32
    %v1984 = vpop.permute.xlu0 %1983
    %1987 = vrot.lane.b32.xlu0 %v1947, 48
    %v1988 = vpop.permute.xlu0 %1987
    %1991 = vrot.lane.b32.xlu0 %v1938, 64
    %v1992 = vpop.permute.xlu0 %1991
    %1995 = vrot.lane.b32.xlu0 %v1948, 80
    %v1996 = vpop.permute.xlu0 %1995
    %1999 = vrot.lane.b32.xlu0 %v1945, 96
    %v2000 = vpop.permute.xlu0 %1999
    %2003 = vrot.lane.b32.xlu0 %v1949, 112
    %v2004 = vpop.permute.xlu0 %2003
    %v2006 = vsel %vm397, %v1854, %v1952
    %v2007 = vsel %vm399, %v2006, %v1956
    %v2008 = vsel %vm401, %v2007, %v1960
    %v2009 = vsel %vm403, %v2008, %v1964
    %v2010 = vsel %vm405, %v2009, %v1968
    %v2011 = vsel %vm407, %v2010, %v1972
    %v2012 = vsel %vm409, %v2011, %v1976
    %v2013 = vsel %vm397, %v1922, %v1980
    %v2014 = vsel %vm399, %v2013, %v1984
    %v2015 = vsel %vm401, %v2014, %v1988
    %v2016 = vsel %vm403, %v2015, %v1992
    %v2017 = vsel %vm405, %v2016, %v1996
    %v2018 = vsel %vm407, %v2017, %v2000
    %v2019 = vsel %vm409, %v2018, %v2004
    %2020 = vrot.lane.b32.xlu0 %v1568, 126
    %v2021 = vpop.permute.xlu0 %2020
    %2022 = vrot.lane.b32.xlu0 %v1569, 126
    %v2023 = vpop.permute.xlu0 %2022
    %2024 = vrot.lane.b32.xlu0 %v1570, 126
    %v2025 = vpop.permute.xlu0 %2024
    %2026 = vrot.lane.b32.xlu0 %v1571, 126
    %v2027 = vpop.permute.xlu0 %2026
    %2028 = vrot.lane.b32.xlu0 %v1572, 126
    %v2029 = vpop.permute.xlu0 %2028
    %2030 = vrot.lane.b32.xlu0 %v1573, 126
    %v2031 = vpop.permute.xlu0 %2030
    %2032 = vrot.lane.b32.xlu0 %v1574, 126
    %v2033 = vpop.permute.xlu0 %2032
    %2034 = vrot.lane.b32.xlu0 %v1575, 126
    %v2035 = vpop.permute.xlu0 %2034
    %v2044 = vcombine.low %v2021, %v2029
    %v2045 = vcombine.high %v2021, %v2029
    %v2047 = vunpack.c.l.s4 1983009808
    %v2048 = vunpack.c.0.s8 %v2047
    %v2049 = vlaneseq
    %v2050 = vshrl.u32 %v2049, 7
    %v2051 = vsub.s32 %v2048, %v2050
    %v2052 = vrot.slane %v2044, %v2051
    %v2054 = vunpack.c.l.s4 1983009808
    %v2055 = vunpack.c.0.s8 %v2054
    %v2056 = vlaneseq
    %v2057 = vshrl.u32 %v2056, 7
    %v2058 = vsub.s32 %v2055, %v2057
    %v2059 = vrot.slane %v2045, %v2058
    %v2060 = vcombine.low %v2025, %v2033
    %v2061 = vcombine.high %v2025, %v2033
    %v2063 = vunpack.c.l.s4 1983009808
    %v2064 = vunpack.c.0.s8 %v2063
    %v2065 = vlaneseq
    %v2066 = vshrl.u32 %v2065, 7
    %v2067 = vsub.s32 %v2064, %v2066
    %v2068 = vrot.slane %v2060, %v2067
    %v2070 = vunpack.c.l.s4 1983009808
    %v2071 = vunpack.c.0.s8 %v2070
    %v2072 = vlaneseq
    %v2073 = vshrl.u32 %v2072, 7
    %v2074 = vsub.s32 %v2071, %v2073
    %v2075 = vrot.slane %v2061, %v2074
    %v2076 = vcombine.low %v2052, %v2068
    %v2077 = vcombine.high %v2052, %v2068
    %v2079 = vunpack.c.l.s4 1934713408
    %v2080 = vunpack.c.0.s8 %v2079
    %v2081 = vlaneseq
    %v2082 = vshrl.u32 %v2081, 7
    %v2083 = vsub.s32 %v2080, %v2082
    %v2084 = vrot.slane %v2076, %v2083
    %v2086 = vunpack.c.l.s4 1934713408
    %v2087 = vunpack.c.0.s8 %v2086
    %v2088 = vlaneseq
    %v2089 = vshrl.u32 %v2088, 7
    %v2090 = vsub.s32 %v2087, %v2089
    %v2091 = vrot.slane %v2077, %v2090
    %v2092 = vcombine.low %v2059, %v2075
    %v2093 = vcombine.high %v2059, %v2075
    %v2095 = vunpack.c.l.s4 1934713408
    %v2096 = vunpack.c.0.s8 %v2095
    %v2097 = vlaneseq
    %v2098 = vshrl.u32 %v2097, 7
    %v2099 = vsub.s32 %v2096, %v2098
    %v2100 = vrot.slane %v2092, %v2099
    %v2102 = vunpack.c.l.s4 1934713408
    %v2103 = vunpack.c.0.s8 %v2102
    %v2104 = vlaneseq
    %v2105 = vshrl.u32 %v2104, 7
    %v2106 = vsub.s32 %v2103, %v2105
    %v2107 = vrot.slane %v2093, %v2106
    %v2108 = vcombine.high %v2084, 0.0
    %v2109 = vcombine.high %v2091, 0.0
    %v2110 = vcombine.high %v2100, 0.0
    %v2111 = vcombine.high %v2107, 0.0
    %v2112 = vcombine.low %v2023, %v2031
    %v2113 = vcombine.high %v2023, %v2031
    %v2115 = vunpack.c.l.s4 1983009808
    %v2116 = vunpack.c.0.s8 %v2115
    %v2117 = vlaneseq
    %v2118 = vshrl.u32 %v2117, 7
    %v2119 = vsub.s32 %v2116, %v2118
    %v2120 = vrot.slane %v2112, %v2119
    %v2122 = vunpack.c.l.s4 1983009808
    %v2123 = vunpack.c.0.s8 %v2122
    %v2124 = vlaneseq
    %v2125 = vshrl.u32 %v2124, 7
    %v2126 = vsub.s32 %v2123, %v2125
    %v2127 = vrot.slane %v2113, %v2126
    %v2128 = vcombine.low %v2027, %v2035
    %v2129 = vcombine.high %v2027, %v2035
    %v2131 = vunpack.c.l.s4 1983009808
    %v2132 = vunpack.c.0.s8 %v2131
    %v2133 = vlaneseq
    %v2134 = vshrl.u32 %v2133, 7
    %v2135 = vsub.s32 %v2132, %v2134
    %v2136 = vrot.slane %v2128, %v2135
    %v2138 = vunpack.c.l.s4 1983009808
    %v2139 = vunpack.c.0.s8 %v2138
    %v2140 = vlaneseq
    %v2141 = vshrl.u32 %v2140, 7
    %v2142 = vsub.s32 %v2139, %v2141
    %v2143 = vrot.slane %v2129, %v2142
    %v2144 = vcombine.low %v2120, %v2136
    %v2145 = vcombine.high %v2120, %v2136
    %v2147 = vunpack.c.l.s4 1934713408
    %v2148 = vunpack.c.0.s8 %v2147
    %v2149 = vlaneseq
    %v2150 = vshrl.u32 %v2149, 7
    %v2151 = vsub.s32 %v2148, %v2150
    %v2152 = vrot.slane %v2144, %v2151
    %v2154 = vunpack.c.l.s4 1934713408
    %v2155 = vunpack.c.0.s8 %v2154
    %v2156 = vlaneseq
    %v2157 = vshrl.u32 %v2156, 7
    %v2158 = vsub.s32 %v2155, %v2157
    %v2159 = vrot.slane %v2145, %v2158
    %v2160 = vcombine.low %v2127, %v2143
    %v2161 = vcombine.high %v2127, %v2143
    %v2163 = vunpack.c.l.s4 1934713408
    %v2164 = vunpack.c.0.s8 %v2163
    %v2165 = vlaneseq
    %v2166 = vshrl.u32 %v2165, 7
    %v2167 = vsub.s32 %v2164, %v2166
    %v2168 = vrot.slane %v2160, %v2167
    %v2170 = vunpack.c.l.s4 1934713408
    %v2171 = vunpack.c.0.s8 %v2170
    %v2172 = vlaneseq
    %v2173 = vshrl.u32 %v2172, 7
    %v2174 = vsub.s32 %v2171, %v2173
    %v2175 = vrot.slane %v2161, %v2174
    %v2176 = vcombine.high %v2152, 0.0
    %v2177 = vcombine.high %v2159, 0.0
    %v2178 = vcombine.high %v2168, 0.0
    %v2179 = vcombine.high %v2175, 0.0
    %2181 = vrot.lane.b32.xlu0 %v2108, 16
    %v2182 = vpop.permute.xlu0 %2181
    %2185 = vrot.lane.b32.xlu0 %v2091, 32
    %v2186 = vpop.permute.xlu0 %2185
    %2189 = vrot.lane.b32.xlu0 %v2109, 48
    %v2190 = vpop.permute.xlu0 %2189
    %2193 = vrot.lane.b32.xlu0 %v2100, 64
    %v2194 = vpop.permute.xlu0 %2193
    %2197 = vrot.lane.b32.xlu0 %v2110, 80
    %v2198 = vpop.permute.xlu0 %2197
    %2201 = vrot.lane.b32.xlu0 %v2107, 96
    %v2202 = vpop.permute.xlu0 %2201
    %2205 = vrot.lane.b32.xlu0 %v2111, 112
    %v2206 = vpop.permute.xlu0 %2205
    %2209 = vrot.lane.b32.xlu0 %v2176, 16
    %v2210 = vpop.permute.xlu0 %2209
    %2213 = vrot.lane.b32.xlu0 %v2159, 32
    %v2214 = vpop.permute.xlu0 %2213
    %2217 = vrot.lane.b32.xlu0 %v2177, 48
    %v2218 = vpop.permute.xlu0 %2217
    %2221 = vrot.lane.b32.xlu0 %v2168, 64
    %v2222 = vpop.permute.xlu0 %2221
    %2225 = vrot.lane.b32.xlu0 %v2178, 80
    %v2226 = vpop.permute.xlu0 %2225
    %2229 = vrot.lane.b32.xlu0 %v2175, 96
    %v2230 = vpop.permute.xlu0 %2229
    %2233 = vrot.lane.b32.xlu0 %v2179, 112
    %v2234 = vpop.permute.xlu0 %2233
    %v2236 = vsel %vm397, %v2084, %v2182
    %v2237 = vsel %vm399, %v2236, %v2186
    %v2238 = vsel %vm401, %v2237, %v2190
    %v2239 = vsel %vm403, %v2238, %v2194
    %v2240 = vsel %vm405, %v2239, %v2198
    %v2241 = vsel %vm407, %v2240, %v2202
    %v2242 = vsel %vm409, %v2241, %v2206
    %v2243 = vsel %vm397, %v2152, %v2210
    %v2244 = vsel %vm399, %v2243, %v2214
    %v2245 = vsel %vm401, %v2244, %v2218
    %v2246 = vsel %vm403, %v2245, %v2222
    %v2247 = vsel %vm405, %v2246, %v2226
    %v2248 = vsel %vm407, %v2247, %v2230
    %v2249 = vsel %vm409, %v2248, %v2234
    %v2252 = vrot.slane %v648, 4
    %v2253 = vrot.slane %v655, 4
    %v2258 = vrot.slane %v1092, 4
    %v2259 = vrot.slane %v1099, 4
    %v2264 = vrot.slane %v1560, 4
    %v2265 = vrot.slane %v1567, 4
    %v2270 = vrot.slane %v2012, 4
    %v2271 = vrot.slane %v2019, 4
    %vm2274 = vcmask 1043456
    %v2275 = vsel %vm2274, %v410, %v2252
    %v2276 = vsel %vm2274, %v417, %v2253
    %v2277 = vsel %vm2274, %v878, %v2258
    %v2278 = vsel %vm2274, %v885, %v2259
    %v2279 = vsel %vm2274, %v1330, %v2264
    %v2280 = vsel %vm2274, %v1337, %v2265
    %v2281 = vsel %vm2274, %v1774, %v2270
    %v2282 = vsel %vm2274, %v1781, %v2271
    %vm2283 = vcmask 293888
    %v2285 = vsel %vm2283, %v63, 0
    %v2288 = vsel %vm2274, %v2242, 0
    %v2291 = vsel %vm2274, %v2249, 0
    %2293 = vmatprep.subr.mxu0 %v2276
    %2294 = vmatpush1.msra.mxu0 %v2275
    %2295 = vmatprep.subr.mxu0 %v2278
    %2296 = vmatpush1.msra.mxu0 %v2277
    %2297 = vmatprep.subr.mxu0 %v2280
    %2298 = vmatpush1.msra.mxu0 %v2279
    %2299 = vmatprep.subr.mxu0 %v2282
    %2300 = vmatpush1.msra.mxu0 %v2281
    %2301 = vmatprep.subr.mxu0 %v2291
    %2302 = vmatpush1.msra.mxu0 %v2288
    %2303 = vmatprep.subr.mxu0 0.0
    %2304 = vmatpush1.msra.mxu0 0.0
    %2305 = vmatprep.subr.mxu0 0.0
    %2306 = vmatpush1.msra.mxu0 0.0
    %2307 = vmatprep.subr.mxu0 0.0
    %2308 = vmatpush1.msra.mxu0 0.0
    %2309 = vmatprep.subr.mxu0 0.0
    %2310 = vmatpush1.msra.mxu0 0.0
    %2311 = vmatprep.subr.mxu0 0.0
    %2312 = vmatpush1.msra.mxu0 0.0
    %2313 = vmatprep.subr.mxu0 0.0
    %2314 = vmatpush1.msra.mxu0 0.0
    %2315 = vmatprep.subr.mxu0 0.0
    %2316 = vmatpush1.msra.mxu0 0.0
    %2317 = vmatprep.subr.mxu0 0.0
    %2318 = vmatpush1.msra.mxu0 0.0
    %2319 = vmatprep.subr.mxu0 0.0
    %2320 = vmatpush1.msra.mxu0 0.0
    %2321 = vmatprep.subr.mxu0 0.0
    %2322 = vmatpush1.msra.mxu0 0.0
    %2323 = vmatprep.subr.mxu0 0.0
    %2324 = vmatpush1.msra.mxu0 0.0
    %2325 = vmatprep.subr.mxu0 0.0
    %2326 = vmatpush1.msra.mxu0 0.0
    %2327 = vmatprep.subr.mxu0 0.0
    %2328 = vmatpush1.msra.mxu0 0.0
    %2329 = vmatprep.subr.mxu0 0.0
    %2330 = vmatpush1.msra.mxu0 0.0
    %2331 = vmatprep.subr.mxu0 0.0
    %2332 = vmatpush1.msra.mxu0 0.0
    %2333 = vmatprep.subr.mxu0 0.0
    %2334 = vmatpush1.msra.mxu0 0.0
    %2335 = vmatprep.subr.mxu0 0.0
    %2336 = vmatpush1.msra.mxu0 0.0
    %2337 = vmatprep.subr.mxu0 0.0
    %2338 = vmatpush1.msra.mxu0 0.0
    %2339 = vmatprep.subr.mxu0 0.0
    %2340 = vmatpush1.msra.mxu0 0.0
    %2341 = vmatprep.subr.mxu0 0.0
    %2342 = vmatpush1.msra.mxu0 0.0
    %2343 = vmatprep.subr.mxu0 0.0
    %2344 = vmatpush1.msra.mxu0 0.0
    %2345 = vmatprep.subr.mxu0 0.0
    %2346 = vmatpush1.msra.mxu0 0.0
    %2347 = vmatprep.subr.mxu0 0.0
    %2348 = vmatpush1.msra.mxu0 0.0
    %2349 = vmatprep.subr.mxu0 0.0
    %2350 = vmatpush1.msra.mxu0 0.0
    %2351 = vmatprep.subr.mxu0 0.0
    %2352 = vmatpush1.msra.mxu0 0.0
    %2353 = vmatprep.subr.mxu0 0.0
    %2354 = vmatpush1.msra.mxu0 0.0
    %2355 = vmatprep.subr.mxu0 0.0
    %2356 = vmatpush1.msra.mxu0 0.0
    %2357 = vmatprep.mubr.f32.mxu0 0.0
    %2358 = vmatmul.mubr.f32.gmra.mrb[0].mxu0 %v2285
    %v2359 = vpop.f32.mrb[0].mxu0
    %v2360 = vadd.f32 0.0, %v2359
    %v2361 = vpop.f32.mrb[0].mxu0
    %v2362 = vadd.f32 0.0, %v2361
    %2363 = vdwg.mxu0
    %s2364 = scalar_lea.vmem [#allocation2], 96
    %v2365 = vld [vmem:[%s2364] sm:$0xff]
    %v2366 = vld [vmem:[%s2364 + $0x8] sm:$0xff]
    %v2367 = vld [vmem:[%s2364 + $0x18] sm:$0xff]
    %v2368 = vld [vmem:[%s2364 + $0x20] sm:$0xff]
    %v2369 = vld [vmem:[%s2364 + $0x30] sm:$0xff]
    %v2370 = vld [vmem:[%s2364 + $0x38] sm:$0xff]
    %v2371 = vld [vmem:[%s2364 + $0x48] sm:$0xff]
    %v2372 = vld [vmem:[%s2364 + $0x50] sm:$0xff]
    %v2373 = vcombine.low %v2365, %v2369
    %v2374 = vcombine.high %v2365, %v2369
    %v2376 = vunpack.c.l.s4 1983009808
    %v2377 = vunpack.c.0.s8 %v2376
    %v2378 = vlaneseq
    %v2379 = vshrl.u32 %v2378, 7
    %v2380 = vsub.s32 %v2377, %v2379
    %v2381 = vrot.slane %v2373, %v2380
    %v2383 = vunpack.c.l.s4 1983009808
    %v2384 = vunpack.c.0.s8 %v2383
    %v2385 = vlaneseq
    %v2386 = vshrl.u32 %v2385, 7
    %v2387 = vsub.s32 %v2384, %v2386
    %v2388 = vrot.slane %v2374, %v2387
    %v2389 = vcombine.low %v2367, %v2371
    %v2390 = vcombine.high %v2367, %v2371
    %v2392 = vunpack.c.l.s4 1983009808
    %v2393 = vunpack.c.0.s8 %v2392
    %v2394 = vlaneseq
    %v2395 = vshrl.u32 %v2394, 7
    %v2396 = vsub.s32 %v2393, %v2395
    %v2397 = vrot.slane %v2389, %v2396
    %v2399 = vunpack.c.l.s4 1983009808
    %v2400 = vunpack.c.0.s8 %v2399
    %v2401 = vlaneseq
    %v2402 = vshrl.u32 %v2401, 7
    %v2403 = vsub.s32 %v2400, %v2402
    %v2404 = vrot.slane %v2390, %v2403
    %v2405 = vcombine.low %v2381, %v2397
    %v2406 = vcombine.high %v2381, %v2397
    %v2408 = vunpack.c.l.s4 1934713408
    %v2409 = vunpack.c.0.s8 %v2408
    %v2410 = vlaneseq
    %v2411 = vshrl.u32 %v2410, 7
    %v2412 = vsub.s32 %v2409, %v2411
    %v2413 = vrot.slane %v2405, %v2412
    %v2415 = vunpack.c.l.s4 1934713408
    %v2416 = vunpack.c.0.s8 %v2415
    %v2417 = vlaneseq
    %v2418 = vshrl.u32 %v2417, 7
    %v2419 = vsub.s32 %v2416, %v2418
    %v2420 = vrot.slane %v2406, %v2419
    %v2421 = vcombine.low %v2388, %v2404
    %v2422 = vcombine.high %v2388, %v2404
    %v2424 = vunpack.c.l.s4 1934713408
    %v2425 = vunpack.c.0.s8 %v2424
    %v2426 = vlaneseq
    %v2427 = vshrl.u32 %v2426, 7
    %v2428 = vsub.s32 %v2425, %v2427
    %v2429 = vrot.slane %v2421, %v2428
    %v2431 = vunpack.c.l.s4 1934713408
    %v2432 = vunpack.c.0.s8 %v2431
    %v2433 = vlaneseq
    %v2434 = vshrl.u32 %v2433, 7
    %v2435 = vsub.s32 %v2432, %v2434
    %v2436 = vrot.slane %v2422, %v2435
    %v2437 = vcombine.high %v2413, 0.0
    %v2438 = vcombine.high %v2420, 0.0
    %v2439 = vcombine.high %v2429, 0.0
    %v2440 = vcombine.high %v2436, 0.0
    %v2441 = vcombine.low %v2366, %v2370
    %v2442 = vcombine.high %v2366, %v2370
    %v2444 = vunpack.c.l.s4 1983009808
    %v2445 = vunpack.c.0.s8 %v2444
    %v2446 = vlaneseq
    %v2447 = vshrl.u32 %v2446, 7
    %v2448 = vsub.s32 %v2445, %v2447
    %v2449 = vrot.slane %v2441, %v2448
    %v2451 = vunpack.c.l.s4 1983009808
    %v2452 = vunpack.c.0.s8 %v2451
    %v2453 = vlaneseq
    %v2454 = vshrl.u32 %v2453, 7
    %v2455 = vsub.s32 %v2452, %v2454
    %v2456 = vrot.slane %v2442, %v2455
    %v2457 = vcombine.low %v2368, %v2372
    %v2458 = vcombine.high %v2368, %v2372
    %v2460 = vunpack.c.l.s4 1983009808
    %v2461 = vunpack.c.0.s8 %v2460
    %v2462 = vlaneseq
    %v2463 = vshrl.u32 %v2462, 7
    %v2464 = vsub.s32 %v2461, %v2463
    %v2465 = vrot.slane %v2457, %v2464
    %v2467 = vunpack.c.l.s4 1983009808
    %v2468 = vunpack.c.0.s8 %v2467
    %v2469 = vlaneseq
    %v2470 = vshrl.u32 %v2469, 7
    %v2471 = vsub.s32 %v2468, %v2470
    %v2472 = vrot.slane %v2458, %v2471
    %v2473 = vcombine.low %v2449, %v2465
    %v2474 = vcombine.high %v2449, %v2465
    %v2476 = vunpack.c.l.s4 1934713408
    %v2477 = vunpack.c.0.s8 %v2476
    %v2478 = vlaneseq
    %v2479 = vshrl.u32 %v2478, 7
    %v2480 = vsub.s32 %v2477, %v2479
    %v2481 = vrot.slane %v2473, %v2480
    %v2483 = vunpack.c.l.s4 1934713408
    %v2484 = vunpack.c.0.s8 %v2483
    %v2485 = vlaneseq
    %v2486 = vshrl.u32 %v2485, 7
    %v2487 = vsub.s32 %v2484, %v2486
    %v2488 = vrot.slane %v2474, %v2487
    %v2489 = vcombine.low %v2456, %v2472
    %v2490 = vcombine.high %v2456, %v2472
    %v2492 = vunpack.c.l.s4 1934713408
    %v2493 = vunpack.c.0.s8 %v2492
    %v2494 = vlaneseq
    %v2495 = vshrl.u32 %v2494, 7
    %v2496 = vsub.s32 %v2493, %v2495
    %v2497 = vrot.slane %v2489, %v2496
    %v2499 = vunpack.c.l.s4 1934713408
    %v2500 = vunpack.c.0.s8 %v2499
    %v2501 = vlaneseq
    %v2502 = vshrl.u32 %v2501, 7
    %v2503 = vsub.s32 %v2500, %v2502
    %v2504 = vrot.slane %v2490, %v2503
    %v2505 = vcombine.high %v2481, 0.0
    %v2506 = vcombine.high %v2488, 0.0
    %v2507 = vcombine.high %v2497, 0.0
    %v2508 = vcombine.high %v2504, 0.0
    %2510 = vrot.lane.b32.xlu0 %v2437, 16
    %v2511 = vpop.permute.xlu0 %2510
    %2514 = vrot.lane.b32.xlu0 %v2420, 32
    %v2515 = vpop.permute.xlu0 %2514
    %2518 = vrot.lane.b32.xlu0 %v2438, 48
    %v2519 = vpop.permute.xlu0 %2518
    %2522 = vrot.lane.b32.xlu0 %v2429, 64
    %v2523 = vpop.permute.xlu0 %2522
    %2526 = vrot.lane.b32.xlu0 %v2439, 80
    %v2527 = vpop.permute.xlu0 %2526
    %2530 = vrot.lane.b32.xlu0 %v2436, 96
    %v2531 = vpop.permute.xlu0 %2530
    %2534 = vrot.lane.b32.xlu0 %v2440, 112
    %v2535 = vpop.permute.xlu0 %2534
    %2538 = vrot.lane.b32.xlu0 %v2505, 16
    %v2539 = vpop.permute.xlu0 %2538
    %2542 = vrot.lane.b32.xlu0 %v2488, 32
    %v2543 = vpop.permute.xlu0 %2542
    %2546 = vrot.lane.b32.xlu0 %v2506, 48
    %v2547 = vpop.permute.xlu0 %2546
    %2550 = vrot.lane.b32.xlu0 %v2497, 64
    %v2551 = vpop.permute.xlu0 %2550
    %2554 = vrot.lane.b32.xlu0 %v2507, 80
    %v2555 = vpop.permute.xlu0 %2554
    %2558 = vrot.lane.b32.xlu0 %v2504, 96
    %v2559 = vpop.permute.xlu0 %2558
    %2562 = vrot.lane.b32.xlu0 %v2508, 112
    %v2563 = vpop.permute.xlu0 %2562
    %v2565 = vsel %vm397, %v2413, %v2511
    %v2566 = vsel %vm399, %v2565, %v2515
    %v2567 = vsel %vm401, %v2566, %v2519
    %v2568 = vsel %vm403, %v2567, %v2523
    %v2569 = vsel %vm405, %v2568, %v2527
    %v2570 = vsel %vm407, %v2569, %v2531
    %v2571 = vsel %vm409, %v2570, %v2535
    %v2572 = vsel %vm397, %v2481, %v2539
    %v2573 = vsel %vm399, %v2572, %v2543
    %v2574 = vsel %vm401, %v2573, %v2547
    %v2575 = vsel %vm403, %v2574, %v2551
    %v2576 = vsel %vm405, %v2575, %v2555
    %v2577 = vsel %vm407, %v2576, %v2559
    %v2578 = vsel %vm409, %v2577, %v2563
    %2587 = vrot.lane.b32.xlu0 %v2365, 127
    %v2588 = vpop.permute.xlu0 %2587
    %2589 = vrot.lane.b32.xlu0 %v2366, 127
    %v2590 = vpop.permute.xlu0 %2589
    %2591 = vrot.lane.b32.xlu0 %v2367, 127
    %v2592 = vpop.permute.xlu0 %2591
    %2593 = vrot.lane.b32.xlu0 %v2368, 127
    %v2594 = vpop.permute.xlu0 %2593
    %2595 = vrot.lane.b32.xlu0 %v2369, 127
    %v2596 = vpop.permute.xlu0 %2595
    %2597 = vrot.lane.b32.xlu0 %v2370, 127
    %v2598 = vpop.permute.xlu0 %2597
    %2599 = vrot.lane.b32.xlu0 %v2371, 127
    %v2600 = vpop.permute.xlu0 %2599
    %2601 = vrot.lane.b32.xlu0 %v2372, 127
    %v2602 = vpop.permute.xlu0 %2601
    %v2611 = vcombine.low %v2588, %v2596
    %v2612 = vcombine.high %v2588, %v2596
    %v2614 = vunpack.c.l.s4 1983009808
    %v2615 = vunpack.c.0.s8 %v2614
    %v2616 = vlaneseq
    %v2617 = vshrl.u32 %v2616, 7
    %v2618 = vsub.s32 %v2615, %v2617
    %v2619 = vrot.slane %v2611, %v2618
    %v2621 = vunpack.c.l.s4 1983009808
    %v2622 = vunpack.c.0.s8 %v2621
    %v2623 = vlaneseq
    %v2624 = vshrl.u32 %v2623, 7
    %v2625 = vsub.s32 %v2622, %v2624
    %v2626 = vrot.slane %v2612, %v2625
    %v2627 = vcombine.low %v2592, %v2600
    %v2628 = vcombine.high %v2592, %v2600
    %v2630 = vunpack.c.l.s4 1983009808
    %v2631 = vunpack.c.0.s8 %v2630
    %v2632 = vlaneseq
    %v2633 = vshrl.u32 %v2632, 7
    %v2634 = vsub.s32 %v2631, %v2633
    %v2635 = vrot.slane %v2627, %v2634
    %v2637 = vunpack.c.l.s4 1983009808
    %v2638 = vunpack.c.0.s8 %v2637
    %v2639 = vlaneseq
    %v2640 = vshrl.u32 %v2639, 7
    %v2641 = vsub.s32 %v2638, %v2640
    %v2642 = vrot.slane %v2628, %v2641
    %v2643 = vcombine.low %v2619, %v2635
    %v2644 = vcombine.high %v2619, %v2635
    %v2646 = vunpack.c.l.s4 1934713408
    %v2647 = vunpack.c.0.s8 %v2646
    %v2648 = vlaneseq
    %v2649 = vshrl.u32 %v2648, 7
    %v2650 = vsub.s32 %v2647, %v2649
    %v2651 = vrot.slane %v2643, %v2650
    %v2653 = vunpack.c.l.s4 1934713408
    %v2654 = vunpack.c.0.s8 %v2653
    %v2655 = vlaneseq
    %v2656 = vshrl.u32 %v2655, 7
    %v2657 = vsub.s32 %v2654, %v2656
    %v2658 = vrot.slane %v2644, %v2657
    %v2659 = vcombine.low %v2626, %v2642
    %v2660 = vcombine.high %v2626, %v2642
    %v2662 = vunpack.c.l.s4 1934713408
    %v2663 = vunpack.c.0.s8 %v2662
    %v2664 = vlaneseq
    %v2665 = vshrl.u32 %v2664, 7
    %v2666 = vsub.s32 %v2663, %v2665
    %v2667 = vrot.slane %v2659, %v2666
    %v2669 = vunpack.c.l.s4 1934713408
    %v2670 = vunpack.c.0.s8 %v2669
    %v2671 = vlaneseq
    %v2672 = vshrl.u32 %v2671, 7
    %v2673 = vsub.s32 %v2670, %v2672
    %v2674 = vrot.slane %v2660, %v2673
    %v2675 = vcombine.high %v2651, 0.0
    %v2676 = vcombine.high %v2658, 0.0
    %v2677 = vcombine.high %v2667, 0.0
    %v2678 = vcombine.high %v2674, 0.0
    %v2679 = vcombine.low %v2590, %v2598
    %v2680 = vcombine.high %v2590, %v2598
    %v2682 = vunpack.c.l.s4 1983009808
    %v2683 = vunpack.c.0.s8 %v2682
    %v2684 = vlaneseq
    %v2685 = vshrl.u32 %v2684, 7
    %v2686 = vsub.s32 %v2683, %v2685
    %v2687 = vrot.slane %v2679, %v2686
    %v2689 = vunpack.c.l.s4 1983009808
    %v2690 = vunpack.c.0.s8 %v2689
    %v2691 = vlaneseq
    %v2692 = vshrl.u32 %v2691, 7
    %v2693 = vsub.s32 %v2690, %v2692
    %v2694 = vrot.slane %v2680, %v2693
    %v2695 = vcombine.low %v2594, %v2602
    %v2696 = vcombine.high %v2594, %v2602
    %v2698 = vunpack.c.l.s4 1983009808
    %v2699 = vunpack.c.0.s8 %v2698
    %v2700 = vlaneseq
    %v2701 = vshrl.u32 %v2700, 7
    %v2702 = vsub.s32 %v2699, %v2701
    %v2703 = vrot.slane %v2695, %v2702
    %v2705 = vunpack.c.l.s4 1983009808
    %v2706 = vunpack.c.0.s8 %v2705
    %v2707 = vlaneseq
    %v2708 = vshrl.u32 %v2707, 7
    %v2709 = vsub.s32 %v2706, %v2708
    %v2710 = vrot.slane %v2696, %v2709
    %v2711 = vcombine.low %v2687, %v2703
    %v2712 = vcombine.high %v2687, %v2703
    %v2714 = vunpack.c.l.s4 1934713408
    %v2715 = vunpack.c.0.s8 %v2714
    %v2716 = vlaneseq
    %v2717 = vshrl.u32 %v2716, 7
    %v2718 = vsub.s32 %v2715, %v2717
    %v2719 = vrot.slane %v2711, %v2718
    %v2721 = vunpack.c.l.s4 1934713408
    %v2722 = vunpack.c.0.s8 %v2721
    %v2723 = vlaneseq
    %v2724 = vshrl.u32 %v2723, 7
    %v2725 = vsub.s32 %v2722, %v2724
    %v2726 = vrot.slane %v2712, %v2725
    %v2727 = vcombine.low %v2694, %v2710
    %v2728 = vcombine.high %v2694, %v2710
    %v2730 = vunpack.c.l.s4 1934713408
    %v2731 = vunpack.c.0.s8 %v2730
    %v2732 = vlaneseq
    %v2733 = vshrl.u32 %v2732, 7
    %v2734 = vsub.s32 %v2731, %v2733
    %v2735 = vrot.slane %v2727, %v2734
    %v2737 = vunpack.c.l.s4 1934713408
    %v2738 = vunpack.c.0.s8 %v2737
    %v2739 = vlaneseq
    %v2740 = vshrl.u32 %v2739, 7
    %v2741 = vsub.s32 %v2738, %v2740
    %v2742 = vrot.slane %v2728, %v2741
    %v2743 = vcombine.high %v2719, 0.0
    %v2744 = vcombine.high %v2726, 0.0
    %v2745 = vcombine.high %v2735, 0.0
    %v2746 = vcombine.high %v2742, 0.0
    %2748 = vrot.lane.b32.xlu0 %v2675, 16
    %v2749 = vpop.permute.xlu0 %2748
    %2752 = vrot.lane.b32.xlu0 %v2658, 32
    %v2753 = vpop.permute.xlu0 %2752
    %2756 = vrot.lane.b32.xlu0 %v2676, 48
    %v2757 = vpop.permute.xlu0 %2756
    %2760 = vrot.lane.b32.xlu0 %v2667, 64
    %v2761 = vpop.permute.xlu0 %2760
    %2764 = vrot.lane.b32.xlu0 %v2677, 80
    %v2765 = vpop.permute.xlu0 %2764
    %2768 = vrot.lane.b32.xlu0 %v2674, 96
    %v2769 = vpop.permute.xlu0 %2768
    %2772 = vrot.lane.b32.xlu0 %v2678, 112
    %v2773 = vpop.permute.xlu0 %2772
    %2776 = vrot.lane.b32.xlu0 %v2743, 16
    %v2777 = vpop.permute.xlu0 %2776
    %2780 = vrot.lane.b32.xlu0 %v2726, 32
    %v2781 = vpop.permute.xlu0 %2780
    %2784 = vrot.lane.b32.xlu0 %v2744, 48
    %v2785 = vpop.permute.xlu0 %2784
    %2788 = vrot.lane.b32.xlu0 %v2735, 64
    %v2789 = vpop.permute.xlu0 %2788
    %2792 = vrot.lane.b32.xlu0 %v2745, 80
    %v2793 = vpop.permute.xlu0 %2792
    %2796 = vrot.lane.b32.xlu0 %v2742, 96
    %v2797 = vpop.permute.xlu0 %2796
    %2800 = vrot.lane.b32.xlu0 %v2746, 112
    %v2801 = vpop.permute.xlu0 %2800
    %v2803 = vsel %vm397, %v2651, %v2749
    %v2804 = vsel %vm399, %v2803, %v2753
    %v2805 = vsel %vm401, %v2804, %v2757
    %v2806 = vsel %vm403, %v2805, %v2761
    %v2807 = vsel %vm405, %v2806, %v2765
    %v2808 = vsel %vm407, %v2807, %v2769
    %v2809 = vsel %vm409, %v2808, %v2773
    %v2810 = vsel %vm397, %v2719, %v2777
    %v2811 = vsel %vm399, %v2810, %v2781
    %v2812 = vsel %vm401, %v2811, %v2785
    %v2813 = vsel %vm403, %v2812, %v2789
    %v2814 = vsel %vm405, %v2813, %v2793
    %v2815 = vsel %vm407, %v2814, %v2797
    %v2816 = vsel %vm409, %v2815, %v2801
    %2817 = vrot.lane.b32.xlu0 %v2365, 126
    %v2818 = vpop.permute.xlu0 %2817
    %2819 = vrot.lane.b32.xlu0 %v2366, 126
    %v2820 = vpop.permute.xlu0 %2819
    %2821 = vrot.lane.b32.xlu0 %v2367, 126
    %v2822 = vpop.permute.xlu0 %2821
    %2823 = vrot.lane.b32.xlu0 %v2368, 126
    %v2824 = vpop.permute.xlu0 %2823
    %2825 = vrot.lane.b32.xlu0 %v2369, 126
    %v2826 = vpop.permute.xlu0 %2825
    %2827 = vrot.lane.b32.xlu0 %v2370, 126
    %v2828 = vpop.permute.xlu0 %2827
    %2829 = vrot.lane.b32.xlu0 %v2371, 126
    %v2830 = vpop.permute.xlu0 %2829
    %2831 = vrot.lane.b32.xlu0 %v2372, 126
    %v2832 = vpop.permute.xlu0 %2831
    %v2841 = vcombine.low %v2818, %v2826
    %v2842 = vcombine.high %v2818, %v2826
    %v2844 = vunpack.c.l.s4 1983009808
    %v2845 = vunpack.c.0.s8 %v2844
    %v2846 = vlaneseq
    %v2847 = vshrl.u32 %v2846, 7
    %v2848 = vsub.s32 %v2845, %v2847
    %v2849 = vrot.slane %v2841, %v2848
    %v2851 = vunpack.c.l.s4 1983009808
    %v2852 = vunpack.c.0.s8 %v2851
    %v2853 = vlaneseq
    %v2854 = vshrl.u32 %v2853, 7
    %v2855 = vsub.s32 %v2852, %v2854
    %v2856 = vrot.slane %v2842, %v2855
    %v2857 = vcombine.low %v2822, %v2830
    %v2858 = vcombine.high %v2822, %v2830
    %v2860 = vunpack.c.l.s4 1983009808
    %v2861 = vunpack.c.0.s8 %v2860
    %v2862 = vlaneseq
    %v2863 = vshrl.u32 %v2862, 7
    %v2864 = vsub.s32 %v2861, %v2863
    %v2865 = vrot.slane %v2857, %v2864
    %v2867 = vunpack.c.l.s4 1983009808
    %v2868 = vunpack.c.0.s8 %v2867
    %v2869 = vlaneseq
    %v2870 = vshrl.u32 %v2869, 7
    %v2871 = vsub.s32 %v2868, %v2870
    %v2872 = vrot.slane %v2858, %v2871
    %v2873 = vcombine.low %v2849, %v2865
    %v2874 = vcombine.high %v2849, %v2865
    %v2876 = vunpack.c.l.s4 1934713408
    %v2877 = vunpack.c.0.s8 %v2876
    %v2878 = vlaneseq
    %v2879 = vshrl.u32 %v2878, 7
    %v2880 = vsub.s32 %v2877, %v2879
    %v2881 = vrot.slane %v2873, %v2880
    %v2883 = vunpack.c.l.s4 1934713408
    %v2884 = vunpack.c.0.s8 %v2883
    %v2885 = vlaneseq
    %v2886 = vshrl.u32 %v2885, 7
    %v2887 = vsub.s32 %v2884, %v2886
    %v2888 = vrot.slane %v2874, %v2887
    %v2889 = vcombine.low %v2856, %v2872
    %v2890 = vcombine.high %v2856, %v2872
    %v2892 = vunpack.c.l.s4 1934713408
    %v2893 = vunpack.c.0.s8 %v2892
    %v2894 = vlaneseq
    %v2895 = vshrl.u32 %v2894, 7
    %v2896 = vsub.s32 %v2893, %v2895
    %v2897 = vrot.slane %v2889, %v2896
    %v2899 = vunpack.c.l.s4 1934713408
    %v2900 = vunpack.c.0.s8 %v2899
    %v2901 = vlaneseq
    %v2902 = vshrl.u32 %v2901, 7
    %v2903 = vsub.s32 %v2900, %v2902
    %v2904 = vrot.slane %v2890, %v2903
    %v2905 = vcombine.high %v2881, 0.0
    %v2906 = vcombine.high %v2888, 0.0
    %v2907 = vcombine.high %v2897, 0.0
    %v2908 = vcombine.high %v2904, 0.0
    %v2909 = vcombine.low %v2820, %v2828
    %v2910 = vcombine.high %v2820, %v2828
    %v2912 = vunpack.c.l.s4 1983009808
    %v2913 = vunpack.c.0.s8 %v2912
    %v2914 = vlaneseq
    %v2915 = vshrl.u32 %v2914, 7
    %v2916 = vsub.s32 %v2913, %v2915
    %v2917 = vrot.slane %v2909, %v2916
    %v2919 = vunpack.c.l.s4 1983009808
    %v2920 = vunpack.c.0.s8 %v2919
    %v2921 = vlaneseq
    %v2922 = vshrl.u32 %v2921, 7
    %v2923 = vsub.s32 %v2920, %v2922
    %v2924 = vrot.slane %v2910, %v2923
    %v2925 = vcombine.low %v2824, %v2832
    %v2926 = vcombine.high %v2824, %v2832
    %v2928 = vunpack.c.l.s4 1983009808
    %v2929 = vunpack.c.0.s8 %v2928
    %v2930 = vlaneseq
    %v2931 = vshrl.u32 %v2930, 7
    %v2932 = vsub.s32 %v2929, %v2931
    %v2933 = vrot.slane %v2925, %v2932
    %v2935 = vunpack.c.l.s4 1983009808
    %v2936 = vunpack.c.0.s8 %v2935
    %v2937 = vlaneseq
    %v2938 = vshrl.u32 %v2937, 7
    %v2939 = vsub.s32 %v2936, %v2938
    %v2940 = vrot.slane %v2926, %v2939
    %v2941 = vcombine.low %v2917, %v2933
    %v2942 = vcombine.high %v2917, %v2933
    %v2944 = vunpack.c.l.s4 1934713408
    %v2945 = vunpack.c.0.s8 %v2944
    %v2946 = vlaneseq
    %v2947 = vshrl.u32 %v2946, 7
    %v2948 = vsub.s32 %v2945, %v2947
    %v2949 = vrot.slane %v2941, %v2948
    %v2951 = vunpack.c.l.s4 1934713408
    %v2952 = vunpack.c.0.s8 %v2951
    %v2953 = vlaneseq
    %v2954 = vshrl.u32 %v2953, 7
    %v2955 = vsub.s32 %v2952, %v2954
    %v2956 = vrot.slane %v2942, %v2955
    %v2957 = vcombine.low %v2924, %v2940
    %v2958 = vcombine.high %v2924, %v2940
    %v2960 = vunpack.c.l.s4 1934713408
    %v2961 = vunpack.c.0.s8 %v2960
    %v2962 = vlaneseq
    %v2963 = vshrl.u32 %v2962, 7
    %v2964 = vsub.s32 %v2961, %v2963
    %v2965 = vrot.slane %v2957, %v2964
    %v2967 = vunpack.c.l.s4 1934713408
    %v2968 = vunpack.c.0.s8 %v2967
    %v2969 = vlaneseq
    %v2970 = vshrl.u32 %v2969, 7
    %v2971 = vsub.s32 %v2968, %v2970
    %v2972 = vrot.slane %v2958, %v2971
    %v2973 = vcombine.high %v2949, 0.0
    %v2974 = vcombine.high %v2956, 0.0
    %v2975 = vcombine.high %v2965, 0.0
    %v2976 = vcombine.high %v2972, 0.0
    %2978 = vrot.lane.b32.xlu0 %v2905, 16
    %v2979 = vpop.permute.xlu0 %2978
    %2982 = vrot.lane.b32.xlu0 %v2888, 32
    %v2983 = vpop.permute.xlu0 %2982
    %2986 = vrot.lane.b32.xlu0 %v2906, 48
    %v2987 = vpop.permute.xlu0 %2986
    %2990 = vrot.lane.b32.xlu0 %v2897, 64
    %v2991 = vpop.permute.xlu0 %2990
    %2994 = vrot.lane.b32.xlu0 %v2907, 80
    %v2995 = vpop.permute.xlu0 %2994
    %2998 = vrot.lane.b32.xlu0 %v2904, 96
    %v2999 = vpop.permute.xlu0 %2998
    %3002 = vrot.lane.b32.xlu0 %v2908, 112
    %v3003 = vpop.permute.xlu0 %3002
    %3006 = vrot.lane.b32.xlu0 %v2973, 16
    %v3007 = vpop.permute.xlu0 %3006
    %3010 = vrot.lane.b32.xlu0 %v2956, 32
    %v3011 = vpop.permute.xlu0 %3010
    %3014 = vrot.lane.b32.xlu0 %v2974, 48
    %v3015 = vpop.permute.xlu0 %3014
    %3018 = vrot.lane.b32.xlu0 %v2965, 64
    %v3019 = vpop.permute.xlu0 %3018
    %3022 = vrot.lane.b32.xlu0 %v2975, 80
    %v3023 = vpop.permute.xlu0 %3022
    %3026 = vrot.lane.b32.xlu0 %v2972, 96
    %v3027 = vpop.permute.xlu0 %3026
    %3030 = vrot.lane.b32.xlu0 %v2976, 112
    %v3031 = vpop.permute.xlu0 %3030
    %v3033 = vsel %vm397, %v2881, %v2979
    %v3034 = vsel %vm399, %v3033, %v2983
    %v3035 = vsel %vm401, %v3034, %v2987
    %v3036 = vsel %vm403, %v3035, %v2991
    %v3037 = vsel %vm405, %v3036, %v2995
    %v3038 = vsel %vm407, %v3037, %v2999
    %v3039 = vsel %vm409, %v3038, %v3003
    %v3040 = vsel %vm397, %v2949, %v3007
    %v3041 = vsel %vm399, %v3040, %v3011
    %v3042 = vsel %vm401, %v3041, %v3015
    %v3043 = vsel %vm403, %v3042, %v3019
    %v3044 = vsel %vm405, %v3043, %v3023
    %v3045 = vsel %vm407, %v3044, %v3027
    %v3046 = vsel %vm409, %v3045, %v3031
    %v3047 = vld [vmem:[%s2364 + $0x1] sm:$0xff]
    %v3048 = vld [vmem:[%s2364 + $0x9] sm:$0xff]
    %v3049 = vld [vmem:[%s2364 + $0x19] sm:$0xff]
    %v3050 = vld [vmem:[%s2364 + $0x21] sm:$0xff]
    %v3051 = vld [vmem:[%s2364 + $0x31] sm:$0xff]
    %v3052 = vld [vmem:[%s2364 + $0x39] sm:$0xff]
    %v3053 = vld [vmem:[%s2364 + $0x49] sm:$0xff]
    %v3054 = vld [vmem:[%s2364 + $0x51] sm:$0xff]
    %v3055 = vcombine.low %v3047, %v3051
    %v3056 = vcombine.high %v3047, %v3051
    %v3058 = vunpack.c.l.s4 1983009808
    %v3059 = vunpack.c.0.s8 %v3058
    %v3060 = vlaneseq
    %v3061 = vshrl.u32 %v3060, 7
    %v3062 = vsub.s32 %v3059, %v3061
    %v3063 = vrot.slane %v3055, %v3062
    %v3065 = vunpack.c.l.s4 1983009808
    %v3066 = vunpack.c.0.s8 %v3065
    %v3067 = vlaneseq
    %v3068 = vshrl.u32 %v3067, 7
    %v3069 = vsub.s32 %v3066, %v3068
    %v3070 = vrot.slane %v3056, %v3069
    %v3071 = vcombine.low %v3049, %v3053
    %v3072 = vcombine.high %v3049, %v3053
    %v3074 = vunpack.c.l.s4 1983009808
    %v3075 = vunpack.c.0.s8 %v3074
    %v3076 = vlaneseq
    %v3077 = vshrl.u32 %v3076, 7
    %v3078 = vsub.s32 %v3075, %v3077
    %v3079 = vrot.slane %v3071, %v3078
    %v3081 = vunpack.c.l.s4 1983009808
    %v3082 = vunpack.c.0.s8 %v3081
    %v3083 = vlaneseq
    %v3084 = vshrl.u32 %v3083, 7
    %v3085 = vsub.s32 %v3082, %v3084
    %v3086 = vrot.slane %v3072, %v3085
    %v3087 = vcombine.low %v3063, %v3079
    %v3088 = vcombine.high %v3063, %v3079
    %v3090 = vunpack.c.l.s4 1934713408
    %v3091 = vunpack.c.0.s8 %v3090
    %v3092 = vlaneseq
    %v3093 = vshrl.u32 %v3092, 7
    %v3094 = vsub.s32 %v3091, %v3093
    %v3095 = vrot.slane %v3087, %v3094
    %v3097 = vunpack.c.l.s4 1934713408
    %v3098 = vunpack.c.0.s8 %v3097
    %v3099 = vlaneseq
    %v3100 = vshrl.u32 %v3099, 7
    %v3101 = vsub.s32 %v3098, %v3100
    %v3102 = vrot.slane %v3088, %v3101
    %v3103 = vcombine.low %v3070, %v3086
    %v3104 = vcombine.high %v3070, %v3086
    %v3106 = vunpack.c.l.s4 1934713408
    %v3107 = vunpack.c.0.s8 %v3106
    %v3108 = vlaneseq
    %v3109 = vshrl.u32 %v3108, 7
    %v3110 = vsub.s32 %v3107, %v3109
    %v3111 = vrot.slane %v3103, %v3110
    %v3113 = vunpack.c.l.s4 1934713408
    %v3114 = vunpack.c.0.s8 %v3113
    %v3115 = vlaneseq
    %v3116 = vshrl.u32 %v3115, 7
    %v3117 = vsub.s32 %v3114, %v3116
    %v3118 = vrot.slane %v3104, %v3117
    %v3119 = vcombine.high %v3095, 0.0
    %v3120 = vcombine.high %v3102, 0.0
    %v3121 = vcombine.high %v3111, 0.0
    %v3122 = vcombine.high %v3118, 0.0
    %v3123 = vcombine.low %v3048, %v3052
    %v3124 = vcombine.high %v3048, %v3052
    %v3126 = vunpack.c.l.s4 1983009808
    %v3127 = vunpack.c.0.s8 %v3126
    %v3128 = vlaneseq
    %v3129 = vshrl.u32 %v3128, 7
    %v3130 = vsub.s32 %v3127, %v3129
    %v3131 = vrot.slane %v3123, %v3130
    %v3133 = vunpack.c.l.s4 1983009808
    %v3134 = vunpack.c.0.s8 %v3133
    %v3135 = vlaneseq
    %v3136 = vshrl.u32 %v3135, 7
    %v3137 = vsub.s32 %v3134, %v3136
    %v3138 = vrot.slane %v3124, %v3137
    %v3139 = vcombine.low %v3050, %v3054
    %v3140 = vcombine.high %v3050, %v3054
    %v3142 = vunpack.c.l.s4 1983009808
    %v3143 = vunpack.c.0.s8 %v3142
    %v3144 = vlaneseq
    %v3145 = vshrl.u32 %v3144, 7
    %v3146 = vsub.s32 %v3143, %v3145
    %v3147 = vrot.slane %v3139, %v3146
    %v3149 = vunpack.c.l.s4 1983009808
    %v3150 = vunpack.c.0.s8 %v3149
    %v3151 = vlaneseq
    %v3152 = vshrl.u32 %v3151, 7
    %v3153 = vsub.s32 %v3150, %v3152
    %v3154 = vrot.slane %v3140, %v3153
    %v3155 = vcombine.low %v3131, %v3147
    %v3156 = vcombine.high %v3131, %v3147
    %v3158 = vunpack.c.l.s4 1934713408
    %v3159 = vunpack.c.0.s8 %v3158
    %v3160 = vlaneseq
    %v3161 = vshrl.u32 %v3160, 7
    %v3162 = vsub.s32 %v3159, %v3161
    %v3163 = vrot.slane %v3155, %v3162
    %v3165 = vunpack.c.l.s4 1934713408
    %v3166 = vunpack.c.0.s8 %v3165
    %v3167 = vlaneseq
    %v3168 = vshrl.u32 %v3167, 7
    %v3169 = vsub.s32 %v3166, %v3168
    %v3170 = vrot.slane %v3156, %v3169
    %v3171 = vcombine.low %v3138, %v3154
    %v3172 = vcombine.high %v3138, %v3154
    %v3174 = vunpack.c.l.s4 1934713408
    %v3175 = vunpack.c.0.s8 %v3174
    %v3176 = vlaneseq
    %v3177 = vshrl.u32 %v3176, 7
    %v3178 = vsub.s32 %v3175, %v3177
    %v3179 = vrot.slane %v3171, %v3178
    %v3181 = vunpack.c.l.s4 1934713408
    %v3182 = vunpack.c.0.s8 %v3181
    %v3183 = vlaneseq
    %v3184 = vshrl.u32 %v3183, 7
    %v3185 = vsub.s32 %v3182, %v3184
    %v3186 = vrot.slane %v3172, %v3185
    %v3187 = vcombine.high %v3163, 0.0
    %v3188 = vcombine.high %v3170, 0.0
    %v3189 = vcombine.high %v3179, 0.0
    %v3190 = vcombine.high %v3186, 0.0
    %3192 = vrot.lane.b32.xlu0 %v3119, 16
    %v3193 = vpop.permute.xlu0 %3192
    %3196 = vrot.lane.b32.xlu0 %v3102, 32
    %v3197 = vpop.permute.xlu0 %3196
    %3200 = vrot.lane.b32.xlu0 %v3120, 48
    %v3201 = vpop.permute.xlu0 %3200
    %3204 = vrot.lane.b32.xlu0 %v3111, 64
    %v3205 = vpop.permute.xlu0 %3204
    %3208 = vrot.lane.b32.xlu0 %v3121, 80
    %v3209 = vpop.permute.xlu0 %3208
    %3212 = vrot.lane.b32.xlu0 %v3118, 96
    %v3213 = vpop.permute.xlu0 %3212
    %3216 = vrot.lane.b32.xlu0 %v3122, 112
    %v3217 = vpop.permute.xlu0 %3216
    %3220 = vrot.lane.b32.xlu0 %v3187, 16
    %v3221 = vpop.permute.xlu0 %3220
    %3224 = vrot.lane.b32.xlu0 %v3170, 32
    %v3225 = vpop.permute.xlu0 %3224
    %3228 = vrot.lane.b32.xlu0 %v3188, 48
    %v3229 = vpop.permute.xlu0 %3228
    %3232 = vrot.lane.b32.xlu0 %v3179, 64
    %v3233 = vpop.permute.xlu0 %3232
    %3236 = vrot.lane.b32.xlu0 %v3189, 80
    %v3237 = vpop.permute.xlu0 %3236
    %3240 = vrot.lane.b32.xlu0 %v3186, 96
    %v3241 = vpop.permute.xlu0 %3240
    %3244 = vrot.lane.b32.xlu0 %v3190, 112
    %v3245 = vpop.permute.xlu0 %3244
    %v3247 = vsel %vm397, %v3095, %v3193
    %v3248 = vsel %vm399, %v3247, %v3197
    %v3249 = vsel %vm401, %v3248, %v3201
    %v3250 = vsel %vm403, %v3249, %v3205
    %v3251 = vsel %vm405, %v3250, %v3209
    %v3252 = vsel %vm407, %v3251, %v3213
    %v3253 = vsel %vm409, %v3252, %v3217
    %v3254 = vsel %vm397, %v3163, %v3221
    %v3255 = vsel %vm399, %v3254, %v3225
    %v3256 = vsel %vm401, %v3255, %v3229
    %v3257 = vsel %vm403, %v3256, %v3233
    %v3258 = vsel %vm405, %v3257, %v3237
    %v3259 = vsel %vm407, %v3258, %v3241
    %v3260 = vsel %vm409, %v3259, %v3245
    %3269 = vrot.lane.b32.xlu0 %v3047, 127
    %v3270 = vpop.permute.xlu0 %3269
    %3271 = vrot.lane.b32.xlu0 %v3048, 127
    %v3272 = vpop.permute.xlu0 %3271
    %3273 = vrot.lane.b32.xlu0 %v3049, 127
    %v3274 = vpop.permute.xlu0 %3273
    %3275 = vrot.lane.b32.xlu0 %v3050, 127
    %v3276 = vpop.permute.xlu0 %3275
    %3277 = vrot.lane.b32.xlu0 %v3051, 127
    %v3278 = vpop.permute.xlu0 %3277
    %3279 = vrot.lane.b32.xlu0 %v3052, 127
    %v3280 = vpop.permute.xlu0 %3279
    %3281 = vrot.lane.b32.xlu0 %v3053, 127
    %v3282 = vpop.permute.xlu0 %3281
    %3283 = vrot.lane.b32.xlu0 %v3054, 127
    %v3284 = vpop.permute.xlu0 %3283
    %v3293 = vcombine.low %v3270, %v3278
    %v3294 = vcombine.high %v3270, %v3278
    %v3296 = vunpack.c.l.s4 1983009808
    %v3297 = vunpack.c.0.s8 %v3296
    %v3298 = vlaneseq
    %v3299 = vshrl.u32 %v3298, 7
    %v3300 = vsub.s32 %v3297, %v3299
    %v3301 = vrot.slane %v3293, %v3300
    %v3303 = vunpack.c.l.s4 1983009808
    %v3304 = vunpack.c.0.s8 %v3303
    %v3305 = vlaneseq
    %v3306 = vshrl.u32 %v3305, 7
    %v3307 = vsub.s32 %v3304, %v3306
    %v3308 = vrot.slane %v3294, %v3307
    %v3309 = vcombine.low %v3274, %v3282
    %v3310 = vcombine.high %v3274, %v3282
    %v3312 = vunpack.c.l.s4 1983009808
    %v3313 = vunpack.c.0.s8 %v3312
    %v3314 = vlaneseq
    %v3315 = vshrl.u32 %v3314, 7
    %v3316 = vsub.s32 %v3313, %v3315
    %v3317 = vrot.slane %v3309, %v3316
    %v3319 = vunpack.c.l.s4 1983009808
    %v3320 = vunpack.c.0.s8 %v3319
    %v3321 = vlaneseq
    %v3322 = vshrl.u32 %v3321, 7
    %v3323 = vsub.s32 %v3320, %v3322
    %v3324 = vrot.slane %v3310, %v3323
    %v3325 = vcombine.low %v3301, %v3317
    %v3326 = vcombine.high %v3301, %v3317
    %v3328 = vunpack.c.l.s4 1934713408
    %v3329 = vunpack.c.0.s8 %v3328
    %v3330 = vlaneseq
    %v3331 = vshrl.u32 %v3330, 7
    %v3332 = vsub.s32 %v3329, %v3331
    %v3333 = vrot.slane %v3325, %v3332
    %v3335 = vunpack.c.l.s4 1934713408
    %v3336 = vunpack.c.0.s8 %v3335
    %v3337 = vlaneseq
    %v3338 = vshrl.u32 %v3337, 7
    %v3339 = vsub.s32 %v3336, %v3338
    %v3340 = vrot.slane %v3326, %v3339
    %v3341 = vcombine.low %v3308, %v3324
    %v3342 = vcombine.high %v3308, %v3324
    %v3344 = vunpack.c.l.s4 1934713408
    %v3345 = vunpack.c.0.s8 %v3344
    %v3346 = vlaneseq
    %v3347 = vshrl.u32 %v3346, 7
    %v3348 = vsub.s32 %v3345, %v3347
    %v3349 = vrot.slane %v3341, %v3348
    %v3351 = vunpack.c.l.s4 1934713408
    %v3352 = vunpack.c.0.s8 %v3351
    %v3353 = vlaneseq
    %v3354 = vshrl.u32 %v3353, 7
    %v3355 = vsub.s32 %v3352, %v3354
    %v3356 = vrot.slane %v3342, %v3355
    %v3357 = vcombine.high %v3333, 0.0
    %v3358 = vcombine.high %v3340, 0.0
    %v3359 = vcombine.high %v3349, 0.0
    %v3360 = vcombine.high %v3356, 0.0
    %v3361 = vcombine.low %v3272, %v3280
    %v3362 = vcombine.high %v3272, %v3280
    %v3364 = vunpack.c.l.s4 1983009808
    %v3365 = vunpack.c.0.s8 %v3364
    %v3366 = vlaneseq
    %v3367 = vshrl.u32 %v3366, 7
    %v3368 = vsub.s32 %v3365, %v3367
    %v3369 = vrot.slane %v3361, %v3368
    %v3371 = vunpack.c.l.s4 1983009808
    %v3372 = vunpack.c.0.s8 %v3371
    %v3373 = vlaneseq
    %v3374 = vshrl.u32 %v3373, 7
    %v3375 = vsub.s32 %v3372, %v3374
    %v3376 = vrot.slane %v3362, %v3375
    %v3377 = vcombine.low %v3276, %v3284
    %v3378 = vcombine.high %v3276, %v3284
    %v3380 = vunpack.c.l.s4 1983009808
    %v3381 = vunpack.c.0.s8 %v3380
    %v3382 = vlaneseq
    %v3383 = vshrl.u32 %v3382, 7
    %v3384 = vsub.s32 %v3381, %v3383
    %v3385 = vrot.slane %v3377, %v3384
    %v3387 = vunpack.c.l.s4 1983009808
    %v3388 = vunpack.c.0.s8 %v3387
    %v3389 = vlaneseq
    %v3390 = vshrl.u32 %v3389, 7
    %v3391 = vsub.s32 %v3388, %v3390
    %v3392 = vrot.slane %v3378, %v3391
    %v3393 = vcombine.low %v3369, %v3385
    %v3394 = vcombine.high %v3369, %v3385
    %v3396 = vunpack.c.l.s4 1934713408
    %v3397 = vunpack.c.0.s8 %v3396
    %v3398 = vlaneseq
    %v3399 = vshrl.u32 %v3398, 7
    %v3400 = vsub.s32 %v3397, %v3399
    %v3401 = vrot.slane %v3393, %v3400
    %v3403 = vunpack.c.l.s4 1934713408
    %v3404 = vunpack.c.0.s8 %v3403
    %v3405 = vlaneseq
    %v3406 = vshrl.u32 %v3405, 7
    %v3407 = vsub.s32 %v3404, %v3406
    %v3408 = vrot.slane %v3394, %v3407
    %v3409 = vcombine.low %v3376, %v3392
    %v3410 = vcombine.high %v3376, %v3392
    %v3412 = vunpack.c.l.s4 1934713408
    %v3413 = vunpack.c.0.s8 %v3412
    %v3414 = vlaneseq
    %v3415 = vshrl.u32 %v3414, 7
    %v3416 = vsub.s32 %v3413, %v3415
    %v3417 = vrot.slane %v3409, %v3416
    %v3419 = vunpack.c.l.s4 1934713408
    %v3420 = vunpack.c.0.s8 %v3419
    %v3421 = vlaneseq
    %v3422 = vshrl.u32 %v3421, 7
    %v3423 = vsub.s32 %v3420, %v3422
    %v3424 = vrot.slane %v3410, %v3423
    %v3425 = vcombine.high %v3401, 0.0
    %v3426 = vcombine.high %v3408, 0.0
    %v3427 = vcombine.high %v3417, 0.0
    %v3428 = vcombine.high %v3424, 0.0
    %3430 = vrot.lane.b32.xlu0 %v3357, 16
    %v3431 = vpop.permute.xlu0 %3430
    %3434 = vrot.lane.b32.xlu0 %v3340, 32
    %v3435 = vpop.permute.xlu0 %3434
    %3438 = vrot.lane.b32.xlu0 %v3358, 48
    %v3439 = vpop.permute.xlu0 %3438
    %3442 = vrot.lane.b32.xlu0 %v3349, 64
    %v3443 = vpop.permute.xlu0 %3442
    %3446 = vrot.lane.b32.xlu0 %v3359, 80
    %v3447 = vpop.permute.xlu0 %3446
    %3450 = vrot.lane.b32.xlu0 %v3356, 96
    %v3451 = vpop.permute.xlu0 %3450
    %3454 = vrot.lane.b32.xlu0 %v3360, 112
    %v3455 = vpop.permute.xlu0 %3454
    %3458 = vrot.lane.b32.xlu0 %v3425, 16
    %v3459 = vpop.permute.xlu0 %3458
    %3462 = vrot.lane.b32.xlu0 %v3408, 32
    %v3463 = vpop.permute.xlu0 %3462
    %3466 = vrot.lane.b32.xlu0 %v3426, 48
    %v3467 = vpop.permute.xlu0 %3466
    %3470 = vrot.lane.b32.xlu0 %v3417, 64
    %v3471 = vpop.permute.xlu0 %3470
    %3474 = vrot.lane.b32.xlu0 %v3427, 80
    %v3475 = vpop.permute.xlu0 %3474
    %3478 = vrot.lane.b32.xlu0 %v3424, 96
    %v3479 = vpop.permute.xlu0 %3478
    %3482 = vrot.lane.b32.xlu0 %v3428, 112
    %v3483 = vpop.permute.xlu0 %3482
    %v3485 = vsel %vm397, %v3333, %v3431
    %v3486 = vsel %vm399, %v3485, %v3435
    %v3487 = vsel %vm401, %v3486, %v3439
    %v3488 = vsel %vm403, %v3487, %v3443
    %v3489 = vsel %vm405, %v3488, %v3447
    %v3490 = vsel %vm407, %v3489, %v3451
    %v3491 = vsel %vm409, %v3490, %v3455
    %v3492 = vsel %vm397, %v3401, %v3459
    %v3493 = vsel %vm399, %v3492, %v3463
    %v3494 = vsel %vm401, %v3493, %v3467
    %v3495 = vsel %vm403, %v3494, %v3471
    %v3496 = vsel %vm405, %v3495, %v3475
    %v3497 = vsel %vm407, %v3496, %v3479
    %v3498 = vsel %vm409, %v3497, %v3483
    %3499 = vrot.lane.b32.xlu0 %v3047, 126
    %v3500 = vpop.permute.xlu0 %3499
    %3501 = vrot.lane.b32.xlu0 %v3048, 126
    %v3502 = vpop.permute.xlu0 %3501
    %3503 = vrot.lane.b32.xlu0 %v3049, 126
    %v3504 = vpop.permute.xlu0 %3503
    %3505 = vrot.lane.b32.xlu0 %v3050, 126
    %v3506 = vpop.permute.xlu0 %3505
    %3507 = vrot.lane.b32.xlu0 %v3051, 126
    %v3508 = vpop.permute.xlu0 %3507
    %3509 = vrot.lane.b32.xlu0 %v3052, 126
    %v3510 = vpop.permute.xlu0 %3509
    %3511 = vrot.lane.b32.xlu0 %v3053, 126
    %v3512 = vpop.permute.xlu0 %3511
    %3513 = vrot.lane.b32.xlu0 %v3054, 126
    %v3514 = vpop.permute.xlu0 %3513
    %v3523 = vcombine.low %v3500, %v3508
    %v3524 = vcombine.high %v3500, %v3508
    %v3526 = vunpack.c.l.s4 1983009808
    %v3527 = vunpack.c.0.s8 %v3526
    %v3528 = vlaneseq
    %v3529 = vshrl.u32 %v3528, 7
    %v3530 = vsub.s32 %v3527, %v3529
    %v3531 = vrot.slane %v3523, %v3530
    %v3533 = vunpack.c.l.s4 1983009808
    %v3534 = vunpack.c.0.s8 %v3533
    %v3535 = vlaneseq
    %v3536 = vshrl.u32 %v3535, 7
    %v3537 = vsub.s32 %v3534, %v3536
    %v3538 = vrot.slane %v3524, %v3537
    %v3539 = vcombine.low %v3504, %v3512
    %v3540 = vcombine.high %v3504, %v3512
    %v3542 = vunpack.c.l.s4 1983009808
    %v3543 = vunpack.c.0.s8 %v3542
    %v3544 = vlaneseq
    %v3545 = vshrl.u32 %v3544, 7
    %v3546 = vsub.s32 %v3543, %v3545
    %v3547 = vrot.slane %v3539, %v3546
    %v3549 = vunpack.c.l.s4 1983009808
    %v3550 = vunpack.c.0.s8 %v3549
    %v3551 = vlaneseq
    %v3552 = vshrl.u32 %v3551, 7
    %v3553 = vsub.s32 %v3550, %v3552
    %v3554 = vrot.slane %v3540, %v3553
    %v3555 = vcombine.low %v3531, %v3547
    %v3556 = vcombine.high %v3531, %v3547
    %v3558 = vunpack.c.l.s4 1934713408
    %v3559 = vunpack.c.0.s8 %v3558
    %v3560 = vlaneseq
    %v3561 = vshrl.u32 %v3560, 7
    %v3562 = vsub.s32 %v3559, %v3561
    %v3563 = vrot.slane %v3555, %v3562
    %v3565 = vunpack.c.l.s4 1934713408
    %v3566 = vunpack.c.0.s8 %v3565
    %v3567 = vlaneseq
    %v3568 = vshrl.u32 %v3567, 7
    %v3569 = vsub.s32 %v3566, %v3568
    %v3570 = vrot.slane %v3556, %v3569
    %v3571 = vcombine.low %v3538, %v3554
    %v3572 = vcombine.high %v3538, %v3554
    %v3574 = vunpack.c.l.s4 1934713408
    %v3575 = vunpack.c.0.s8 %v3574
    %v3576 = vlaneseq
    %v3577 = vshrl.u32 %v3576, 7
    %v3578 = vsub.s32 %v3575, %v3577
    %v3579 = vrot.slane %v3571, %v3578
    %v3581 = vunpack.c.l.s4 1934713408
    %v3582 = vunpack.c.0.s8 %v3581
    %v3583 = vlaneseq
    %v3584 = vshrl.u32 %v3583, 7
    %v3585 = vsub.s32 %v3582, %v3584
    %v3586 = vrot.slane %v3572, %v3585
    %v3587 = vcombine.high %v3563, 0.0
    %v3588 = vcombine.high %v3570, 0.0
    %v3589 = vcombine.high %v3579, 0.0
    %v3590 = vcombine.high %v3586, 0.0
    %v3591 = vcombine.low %v3502, %v3510
    %v3592 = vcombine.high %v3502, %v3510
    %v3594 = vunpack.c.l.s4 1983009808
    %v3595 = vunpack.c.0.s8 %v3594
    %v3596 = vlaneseq
    %v3597 = vshrl.u32 %v3596, 7
    %v3598 = vsub.s32 %v3595, %v3597
    %v3599 = vrot.slane %v3591, %v3598
    %v3601 = vunpack.c.l.s4 1983009808
    %v3602 = vunpack.c.0.s8 %v3601
    %v3603 = vlaneseq
    %v3604 = vshrl.u32 %v3603, 7
    %v3605 = vsub.s32 %v3602, %v3604
    %v3606 = vrot.slane %v3592, %v3605
    %v3607 = vcombine.low %v3506, %v3514
    %v3608 = vcombine.high %v3506, %v3514
    %v3610 = vunpack.c.l.s4 1983009808
    %v3611 = vunpack.c.0.s8 %v3610
    %v3612 = vlaneseq
    %v3613 = vshrl.u32 %v3612, 7
    %v3614 = vsub.s32 %v3611, %v3613
    %v3615 = vrot.slane %v3607, %v3614
    %v3617 = vunpack.c.l.s4 1983009808
    %v3618 = vunpack.c.0.s8 %v3617
    %v3619 = vlaneseq
    %v3620 = vshrl.u32 %v3619, 7
    %v3621 = vsub.s32 %v3618, %v3620
    %v3622 = vrot.slane %v3608, %v3621
    %v3623 = vcombine.low %v3599, %v3615
    %v3624 = vcombine.high %v3599, %v3615
    %v3626 = vunpack.c.l.s4 1934713408
    %v3627 = vunpack.c.0.s8 %v3626
    %v3628 = vlaneseq
    %v3629 = vshrl.u32 %v3628, 7
    %v3630 = vsub.s32 %v3627, %v3629
    %v3631 = vrot.slane %v3623, %v3630
    %v3633 = vunpack.c.l.s4 1934713408
    %v3634 = vunpack.c.0.s8 %v3633
    %v3635 = vlaneseq
    %v3636 = vshrl.u32 %v3635, 7
    %v3637 = vsub.s32 %v3634, %v3636
    %v3638 = vrot.slane %v3624, %v3637
    %v3639 = vcombine.low %v3606, %v3622
    %v3640 = vcombine.high %v3606, %v3622
    %v3642 = vunpack.c.l.s4 1934713408
    %v3643 = vunpack.c.0.s8 %v3642
    %v3644 = vlaneseq
    %v3645 = vshrl.u32 %v3644, 7
    %v3646 = vsub.s32 %v3643, %v3645
    %v3647 = vrot.slane %v3639, %v3646
    %v3649 = vunpack.c.l.s4 1934713408
    %v3650 = vunpack.c.0.s8 %v3649
    %v3651 = vlaneseq
    %v3652 = vshrl.u32 %v3651, 7
    %v3653 = vsub.s32 %v3650, %v3652
    %v3654 = vrot.slane %v3640, %v3653
    %v3655 = vcombine.high %v3631, 0.0
    %v3656 = vcombine.high %v3638, 0.0
    %v3657 = vcombine.high %v3647, 0.0
    %v3658 = vcombine.high %v3654, 0.0
    %3660 = vrot.lane.b32.xlu0 %v3587, 16
    %v3661 = vpop.permute.xlu0 %3660
    %3664 = vrot.lane.b32.xlu0 %v3570, 32
    %v3665 = vpop.permute.xlu0 %3664
    %3668 = vrot.lane.b32.xlu0 %v3588, 48
    %v3669 = vpop.permute.xlu0 %3668
    %3672 = vrot.lane.b32.xlu0 %v3579, 64
    %v3673 = vpop.permute.xlu0 %3672
    %3676 = vrot.lane.b32.xlu0 %v3589, 80
    %v3677 = vpop.permute.xlu0 %3676
    %3680 = vrot.lane.b32.xlu0 %v3586, 96
    %v3681 = vpop.permute.xlu0 %3680
    %3684 = vrot.lane.b32.xlu0 %v3590, 112
    %v3685 = vpop.permute.xlu0 %3684
    %3688 = vrot.lane.b32.xlu0 %v3655, 16
    %v3689 = vpop.permute.xlu0 %3688
    %3692 = vrot.lane.b32.xlu0 %v3638, 32
    %v3693 = vpop.permute.xlu0 %3692
    %3696 = vrot.lane.b32.xlu0 %v3656, 48
    %v3697 = vpop.permute.xlu0 %3696
    %3700 = vrot.lane.b32.xlu0 %v3647, 64
    %v3701 = vpop.permute.xlu0 %3700
    %3704 = vrot.lane.b32.xlu0 %v3657, 80
    %v3705 = vpop.permute.xlu0 %3704
    %3708 = vrot.lane.b32.xlu0 %v3654, 96
    %v3709 = vpop.permute.xlu0 %3708
    %3712 = vrot.lane.b32.xlu0 %v3658, 112
    %v3713 = vpop.permute.xlu0 %3712
    %v3715 = vsel %vm397, %v3563, %v3661
    %v3716 = vsel %vm399, %v3715, %v3665
    %v3717 = vsel %vm401, %v3716, %v3669
    %v3718 = vsel %vm403, %v3717, %v3673
    %v3719 = vsel %vm405, %v3718, %v3677
    %v3720 = vsel %vm407, %v3719, %v3681
    %v3721 = vsel %vm409, %v3720, %v3685
    %v3722 = vsel %vm397, %v3631, %v3689
    %v3723 = vsel %vm399, %v3722, %v3693
    %v3724 = vsel %vm401, %v3723, %v3697
    %v3725 = vsel %vm403, %v3724, %v3701
    %v3726 = vsel %vm405, %v3725, %v3705
    %v3727 = vsel %vm407, %v3726, %v3709
    %v3728 = vsel %vm409, %v3727, %v3713
    %v3729 = vld [vmem:[%s2364 + $0x2] sm:$0xff]
    %v3730 = vld [vmem:[%s2364 + $0xa] sm:$0xff]
    %v3731 = vld [vmem:[%s2364 + $0x1a] sm:$0xff]
    %v3732 = vld [vmem:[%s2364 + $0x22] sm:$0xff]
    %v3733 = vld [vmem:[%s2364 + $0x32] sm:$0xff]
    %v3734 = vld [vmem:[%s2364 + $0x3a] sm:$0xff]
    %v3735 = vld [vmem:[%s2364 + $0x4a] sm:$0xff]
    %v3736 = vld [vmem:[%s2364 + $0x52] sm:$0xff]
    %v3737 = vcombine.low %v3729, %v3733
    %v3738 = vcombine.high %v3729, %v3733
    %v3740 = vunpack.c.l.s4 1983009808
    %v3741 = vunpack.c.0.s8 %v3740
    %v3742 = vlaneseq
    %v3743 = vshrl.u32 %v3742, 7
    %v3744 = vsub.s32 %v3741, %v3743
    %v3745 = vrot.slane %v3737, %v3744
    %v3747 = vunpack.c.l.s4 1983009808
    %v3748 = vunpack.c.0.s8 %v3747
    %v3749 = vlaneseq
    %v3750 = vshrl.u32 %v3749, 7
    %v3751 = vsub.s32 %v3748, %v3750
    %v3752 = vrot.slane %v3738, %v3751
    %v3753 = vcombine.low %v3731, %v3735
    %v3754 = vcombine.high %v3731, %v3735
    %v3756 = vunpack.c.l.s4 1983009808
    %v3757 = vunpack.c.0.s8 %v3756
    %v3758 = vlaneseq
    %v3759 = vshrl.u32 %v3758, 7
    %v3760 = vsub.s32 %v3757, %v3759
    %v3761 = vrot.slane %v3753, %v3760
    %v3763 = vunpack.c.l.s4 1983009808
    %v3764 = vunpack.c.0.s8 %v3763
    %v3765 = vlaneseq
    %v3766 = vshrl.u32 %v3765, 7
    %v3767 = vsub.s32 %v3764, %v3766
    %v3768 = vrot.slane %v3754, %v3767
    %v3769 = vcombine.low %v3745, %v3761
    %v3770 = vcombine.high %v3745, %v3761
    %v3772 = vunpack.c.l.s4 1934713408
    %v3773 = vunpack.c.0.s8 %v3772
    %v3774 = vlaneseq
    %v3775 = vshrl.u32 %v3774, 7
    %v3776 = vsub.s32 %v3773, %v3775
    %v3777 = vrot.slane %v3769, %v3776
    %v3779 = vunpack.c.l.s4 1934713408
    %v3780 = vunpack.c.0.s8 %v3779
    %v3781 = vlaneseq
    %v3782 = vshrl.u32 %v3781, 7
    %v3783 = vsub.s32 %v3780, %v3782
    %v3784 = vrot.slane %v3770, %v3783
    %v3785 = vcombine.low %v3752, %v3768
    %v3786 = vcombine.high %v3752, %v3768
    %v3788 = vunpack.c.l.s4 1934713408
    %v3789 = vunpack.c.0.s8 %v3788
    %v3790 = vlaneseq
    %v3791 = vshrl.u32 %v3790, 7
    %v3792 = vsub.s32 %v3789, %v3791
    %v3793 = vrot.slane %v3785, %v3792
    %v3795 = vunpack.c.l.s4 1934713408
    %v3796 = vunpack.c.0.s8 %v3795
    %v3797 = vlaneseq
    %v3798 = vshrl.u32 %v3797, 7
    %v3799 = vsub.s32 %v3796, %v3798
    %v3800 = vrot.slane %v3786, %v3799
    %v3801 = vcombine.high %v3777, 0.0
    %v3802 = vcombine.high %v3784, 0.0
    %v3803 = vcombine.high %v3793, 0.0
    %v3804 = vcombine.high %v3800, 0.0
    %v3805 = vcombine.low %v3730, %v3734
    %v3806 = vcombine.high %v3730, %v3734
    %v3808 = vunpack.c.l.s4 1983009808
    %v3809 = vunpack.c.0.s8 %v3808
    %v3810 = vlaneseq
    %v3811 = vshrl.u32 %v3810, 7
    %v3812 = vsub.s32 %v3809, %v3811
    %v3813 = vrot.slane %v3805, %v3812
    %v3815 = vunpack.c.l.s4 1983009808
    %v3816 = vunpack.c.0.s8 %v3815
    %v3817 = vlaneseq
    %v3818 = vshrl.u32 %v3817, 7
    %v3819 = vsub.s32 %v3816, %v3818
    %v3820 = vrot.slane %v3806, %v3819
    %v3821 = vcombine.low %v3732, %v3736
    %v3822 = vcombine.high %v3732, %v3736
    %v3824 = vunpack.c.l.s4 1983009808
    %v3825 = vunpack.c.0.s8 %v3824
    %v3826 = vlaneseq
    %v3827 = vshrl.u32 %v3826, 7
    %v3828 = vsub.s32 %v3825, %v3827
    %v3829 = vrot.slane %v3821, %v3828
    %v3831 = vunpack.c.l.s4 1983009808
    %v3832 = vunpack.c.0.s8 %v3831
    %v3833 = vlaneseq
    %v3834 = vshrl.u32 %v3833, 7
    %v3835 = vsub.s32 %v3832, %v3834
    %v3836 = vrot.slane %v3822, %v3835
    %v3837 = vcombine.low %v3813, %v3829
    %v3838 = vcombine.high %v3813, %v3829
    %v3840 = vunpack.c.l.s4 1934713408
    %v3841 = vunpack.c.0.s8 %v3840
    %v3842 = vlaneseq
    %v3843 = vshrl.u32 %v3842, 7
    %v3844 = vsub.s32 %v3841, %v3843
    %v3845 = vrot.slane %v3837, %v3844
    %v3847 = vunpack.c.l.s4 1934713408
    %v3848 = vunpack.c.0.s8 %v3847
    %v3849 = vlaneseq
    %v3850 = vshrl.u32 %v3849, 7
    %v3851 = vsub.s32 %v3848, %v3850
    %v3852 = vrot.slane %v3838, %v3851
    %v3853 = vcombine.low %v3820, %v3836
    %v3854 = vcombine.high %v3820, %v3836
    %v3856 = vunpack.c.l.s4 1934713408
    %v3857 = vunpack.c.0.s8 %v3856
    %v3858 = vlaneseq
    %v3859 = vshrl.u32 %v3858, 7
    %v3860 = vsub.s32 %v3857, %v3859
    %v3861 = vrot.slane %v3853, %v3860
    %v3863 = vunpack.c.l.s4 1934713408
    %v3864 = vunpack.c.0.s8 %v3863
    %v3865 = vlaneseq
    %v3866 = vshrl.u32 %v3865, 7
    %v3867 = vsub.s32 %v3864, %v3866
    %v3868 = vrot.slane %v3854, %v3867
    %v3869 = vcombine.high %v3845, 0.0
    %v3870 = vcombine.high %v3852, 0.0
    %v3871 = vcombine.high %v3861, 0.0
    %v3872 = vcombine.high %v3868, 0.0
    %3874 = vrot.lane.b32.xlu0 %v3801, 16
    %v3875 = vpop.permute.xlu0 %3874
    %3878 = vrot.lane.b32.xlu0 %v3784, 32
    %v3879 = vpop.permute.xlu0 %3878
    %3882 = vrot.lane.b32.xlu0 %v3802, 48
    %v3883 = vpop.permute.xlu0 %3882
    %3886 = vrot.lane.b32.xlu0 %v3793, 64
    %v3887 = vpop.permute.xlu0 %3886
    %3890 = vrot.lane.b32.xlu0 %v3803, 80
    %v3891 = vpop.permute.xlu0 %3890
    %3894 = vrot.lane.b32.xlu0 %v3800, 96
    %v3895 = vpop.permute.xlu0 %3894
    %3898 = vrot.lane.b32.xlu0 %v3804, 112
    %v3899 = vpop.permute.xlu0 %3898
    %3902 = vrot.lane.b32.xlu0 %v3869, 16
    %v3903 = vpop.permute.xlu0 %3902
    %3906 = vrot.lane.b32.xlu0 %v3852, 32
    %v3907 = vpop.permute.xlu0 %3906
    %3910 = vrot.lane.b32.xlu0 %v3870, 48
    %v3911 = vpop.permute.xlu0 %3910
    %3914 = vrot.lane.b32.xlu0 %v3861, 64
    %v3915 = vpop.permute.xlu0 %3914
    %3918 = vrot.lane.b32.xlu0 %v3871, 80
    %v3919 = vpop.permute.xlu0 %3918
    %3922 = vrot.lane.b32.xlu0 %v3868, 96
    %v3923 = vpop.permute.xlu0 %3922
    %3926 = vrot.lane.b32.xlu0 %v3872, 112
    %v3927 = vpop.permute.xlu0 %3926
    %v3929 = vsel %vm397, %v3777, %v3875
    %v3930 = vsel %vm399, %v3929, %v3879
    %v3931 = vsel %vm401, %v3930, %v3883
    %v3932 = vsel %vm403, %v3931, %v3887
    %v3933 = vsel %vm405, %v3932, %v3891
    %v3934 = vsel %vm407, %v3933, %v3895
    %v3935 = vsel %vm409, %v3934, %v3899
    %v3936 = vsel %vm397, %v3845, %v3903
    %v3937 = vsel %vm399, %v3936, %v3907
    %v3938 = vsel %vm401, %v3937, %v3911
    %v3939 = vsel %vm403, %v3938, %v3915
    %v3940 = vsel %vm405, %v3939, %v3919
    %v3941 = vsel %vm407, %v3940, %v3923
    %v3942 = vsel %vm409, %v3941, %v3927
    %3951 = vrot.lane.b32.xlu0 %v3729, 127
    %v3952 = vpop.permute.xlu0 %3951
    %3953 = vrot.lane.b32.xlu0 %v3730, 127
    %v3954 = vpop.permute.xlu0 %3953
    %3955 = vrot.lane.b32.xlu0 %v3731, 127
    %v3956 = vpop.permute.xlu0 %3955
    %3957 = vrot.lane.b32.xlu0 %v3732, 127
    %v3958 = vpop.permute.xlu0 %3957
    %3959 = vrot.lane.b32.xlu0 %v3733, 127
    %v3960 = vpop.permute.xlu0 %3959
    %3961 = vrot.lane.b32.xlu0 %v3734, 127
    %v3962 = vpop.permute.xlu0 %3961
    %3963 = vrot.lane.b32.xlu0 %v3735, 127
    %v3964 = vpop.permute.xlu0 %3963
    %3965 = vrot.lane.b32.xlu0 %v3736, 127
    %v3966 = vpop.permute.xlu0 %3965
    %v3975 = vcombine.low %v3952, %v3960
    %v3976 = vcombine.high %v3952, %v3960
    %v3978 = vunpack.c.l.s4 1983009808
    %v3979 = vunpack.c.0.s8 %v3978
    %v3980 = vlaneseq
    %v3981 = vshrl.u32 %v3980, 7
    %v3982 = vsub.s32 %v3979, %v3981
    %v3983 = vrot.slane %v3975, %v3982
    %v3985 = vunpack.c.l.s4 1983009808
    %v3986 = vunpack.c.0.s8 %v3985
    %v3987 = vlaneseq
    %v3988 = vshrl.u32 %v3987, 7
    %v3989 = vsub.s32 %v3986, %v3988
    %v3990 = vrot.slane %v3976, %v3989
    %v3991 = vcombine.low %v3956, %v3964
    %v3992 = vcombine.high %v3956, %v3964
    %v3994 = vunpack.c.l.s4 1983009808
    %v3995 = vunpack.c.0.s8 %v3994
    %v3996 = vlaneseq
    %v3997 = vshrl.u32 %v3996, 7
    %v3998 = vsub.s32 %v3995, %v3997
    %v3999 = vrot.slane %v3991, %v3998
    %v4001 = vunpack.c.l.s4 1983009808
    %v4002 = vunpack.c.0.s8 %v4001
    %v4003 = vlaneseq
    %v4004 = vshrl.u32 %v4003, 7
    %v4005 = vsub.s32 %v4002, %v4004
    %v4006 = vrot.slane %v3992, %v4005
    %v4007 = vcombine.low %v3983, %v3999
    %v4008 = vcombine.high %v3983, %v3999
    %v4010 = vunpack.c.l.s4 1934713408
    %v4011 = vunpack.c.0.s8 %v4010
    %v4012 = vlaneseq
    %v4013 = vshrl.u32 %v4012, 7
    %v4014 = vsub.s32 %v4011, %v4013
    %v4015 = vrot.slane %v4007, %v4014
    %v4017 = vunpack.c.l.s4 1934713408
    %v4018 = vunpack.c.0.s8 %v4017
    %v4019 = vlaneseq
    %v4020 = vshrl.u32 %v4019, 7
    %v4021 = vsub.s32 %v4018, %v4020
    %v4022 = vrot.slane %v4008, %v4021
    %v4023 = vcombine.low %v3990, %v4006
    %v4024 = vcombine.high %v3990, %v4006
    %v4026 = vunpack.c.l.s4 1934713408
    %v4027 = vunpack.c.0.s8 %v4026
    %v4028 = vlaneseq
    %v4029 = vshrl.u32 %v4028, 7
    %v4030 = vsub.s32 %v4027, %v4029
    %v4031 = vrot.slane %v4023, %v4030
    %v4033 = vunpack.c.l.s4 1934713408
    %v4034 = vunpack.c.0.s8 %v4033
    %v4035 = vlaneseq
    %v4036 = vshrl.u32 %v4035, 7
    %v4037 = vsub.s32 %v4034, %v4036
    %v4038 = vrot.slane %v4024, %v4037
    %v4039 = vcombine.high %v4015, 0.0
    %v4040 = vcombine.high %v4022, 0.0
    %v4041 = vcombine.high %v4031, 0.0
    %v4042 = vcombine.high %v4038, 0.0
    %v4043 = vcombine.low %v3954, %v3962
    %v4044 = vcombine.high %v3954, %v3962
    %v4046 = vunpack.c.l.s4 1983009808
    %v4047 = vunpack.c.0.s8 %v4046
    %v4048 = vlaneseq
    %v4049 = vshrl.u32 %v4048, 7
    %v4050 = vsub.s32 %v4047, %v4049
    %v4051 = vrot.slane %v4043, %v4050
    %v4053 = vunpack.c.l.s4 1983009808
    %v4054 = vunpack.c.0.s8 %v4053
    %v4055 = vlaneseq
    %v4056 = vshrl.u32 %v4055, 7
    %v4057 = vsub.s32 %v4054, %v4056
    %v4058 = vrot.slane %v4044, %v4057
    %v4059 = vcombine.low %v3958, %v3966
    %v4060 = vcombine.high %v3958, %v3966
    %v4062 = vunpack.c.l.s4 1983009808
    %v4063 = vunpack.c.0.s8 %v4062
    %v4064 = vlaneseq
    %v4065 = vshrl.u32 %v4064, 7
    %v4066 = vsub.s32 %v4063, %v4065
    %v4067 = vrot.slane %v4059, %v4066
    %v4069 = vunpack.c.l.s4 1983009808
    %v4070 = vunpack.c.0.s8 %v4069
    %v4071 = vlaneseq
    %v4072 = vshrl.u32 %v4071, 7
    %v4073 = vsub.s32 %v4070, %v4072
    %v4074 = vrot.slane %v4060, %v4073
    %v4075 = vcombine.low %v4051, %v4067
    %v4076 = vcombine.high %v4051, %v4067
    %v4078 = vunpack.c.l.s4 1934713408
    %v4079 = vunpack.c.0.s8 %v4078
    %v4080 = vlaneseq
    %v4081 = vshrl.u32 %v4080, 7
    %v4082 = vsub.s32 %v4079, %v4081
    %v4083 = vrot.slane %v4075, %v4082
    %v4085 = vunpack.c.l.s4 1934713408
    %v4086 = vunpack.c.0.s8 %v4085
    %v4087 = vlaneseq
    %v4088 = vshrl.u32 %v4087, 7
    %v4089 = vsub.s32 %v4086, %v4088
    %v4090 = vrot.slane %v4076, %v4089
    %v4091 = vcombine.low %v4058, %v4074
    %v4092 = vcombine.high %v4058, %v4074
    %v4094 = vunpack.c.l.s4 1934713408
    %v4095 = vunpack.c.0.s8 %v4094
    %v4096 = vlaneseq
    %v4097 = vshrl.u32 %v4096, 7
    %v4098 = vsub.s32 %v4095, %v4097
    %v4099 = vrot.slane %v4091, %v4098
    %v4101 = vunpack.c.l.s4 1934713408
    %v4102 = vunpack.c.0.s8 %v4101
    %v4103 = vlaneseq
    %v4104 = vshrl.u32 %v4103, 7
    %v4105 = vsub.s32 %v4102, %v4104
    %v4106 = vrot.slane %v4092, %v4105
    %v4107 = vcombine.high %v4083, 0.0
    %v4108 = vcombine.high %v4090, 0.0
    %v4109 = vcombine.high %v4099, 0.0
    %v4110 = vcombine.high %v4106, 0.0
    %4112 = vrot.lane.b32.xlu0 %v4039, 16
    %v4113 = vpop.permute.xlu0 %4112
    %4116 = vrot.lane.b32.xlu0 %v4022, 32
    %v4117 = vpop.permute.xlu0 %4116
    %4120 = vrot.lane.b32.xlu0 %v4040, 48
    %v4121 = vpop.permute.xlu0 %4120
    %4124 = vrot.lane.b32.xlu0 %v4031, 64
    %v4125 = vpop.permute.xlu0 %4124
    %4128 = vrot.lane.b32.xlu0 %v4041, 80
    %v4129 = vpop.permute.xlu0 %4128
    %4132 = vrot.lane.b32.xlu0 %v4038, 96
    %v4133 = vpop.permute.xlu0 %4132
    %4136 = vrot.lane.b32.xlu0 %v4042, 112
    %v4137 = vpop.permute.xlu0 %4136
    %4140 = vrot.lane.b32.xlu0 %v4107, 16
    %v4141 = vpop.permute.xlu0 %4140
    %4144 = vrot.lane.b32.xlu0 %v4090, 32
    %v4145 = vpop.permute.xlu0 %4144
    %4148 = vrot.lane.b32.xlu0 %v4108, 48
    %v4149 = vpop.permute.xlu0 %4148
    %4152 = vrot.lane.b32.xlu0 %v4099, 64
    %v4153 = vpop.permute.xlu0 %4152
    %4156 = vrot.lane.b32.xlu0 %v4109, 80
    %v4157 = vpop.permute.xlu0 %4156
    %4160 = vrot.lane.b32.xlu0 %v4106, 96
    %v4161 = vpop.permute.xlu0 %4160
    %4164 = vrot.lane.b32.xlu0 %v4110, 112
    %v4165 = vpop.permute.xlu0 %4164
    %v4167 = vsel %vm397, %v4015, %v4113
    %v4168 = vsel %vm399, %v4167, %v4117
    %v4169 = vsel %vm401, %v4168, %v4121
    %v4170 = vsel %vm403, %v4169, %v4125
    %v4171 = vsel %vm405, %v4170, %v4129
    %v4172 = vsel %vm407, %v4171, %v4133
    %v4173 = vsel %vm409, %v4172, %v4137
    %v4174 = vsel %vm397, %v4083, %v4141
    %v4175 = vsel %vm399, %v4174, %v4145
    %v4176 = vsel %vm401, %v4175, %v4149
    %v4177 = vsel %vm403, %v4176, %v4153
    %v4178 = vsel %vm405, %v4177, %v4157
    %v4179 = vsel %vm407, %v4178, %v4161
    %v4180 = vsel %vm409, %v4179, %v4165
    %4181 = vrot.lane.b32.xlu0 %v3729, 126
    %v4182 = vpop.permute.xlu0 %4181
    %4183 = vrot.lane.b32.xlu0 %v3730, 126
    %v4184 = vpop.permute.xlu0 %4183
    %4185 = vrot.lane.b32.xlu0 %v3731, 126
    %v4186 = vpop.permute.xlu0 %4185
    %4187 = vrot.lane.b32.xlu0 %v3732, 126
    %v4188 = vpop.permute.xlu0 %4187
    %4189 = vrot.lane.b32.xlu0 %v3733, 126
    %v4190 = vpop.permute.xlu0 %4189
    %4191 = vrot.lane.b32.xlu0 %v3734, 126
    %v4192 = vpop.permute.xlu0 %4191
    %4193 = vrot.lane.b32.xlu0 %v3735, 126
    %v4194 = vpop.permute.xlu0 %4193
    %4195 = vrot.lane.b32.xlu0 %v3736, 126
    %v4196 = vpop.permute.xlu0 %4195
    %v4205 = vcombine.low %v4182, %v4190
    %v4206 = vcombine.high %v4182, %v4190
    %v4208 = vunpack.c.l.s4 1983009808
    %v4209 = vunpack.c.0.s8 %v4208
    %v4210 = vlaneseq
    %v4211 = vshrl.u32 %v4210, 7
    %v4212 = vsub.s32 %v4209, %v4211
    %v4213 = vrot.slane %v4205, %v4212
    %v4215 = vunpack.c.l.s4 1983009808
    %v4216 = vunpack.c.0.s8 %v4215
    %v4217 = vlaneseq
    %v4218 = vshrl.u32 %v4217, 7
    %v4219 = vsub.s32 %v4216, %v4218
    %v4220 = vrot.slane %v4206, %v4219
    %v4221 = vcombine.low %v4186, %v4194
    %v4222 = vcombine.high %v4186, %v4194
    %v4224 = vunpack.c.l.s4 1983009808
    %v4225 = vunpack.c.0.s8 %v4224
    %v4226 = vlaneseq
    %v4227 = vshrl.u32 %v4226, 7
    %v4228 = vsub.s32 %v4225, %v4227
    %v4229 = vrot.slane %v4221, %v4228
    %v4231 = vunpack.c.l.s4 1983009808
    %v4232 = vunpack.c.0.s8 %v4231
    %v4233 = vlaneseq
    %v4234 = vshrl.u32 %v4233, 7
    %v4235 = vsub.s32 %v4232, %v4234
    %v4236 = vrot.slane %v4222, %v4235
    %v4237 = vcombine.low %v4213, %v4229
    %v4238 = vcombine.high %v4213, %v4229
    %v4240 = vunpack.c.l.s4 1934713408
    %v4241 = vunpack.c.0.s8 %v4240
    %v4242 = vlaneseq
    %v4243 = vshrl.u32 %v4242, 7
    %v4244 = vsub.s32 %v4241, %v4243
    %v4245 = vrot.slane %v4237, %v4244
    %v4247 = vunpack.c.l.s4 1934713408
    %v4248 = vunpack.c.0.s8 %v4247
    %v4249 = vlaneseq
    %v4250 = vshrl.u32 %v4249, 7
    %v4251 = vsub.s32 %v4248, %v4250
    %v4252 = vrot.slane %v4238, %v4251
    %v4253 = vcombine.low %v4220, %v4236
    %v4254 = vcombine.high %v4220, %v4236
    %v4256 = vunpack.c.l.s4 1934713408
    %v4257 = vunpack.c.0.s8 %v4256
    %v4258 = vlaneseq
    %v4259 = vshrl.u32 %v4258, 7
    %v4260 = vsub.s32 %v4257, %v4259
    %v4261 = vrot.slane %v4253, %v4260
    %v4263 = vunpack.c.l.s4 1934713408
    %v4264 = vunpack.c.0.s8 %v4263
    %v4265 = vlaneseq
    %v4266 = vshrl.u32 %v4265, 7
    %v4267 = vsub.s32 %v4264, %v4266
    %v4268 = vrot.slane %v4254, %v4267
    %v4269 = vcombine.high %v4245, 0.0
    %v4270 = vcombine.high %v4252, 0.0
    %v4271 = vcombine.high %v4261, 0.0
    %v4272 = vcombine.high %v4268, 0.0
    %v4273 = vcombine.low %v4184, %v4192
    %v4274 = vcombine.high %v4184, %v4192
    %v4276 = vunpack.c.l.s4 1983009808
    %v4277 = vunpack.c.0.s8 %v4276
    %v4278 = vlaneseq
    %v4279 = vshrl.u32 %v4278, 7
    %v4280 = vsub.s32 %v4277, %v4279
    %v4281 = vrot.slane %v4273, %v4280
    %v4283 = vunpack.c.l.s4 1983009808
    %v4284 = vunpack.c.0.s8 %v4283
    %v4285 = vlaneseq
    %v4286 = vshrl.u32 %v4285, 7
    %v4287 = vsub.s32 %v4284, %v4286
    %v4288 = vrot.slane %v4274, %v4287
    %v4289 = vcombine.low %v4188, %v4196
    %v4290 = vcombine.high %v4188, %v4196
    %v4292 = vunpack.c.l.s4 1983009808
    %v4293 = vunpack.c.0.s8 %v4292
    %v4294 = vlaneseq
    %v4295 = vshrl.u32 %v4294, 7
    %v4296 = vsub.s32 %v4293, %v4295
    %v4297 = vrot.slane %v4289, %v4296
    %v4299 = vunpack.c.l.s4 1983009808
    %v4300 = vunpack.c.0.s8 %v4299
    %v4301 = vlaneseq
    %v4302 = vshrl.u32 %v4301, 7
    %v4303 = vsub.s32 %v4300, %v4302
    %v4304 = vrot.slane %v4290, %v4303
    %v4305 = vcombine.low %v4281, %v4297
    %v4306 = vcombine.high %v4281, %v4297
    %v4308 = vunpack.c.l.s4 1934713408
    %v4309 = vunpack.c.0.s8 %v4308
    %v4310 = vlaneseq
    %v4311 = vshrl.u32 %v4310, 7
    %v4312 = vsub.s32 %v4309, %v4311
    %v4313 = vrot.slane %v4305, %v4312
    %v4315 = vunpack.c.l.s4 1934713408
    %v4316 = vunpack.c.0.s8 %v4315
    %v4317 = vlaneseq
    %v4318 = vshrl.u32 %v4317, 7
    %v4319 = vsub.s32 %v4316, %v4318
    %v4320 = vrot.slane %v4306, %v4319
    %v4321 = vcombine.low %v4288, %v4304
    %v4322 = vcombine.high %v4288, %v4304
    %v4324 = vunpack.c.l.s4 1934713408
    %v4325 = vunpack.c.0.s8 %v4324
    %v4326 = vlaneseq
    %v4327 = vshrl.u32 %v4326, 7
    %v4328 = vsub.s32 %v4325, %v4327
    %v4329 = vrot.slane %v4321, %v4328
    %v4331 = vunpack.c.l.s4 1934713408
    %v4332 = vunpack.c.0.s8 %v4331
    %v4333 = vlaneseq
    %v4334 = vshrl.u32 %v4333, 7
    %v4335 = vsub.s32 %v4332, %v4334
    %v4336 = vrot.slane %v4322, %v4335
    %v4337 = vcombine.high %v4313, 0.0
    %v4338 = vcombine.high %v4320, 0.0
    %v4339 = vcombine.high %v4329, 0.0
    %v4340 = vcombine.high %v4336, 0.0
    %4342 = vrot.lane.b32.xlu0 %v4269, 16
    %v4343 = vpop.permute.xlu0 %4342
    %4346 = vrot.lane.b32.xlu0 %v4252, 32
    %v4347 = vpop.permute.xlu0 %4346
    %4350 = vrot.lane.b32.xlu0 %v4270, 48
    %v4351 = vpop.permute.xlu0 %4350
    %4354 = vrot.lane.b32.xlu0 %v4261, 64
    %v4355 = vpop.permute.xlu0 %4354
    %4358 = vrot.lane.b32.xlu0 %v4271, 80
    %v4359 = vpop.permute.xlu0 %4358
    %4362 = vrot.lane.b32.xlu0 %v4268, 96
    %v4363 = vpop.permute.xlu0 %4362
    %4366 = vrot.lane.b32.xlu0 %v4272, 112
    %v4367 = vpop.permute.xlu0 %4366
    %4370 = vrot.lane.b32.xlu0 %v4337, 16
    %v4371 = vpop.permute.xlu0 %4370
    %4374 = vrot.lane.b32.xlu0 %v4320, 32
    %v4375 = vpop.permute.xlu0 %4374
    %4378 = vrot.lane.b32.xlu0 %v4338, 48
    %v4379 = vpop.permute.xlu0 %4378
    %4382 = vrot.lane.b32.xlu0 %v4329, 64
    %v4383 = vpop.permute.xlu0 %4382
    %4386 = vrot.lane.b32.xlu0 %v4339, 80
    %v4387 = vpop.permute.xlu0 %4386
    %4390 = vrot.lane.b32.xlu0 %v4336, 96
    %v4391 = vpop.permute.xlu0 %4390
    %4394 = vrot.lane.b32.xlu0 %v4340, 112
    %v4395 = vpop.permute.xlu0 %4394
    %v4397 = vsel %vm397, %v4245, %v4343
    %v4398 = vsel %vm399, %v4397, %v4347
    %v4399 = vsel %vm401, %v4398, %v4351
    %v4400 = vsel %vm403, %v4399, %v4355
    %v4401 = vsel %vm405, %v4400, %v4359
    %v4402 = vsel %vm407, %v4401, %v4363
    %v4403 = vsel %vm409, %v4402, %v4367
    %v4404 = vsel %vm397, %v4313, %v4371
    %v4405 = vsel %vm399, %v4404, %v4375
    %v4406 = vsel %vm401, %v4405, %v4379
    %v4407 = vsel %vm403, %v4406, %v4383
    %v4408 = vsel %vm405, %v4407, %v4387
    %v4409 = vsel %vm407, %v4408, %v4391
    %v4410 = vsel %vm409, %v4409, %v4395
    %v4413 = vrot.slane %v2809, 4
    %v4414 = vrot.slane %v2816, 4
    %v4419 = vrot.slane %v3253, 4
    %v4420 = vrot.slane %v3260, 4
    %v4425 = vrot.slane %v3721, 4
    %v4426 = vrot.slane %v3728, 4
    %v4431 = vrot.slane %v4173, 4
    %v4432 = vrot.slane %v4180, 4
    %v4435 = vsel %vm2274, %v2571, %v4413
    %v4436 = vsel %vm2274, %v2578, %v4414
    %v4437 = vsel %vm2274, %v3039, %v4419
    %v4438 = vsel %vm2274, %v3046, %v4420
    %v4439 = vsel %vm2274, %v3491, %v4425
    %v4440 = vsel %vm2274, %v3498, %v4426
    %v4441 = vsel %vm2274, %v3935, %v4431
    %v4442 = vsel %vm2274, %v3942, %v4432
    %v4444 = vsel %vm2274, %v4403, 0
    %v4447 = vsel %vm2274, %v4410, 0
    %4449 = vmatprep.subr.mxu0 %v4436
    %4450 = vmatpush1.msra.mxu0 %v4435
    %4451 = vmatprep.subr.mxu0 %v4438
    %4452 = vmatpush1.msra.mxu0 %v4437
    %4453 = vmatprep.subr.mxu0 %v4440
    %4454 = vmatpush1.msra.mxu0 %v4439
    %4455 = vmatprep.subr.mxu0 %v4442
    %4456 = vmatpush1.msra.mxu0 %v4441
    %4457 = vmatprep.subr.mxu0 %v4447
    %4458 = vmatpush1.msra.mxu0 %v4444
    %4459 = vmatprep.subr.mxu0 0.0
    %4460 = vmatpush1.msra.mxu0 0.0
    %4461 = vmatprep.subr.mxu0 0.0
    %4462 = vmatpush1.msra.mxu0 0.0
    %4463 = vmatprep.subr.mxu0 0.0
    %4464 = vmatpush1.msra.mxu0 0.0
    %4465 = vmatprep.subr.mxu0 0.0
    %4466 = vmatpush1.msra.mxu0 0.0
    %4467 = vmatprep.subr.mxu0 0.0
    %4468 = vmatpush1.msra.mxu0 0.0
    %4469 = vmatprep.subr.mxu0 0.0
    %4470 = vmatpush1.msra.mxu0 0.0
    %4471 = vmatprep.subr.mxu0 0.0
    %4472 = vmatpush1.msra.mxu0 0.0
    %4473 = vmatprep.subr.mxu0 0.0
    %4474 = vmatpush1.msra.mxu0 0.0
    %4475 = vmatprep.subr.mxu0 0.0
    %4476 = vmatpush1.msra.mxu0 0.0
    %4477 = vmatprep.subr.mxu0 0.0
    %4478 = vmatpush1.msra.mxu0 0.0
    %4479 = vmatprep.subr.mxu0 0.0
    %4480 = vmatpush1.msra.mxu0 0.0
    %4481 = vmatprep.subr.mxu0 0.0
    %4482 = vmatpush1.msra.mxu0 0.0
    %4483 = vmatprep.subr.mxu0 0.0
    %4484 = vmatpush1.msra.mxu0 0.0
    %4485 = vmatprep.subr.mxu0 0.0
    %4486 = vmatpush1.msra.mxu0 0.0
    %4487 = vmatprep.subr.mxu0 0.0
    %4488 = vmatpush1.msra.mxu0 0.0
    %4489 = vmatprep.subr.mxu0 0.0
    %4490 = vmatpush1.msra.mxu0 0.0
    %4491 = vmatprep.subr.mxu0 0.0
    %4492 = vmatpush1.msra.mxu0 0.0
    %4493 = vmatprep.subr.mxu0 0.0
    %4494 = vmatpush1.msra.mxu0 0.0
    %4495 = vmatprep.subr.mxu0 0.0
    %4496 = vmatpush1.msra.mxu0 0.0
    %4497 = vmatprep.subr.mxu0 0.0
    %4498 = vmatpush1.msra.mxu0 0.0
    %4499 = vmatprep.subr.mxu0 0.0
    %4500 = vmatpush1.msra.mxu0 0.0
    %4501 = vmatprep.subr.mxu0 0.0
    %4502 = vmatpush1.msra.mxu0 0.0
    %4503 = vmatprep.subr.mxu0 0.0
    %4504 = vmatpush1.msra.mxu0 0.0
    %4505 = vmatprep.subr.mxu0 0.0
    %4506 = vmatpush1.msra.mxu0 0.0
    %4507 = vmatprep.subr.mxu0 0.0
    %4508 = vmatpush1.msra.mxu0 0.0
    %4509 = vmatprep.subr.mxu0 0.0
    %4510 = vmatpush1.msra.mxu0 0.0
    %4511 = vmatprep.subr.mxu0 0.0
    %4512 = vmatpush1.msra.mxu0 0.0
    %4513 = vmatprep.mubr.f32.mxu0 0.0
    %4514 = vmatmul.mubr.f32.gmra.mrb[0].mxu0 %v2285
    %v4515 = vpop.f32.mrb[0].mxu0
    %v4516 = vadd.f32 0.0, %v4515
    %v4517 = vpop.f32.mrb[0].mxu0
    %v4518 = vadd.f32 0.0, %v4517
    %4519 = vdwg.mxu0
    %4521 = vset.pattern.permute.xlu0 0
    %4522 = vperm.xlu0 %4521, %v64
    %v4523 = vpop.permute.xlu0 %4522
    %v4525 = vadd.f32 %v2360, %v4523
    %v4526 = vadd.f32 %v2362, %v4523
    %v4527 = vadd.f32 %v4516, %v4523
    %v4528 = vadd.f32 %v4518, %v4523
    %v4529 = vmax.f32 %v4525, 0.0
    %v4530 = vmax.f32 %v4526, 0.0
    %v4531 = vmax.f32 %v4527, 0.0
    %v4532 = vmax.f32 %v4528, 0.0
    %v4533 = vld [vmem:[%s3] sm:$0xff]
    %v4534 = vld [vmem:[%s4] sm:$0xff]
    %v4535 = vadd.f32 %v4529, %v4530
    %4536 = vadd.xlane.f32.xlu0 %v4535
    %v4537 = vpop.xlane.xlu0 %4536
    %v4538 = vadd.f32 %v4531, %v4532
    %4539 = vadd.xlane.f32.xlu0 %v4538
    %v4540 = vpop.xlane.xlu0 %4539
    %v4541 = vrcp.pop 256.0
    %v4542 = vmul.f32 %v4537, %v4541
    %v4543 = vmul.f32 %v4540, %v4541
    %v4544 = vadd.f32 %v4542, %v4543
    %v4545 = vrcp.pop 2.0
    %v4546 = vmul.f32 %v4544, %v4545
    %v4547 = vsub.f32 %v4529, %v4546
    %v4548 = vsub.f32 %v4530, %v4546
    %v4549 = vsub.f32 %v4531, %v4546
    %v4550 = vsub.f32 %v4532, %v4546
    %v4551 = vmul.f32 %v4547, %v4547
    %v4552 = vmul.f32 %v4548, %v4548
    %v4553 = vmul.f32 %v4549, %v4549
    %v4554 = vmul.f32 %v4550, %v4550
    %v4555 = vadd.f32 %v4551, %v4552
    %4556 = vadd.xlane.f32.xlu0 %v4555
    %v4557 = vpop.xlane.xlu0 %4556
    %v4558 = vadd.f32 %v4553, %v4554
    %4559 = vadd.xlane.f32.xlu0 %v4558
    %v4560 = vpop.xlane.xlu0 %4559
    %v4561 = vmul.f32 %v4557, %v4541
    %v4562 = vmul.f32 %v4560, %v4541
    %v4563 = vadd.f32 %v4561, %v4562
    %v4564 = vmul.f32 %v4563, %v4545
    %v4565 = vadd.f32 %v4564, 1e-05
    %v4566 = vrsqrt.pop %v4565
    %v4567 = vmul.f32 %v4533, %v4566
    %v4568 = vmul.f32 %v4546, %v4567
    %v4569 = vsub.f32 %v4534, %v4568
    %4571 = vset.pattern.permute.xlu0 0
    %4572 = vperm.xlu0 %4571, %v4567
    %v4573 = vpop.permute.xlu0 %4572
    %v4575 = vmul.f32 %v4529, %v4573
    %v4576 = vmul.f32 %v4530, %v4573
    %v4577 = vmul.f32 %v4531, %v4573
    %v4578 = vmul.f32 %v4532, %v4573
    %4580 = vset.pattern.permute.xlu0 0
    %4581 = vperm.xlu0 %4580, %v4569
    %v4582 = vpop.permute.xlu0 %4581
    %v4584 = vadd.f32 %v4575, %v4582
    %v4585 = vadd.f32 %v4576, %v4582
    %v4586 = vadd.f32 %v4577, %v4582
    %v4587 = vadd.f32 %v4578, %v4582
    %4590 = vrot.lane.b32.xlu0 %v4584, 112
    %v4591 = vpop.permute.xlu0 %4590
    %4592 = vrot.lane.b32.xlu0 %v4586, 112
    %v4593 = vpop.permute.xlu0 %4592
    %4596 = vrot.lane.b32.xlu0 %v4584, 96
    %v4597 = vpop.permute.xlu0 %4596
    %4598 = vrot.lane.b32.xlu0 %v4586, 96
    %v4599 = vpop.permute.xlu0 %4598
    %4602 = vrot.lane.b32.xlu0 %v4584, 80
    %v4603 = vpop.permute.xlu0 %4602
    %4604 = vrot.lane.b32.xlu0 %v4586, 80
    %v4605 = vpop.permute.xlu0 %4604
    %4608 = vrot.lane.b32.xlu0 %v4584, 64
    %v4609 = vpop.permute.xlu0 %4608
    %4610 = vrot.lane.b32.xlu0 %v4586, 64
    %v4611 = vpop.permute.xlu0 %4610
    %4614 = vrot.lane.b32.xlu0 %v4584, 48
    %v4615 = vpop.permute.xlu0 %4614
    %4616 = vrot.lane.b32.xlu0 %v4586, 48
    %v4617 = vpop.permute.xlu0 %4616
    %4620 = vrot.lane.b32.xlu0 %v4584, 32
    %v4621 = vpop.permute.xlu0 %4620
    %4622 = vrot.lane.b32.xlu0 %v4586, 32
    %v4623 = vpop.permute.xlu0 %4622
    %4626 = vrot.lane.b32.xlu0 %v4584, 16
    %v4627 = vpop.permute.xlu0 %4626
    %4628 = vrot.lane.b32.xlu0 %v4586, 16
    %v4629 = vpop.permute.xlu0 %4628
    %4634 = vrot.lane.b32.xlu0 %v4585, 112
    %v4635 = vpop.permute.xlu0 %4634
    %4636 = vrot.lane.b32.xlu0 %v4587, 112
    %v4637 = vpop.permute.xlu0 %4636
    %4640 = vrot.lane.b32.xlu0 %v4585, 96
    %v4641 = vpop.permute.xlu0 %4640
    %4642 = vrot.lane.b32.xlu0 %v4587, 96
    %v4643 = vpop.permute.xlu0 %4642
    %4646 = vrot.lane.b32.xlu0 %v4585, 80
    %v4647 = vpop.permute.xlu0 %4646
    %4648 = vrot.lane.b32.xlu0 %v4587, 80
    %v4649 = vpop.permute.xlu0 %4648
    %4652 = vrot.lane.b32.xlu0 %v4585, 64
    %v4653 = vpop.permute.xlu0 %4652
    %4654 = vrot.lane.b32.xlu0 %v4587, 64
    %v4655 = vpop.permute.xlu0 %4654
    %4658 = vrot.lane.b32.xlu0 %v4585, 48
    %v4659 = vpop.permute.xlu0 %4658
    %4660 = vrot.lane.b32.xlu0 %v4587, 48
    %v4661 = vpop.permute.xlu0 %4660
    %4664 = vrot.lane.b32.xlu0 %v4585, 32
    %v4665 = vpop.permute.xlu0 %4664
    %4666 = vrot.lane.b32.xlu0 %v4587, 32
    %v4667 = vpop.permute.xlu0 %4666
    %4670 = vrot.lane.b32.xlu0 %v4585, 16
    %v4671 = vpop.permute.xlu0 %4670
    %4672 = vrot.lane.b32.xlu0 %v4587, 16
    %v4673 = vpop.permute.xlu0 %4672
    %v4676 = vcombine.low %v4584, %v4597
    %v4677 = vcombine.high %v4584, %v4597
    %v4679 = vunpack.c.l.s4 1983009808
    %v4680 = vunpack.c.0.s8 %v4679
    %v4681 = vlaneseq
    %v4682 = vshrl.u32 %v4681, 7
    %v4683 = vsub.s32 %v4680, %v4682
    %v4684 = vrot.slane %v4676, %v4683
    %v4686 = vunpack.c.l.s4 1983009808
    %v4687 = vunpack.c.0.s8 %v4686
    %v4688 = vlaneseq
    %v4689 = vshrl.u32 %v4688, 7
    %v4690 = vsub.s32 %v4687, %v4689
    %v4691 = vrot.slane %v4677, %v4690
    %v4692 = vcombine.low %v4591, %v4603
    %v4693 = vcombine.high %v4591, %v4603
    %v4695 = vunpack.c.l.s4 1983009808
    %v4696 = vunpack.c.0.s8 %v4695
    %v4697 = vlaneseq
    %v4698 = vshrl.u32 %v4697, 7
    %v4699 = vsub.s32 %v4696, %v4698
    %v4700 = vrot.slane %v4692, %v4699
    %v4702 = vunpack.c.l.s4 1983009808
    %v4703 = vunpack.c.0.s8 %v4702
    %v4704 = vlaneseq
    %v4705 = vshrl.u32 %v4704, 7
    %v4706 = vsub.s32 %v4703, %v4705
    %v4707 = vrot.slane %v4693, %v4706
    %v4708 = vcombine.low %v4609, %v4621
    %v4709 = vcombine.high %v4609, %v4621
    %v4711 = vunpack.c.l.s4 1983009808
    %v4712 = vunpack.c.0.s8 %v4711
    %v4713 = vlaneseq
    %v4714 = vshrl.u32 %v4713, 7
    %v4715 = vsub.s32 %v4712, %v4714
    %v4716 = vrot.slane %v4708, %v4715
    %v4718 = vunpack.c.l.s4 1983009808
    %v4719 = vunpack.c.0.s8 %v4718
    %v4720 = vlaneseq
    %v4721 = vshrl.u32 %v4720, 7
    %v4722 = vsub.s32 %v4719, %v4721
    %v4723 = vrot.slane %v4709, %v4722
    %v4724 = vcombine.low %v4615, %v4627
    %v4725 = vcombine.high %v4615, %v4627
    %v4727 = vunpack.c.l.s4 1983009808
    %v4728 = vunpack.c.0.s8 %v4727
    %v4729 = vlaneseq
    %v4730 = vshrl.u32 %v4729, 7
    %v4731 = vsub.s32 %v4728, %v4730
    %v4732 = vrot.slane %v4724, %v4731
    %v4734 = vunpack.c.l.s4 1983009808
    %v4735 = vunpack.c.0.s8 %v4734
    %v4736 = vlaneseq
    %v4737 = vshrl.u32 %v4736, 7
    %v4738 = vsub.s32 %v4735, %v4737
    %v4739 = vrot.slane %v4725, %v4738
    %v4740 = vcombine.low %v4684, %v4700
    %v4741 = vcombine.high %v4684, %v4700
    %v4743 = vunpack.c.l.s4 1934713408
    %v4744 = vunpack.c.0.s8 %v4743
    %v4745 = vlaneseq
    %v4746 = vshrl.u32 %v4745, 7
    %v4747 = vsub.s32 %v4744, %v4746
    %v4748 = vrot.slane %v4740, %v4747
    %v4750 = vunpack.c.l.s4 1934713408
    %v4751 = vunpack.c.0.s8 %v4750
    %v4752 = vlaneseq
    %v4753 = vshrl.u32 %v4752, 7
    %v4754 = vsub.s32 %v4751, %v4753
    %v4755 = vrot.slane %v4741, %v4754
    %v4756 = vcombine.low %v4691, %v4707
    %v4757 = vcombine.high %v4691, %v4707
    %v4759 = vunpack.c.l.s4 1934713408
    %v4760 = vunpack.c.0.s8 %v4759
    %v4761 = vlaneseq
    %v4762 = vshrl.u32 %v4761, 7
    %v4763 = vsub.s32 %v4760, %v4762
    %v4764 = vrot.slane %v4756, %v4763
    %v4766 = vunpack.c.l.s4 1934713408
    %v4767 = vunpack.c.0.s8 %v4766
    %v4768 = vlaneseq
    %v4769 = vshrl.u32 %v4768, 7
    %v4770 = vsub.s32 %v4767, %v4769
    %v4771 = vrot.slane %v4757, %v4770
    %v4772 = vcombine.low %v4716, %v4732
    %v4773 = vcombine.high %v4716, %v4732
    %v4775 = vunpack.c.l.s4 1934713408
    %v4776 = vunpack.c.0.s8 %v4775
    %v4777 = vlaneseq
    %v4778 = vshrl.u32 %v4777, 7
    %v4779 = vsub.s32 %v4776, %v4778
    %v4780 = vrot.slane %v4772, %v4779
    %v4782 = vunpack.c.l.s4 1934713408
    %v4783 = vunpack.c.0.s8 %v4782
    %v4784 = vlaneseq
    %v4785 = vshrl.u32 %v4784, 7
    %v4786 = vsub.s32 %v4783, %v4785
    %v4787 = vrot.slane %v4773, %v4786
    %v4788 = vcombine.low %v4723, %v4739
    %v4789 = vcombine.high %v4723, %v4739
    %v4791 = vunpack.c.l.s4 1934713408
    %v4792 = vunpack.c.0.s8 %v4791
    %v4793 = vlaneseq
    %v4794 = vshrl.u32 %v4793, 7
    %v4795 = vsub.s32 %v4792, %v4794
    %v4796 = vrot.slane %v4788, %v4795
    %v4798 = vunpack.c.l.s4 1934713408
    %v4799 = vunpack.c.0.s8 %v4798
    %v4800 = vlaneseq
    %v4801 = vshrl.u32 %v4800, 7
    %v4802 = vsub.s32 %v4799, %v4801
    %v4803 = vrot.slane %v4789, %v4802
    %v4804 = vcombine.low %v4748, %v4780
    %v4805 = vcombine.high %v4748, %v4780
    %v4806 = vcombine.low %v4755, %v4787
    %v4807 = vcombine.high %v4755, %v4787
    %v4808 = vcombine.low %v4764, %v4796
    %v4809 = vcombine.high %v4764, %v4796
    %v4810 = vcombine.low %v4771, %v4803
    %v4811 = vcombine.high %v4771, %v4803
    %v4812 = vcombine.low %v4585, %v4641
    %v4813 = vcombine.high %v4585, %v4641
    %v4815 = vunpack.c.l.s4 1983009808
    %v4816 = vunpack.c.0.s8 %v4815
    %v4817 = vlaneseq
    %v4818 = vshrl.u32 %v4817, 7
    %v4819 = vsub.s32 %v4816, %v4818
    %v4820 = vrot.slane %v4812, %v4819
    %v4822 = vunpack.c.l.s4 1983009808
    %v4823 = vunpack.c.0.s8 %v4822
    %v4824 = vlaneseq
    %v4825 = vshrl.u32 %v4824, 7
    %v4826 = vsub.s32 %v4823, %v4825
    %v4827 = vrot.slane %v4813, %v4826
    %v4828 = vcombine.low %v4635, %v4647
    %v4829 = vcombine.high %v4635, %v4647
    %v4831 = vunpack.c.l.s4 1983009808
    %v4832 = vunpack.c.0.s8 %v4831
    %v4833 = vlaneseq
    %v4834 = vshrl.u32 %v4833, 7
    %v4835 = vsub.s32 %v4832, %v4834
    %v4836 = vrot.slane %v4828, %v4835
    %v4838 = vunpack.c.l.s4 1983009808
    %v4839 = vunpack.c.0.s8 %v4838
    %v4840 = vlaneseq
    %v4841 = vshrl.u32 %v4840, 7
    %v4842 = vsub.s32 %v4839, %v4841
    %v4843 = vrot.slane %v4829, %v4842
    %v4844 = vcombine.low %v4653, %v4665
    %v4845 = vcombine.high %v4653, %v4665
    %v4847 = vunpack.c.l.s4 1983009808
    %v4848 = vunpack.c.0.s8 %v4847
    %v4849 = vlaneseq
    %v4850 = vshrl.u32 %v4849, 7
    %v4851 = vsub.s32 %v4848, %v4850
    %v4852 = vrot.slane %v4844, %v4851
    %v4854 = vunpack.c.l.s4 1983009808
    %v4855 = vunpack.c.0.s8 %v4854
    %v4856 = vlaneseq
    %v4857 = vshrl.u32 %v4856, 7
    %v4858 = vsub.s32 %v4855, %v4857
    %v4859 = vrot.slane %v4845, %v4858
    %v4860 = vcombine.low %v4659, %v4671
    %v4861 = vcombine.high %v4659, %v4671
    %v4863 = vunpack.c.l.s4 1983009808
    %v4864 = vunpack.c.0.s8 %v4863
    %v4865 = vlaneseq
    %v4866 = vshrl.u32 %v4865, 7
    %v4867 = vsub.s32 %v4864, %v4866
    %v4868 = vrot.slane %v4860, %v4867
    %v4870 = vunpack.c.l.s4 1983009808
    %v4871 = vunpack.c.0.s8 %v4870
    %v4872 = vlaneseq
    %v4873 = vshrl.u32 %v4872, 7
    %v4874 = vsub.s32 %v4871, %v4873
    %v4875 = vrot.slane %v4861, %v4874
    %v4876 = vcombine.low %v4820, %v4836
    %v4877 = vcombine.high %v4820, %v4836
    %v4879 = vunpack.c.l.s4 1934713408
    %v4880 = vunpack.c.0.s8 %v4879
    %v4881 = vlaneseq
    %v4882 = vshrl.u32 %v4881, 7
    %v4883 = vsub.s32 %v4880, %v4882
    %v4884 = vrot.slane %v4876, %v4883
    %v4886 = vunpack.c.l.s4 1934713408
    %v4887 = vunpack.c.0.s8 %v4886
    %v4888 = vlaneseq
    %v4889 = vshrl.u32 %v4888, 7
    %v4890 = vsub.s32 %v4887, %v4889
    %v4891 = vrot.slane %v4877, %v4890
    %v4892 = vcombine.low %v4827, %v4843
    %v4893 = vcombine.high %v4827, %v4843
    %v4895 = vunpack.c.l.s4 1934713408
    %v4896 = vunpack.c.0.s8 %v4895
    %v4897 = vlaneseq
    %v4898 = vshrl.u32 %v4897, 7
    %v4899 = vsub.s32 %v4896, %v4898
    %v4900 = vrot.slane %v4892, %v4899
    %v4902 = vunpack.c.l.s4 1934713408
    %v4903 = vunpack.c.0.s8 %v4902
    %v4904 = vlaneseq
    %v4905 = vshrl.u32 %v4904, 7
    %v4906 = vsub.s32 %v4903, %v4905
    %v4907 = vrot.slane %v4893, %v4906
    %v4908 = vcombine.low %v4852, %v4868
    %v4909 = vcombine.high %v4852, %v4868
    %v4911 = vunpack.c.l.s4 1934713408
    %v4912 = vunpack.c.0.s8 %v4911
    %v4913 = vlaneseq
    %v4914 = vshrl.u32 %v4913, 7
    %v4915 = vsub.s32 %v4912, %v4914
    %v4916 = vrot.slane %v4908, %v4915
    %v4918 = vunpack.c.l.s4 1934713408
    %v4919 = vunpack.c.0.s8 %v4918
    %v4920 = vlaneseq
    %v4921 = vshrl.u32 %v4920, 7
    %v4922 = vsub.s32 %v4919, %v4921
    %v4923 = vrot.slane %v4909, %v4922
    %v4924 = vcombine.low %v4859, %v4875
    %v4925 = vcombine.high %v4859, %v4875
    %v4927 = vunpack.c.l.s4 1934713408
    %v4928 = vunpack.c.0.s8 %v4927
    %v4929 = vlaneseq
    %v4930 = vshrl.u32 %v4929, 7
    %v4931 = vsub.s32 %v4928, %v4930
    %v4932 = vrot.slane %v4924, %v4931
    %v4934 = vunpack.c.l.s4 1934713408
    %v4935 = vunpack.c.0.s8 %v4934
    %v4936 = vlaneseq
    %v4937 = vshrl.u32 %v4936, 7
    %v4938 = vsub.s32 %v4935, %v4937
    %v4939 = vrot.slane %v4925, %v4938
    %v4940 = vcombine.low %v4884, %v4916
    %v4941 = vcombine.high %v4884, %v4916
    %v4942 = vcombine.low %v4891, %v4923
    %v4943 = vcombine.high %v4891, %v4923
    %v4944 = vcombine.low %v4900, %v4932
    %v4945 = vcombine.high %v4900, %v4932
    %v4946 = vcombine.low %v4907, %v4939
    %v4947 = vcombine.high %v4907, %v4939
    %v4948 = vcombine.low %v4586, %v4599
    %v4949 = vcombine.high %v4586, %v4599
    %v4951 = vunpack.c.l.s4 1983009808
    %v4952 = vunpack.c.0.s8 %v4951
    %v4953 = vlaneseq
    %v4954 = vshrl.u32 %v4953, 7
    %v4955 = vsub.s32 %v4952, %v4954
    %v4956 = vrot.slane %v4948, %v4955
    %v4958 = vunpack.c.l.s4 1983009808
    %v4959 = vunpack.c.0.s8 %v4958
    %v4960 = vlaneseq
    %v4961 = vshrl.u32 %v4960, 7
    %v4962 = vsub.s32 %v4959, %v4961
    %v4963 = vrot.slane %v4949, %v4962
    %v4964 = vcombine.low %v4593, %v4605
    %v4965 = vcombine.high %v4593, %v4605
    %v4967 = vunpack.c.l.s4 1983009808
    %v4968 = vunpack.c.0.s8 %v4967
    %v4969 = vlaneseq
    %v4970 = vshrl.u32 %v4969, 7
    %v4971 = vsub.s32 %v4968, %v4970
    %v4972 = vrot.slane %v4964, %v4971
    %v4974 = vunpack.c.l.s4 1983009808
    %v4975 = vunpack.c.0.s8 %v4974
    %v4976 = vlaneseq
    %v4977 = vshrl.u32 %v4976, 7
    %v4978 = vsub.s32 %v4975, %v4977
    %v4979 = vrot.slane %v4965, %v4978
    %v4980 = vcombine.low %v4611, %v4623
    %v4981 = vcombine.high %v4611, %v4623
    %v4983 = vunpack.c.l.s4 1983009808
    %v4984 = vunpack.c.0.s8 %v4983
    %v4985 = vlaneseq
    %v4986 = vshrl.u32 %v4985, 7
    %v4987 = vsub.s32 %v4984, %v4986
    %v4988 = vrot.slane %v4980, %v4987
    %v4990 = vunpack.c.l.s4 1983009808
    %v4991 = vunpack.c.0.s8 %v4990
    %v4992 = vlaneseq
    %v4993 = vshrl.u32 %v4992, 7
    %v4994 = vsub.s32 %v4991, %v4993
    %v4995 = vrot.slane %v4981, %v4994
    %v4996 = vcombine.low %v4617, %v4629
    %v4997 = vcombine.high %v4617, %v4629
    %v4999 = vunpack.c.l.s4 1983009808
    %v5000 = vunpack.c.0.s8 %v4999
    %v5001 = vlaneseq
    %v5002 = vshrl.u32 %v5001, 7
    %v5003 = vsub.s32 %v5000, %v5002
    %v5004 = vrot.slane %v4996, %v5003
    %v5006 = vunpack.c.l.s4 1983009808
    %v5007 = vunpack.c.0.s8 %v5006
    %v5008 = vlaneseq
    %v5009 = vshrl.u32 %v5008, 7
    %v5010 = vsub.s32 %v5007, %v5009
    %v5011 = vrot.slane %v4997, %v5010
    %v5012 = vcombine.low %v4956, %v4972
    %v5013 = vcombine.high %v4956, %v4972
    %v5015 = vunpack.c.l.s4 1934713408
    %v5016 = vunpack.c.0.s8 %v5015
    %v5017 = vlaneseq
    %v5018 = vshrl.u32 %v5017, 7
    %v5019 = vsub.s32 %v5016, %v5018
    %v5020 = vrot.slane %v5012, %v5019
    %v5022 = vunpack.c.l.s4 1934713408
    %v5023 = vunpack.c.0.s8 %v5022
    %v5024 = vlaneseq
    %v5025 = vshrl.u32 %v5024, 7
    %v5026 = vsub.s32 %v5023, %v5025
    %v5027 = vrot.slane %v5013, %v5026
    %v5028 = vcombine.low %v4963, %v4979
    %v5029 = vcombine.high %v4963, %v4979
    %v5031 = vunpack.c.l.s4 1934713408
    %v5032 = vunpack.c.0.s8 %v5031
    %v5033 = vlaneseq
    %v5034 = vshrl.u32 %v5033, 7
    %v5035 = vsub.s32 %v5032, %v5034
    %v5036 = vrot.slane %v5028, %v5035
    %v5038 = vunpack.c.l.s4 1934713408
    %v5039 = vunpack.c.0.s8 %v5038
    %v5040 = vlaneseq
    %v5041 = vshrl.u32 %v5040, 7
    %v5042 = vsub.s32 %v5039, %v5041
    %v5043 = vrot.slane %v5029, %v5042
    %v5044 = vcombine.low %v4988, %v5004
    %v5045 = vcombine.high %v4988, %v5004
    %v5047 = vunpack.c.l.s4 1934713408
    %v5048 = vunpack.c.0.s8 %v5047
    %v5049 = vlaneseq
    %v5050 = vshrl.u32 %v5049, 7
    %v5051 = vsub.s32 %v5048, %v5050
    %v5052 = vrot.slane %v5044, %v5051
    %v5054 = vunpack.c.l.s4 1934713408
    %v5055 = vunpack.c.0.s8 %v5054
    %v5056 = vlaneseq
    %v5057 = vshrl.u32 %v5056, 7
    %v5058 = vsub.s32 %v5055, %v5057
    %v5059 = vrot.slane %v5045, %v5058
    %v5060 = vcombine.low %v4995, %v5011
    %v5061 = vcombine.high %v4995, %v5011
    %v5063 = vunpack.c.l.s4 1934713408
    %v5064 = vunpack.c.0.s8 %v5063
    %v5065 = vlaneseq
    %v5066 = vshrl.u32 %v5065, 7
    %v5067 = vsub.s32 %v5064, %v5066
    %v5068 = vrot.slane %v5060, %v5067
    %v5070 = vunpack.c.l.s4 1934713408
    %v5071 = vunpack.c.0.s8 %v5070
    %v5072 = vlaneseq
    %v5073 = vshrl.u32 %v5072, 7
    %v5074 = vsub.s32 %v5071, %v5073
    %v5075 = vrot.slane %v5061, %v5074
    %v5076 = vcombine.low %v5020, %v5052
    %v5077 = vcombine.high %v5020, %v5052
    %v5078 = vcombine.low %v5027, %v5059
    %v5079 = vcombine.high %v5027, %v5059
    %v5080 = vcombine.low %v5036, %v5068
    %v5081 = vcombine.high %v5036, %v5068
    %v5082 = vcombine.low %v5043, %v5075
    %v5083 = vcombine.high %v5043, %v5075
    %v5084 = vcombine.low %v4587, %v4643
    %v5085 = vcombine.high %v4587, %v4643
    %v5087 = vunpack.c.l.s4 1983009808
    %v5088 = vunpack.c.0.s8 %v5087
    %v5089 = vlaneseq
    %v5090 = vshrl.u32 %v5089, 7
    %v5091 = vsub.s32 %v5088, %v5090
    %v5092 = vrot.slane %v5084, %v5091
    %v5094 = vunpack.c.l.s4 1983009808
    %v5095 = vunpack.c.0.s8 %v5094
    %v5096 = vlaneseq
    %v5097 = vshrl.u32 %v5096, 7
    %v5098 = vsub.s32 %v5095, %v5097
    %v5099 = vrot.slane %v5085, %v5098
    %v5100 = vcombine.low %v4637, %v4649
    %v5101 = vcombine.high %v4637, %v4649
    %v5103 = vunpack.c.l.s4 1983009808
    %v5104 = vunpack.c.0.s8 %v5103
    %v5105 = vlaneseq
    %v5106 = vshrl.u32 %v5105, 7
    %v5107 = vsub.s32 %v5104, %v5106
    %v5108 = vrot.slane %v5100, %v5107
    %v5110 = vunpack.c.l.s4 1983009808
    %v5111 = vunpack.c.0.s8 %v5110
    %v5112 = vlaneseq
    %v5113 = vshrl.u32 %v5112, 7
    %v5114 = vsub.s32 %v5111, %v5113
    %v5115 = vrot.slane %v5101, %v5114
    %v5116 = vcombine.low %v4655, %v4667
    %v5117 = vcombine.high %v4655, %v4667
    %v5119 = vunpack.c.l.s4 1983009808
    %v5120 = vunpack.c.0.s8 %v5119
    %v5121 = vlaneseq
    %v5122 = vshrl.u32 %v5121, 7
    %v5123 = vsub.s32 %v5120, %v5122
    %v5124 = vrot.slane %v5116, %v5123
    %v5126 = vunpack.c.l.s4 1983009808
    %v5127 = vunpack.c.0.s8 %v5126
    %v5128 = vlaneseq
    %v5129 = vshrl.u32 %v5128, 7
    %v5130 = vsub.s32 %v5127, %v5129
    %v5131 = vrot.slane %v5117, %v5130
    %v5132 = vcombine.low %v4661, %v4673
    %v5133 = vcombine.high %v4661, %v4673
    %v5135 = vunpack.c.l.s4 1983009808
    %v5136 = vunpack.c.0.s8 %v5135
    %v5137 = vlaneseq
    %v5138 = vshrl.u32 %v5137, 7
    %v5139 = vsub.s32 %v5136, %v5138
    %v5140 = vrot.slane %v5132, %v5139
    %v5142 = vunpack.c.l.s4 1983009808
    %v5143 = vunpack.c.0.s8 %v5142
    %v5144 = vlaneseq
    %v5145 = vshrl.u32 %v5144, 7
    %v5146 = vsub.s32 %v5143, %v5145
    %v5147 = vrot.slane %v5133, %v5146
    %v5148 = vcombine.low %v5092, %v5108
    %v5149 = vcombine.high %v5092, %v5108
    %v5151 = vunpack.c.l.s4 1934713408
    %v5152 = vunpack.c.0.s8 %v5151
    %v5153 = vlaneseq
    %v5154 = vshrl.u32 %v5153, 7
    %v5155 = vsub.s32 %v5152, %v5154
    %v5156 = vrot.slane %v5148, %v5155
    %v5158 = vunpack.c.l.s4 1934713408
    %v5159 = vunpack.c.0.s8 %v5158
    %v5160 = vlaneseq
    %v5161 = vshrl.u32 %v5160, 7
    %v5162 = vsub.s32 %v5159, %v5161
    %v5163 = vrot.slane %v5149, %v5162
    %v5164 = vcombine.low %v5099, %v5115
    %v5165 = vcombine.high %v5099, %v5115
    %v5167 = vunpack.c.l.s4 1934713408
    %v5168 = vunpack.c.0.s8 %v5167
    %v5169 = vlaneseq
    %v5170 = vshrl.u32 %v5169, 7
    %v5171 = vsub.s32 %v5168, %v5170
    %v5172 = vrot.slane %v5164, %v5171
    %v5174 = vunpack.c.l.s4 1934713408
    %v5175 = vunpack.c.0.s8 %v5174
    %v5176 = vlaneseq
    %v5177 = vshrl.u32 %v5176, 7
    %v5178 = vsub.s32 %v5175, %v5177
    %v5179 = vrot.slane %v5165, %v5178
    %v5180 = vcombine.low %v5124, %v5140
    %v5181 = vcombine.high %v5124, %v5140
    %v5183 = vunpack.c.l.s4 1934713408
    %v5184 = vunpack.c.0.s8 %v5183
    %v5185 = vlaneseq
    %v5186 = vshrl.u32 %v5185, 7
    %v5187 = vsub.s32 %v5184, %v5186
    %v5188 = vrot.slane %v5180, %v5187
    %v5190 = vunpack.c.l.s4 1934713408
    %v5191 = vunpack.c.0.s8 %v5190
    %v5192 = vlaneseq
    %v5193 = vshrl.u32 %v5192, 7
    %v5194 = vsub.s32 %v5191, %v5193
    %v5195 = vrot.slane %v5181, %v5194
    %v5196 = vcombine.low %v5131, %v5147
    %v5197 = vcombine.high %v5131, %v5147
    %v5199 = vunpack.c.l.s4 1934713408
    %v5200 = vunpack.c.0.s8 %v5199
    %v5201 = vlaneseq
    %v5202 = vshrl.u32 %v5201, 7
    %v5203 = vsub.s32 %v5200, %v5202
    %v5204 = vrot.slane %v5196, %v5203
    %v5206 = vunpack.c.l.s4 1934713408
    %v5207 = vunpack.c.0.s8 %v5206
    %v5208 = vlaneseq
    %v5209 = vshrl.u32 %v5208, 7
    %v5210 = vsub.s32 %v5207, %v5209
    %v5211 = vrot.slane %v5197, %v5210
    %v5212 = vcombine.low %v5156, %v5188
    %v5213 = vcombine.high %v5156, %v5188
    %v5214 = vcombine.low %v5163, %v5195
    %v5215 = vcombine.high %v5163, %v5195
    %v5216 = vcombine.low %v5172, %v5204
    %v5217 = vcombine.high %v5172, %v5204
    %v5218 = vcombine.low %v5179, %v5211
    %v5219 = vcombine.high %v5179, %v5211
    %v5220 = vld [vmem:[%s5] sm:$0xff]
    %v5221 = vld [vmem:[%s6] sm:$0xff]
    %5222 = vst.msk [vmem:[#allocation3] sm:$0x1] %vm65, 0.0
    %5223 = vst.msk [vmem:[#allocation3 + $0x18] sm:$0x1] %vm65, 0.0
    %5224 = vst.msk [vmem:[#allocation3 + $0x30] sm:$0x1] %vm65, 0.0
    %5225 = vst.msk [vmem:[#allocation3 + $0x48] sm:$0x1] %vm65, 0.0
    %5226 = vst.msk [vmem:[#allocation3 + $0x60] sm:$0x1] %vm65, 0.0
    %5227 = vst.msk [vmem:[#allocation3 + $0x78] sm:$0x1] %vm65, 0.0
    %5228 = vst.msk [vmem:[#allocation3 + $0x90] sm:$0x1] %vm65, 0.0
    %5229 = vst.msk [vmem:[#allocation3 + $0xa8] sm:$0x1] %vm65, 0.0
    %5230 = vst.msk [vmem:[#allocation3 + $0xc0] sm:$0x1] %vm65, 0.0
    %5231 = vst.msk [vmem:[#allocation3 + $0xd8] sm:$0x1] %vm65, 0.0
    %5232 = vst.msk [vmem:[#allocation3 + $0xf0] sm:$0x1] %vm65, 0.0
    %5233 = vst.msk [vmem:[#allocation3 + $0x108] sm:$0x1] %vm65, 0.0
    %5234 = vst.msk [vmem:[#allocation3 + $0x120] sm:$0x1] %vm65, 0.0
    %5235 = vst.msk [vmem:[#allocation3 + $0x138] sm:$0x1] %vm65, 0.0
    %5236 = vst.msk [vmem:[#allocation3 + $0x150] sm:$0x1] %vm65, 0.0
    %5237 = vst.msk [vmem:[#allocation3 + $0x168] sm:$0x1] %vm65, 0.0
    %5238 = vst.msk [vmem:[#allocation3 + $0x11] sm:$0x1] %vm65, 0.0
    %5239 = vst.msk [vmem:[#allocation3 + $0x29] sm:$0x1] %vm65, 0.0
    %5240 = vst.msk [vmem:[#allocation3 + $0x41] sm:$0x1] %vm65, 0.0
    %5241 = vst.msk [vmem:[#allocation3 + $0x59] sm:$0x1] %vm65, 0.0
    %5242 = vst.msk [vmem:[#allocation3 + $0x71] sm:$0x1] %vm65, 0.0
    %5243 = vst.msk [vmem:[#allocation3 + $0x89] sm:$0x1] %vm65, 0.0
    %5244 = vst.msk [vmem:[#allocation3 + $0xa1] sm:$0x1] %vm65, 0.0
    %5245 = vst.msk [vmem:[#allocation3 + $0xb9] sm:$0x1] %vm65, 0.0
    %5246 = vst.msk [vmem:[#allocation3 + $0xd1] sm:$0x1] %vm65, 0.0
    %5247 = vst.msk [vmem:[#allocation3 + $0xe9] sm:$0x1] %vm65, 0.0
    %5248 = vst.msk [vmem:[#allocation3 + $0x101] sm:$0x1] %vm65, 0.0
    %5249 = vst.msk [vmem:[#allocation3 + $0x119] sm:$0x1] %vm65, 0.0
    %5250 = vst.msk [vmem:[#allocation3 + $0x131] sm:$0x1] %vm65, 0.0
    %5251 = vst.msk [vmem:[#allocation3 + $0x149] sm:$0x1] %vm65, 0.0
    %5252 = vst.msk [vmem:[#allocation3 + $0x161] sm:$0x1] %vm65, 0.0
    %5253 = vst.msk [vmem:[#allocation3 + $0x179] sm:$0x1] %vm65, 0.0
    %5254 = vst.msk [vmem:[#allocation3 + $0x1] sm:$0xff] %vm82, 0.0
    %5255 = vst.msk [vmem:[#allocation3 + $0x9] sm:$0xff] %vm82, 0.0
    %5256 = vst.msk [vmem:[#allocation3 + $0x19] sm:$0xff] %vm82, 0.0
    %5257 = vst.msk [vmem:[#allocation3 + $0x21] sm:$0xff] %vm82, 0.0
    %5258 = vst.msk [vmem:[#allocation3 + $0x31] sm:$0xff] %vm82, 0.0
    %5259 = vst.msk [vmem:[#allocation3 + $0x39] sm:$0xff] %vm82, 0.0
    %5260 = vst.msk [vmem:[#allocation3 + $0x49] sm:$0xff] %vm82, 0.0
    %5261 = vst.msk [vmem:[#allocation3 + $0x51] sm:$0xff] %vm82, 0.0
    %5262 = vst.msk [vmem:[#allocation3 + $0x61] sm:$0xff] %vm82, 0.0
    %5263 = vst.msk [vmem:[#allocation3 + $0x69] sm:$0xff] %vm82, 0.0
    %5264 = vst.msk [vmem:[#allocation3 + $0x79] sm:$0xff] %vm82, 0.0
    %5265 = vst.msk [vmem:[#allocation3 + $0x81] sm:$0xff] %vm82, 0.0
    %5266 = vst.msk [vmem:[#allocation3 + $0x91] sm:$0xff] %vm82, 0.0
    %5267 = vst.msk [vmem:[#allocation3 + $0x99] sm:$0xff] %vm82, 0.0
    %5268 = vst.msk [vmem:[#allocation3 + $0xa9] sm:$0xff] %vm82, 0.0
    %5269 = vst.msk [vmem:[#allocation3 + $0xb1] sm:$0xff] %vm82, 0.0
    %5270 = vst.msk [vmem:[#allocation3 + $0xc1] sm:$0xff] %vm82, 0.0
    %5271 = vst.msk [vmem:[#allocation3 + $0xc9] sm:$0xff] %vm82, 0.0
    %5272 = vst.msk [vmem:[#allocation3 + $0xd9] sm:$0xff] %vm82, 0.0
    %5273 = vst.msk [vmem:[#allocation3 + $0xe1] sm:$0xff] %vm82, 0.0
    %5274 = vst.msk [vmem:[#allocation3 + $0xf1] sm:$0xff] %vm82, 0.0
    %5275 = vst.msk [vmem:[#allocation3 + $0xf9] sm:$0xff] %vm82, 0.0
    %5276 = vst.msk [vmem:[#allocation3 + $0x109] sm:$0xff] %vm82, 0.0
    %5277 = vst.msk [vmem:[#allocation3 + $0x111] sm:$0xff] %vm82, 0.0
    %5278 = vst.msk [vmem:[#allocation3 + $0x121] sm:$0xff] %vm82, 0.0
    %5279 = vst.msk [vmem:[#allocation3 + $0x129] sm:$0xff] %vm82, 0.0
    %5280 = vst.msk [vmem:[#allocation3 + $0x139] sm:$0xff] %vm82, 0.0
    %5281 = vst.msk [vmem:[#allocation3 + $0x141] sm:$0xff] %vm82, 0.0
    %5282 = vst.msk [vmem:[#allocation3 + $0x151] sm:$0xff] %vm82, 0.0
    %5283 = vst.msk [vmem:[#allocation3 + $0x159] sm:$0xff] %vm82, 0.0
    %5284 = vst.msk [vmem:[#allocation3 + $0x169] sm:$0xff] %vm82, 0.0
    %5285 = vst.msk [vmem:[#allocation3 + $0x171] sm:$0xff] %vm82, 0.0
    %5286 = vst.msk [vmem:[#allocation3 + $0x1] sm:$0xff] %vm99, 0.0
    %5287 = vst.msk [vmem:[#allocation3 + $0x9] sm:$0xff] %vm99, 0.0
    %5288 = vst.msk [vmem:[#allocation3 + $0x19] sm:$0xff] %vm99, 0.0
    %5289 = vst.msk [vmem:[#allocation3 + $0x21] sm:$0xff] %vm99, 0.0
    %5290 = vst.msk [vmem:[#allocation3 + $0x31] sm:$0xff] %vm99, 0.0
    %5291 = vst.msk [vmem:[#allocation3 + $0x39] sm:$0xff] %vm99, 0.0
    %5292 = vst.msk [vmem:[#allocation3 + $0x49] sm:$0xff] %vm99, 0.0
    %5293 = vst.msk [vmem:[#allocation3 + $0x51] sm:$0xff] %vm99, 0.0
    %5294 = vst.msk [vmem:[#allocation3 + $0x61] sm:$0xff] %vm99, 0.0
    %5295 = vst.msk [vmem:[#allocation3 + $0x69] sm:$0xff] %vm99, 0.0
    %5296 = vst.msk [vmem:[#allocation3 + $0x79] sm:$0xff] %vm99, 0.0
    %5297 = vst.msk [vmem:[#allocation3 + $0x81] sm:$0xff] %vm99, 0.0
    %5298 = vst.msk [vmem:[#allocation3 + $0x91] sm:$0xff] %vm99, 0.0
    %5299 = vst.msk [vmem:[#allocation3 + $0x99] sm:$0xff] %vm99, 0.0
    %5300 = vst.msk [vmem:[#allocation3 + $0xa9] sm:$0xff] %vm99, 0.0
    %5301 = vst.msk [vmem:[#allocation3 + $0xb1] sm:$0xff] %vm99, 0.0
    %5302 = vst.msk [vmem:[#allocation3 + $0xc1] sm:$0xff] %vm99, 0.0
    %5303 = vst.msk [vmem:[#allocation3 + $0xc9] sm:$0xff] %vm99, 0.0
    %5304 = vst.msk [vmem:[#allocation3 + $0xd9] sm:$0xff] %vm99, 0.0
    %5305 = vst.msk [vmem:[#allocation3 + $0xe1] sm:$0xff] %vm99, 0.0
    %5306 = vst.msk [vmem:[#allocation3 + $0xf1] sm:$0xff] %vm99, 0.0
    %5307 = vst.msk [vmem:[#allocation3 + $0xf9] sm:$0xff] %vm99, 0.0
    %5308 = vst.msk [vmem:[#allocation3 + $0x109] sm:$0xff] %vm99, 0.0
    %5309 = vst.msk [vmem:[#allocation3 + $0x111] sm:$0xff] %vm99, 0.0
    %5310 = vst.msk [vmem:[#allocation3 + $0x121] sm:$0xff] %vm99, 0.0
    %5311 = vst.msk [vmem:[#allocation3 + $0x129] sm:$0xff] %vm99, 0.0
    %5312 = vst.msk [vmem:[#allocation3 + $0x139] sm:$0xff] %vm99, 0.0
    %5313 = vst.msk [vmem:[#allocation3 + $0x141] sm:$0xff] %vm99, 0.0
    %5314 = vst.msk [vmem:[#allocation3 + $0x151] sm:$0xff] %vm99, 0.0
    %5315 = vst.msk [vmem:[#allocation3 + $0x159] sm:$0xff] %vm99, 0.0
    %5316 = vst.msk [vmem:[#allocation3 + $0x169] sm:$0xff] %vm99, 0.0
    %5317 = vst.msk [vmem:[#allocation3 + $0x171] sm:$0xff] %vm99, 0.0
    %5350 = vrot.lane.b32.xlu0 %v4804, 1
    %v5351 = vpop.permute.xlu0 %5350
    %5352 = vrot.lane.b32.xlu0 %v4940, 1
    %v5353 = vpop.permute.xlu0 %5352
    %5354 = vrot.lane.b32.xlu0 %v4805, 1
    %v5355 = vpop.permute.xlu0 %5354
    %5356 = vrot.lane.b32.xlu0 %v4941, 1
    %v5357 = vpop.permute.xlu0 %5356
    %5358 = vrot.lane.b32.xlu0 %v4806, 1
    %v5359 = vpop.permute.xlu0 %5358
    %5360 = vrot.lane.b32.xlu0 %v4942, 1
    %v5361 = vpop.permute.xlu0 %5360
    %5362 = vrot.lane.b32.xlu0 %v4807, 1
    %v5363 = vpop.permute.xlu0 %5362
    %5364 = vrot.lane.b32.xlu0 %v4943, 1
    %v5365 = vpop.permute.xlu0 %5364
    %5366 = vrot.lane.b32.xlu0 %v4808, 1
    %v5367 = vpop.permute.xlu0 %5366
    %5368 = vrot.lane.b32.xlu0 %v4944, 1
    %v5369 = vpop.permute.xlu0 %5368
    %5370 = vrot.lane.b32.xlu0 %v4809, 1
    %v5371 = vpop.permute.xlu0 %5370
    %5372 = vrot.lane.b32.xlu0 %v4945, 1
    %v5373 = vpop.permute.xlu0 %5372
    %5374 = vrot.lane.b32.xlu0 %v4810, 1
    %v5375 = vpop.permute.xlu0 %5374
    %5376 = vrot.lane.b32.xlu0 %v4946, 1
    %v5377 = vpop.permute.xlu0 %5376
    %5378 = vrot.lane.b32.xlu0 %v4811, 1
    %v5379 = vpop.permute.xlu0 %5378
    %5380 = vrot.lane.b32.xlu0 %v4947, 1
    %v5381 = vpop.permute.xlu0 %5380
    %5382 = vrot.lane.b32.xlu0 %v5076, 1
    %v5383 = vpop.permute.xlu0 %5382
    %5384 = vrot.lane.b32.xlu0 %v5212, 1
    %v5385 = vpop.permute.xlu0 %5384
    %5386 = vrot.lane.b32.xlu0 %v5077, 1
    %v5387 = vpop.permute.xlu0 %5386
    %5388 = vrot.lane.b32.xlu0 %v5213, 1
    %v5389 = vpop.permute.xlu0 %5388
    %5390 = vrot.lane.b32.xlu0 %v5078, 1
    %v5391 = vpop.permute.xlu0 %5390
    %5392 = vrot.lane.b32.xlu0 %v5214, 1
    %v5393 = vpop.permute.xlu0 %5392
    %5394 = vrot.lane.b32.xlu0 %v5079, 1
    %v5395 = vpop.permute.xlu0 %5394
    %5396 = vrot.lane.b32.xlu0 %v5215, 1
    %v5397 = vpop.permute.xlu0 %5396
    %5398 = vrot.lane.b32.xlu0 %v5080, 1
    %v5399 = vpop.permute.xlu0 %5398
    %5400 = vrot.lane.b32.xlu0 %v5216, 1
    %v5401 = vpop.permute.xlu0 %5400
    %5402 = vrot.lane.b32.xlu0 %v5081, 1
    %v5403 = vpop.permute.xlu0 %5402
    %5404 = vrot.lane.b32.xlu0 %v5217, 1
    %v5405 = vpop.permute.xlu0 %5404
    %5406 = vrot.lane.b32.xlu0 %v5082, 1
    %v5407 = vpop.permute.xlu0 %5406
    %5408 = vrot.lane.b32.xlu0 %v5218, 1
    %v5409 = vpop.permute.xlu0 %5408
    %5410 = vrot.lane.b32.xlu0 %v5083, 1
    %v5411 = vpop.permute.xlu0 %5410
    %5412 = vrot.lane.b32.xlu0 %v5219, 1
    %v5413 = vpop.permute.xlu0 %5412
    %5446 = vst.msk [vmem:[#allocation3 + $0x1] sm:$0xff] %vm180, %v5351
    %5447 = vst.msk [vmem:[#allocation3 + $0x9] sm:$0xff] %vm180, %v5353
    %5448 = vst.msk [vmem:[#allocation3 + $0x19] sm:$0xff] %vm180, %v5355
    %5449 = vst.msk [vmem:[#allocation3 + $0x21] sm:$0xff] %vm180, %v5357
    %5450 = vst.msk [vmem:[#allocation3 + $0x31] sm:$0xff] %vm180, %v5359
    %5451 = vst.msk [vmem:[#allocation3 + $0x39] sm:$0xff] %vm180, %v5361
    %5452 = vst.msk [vmem:[#allocation3 + $0x49] sm:$0xff] %vm180, %v5363
    %5453 = vst.msk [vmem:[#allocation3 + $0x51] sm:$0xff] %vm180, %v5365
    %5454 = vst.msk [vmem:[#allocation3 + $0x61] sm:$0xff] %vm180, %v5367
    %5455 = vst.msk [vmem:[#allocation3 + $0x69] sm:$0xff] %vm180, %v5369
    %5456 = vst.msk [vmem:[#allocation3 + $0x79] sm:$0xff] %vm180, %v5371
    %5457 = vst.msk [vmem:[#allocation3 + $0x81] sm:$0xff] %vm180, %v5373
    %5458 = vst.msk [vmem:[#allocation3 + $0x91] sm:$0xff] %vm180, %v5375
    %5459 = vst.msk [vmem:[#allocation3 + $0x99] sm:$0xff] %vm180, %v5377
    %5460 = vst.msk [vmem:[#allocation3 + $0xa9] sm:$0xff] %vm180, %v5379
    %5461 = vst.msk [vmem:[#allocation3 + $0xb1] sm:$0xff] %vm180, %v5381
    %5462 = vst.msk [vmem:[#allocation3 + $0xc1] sm:$0xff] %vm180, %v5383
    %5463 = vst.msk [vmem:[#allocation3 + $0xc9] sm:$0xff] %vm180, %v5385
    %5464 = vst.msk [vmem:[#allocation3 + $0xd9] sm:$0xff] %vm180, %v5387
    %5465 = vst.msk [vmem:[#allocation3 + $0xe1] sm:$0xff] %vm180, %v5389
    %5466 = vst.msk [vmem:[#allocation3 + $0xf1] sm:$0xff] %vm180, %v5391
    %5467 = vst.msk [vmem:[#allocation3 + $0xf9] sm:$0xff] %vm180, %v5393
    %5468 = vst.msk [vmem:[#allocation3 + $0x109] sm:$0xff] %vm180, %v5395
    %5469 = vst.msk [vmem:[#allocation3 + $0x111] sm:$0xff] %vm180, %v5397
    %5470 = vst.msk [vmem:[#allocation3 + $0x121] sm:$0xff] %vm180, %v5399
    %5471 = vst.msk [vmem:[#allocation3 + $0x129] sm:$0xff] %vm180, %v5401
    %5472 = vst.msk [vmem:[#allocation3 + $0x139] sm:$0xff] %vm180, %v5403
    %5473 = vst.msk [vmem:[#allocation3 + $0x141] sm:$0xff] %vm180, %v5405
    %5474 = vst.msk [vmem:[#allocation3 + $0x151] sm:$0xff] %vm180, %v5407
    %5475 = vst.msk [vmem:[#allocation3 + $0x159] sm:$0xff] %vm180, %v5409
    %5476 = vst.msk [vmem:[#allocation3 + $0x169] sm:$0xff] %vm180, %v5411
    %5477 = vst.msk [vmem:[#allocation3 + $0x171] sm:$0xff] %vm180, %v5413
    %v5478 = vld [vmem:[#allocation3] sm:$0xff]
    %v5479 = vld [vmem:[#allocation3 + $0x8] sm:$0xff]
    %v5480 = vld [vmem:[#allocation3 + $0x18] sm:$0xff]
    %v5481 = vld [vmem:[#allocation3 + $0x20] sm:$0xff]
    %v5482 = vld [vmem:[#allocation3 + $0x30] sm:$0xff]
    %v5483 = vld [vmem:[#allocation3 + $0x38] sm:$0xff]
    %v5484 = vld [vmem:[#allocation3 + $0x48] sm:$0xff]
    %v5485 = vld [vmem:[#allocation3 + $0x50] sm:$0xff]
    %v5486 = vld [vmem:[#allocation3 + $0x60] sm:$0xff]
    %v5487 = vld [vmem:[#allocation3 + $0x68] sm:$0xff]
    %v5488 = vld [vmem:[#allocation3 + $0x78] sm:$0xff]
    %v5489 = vld [vmem:[#allocation3 + $0x80] sm:$0xff]
    %v5490 = vld [vmem:[#allocation3 + $0x90] sm:$0xff]
    %v5491 = vld [vmem:[#allocation3 + $0x98] sm:$0xff]
    %v5492 = vld [vmem:[#allocation3 + $0xa8] sm:$0xff]
    %v5493 = vld [vmem:[#allocation3 + $0xb0] sm:$0xff]
    %v5494 = vcombine.low %v5478, %v5482
    %v5495 = vcombine.high %v5478, %v5482
    %v5497 = vunpack.c.l.s4 1983009808
    %v5498 = vunpack.c.0.s8 %v5497
    %v5499 = vlaneseq
    %v5500 = vshrl.u32 %v5499, 7
    %v5501 = vsub.s32 %v5498, %v5500
    %v5502 = vrot.slane %v5494, %v5501
    %v5504 = vunpack.c.l.s4 1983009808
    %v5505 = vunpack.c.0.s8 %v5504
    %v5506 = vlaneseq
    %v5507 = vshrl.u32 %v5506, 7
    %v5508 = vsub.s32 %v5505, %v5507
    %v5509 = vrot.slane %v5495, %v5508
    %v5510 = vcombine.low %v5480, %v5484
    %v5511 = vcombine.high %v5480, %v5484
    %v5513 = vunpack.c.l.s4 1983009808
    %v5514 = vunpack.c.0.s8 %v5513
    %v5515 = vlaneseq
    %v5516 = vshrl.u32 %v5515, 7
    %v5517 = vsub.s32 %v5514, %v5516
    %v5518 = vrot.slane %v5510, %v5517
    %v5520 = vunpack.c.l.s4 1983009808
    %v5521 = vunpack.c.0.s8 %v5520
    %v5522 = vlaneseq
    %v5523 = vshrl.u32 %v5522, 7
    %v5524 = vsub.s32 %v5521, %v5523
    %v5525 = vrot.slane %v5511, %v5524
    %v5526 = vcombine.low %v5486, %v5490
    %v5527 = vcombine.high %v5486, %v5490
    %v5529 = vunpack.c.l.s4 1983009808
    %v5530 = vunpack.c.0.s8 %v5529
    %v5531 = vlaneseq
    %v5532 = vshrl.u32 %v5531, 7
    %v5533 = vsub.s32 %v5530, %v5532
    %v5534 = vrot.slane %v5526, %v5533
    %v5536 = vunpack.c.l.s4 1983009808
    %v5537 = vunpack.c.0.s8 %v5536
    %v5538 = vlaneseq
    %v5539 = vshrl.u32 %v5538, 7
    %v5540 = vsub.s32 %v5537, %v5539
    %v5541 = vrot.slane %v5527, %v5540
    %v5542 = vcombine.low %v5488, %v5492
    %v5543 = vcombine.high %v5488, %v5492
    %v5545 = vunpack.c.l.s4 1983009808
    %v5546 = vunpack.c.0.s8 %v5545
    %v5547 = vlaneseq
    %v5548 = vshrl.u32 %v5547, 7
    %v5549 = vsub.s32 %v5546, %v5548
    %v5550 = vrot.slane %v5542, %v5549
    %v5552 = vunpack.c.l.s4 1983009808
    %v5553 = vunpack.c.0.s8 %v5552
    %v5554 = vlaneseq
    %v5555 = vshrl.u32 %v5554, 7
    %v5556 = vsub.s32 %v5553, %v5555
    %v5557 = vrot.slane %v5543, %v5556
    %v5558 = vcombine.low %v5502, %v5518
    %v5559 = vcombine.high %v5502, %v5518
    %v5561 = vunpack.c.l.s4 1934713408
    %v5562 = vunpack.c.0.s8 %v5561
    %v5563 = vlaneseq
    %v5564 = vshrl.u32 %v5563, 7
    %v5565 = vsub.s32 %v5562, %v5564
    %v5566 = vrot.slane %v5558, %v5565
    %v5568 = vunpack.c.l.s4 1934713408
    %v5569 = vunpack.c.0.s8 %v5568
    %v5570 = vlaneseq
    %v5571 = vshrl.u32 %v5570, 7
    %v5572 = vsub.s32 %v5569, %v5571
    %v5573 = vrot.slane %v5559, %v5572
    %v5574 = vcombine.low %v5509, %v5525
    %v5575 = vcombine.high %v5509, %v5525
    %v5577 = vunpack.c.l.s4 1934713408
    %v5578 = vunpack.c.0.s8 %v5577
    %v5579 = vlaneseq
    %v5580 = vshrl.u32 %v5579, 7
    %v5581 = vsub.s32 %v5578, %v5580
    %v5582 = vrot.slane %v5574, %v5581
    %v5584 = vunpack.c.l.s4 1934713408
    %v5585 = vunpack.c.0.s8 %v5584
    %v5586 = vlaneseq
    %v5587 = vshrl.u32 %v5586, 7
    %v5588 = vsub.s32 %v5585, %v5587
    %v5589 = vrot.slane %v5575, %v5588
    %v5590 = vcombine.low %v5534, %v5550
    %v5591 = vcombine.high %v5534, %v5550
    %v5593 = vunpack.c.l.s4 1934713408
    %v5594 = vunpack.c.0.s8 %v5593
    %v5595 = vlaneseq
    %v5596 = vshrl.u32 %v5595, 7
    %v5597 = vsub.s32 %v5594, %v5596
    %v5598 = vrot.slane %v5590, %v5597
    %v5600 = vunpack.c.l.s4 1934713408
    %v5601 = vunpack.c.0.s8 %v5600
    %v5602 = vlaneseq
    %v5603 = vshrl.u32 %v5602, 7
    %v5604 = vsub.s32 %v5601, %v5603
    %v5605 = vrot.slane %v5591, %v5604
    %v5606 = vcombine.low %v5541, %v5557
    %v5607 = vcombine.high %v5541, %v5557
    %v5609 = vunpack.c.l.s4 1934713408
    %v5610 = vunpack.c.0.s8 %v5609
    %v5611 = vlaneseq
    %v5612 = vshrl.u32 %v5611, 7
    %v5613 = vsub.s32 %v5610, %v5612
    %v5614 = vrot.slane %v5606, %v5613
    %v5616 = vunpack.c.l.s4 1934713408
    %v5617 = vunpack.c.0.s8 %v5616
    %v5618 = vlaneseq
    %v5619 = vshrl.u32 %v5618, 7
    %v5620 = vsub.s32 %v5617, %v5619
    %v5621 = vrot.slane %v5607, %v5620
    %v5622 = vcombine.low %v5566, %v5598
    %v5623 = vcombine.high %v5566, %v5598
    %v5624 = vcombine.low %v5573, %v5605
    %v5625 = vcombine.high %v5573, %v5605
    %v5626 = vcombine.low %v5582, %v5614
    %v5627 = vcombine.high %v5582, %v5614
    %v5628 = vcombine.low %v5589, %v5621
    %v5629 = vcombine.high %v5589, %v5621
    %v5630 = vcombine.low %v5479, %v5483
    %v5631 = vcombine.high %v5479, %v5483
    %v5633 = vunpack.c.l.s4 1983009808
    %v5634 = vunpack.c.0.s8 %v5633
    %v5635 = vlaneseq
    %v5636 = vshrl.u32 %v5635, 7
    %v5637 = vsub.s32 %v5634, %v5636
    %v5638 = vrot.slane %v5630, %v5637
    %v5640 = vunpack.c.l.s4 1983009808
    %v5641 = vunpack.c.0.s8 %v5640
    %v5642 = vlaneseq
    %v5643 = vshrl.u32 %v5642, 7
    %v5644 = vsub.s32 %v5641, %v5643
    %v5645 = vrot.slane %v5631, %v5644
    %v5646 = vcombine.low %v5481, %v5485
    %v5647 = vcombine.high %v5481, %v5485
    %v5649 = vunpack.c.l.s4 1983009808
    %v5650 = vunpack.c.0.s8 %v5649
    %v5651 = vlaneseq
    %v5652 = vshrl.u32 %v5651, 7
    %v5653 = vsub.s32 %v5650, %v5652
    %v5654 = vrot.slane %v5646, %v5653
    %v5656 = vunpack.c.l.s4 1983009808
    %v5657 = vunpack.c.0.s8 %v5656
    %v5658 = vlaneseq
    %v5659 = vshrl.u32 %v5658, 7
    %v5660 = vsub.s32 %v5657, %v5659
    %v5661 = vrot.slane %v5647, %v5660
    %v5662 = vcombine.low %v5487, %v5491
    %v5663 = vcombine.high %v5487, %v5491
    %v5665 = vunpack.c.l.s4 1983009808
    %v5666 = vunpack.c.0.s8 %v5665
    %v5667 = vlaneseq
    %v5668 = vshrl.u32 %v5667, 7
    %v5669 = vsub.s32 %v5666, %v5668
    %v5670 = vrot.slane %v5662, %v5669
    %v5672 = vunpack.c.l.s4 1983009808
    %v5673 = vunpack.c.0.s8 %v5672
    %v5674 = vlaneseq
    %v5675 = vshrl.u32 %v5674, 7
    %v5676 = vsub.s32 %v5673, %v5675
    %v5677 = vrot.slane %v5663, %v5676
    %v5678 = vcombine.low %v5489, %v5493
    %v5679 = vcombine.high %v5489, %v5493
    %v5681 = vunpack.c.l.s4 1983009808
    %v5682 = vunpack.c.0.s8 %v5681
    %v5683 = vlaneseq
    %v5684 = vshrl.u32 %v5683, 7
    %v5685 = vsub.s32 %v5682, %v5684
    %v5686 = vrot.slane %v5678, %v5685
    %v5688 = vunpack.c.l.s4 1983009808
    %v5689 = vunpack.c.0.s8 %v5688
    %v5690 = vlaneseq
    %v5691 = vshrl.u32 %v5690, 7
    %v5692 = vsub.s32 %v5689, %v5691
    %v5693 = vrot.slane %v5679, %v5692
    %v5694 = vcombine.low %v5638, %v5654
    %v5695 = vcombine.high %v5638, %v5654
    %v5697 = vunpack.c.l.s4 1934713408
    %v5698 = vunpack.c.0.s8 %v5697
    %v5699 = vlaneseq
    %v5700 = vshrl.u32 %v5699, 7
    %v5701 = vsub.s32 %v5698, %v5700
    %v5702 = vrot.slane %v5694, %v5701
    %v5704 = vunpack.c.l.s4 1934713408
    %v5705 = vunpack.c.0.s8 %v5704
    %v5706 = vlaneseq
    %v5707 = vshrl.u32 %v5706, 7
    %v5708 = vsub.s32 %v5705, %v5707
    %v5709 = vrot.slane %v5695, %v5708
    %v5710 = vcombine.low %v5645, %v5661
    %v5711 = vcombine.high %v5645, %v5661
    %v5713 = vunpack.c.l.s4 1934713408
    %v5714 = vunpack.c.0.s8 %v5713
    %v5715 = vlaneseq
    %v5716 = vshrl.u32 %v5715, 7
    %v5717 = vsub.s32 %v5714, %v5716
    %v5718 = vrot.slane %v5710, %v5717
    %v5720 = vunpack.c.l.s4 1934713408
    %v5721 = vunpack.c.0.s8 %v5720
    %v5722 = vlaneseq
    %v5723 = vshrl.u32 %v5722, 7
    %v5724 = vsub.s32 %v5721, %v5723
    %v5725 = vrot.slane %v5711, %v5724
    %v5726 = vcombine.low %v5670, %v5686
    %v5727 = vcombine.high %v5670, %v5686
    %v5729 = vunpack.c.l.s4 1934713408
    %v5730 = vunpack.c.0.s8 %v5729
    %v5731 = vlaneseq
    %v5732 = vshrl.u32 %v5731, 7
    %v5733 = vsub.s32 %v5730, %v5732
    %v5734 = vrot.slane %v5726, %v5733
    %v5736 = vunpack.c.l.s4 1934713408
    %v5737 = vunpack.c.0.s8 %v5736
    %v5738 = vlaneseq
    %v5739 = vshrl.u32 %v5738, 7
    %v5740 = vsub.s32 %v5737, %v5739
    %v5741 = vrot.slane %v5727, %v5740
    %v5742 = vcombine.low %v5677, %v5693
    %v5743 = vcombine.high %v5677, %v5693
    %v5745 = vunpack.c.l.s4 1934713408
    %v5746 = vunpack.c.0.s8 %v5745
    %v5747 = vlaneseq
    %v5748 = vshrl.u32 %v5747, 7
    %v5749 = vsub.s32 %v5746, %v5748
    %v5750 = vrot.slane %v5742, %v5749
    %v5752 = vunpack.c.l.s4 1934713408
    %v5753 = vunpack.c.0.s8 %v5752
    %v5754 = vlaneseq
    %v5755 = vshrl.u32 %v5754, 7
    %v5756 = vsub.s32 %v5753, %v5755
    %v5757 = vrot.slane %v5743, %v5756
    %v5758 = vcombine.low %v5702, %v5734
    %v5759 = vcombine.high %v5702, %v5734
    %v5760 = vcombine.low %v5709, %v5741
    %v5761 = vcombine.high %v5709, %v5741
    %v5762 = vcombine.low %v5718, %v5750
    %v5763 = vcombine.high %v5718, %v5750
    %v5764 = vcombine.low %v5725, %v5757
    %v5765 = vcombine.high %v5725, %v5757
    %5767 = vrot.lane.b32.xlu0 %v5623, 16
    %v5768 = vpop.permute.xlu0 %5767
    %5771 = vrot.lane.b32.xlu0 %v5624, 32
    %v5772 = vpop.permute.xlu0 %5771
    %5775 = vrot.lane.b32.xlu0 %v5625, 48
    %v5776 = vpop.permute.xlu0 %5775
    %5779 = vrot.lane.b32.xlu0 %v5626, 64
    %v5780 = vpop.permute.xlu0 %5779
    %5783 = vrot.lane.b32.xlu0 %v5627, 80
    %v5784 = vpop.permute.xlu0 %5783
    %5787 = vrot.lane.b32.xlu0 %v5628, 96
    %v5788 = vpop.permute.xlu0 %5787
    %5791 = vrot.lane.b32.xlu0 %v5629, 112
    %v5792 = vpop.permute.xlu0 %5791
    %5795 = vrot.lane.b32.xlu0 %v5759, 16
    %v5796 = vpop.permute.xlu0 %5795
    %5799 = vrot.lane.b32.xlu0 %v5760, 32
    %v5800 = vpop.permute.xlu0 %5799
    %5803 = vrot.lane.b32.xlu0 %v5761, 48
    %v5804 = vpop.permute.xlu0 %5803
    %5807 = vrot.lane.b32.xlu0 %v5762, 64
    %v5808 = vpop.permute.xlu0 %5807
    %5811 = vrot.lane.b32.xlu0 %v5763, 80
    %v5812 = vpop.permute.xlu0 %5811
    %5815 = vrot.lane.b32.xlu0 %v5764, 96
    %v5816 = vpop.permute.xlu0 %5815
    %5819 = vrot.lane.b32.xlu0 %v5765, 112
    %v5820 = vpop.permute.xlu0 %5819
    %v5822 = vsel %vm397, %v5622, %v5768
    %v5823 = vsel %vm399, %v5822, %v5772
    %v5824 = vsel %vm401, %v5823, %v5776
    %v5825 = vsel %vm403, %v5824, %v5780
    %v5826 = vsel %vm405, %v5825, %v5784
    %v5827 = vsel %vm407, %v5826, %v5788
    %v5828 = vsel %vm409, %v5827, %v5792
    %v5829 = vsel %vm397, %v5758, %v5796
    %v5830 = vsel %vm399, %v5829, %v5800
    %v5831 = vsel %vm401, %v5830, %v5804
    %v5832 = vsel %vm403, %v5831, %v5808
    %v5833 = vsel %vm405, %v5832, %v5812
    %v5834 = vsel %vm407, %v5833, %v5816
    %v5835 = vsel %vm409, %v5834, %v5820
    %5852 = vrot.lane.b32.xlu0 %v5478, 127
    %v5853 = vpop.permute.xlu0 %5852
    %5854 = vrot.lane.b32.xlu0 %v5479, 127
    %v5855 = vpop.permute.xlu0 %5854
    %5856 = vrot.lane.b32.xlu0 %v5480, 127
    %v5857 = vpop.permute.xlu0 %5856
    %5858 = vrot.lane.b32.xlu0 %v5481, 127
    %v5859 = vpop.permute.xlu0 %5858
    %5860 = vrot.lane.b32.xlu0 %v5482, 127
    %v5861 = vpop.permute.xlu0 %5860
    %5862 = vrot.lane.b32.xlu0 %v5483, 127
    %v5863 = vpop.permute.xlu0 %5862
    %5864 = vrot.lane.b32.xlu0 %v5484, 127
    %v5865 = vpop.permute.xlu0 %5864
    %5866 = vrot.lane.b32.xlu0 %v5485, 127
    %v5867 = vpop.permute.xlu0 %5866
    %5868 = vrot.lane.b32.xlu0 %v5486, 127
    %v5869 = vpop.permute.xlu0 %5868
    %5870 = vrot.lane.b32.xlu0 %v5487, 127
    %v5871 = vpop.permute.xlu0 %5870
    %5872 = vrot.lane.b32.xlu0 %v5488, 127
    %v5873 = vpop.permute.xlu0 %5872
    %5874 = vrot.lane.b32.xlu0 %v5489, 127
    %v5875 = vpop.permute.xlu0 %5874
    %5876 = vrot.lane.b32.xlu0 %v5490, 127
    %v5877 = vpop.permute.xlu0 %5876
    %5878 = vrot.lane.b32.xlu0 %v5491, 127
    %v5879 = vpop.permute.xlu0 %5878
    %5880 = vrot.lane.b32.xlu0 %v5492, 127
    %v5881 = vpop.permute.xlu0 %5880
    %5882 = vrot.lane.b32.xlu0 %v5493, 127
    %v5883 = vpop.permute.xlu0 %5882
    %v5900 = vcombine.low %v5853, %v5861
    %v5901 = vcombine.high %v5853, %v5861
    %v5903 = vunpack.c.l.s4 1983009808
    %v5904 = vunpack.c.0.s8 %v5903
    %v5905 = vlaneseq
    %v5906 = vshrl.u32 %v5905, 7
    %v5907 = vsub.s32 %v5904, %v5906
    %v5908 = vrot.slane %v5900, %v5907
    %v5910 = vunpack.c.l.s4 1983009808
    %v5911 = vunpack.c.0.s8 %v5910
    %v5912 = vlaneseq
    %v5913 = vshrl.u32 %v5912, 7
    %v5914 = vsub.s32 %v5911, %v5913
    %v5915 = vrot.slane %v5901, %v5914
    %v5916 = vcombine.low %v5857, %v5865
    %v5917 = vcombine.high %v5857, %v5865
    %v5919 = vunpack.c.l.s4 1983009808
    %v5920 = vunpack.c.0.s8 %v5919
    %v5921 = vlaneseq
    %v5922 = vshrl.u32 %v5921, 7
    %v5923 = vsub.s32 %v5920, %v5922
    %v5924 = vrot.slane %v5916, %v5923
    %v5926 = vunpack.c.l.s4 1983009808
    %v5927 = vunpack.c.0.s8 %v5926
    %v5928 = vlaneseq
    %v5929 = vshrl.u32 %v5928, 7
    %v5930 = vsub.s32 %v5927, %v5929
    %v5931 = vrot.slane %v5917, %v5930
    %v5932 = vcombine.low %v5869, %v5877
    %v5933 = vcombine.high %v5869, %v5877
    %v5935 = vunpack.c.l.s4 1983009808
    %v5936 = vunpack.c.0.s8 %v5935
    %v5937 = vlaneseq
    %v5938 = vshrl.u32 %v5937, 7
    %v5939 = vsub.s32 %v5936, %v5938
    %v5940 = vrot.slane %v5932, %v5939
    %v5942 = vunpack.c.l.s4 1983009808
    %v5943 = vunpack.c.0.s8 %v5942
    %v5944 = vlaneseq
    %v5945 = vshrl.u32 %v5944, 7
    %v5946 = vsub.s32 %v5943, %v5945
    %v5947 = vrot.slane %v5933, %v5946
    %v5948 = vcombine.low %v5873, %v5881
    %v5949 = vcombine.high %v5873, %v5881
    %v5951 = vunpack.c.l.s4 1983009808
    %v5952 = vunpack.c.0.s8 %v5951
    %v5953 = vlaneseq
    %v5954 = vshrl.u32 %v5953, 7
    %v5955 = vsub.s32 %v5952, %v5954
    %v5956 = vrot.slane %v5948, %v5955
    %v5958 = vunpack.c.l.s4 1983009808
    %v5959 = vunpack.c.0.s8 %v5958
    %v5960 = vlaneseq
    %v5961 = vshrl.u32 %v5960, 7
    %v5962 = vsub.s32 %v5959, %v5961
    %v5963 = vrot.slane %v5949, %v5962
    %v5964 = vcombine.low %v5908, %v5924
    %v5965 = vcombine.high %v5908, %v5924
    %v5967 = vunpack.c.l.s4 1934713408
    %v5968 = vunpack.c.0.s8 %v5967
    %v5969 = vlaneseq
    %v5970 = vshrl.u32 %v5969, 7
    %v5971 = vsub.s32 %v5968, %v5970
    %v5972 = vrot.slane %v5964, %v5971
    %v5974 = vunpack.c.l.s4 1934713408
    %v5975 = vunpack.c.0.s8 %v5974
    %v5976 = vlaneseq
    %v5977 = vshrl.u32 %v5976, 7
    %v5978 = vsub.s32 %v5975, %v5977
    %v5979 = vrot.slane %v5965, %v5978
    %v5980 = vcombine.low %v5915, %v5931
    %v5981 = vcombine.high %v5915, %v5931
    %v5983 = vunpack.c.l.s4 1934713408
    %v5984 = vunpack.c.0.s8 %v5983
    %v5985 = vlaneseq
    %v5986 = vshrl.u32 %v5985, 7
    %v5987 = vsub.s32 %v5984, %v5986
    %v5988 = vrot.slane %v5980, %v5987
    %v5990 = vunpack.c.l.s4 1934713408
    %v5991 = vunpack.c.0.s8 %v5990
    %v5992 = vlaneseq
    %v5993 = vshrl.u32 %v5992, 7
    %v5994 = vsub.s32 %v5991, %v5993
    %v5995 = vrot.slane %v5981, %v5994
    %v5996 = vcombine.low %v5940, %v5956
    %v5997 = vcombine.high %v5940, %v5956
    %v5999 = vunpack.c.l.s4 1934713408
    %v6000 = vunpack.c.0.s8 %v5999
    %v6001 = vlaneseq
    %v6002 = vshrl.u32 %v6001, 7
    %v6003 = vsub.s32 %v6000, %v6002
    %v6004 = vrot.slane %v5996, %v6003
    %v6006 = vunpack.c.l.s4 1934713408
    %v6007 = vunpack.c.0.s8 %v6006
    %v6008 = vlaneseq
    %v6009 = vshrl.u32 %v6008, 7
    %v6010 = vsub.s32 %v6007, %v6009
    %v6011 = vrot.slane %v5997, %v6010
    %v6012 = vcombine.low %v5947, %v5963
    %v6013 = vcombine.high %v5947, %v5963
    %v6015 = vunpack.c.l.s4 1934713408
    %v6016 = vunpack.c.0.s8 %v6015
    %v6017 = vlaneseq
    %v6018 = vshrl.u32 %v6017, 7
    %v6019 = vsub.s32 %v6016, %v6018
    %v6020 = vrot.slane %v6012, %v6019
    %v6022 = vunpack.c.l.s4 1934713408
    %v6023 = vunpack.c.0.s8 %v6022
    %v6024 = vlaneseq
    %v6025 = vshrl.u32 %v6024, 7
    %v6026 = vsub.s32 %v6023, %v6025
    %v6027 = vrot.slane %v6013, %v6026
    %v6028 = vcombine.low %v5972, %v6004
    %v6029 = vcombine.high %v5972, %v6004
    %v6030 = vcombine.low %v5979, %v6011
    %v6031 = vcombine.high %v5979, %v6011
    %v6032 = vcombine.low %v5988, %v6020
    %v6033 = vcombine.high %v5988, %v6020
    %v6034 = vcombine.low %v5995, %v6027
    %v6035 = vcombine.high %v5995, %v6027
    %v6036 = vcombine.low %v5855, %v5863
    %v6037 = vcombine.high %v5855, %v5863
    %v6039 = vunpack.c.l.s4 1983009808
    %v6040 = vunpack.c.0.s8 %v6039
    %v6041 = vlaneseq
    %v6042 = vshrl.u32 %v6041, 7
    %v6043 = vsub.s32 %v6040, %v6042
    %v6044 = vrot.slane %v6036, %v6043
    %v6046 = vunpack.c.l.s4 1983009808
    %v6047 = vunpack.c.0.s8 %v6046
    %v6048 = vlaneseq
    %v6049 = vshrl.u32 %v6048, 7
    %v6050 = vsub.s32 %v6047, %v6049
    %v6051 = vrot.slane %v6037, %v6050
    %v6052 = vcombine.low %v5859, %v5867
    %v6053 = vcombine.high %v5859, %v5867
    %v6055 = vunpack.c.l.s4 1983009808
    %v6056 = vunpack.c.0.s8 %v6055
    %v6057 = vlaneseq
    %v6058 = vshrl.u32 %v6057, 7
    %v6059 = vsub.s32 %v6056, %v6058
    %v6060 = vrot.slane %v6052, %v6059
    %v6062 = vunpack.c.l.s4 1983009808
    %v6063 = vunpack.c.0.s8 %v6062
    %v6064 = vlaneseq
    %v6065 = vshrl.u32 %v6064, 7
    %v6066 = vsub.s32 %v6063, %v6065
    %v6067 = vrot.slane %v6053, %v6066
    %v6068 = vcombine.low %v5871, %v5879
    %v6069 = vcombine.high %v5871, %v5879
    %v6071 = vunpack.c.l.s4 1983009808
    %v6072 = vunpack.c.0.s8 %v6071
    %v6073 = vlaneseq
    %v6074 = vshrl.u32 %v6073, 7
    %v6075 = vsub.s32 %v6072, %v6074
    %v6076 = vrot.slane %v6068, %v6075
    %v6078 = vunpack.c.l.s4 1983009808
    %v6079 = vunpack.c.0.s8 %v6078
    %v6080 = vlaneseq
    %v6081 = vshrl.u32 %v6080, 7
    %v6082 = vsub.s32 %v6079, %v6081
    %v6083 = vrot.slane %v6069, %v6082
    %v6084 = vcombine.low %v5875, %v5883
    %v6085 = vcombine.high %v5875, %v5883
    %v6087 = vunpack.c.l.s4 1983009808
    %v6088 = vunpack.c.0.s8 %v6087
    %v6089 = vlaneseq
    %v6090 = vshrl.u32 %v6089, 7
    %v6091 = vsub.s32 %v6088, %v6090
    %v6092 = vrot.slane %v6084, %v6091
    %v6094 = vunpack.c.l.s4 1983009808
    %v6095 = vunpack.c.0.s8 %v6094
    %v6096 = vlaneseq
    %v6097 = vshrl.u32 %v6096, 7
    %v6098 = vsub.s32 %v6095, %v6097
    %v6099 = vrot.slane %v6085, %v6098
    %v6100 = vcombine.low %v6044, %v6060
    %v6101 = vcombine.high %v6044, %v6060
    %v6103 = vunpack.c.l.s4 1934713408
    %v6104 = vunpack.c.0.s8 %v6103
    %v6105 = vlaneseq
    %v6106 = vshrl.u32 %v6105, 7
    %v6107 = vsub.s32 %v6104, %v6106
    %v6108 = vrot.slane %v6100, %v6107
    %v6110 = vunpack.c.l.s4 1934713408
    %v6111 = vunpack.c.0.s8 %v6110
    %v6112 = vlaneseq
    %v6113 = vshrl.u32 %v6112, 7
    %v6114 = vsub.s32 %v6111, %v6113
    %v6115 = vrot.slane %v6101, %v6114
    %v6116 = vcombine.low %v6051, %v6067
    %v6117 = vcombine.high %v6051, %v6067
    %v6119 = vunpack.c.l.s4 1934713408
    %v6120 = vunpack.c.0.s8 %v6119
    %v6121 = vlaneseq
    %v6122 = vshrl.u32 %v6121, 7
    %v6123 = vsub.s32 %v6120, %v6122
    %v6124 = vrot.slane %v6116, %v6123
    %v6126 = vunpack.c.l.s4 1934713408
    %v6127 = vunpack.c.0.s8 %v6126
    %v6128 = vlaneseq
    %v6129 = vshrl.u32 %v6128, 7
    %v6130 = vsub.s32 %v6127, %v6129
    %v6131 = vrot.slane %v6117, %v6130
    %v6132 = vcombine.low %v6076, %v6092
    %v6133 = vcombine.high %v6076, %v6092
    %v6135 = vunpack.c.l.s4 1934713408
    %v6136 = vunpack.c.0.s8 %v6135
    %v6137 = vlaneseq
    %v6138 = vshrl.u32 %v6137, 7
    %v6139 = vsub.s32 %v6136, %v6138
    %v6140 = vrot.slane %v6132, %v6139
    %v6142 = vunpack.c.l.s4 1934713408
    %v6143 = vunpack.c.0.s8 %v6142
    %v6144 = vlaneseq
    %v6145 = vshrl.u32 %v6144, 7
    %v6146 = vsub.s32 %v6143, %v6145
    %v6147 = vrot.slane %v6133, %v6146
    %v6148 = vcombine.low %v6083, %v6099
    %v6149 = vcombine.high %v6083, %v6099
    %v6151 = vunpack.c.l.s4 1934713408
    %v6152 = vunpack.c.0.s8 %v6151
    %v6153 = vlaneseq
    %v6154 = vshrl.u32 %v6153, 7
    %v6155 = vsub.s32 %v6152, %v6154
    %v6156 = vrot.slane %v6148, %v6155
    %v6158 = vunpack.c.l.s4 1934713408
    %v6159 = vunpack.c.0.s8 %v6158
    %v6160 = vlaneseq
    %v6161 = vshrl.u32 %v6160, 7
    %v6162 = vsub.s32 %v6159, %v6161
    %v6163 = vrot.slane %v6149, %v6162
    %v6164 = vcombine.low %v6108, %v6140
    %v6165 = vcombine.high %v6108, %v6140
    %v6166 = vcombine.low %v6115, %v6147
    %v6167 = vcombine.high %v6115, %v6147
    %v6168 = vcombine.low %v6124, %v6156
    %v6169 = vcombine.high %v6124, %v6156
    %v6170 = vcombine.low %v6131, %v6163
    %v6171 = vcombine.high %v6131, %v6163
    %6173 = vrot.lane.b32.xlu0 %v6029, 16
    %v6174 = vpop.permute.xlu0 %6173
    %6177 = vrot.lane.b32.xlu0 %v6030, 32
    %v6178 = vpop.permute.xlu0 %6177
    %6181 = vrot.lane.b32.xlu0 %v6031, 48
    %v6182 = vpop.permute.xlu0 %6181
    %6185 = vrot.lane.b32.xlu0 %v6032, 64
    %v6186 = vpop.permute.xlu0 %6185
    %6189 = vrot.lane.b32.xlu0 %v6033, 80
    %v6190 = vpop.permute.xlu0 %6189
    %6193 = vrot.lane.b32.xlu0 %v6034, 96
    %v6194 = vpop.permute.xlu0 %6193
    %6197 = vrot.lane.b32.xlu0 %v6035, 112
    %v6198 = vpop.permute.xlu0 %6197
    %6201 = vrot.lane.b32.xlu0 %v6165, 16
    %v6202 = vpop.permute.xlu0 %6201
    %6205 = vrot.lane.b32.xlu0 %v6166, 32
    %v6206 = vpop.permute.xlu0 %6205
    %6209 = vrot.lane.b32.xlu0 %v6167, 48
    %v6210 = vpop.permute.xlu0 %6209
    %6213 = vrot.lane.b32.xlu0 %v6168, 64
    %v6214 = vpop.permute.xlu0 %6213
    %6217 = vrot.lane.b32.xlu0 %v6169, 80
    %v6218 = vpop.permute.xlu0 %6217
    %6221 = vrot.lane.b32.xlu0 %v6170, 96
    %v6222 = vpop.permute.xlu0 %6221
    %6225 = vrot.lane.b32.xlu0 %v6171, 112
    %v6226 = vpop.permute.xlu0 %6225
    %v6228 = vsel %vm397, %v6028, %v6174
    %v6229 = vsel %vm399, %v6228, %v6178
    %v6230 = vsel %vm401, %v6229, %v6182
    %v6231 = vsel %vm403, %v6230, %v6186
    %v6232 = vsel %vm405, %v6231, %v6190
    %v6233 = vsel %vm407, %v6232, %v6194
    %v6234 = vsel %vm409, %v6233, %v6198
    %v6235 = vsel %vm397, %v6164, %v6202
    %v6236 = vsel %vm399, %v6235, %v6206
    %v6237 = vsel %vm401, %v6236, %v6210
    %v6238 = vsel %vm403, %v6237, %v6214
    %v6239 = vsel %vm405, %v6238, %v6218
    %v6240 = vsel %vm407, %v6239, %v6222
    %v6241 = vsel %vm409, %v6240, %v6226
    %6242 = vrot.lane.b32.xlu0 %v5478, 126
    %v6243 = vpop.permute.xlu0 %6242
    %6244 = vrot.lane.b32.xlu0 %v5479, 126
    %v6245 = vpop.permute.xlu0 %6244
    %6246 = vrot.lane.b32.xlu0 %v5480, 126
    %v6247 = vpop.permute.xlu0 %6246
    %6248 = vrot.lane.b32.xlu0 %v5481, 126
    %v6249 = vpop.permute.xlu0 %6248
    %6250 = vrot.lane.b32.xlu0 %v5482, 126
    %v6251 = vpop.permute.xlu0 %6250
    %6252 = vrot.lane.b32.xlu0 %v5483, 126
    %v6253 = vpop.permute.xlu0 %6252
    %6254 = vrot.lane.b32.xlu0 %v5484, 126
    %v6255 = vpop.permute.xlu0 %6254
    %6256 = vrot.lane.b32.xlu0 %v5485, 126
    %v6257 = vpop.permute.xlu0 %6256
    %6258 = vrot.lane.b32.xlu0 %v5486, 126
    %v6259 = vpop.permute.xlu0 %6258
    %6260 = vrot.lane.b32.xlu0 %v5487, 126
    %v6261 = vpop.permute.xlu0 %6260
    %6262 = vrot.lane.b32.xlu0 %v5488, 126
    %v6263 = vpop.permute.xlu0 %6262
    %6264 = vrot.lane.b32.xlu0 %v5489, 126
    %v6265 = vpop.permute.xlu0 %6264
    %6266 = vrot.lane.b32.xlu0 %v5490, 126
    %v6267 = vpop.permute.xlu0 %6266
    %6268 = vrot.lane.b32.xlu0 %v5491, 126
    %v6269 = vpop.permute.xlu0 %6268
    %6270 = vrot.lane.b32.xlu0 %v5492, 126
    %v6271 = vpop.permute.xlu0 %6270
    %6272 = vrot.lane.b32.xlu0 %v5493, 126
    %v6273 = vpop.permute.xlu0 %6272
    %v6290 = vcombine.low %v6243, %v6251
    %v6291 = vcombine.high %v6243, %v6251
    %v6293 = vunpack.c.l.s4 1983009808
    %v6294 = vunpack.c.0.s8 %v6293
    %v6295 = vlaneseq
    %v6296 = vshrl.u32 %v6295, 7
    %v6297 = vsub.s32 %v6294, %v6296
    %v6298 = vrot.slane %v6290, %v6297
    %v6300 = vunpack.c.l.s4 1983009808
    %v6301 = vunpack.c.0.s8 %v6300
    %v6302 = vlaneseq
    %v6303 = vshrl.u32 %v6302, 7
    %v6304 = vsub.s32 %v6301, %v6303
    %v6305 = vrot.slane %v6291, %v6304
    %v6306 = vcombine.low %v6247, %v6255
    %v6307 = vcombine.high %v6247, %v6255
    %v6309 = vunpack.c.l.s4 1983009808
    %v6310 = vunpack.c.0.s8 %v6309
    %v6311 = vlaneseq
    %v6312 = vshrl.u32 %v6311, 7
    %v6313 = vsub.s32 %v6310, %v6312
    %v6314 = vrot.slane %v6306, %v6313
    %v6316 = vunpack.c.l.s4 1983009808
    %v6317 = vunpack.c.0.s8 %v6316
    %v6318 = vlaneseq
    %v6319 = vshrl.u32 %v6318, 7
    %v6320 = vsub.s32 %v6317, %v6319
    %v6321 = vrot.slane %v6307, %v6320
    %v6322 = vcombine.low %v6259, %v6267
    %v6323 = vcombine.high %v6259, %v6267
    %v6325 = vunpack.c.l.s4 1983009808
    %v6326 = vunpack.c.0.s8 %v6325
    %v6327 = vlaneseq
    %v6328 = vshrl.u32 %v6327, 7
    %v6329 = vsub.s32 %v6326, %v6328
    %v6330 = vrot.slane %v6322, %v6329
    %v6332 = vunpack.c.l.s4 1983009808
    %v6333 = vunpack.c.0.s8 %v6332
    %v6334 = vlaneseq
    %v6335 = vshrl.u32 %v6334, 7
    %v6336 = vsub.s32 %v6333, %v6335
    %v6337 = vrot.slane %v6323, %v6336
    %v6338 = vcombine.low %v6263, %v6271
    %v6339 = vcombine.high %v6263, %v6271
    %v6341 = vunpack.c.l.s4 1983009808
    %v6342 = vunpack.c.0.s8 %v6341
    %v6343 = vlaneseq
    %v6344 = vshrl.u32 %v6343, 7
    %v6345 = vsub.s32 %v6342, %v6344
    %v6346 = vrot.slane %v6338, %v6345
    %v6348 = vunpack.c.l.s4 1983009808
    %v6349 = vunpack.c.0.s8 %v6348
    %v6350 = vlaneseq
    %v6351 = vshrl.u32 %v6350, 7
    %v6352 = vsub.s32 %v6349, %v6351
    %v6353 = vrot.slane %v6339, %v6352
    %v6354 = vcombine.low %v6298, %v6314
    %v6355 = vcombine.high %v6298, %v6314
    %v6357 = vunpack.c.l.s4 1934713408
    %v6358 = vunpack.c.0.s8 %v6357
    %v6359 = vlaneseq
    %v6360 = vshrl.u32 %v6359, 7
    %v6361 = vsub.s32 %v6358, %v6360
    %v6362 = vrot.slane %v6354, %v6361
    %v6364 = vunpack.c.l.s4 1934713408
    %v6365 = vunpack.c.0.s8 %v6364
    %v6366 = vlaneseq
    %v6367 = vshrl.u32 %v6366, 7
    %v6368 = vsub.s32 %v6365, %v6367
    %v6369 = vrot.slane %v6355, %v6368
    %v6370 = vcombine.low %v6305, %v6321
    %v6371 = vcombine.high %v6305, %v6321
    %v6373 = vunpack.c.l.s4 1934713408
    %v6374 = vunpack.c.0.s8 %v6373
    %v6375 = vlaneseq
    %v6376 = vshrl.u32 %v6375, 7
    %v6377 = vsub.s32 %v6374, %v6376
    %v6378 = vrot.slane %v6370, %v6377
    %v6380 = vunpack.c.l.s4 1934713408
    %v6381 = vunpack.c.0.s8 %v6380
    %v6382 = vlaneseq
    %v6383 = vshrl.u32 %v6382, 7
    %v6384 = vsub.s32 %v6381, %v6383
    %v6385 = vrot.slane %v6371, %v6384
    %v6386 = vcombine.low %v6330, %v6346
    %v6387 = vcombine.high %v6330, %v6346
    %v6389 = vunpack.c.l.s4 1934713408
    %v6390 = vunpack.c.0.s8 %v6389
    %v6391 = vlaneseq
    %v6392 = vshrl.u32 %v6391, 7
    %v6393 = vsub.s32 %v6390, %v6392
    %v6394 = vrot.slane %v6386, %v6393
    %v6396 = vunpack.c.l.s4 1934713408
    %v6397 = vunpack.c.0.s8 %v6396
    %v6398 = vlaneseq
    %v6399 = vshrl.u32 %v6398, 7
    %v6400 = vsub.s32 %v6397, %v6399
    %v6401 = vrot.slane %v6387, %v6400
    %v6402 = vcombine.low %v6337, %v6353
    %v6403 = vcombine.high %v6337, %v6353
    %v6405 = vunpack.c.l.s4 1934713408
    %v6406 = vunpack.c.0.s8 %v6405
    %v6407 = vlaneseq
    %v6408 = vshrl.u32 %v6407, 7
    %v6409 = vsub.s32 %v6406, %v6408
    %v6410 = vrot.slane %v6402, %v6409
    %v6412 = vunpack.c.l.s4 1934713408
    %v6413 = vunpack.c.0.s8 %v6412
    %v6414 = vlaneseq
    %v6415 = vshrl.u32 %v6414, 7
    %v6416 = vsub.s32 %v6413, %v6415
    %v6417 = vrot.slane %v6403, %v6416
    %v6418 = vcombine.low %v6362, %v6394
    %v6419 = vcombine.high %v6362, %v6394
    %v6420 = vcombine.low %v6369, %v6401
    %v6421 = vcombine.high %v6369, %v6401
    %v6422 = vcombine.low %v6378, %v6410
    %v6423 = vcombine.high %v6378, %v6410
    %v6424 = vcombine.low %v6385, %v6417
    %v6425 = vcombine.high %v6385, %v6417
    %v6426 = vcombine.low %v6245, %v6253
    %v6427 = vcombine.high %v6245, %v6253
    %v6429 = vunpack.c.l.s4 1983009808
    %v6430 = vunpack.c.0.s8 %v6429
    %v6431 = vlaneseq
    %v6432 = vshrl.u32 %v6431, 7
    %v6433 = vsub.s32 %v6430, %v6432
    %v6434 = vrot.slane %v6426, %v6433
    %v6436 = vunpack.c.l.s4 1983009808
    %v6437 = vunpack.c.0.s8 %v6436
    %v6438 = vlaneseq
    %v6439 = vshrl.u32 %v6438, 7
    %v6440 = vsub.s32 %v6437, %v6439
    %v6441 = vrot.slane %v6427, %v6440
    %v6442 = vcombine.low %v6249, %v6257
    %v6443 = vcombine.high %v6249, %v6257
    %v6445 = vunpack.c.l.s4 1983009808
    %v6446 = vunpack.c.0.s8 %v6445
    %v6447 = vlaneseq
    %v6448 = vshrl.u32 %v6447, 7
    %v6449 = vsub.s32 %v6446, %v6448
    %v6450 = vrot.slane %v6442, %v6449
    %v6452 = vunpack.c.l.s4 1983009808
    %v6453 = vunpack.c.0.s8 %v6452
    %v6454 = vlaneseq
    %v6455 = vshrl.u32 %v6454, 7
    %v6456 = vsub.s32 %v6453, %v6455
    %v6457 = vrot.slane %v6443, %v6456
    %v6458 = vcombine.low %v6261, %v6269
    %v6459 = vcombine.high %v6261, %v6269
    %v6461 = vunpack.c.l.s4 1983009808
    %v6462 = vunpack.c.0.s8 %v6461
    %v6463 = vlaneseq
    %v6464 = vshrl.u32 %v6463, 7
    %v6465 = vsub.s32 %v6462, %v6464
    %v6466 = vrot.slane %v6458, %v6465
    %v6468 = vunpack.c.l.s4 1983009808
    %v6469 = vunpack.c.0.s8 %v6468
    %v6470 = vlaneseq
    %v6471 = vshrl.u32 %v6470, 7
    %v6472 = vsub.s32 %v6469, %v6471
    %v6473 = vrot.slane %v6459, %v6472
    %v6474 = vcombine.low %v6265, %v6273
    %v6475 = vcombine.high %v6265, %v6273
    %v6477 = vunpack.c.l.s4 1983009808
    %v6478 = vunpack.c.0.s8 %v6477
    %v6479 = vlaneseq
    %v6480 = vshrl.u32 %v6479, 7
    %v6481 = vsub.s32 %v6478, %v6480
    %v6482 = vrot.slane %v6474, %v6481
    %v6484 = vunpack.c.l.s4 1983009808
    %v6485 = vunpack.c.0.s8 %v6484
    %v6486 = vlaneseq
    %v6487 = vshrl.u32 %v6486, 7
    %v6488 = vsub.s32 %v6485, %v6487
    %v6489 = vrot.slane %v6475, %v6488
    %v6490 = vcombine.low %v6434, %v6450
    %v6491 = vcombine.high %v6434, %v6450
    %v6493 = vunpack.c.l.s4 1934713408
    %v6494 = vunpack.c.0.s8 %v6493
    %v6495 = vlaneseq
    %v6496 = vshrl.u32 %v6495, 7
    %v6497 = vsub.s32 %v6494, %v6496
    %v6498 = vrot.slane %v6490, %v6497
    %v6500 = vunpack.c.l.s4 1934713408
    %v6501 = vunpack.c.0.s8 %v6500
    %v6502 = vlaneseq
    %v6503 = vshrl.u32 %v6502, 7
    %v6504 = vsub.s32 %v6501, %v6503
    %v6505 = vrot.slane %v6491, %v6504
    %v6506 = vcombine.low %v6441, %v6457
    %v6507 = vcombine.high %v6441, %v6457
    %v6509 = vunpack.c.l.s4 1934713408
    %v6510 = vunpack.c.0.s8 %v6509
    %v6511 = vlaneseq
    %v6512 = vshrl.u32 %v6511, 7
    %v6513 = vsub.s32 %v6510, %v6512
    %v6514 = vrot.slane %v6506, %v6513
    %v6516 = vunpack.c.l.s4 1934713408
    %v6517 = vunpack.c.0.s8 %v6516
    %v6518 = vlaneseq
    %v6519 = vshrl.u32 %v6518, 7
    %v6520 = vsub.s32 %v6517, %v6519
    %v6521 = vrot.slane %v6507, %v6520
    %v6522 = vcombine.low %v6466, %v6482
    %v6523 = vcombine.high %v6466, %v6482
    %v6525 = vunpack.c.l.s4 1934713408
    %v6526 = vunpack.c.0.s8 %v6525
    %v6527 = vlaneseq
    %v6528 = vshrl.u32 %v6527, 7
    %v6529 = vsub.s32 %v6526, %v6528
    %v6530 = vrot.slane %v6522, %v6529
    %v6532 = vunpack.c.l.s4 1934713408
    %v6533 = vunpack.c.0.s8 %v6532
    %v6534 = vlaneseq
    %v6535 = vshrl.u32 %v6534, 7
    %v6536 = vsub.s32 %v6533, %v6535
    %v6537 = vrot.slane %v6523, %v6536
    %v6538 = vcombine.low %v6473, %v6489
    %v6539 = vcombine.high %v6473, %v6489
    %v6541 = vunpack.c.l.s4 1934713408
    %v6542 = vunpack.c.0.s8 %v6541
    %v6543 = vlaneseq
    %v6544 = vshrl.u32 %v6543, 7
    %v6545 = vsub.s32 %v6542, %v6544
    %v6546 = vrot.slane %v6538, %v6545
    %v6548 = vunpack.c.l.s4 1934713408
    %v6549 = vunpack.c.0.s8 %v6548
    %v6550 = vlaneseq
    %v6551 = vshrl.u32 %v6550, 7
    %v6552 = vsub.s32 %v6549, %v6551
    %v6553 = vrot.slane %v6539, %v6552
    %v6554 = vcombine.low %v6498, %v6530
    %v6555 = vcombine.high %v6498, %v6530
    %v6556 = vcombine.low %v6505, %v6537
    %v6557 = vcombine.high %v6505, %v6537
    %v6558 = vcombine.low %v6514, %v6546
    %v6559 = vcombine.high %v6514, %v6546
    %v6560 = vcombine.low %v6521, %v6553
    %v6561 = vcombine.high %v6521, %v6553
    %6563 = vrot.lane.b32.xlu0 %v6419, 16
    %v6564 = vpop.permute.xlu0 %6563
    %6567 = vrot.lane.b32.xlu0 %v6420, 32
    %v6568 = vpop.permute.xlu0 %6567
    %6571 = vrot.lane.b32.xlu0 %v6421, 48
    %v6572 = vpop.permute.xlu0 %6571
    %6575 = vrot.lane.b32.xlu0 %v6422, 64
    %v6576 = vpop.permute.xlu0 %6575
    %6579 = vrot.lane.b32.xlu0 %v6423, 80
    %v6580 = vpop.permute.xlu0 %6579
    %6583 = vrot.lane.b32.xlu0 %v6424, 96
    %v6584 = vpop.permute.xlu0 %6583
    %6587 = vrot.lane.b32.xlu0 %v6425, 112
    %v6588 = vpop.permute.xlu0 %6587
    %6591 = vrot.lane.b32.xlu0 %v6555, 16
    %v6592 = vpop.permute.xlu0 %6591
    %6595 = vrot.lane.b32.xlu0 %v6556, 32
    %v6596 = vpop.permute.xlu0 %6595
    %6599 = vrot.lane.b32.xlu0 %v6557, 48
    %v6600 = vpop.permute.xlu0 %6599
    %6603 = vrot.lane.b32.xlu0 %v6558, 64
    %v6604 = vpop.permute.xlu0 %6603
    %6607 = vrot.lane.b32.xlu0 %v6559, 80
    %v6608 = vpop.permute.xlu0 %6607
    %6611 = vrot.lane.b32.xlu0 %v6560, 96
    %v6612 = vpop.permute.xlu0 %6611
    %6615 = vrot.lane.b32.xlu0 %v6561, 112
    %v6616 = vpop.permute.xlu0 %6615
    %v6618 = vsel %vm397, %v6418, %v6564
    %v6619 = vsel %vm399, %v6618, %v6568
    %v6620 = vsel %vm401, %v6619, %v6572
    %v6621 = vsel %vm403, %v6620, %v6576
    %v6622 = vsel %vm405, %v6621, %v6580
    %v6623 = vsel %vm407, %v6622, %v6584
    %v6624 = vsel %vm409, %v6623, %v6588
    %v6625 = vsel %vm397, %v6554, %v6592
    %v6626 = vsel %vm399, %v6625, %v6596
    %v6627 = vsel %vm401, %v6626, %v6600
    %v6628 = vsel %vm403, %v6627, %v6604
    %v6629 = vsel %vm405, %v6628, %v6608
    %v6630 = vsel %vm407, %v6629, %v6612
    %v6631 = vsel %vm409, %v6630, %v6616
    %v6632 = vld [vmem:[#allocation3 + $0x1] sm:$0xff]
    %v6633 = vld [vmem:[#allocation3 + $0x9] sm:$0xff]
    %v6634 = vld [vmem:[#allocation3 + $0x19] sm:$0xff]
    %v6635 = vld [vmem:[#allocation3 + $0x21] sm:$0xff]
    %v6636 = vld [vmem:[#allocation3 + $0x31] sm:$0xff]
    %v6637 = vld [vmem:[#allocation3 + $0x39] sm:$0xff]
    %v6638 = vld [vmem:[#allocation3 + $0x49] sm:$0xff]
    %v6639 = vld [vmem:[#allocation3 + $0x51] sm:$0xff]
    %v6640 = vld [vmem:[#allocation3 + $0x61] sm:$0xff]
    %v6641 = vld [vmem:[#allocation3 + $0x69] sm:$0xff]
    %v6642 = vld [vmem:[#allocation3 + $0x79] sm:$0xff]
    %v6643 = vld [vmem:[#allocation3 + $0x81] sm:$0xff]
    %v6644 = vld [vmem:[#allocation3 + $0x91] sm:$0xff]
    %v6645 = vld [vmem:[#allocation3 + $0x99] sm:$0xff]
    %v6646 = vld [vmem:[#allocation3 + $0xa9] sm:$0xff]
    %v6647 = vld [vmem:[#allocation3 + $0xb1] sm:$0xff]
    %v6648 = vcombine.low %v6632, %v6636
    %v6649 = vcombine.high %v6632, %v6636
    %v6651 = vunpack.c.l.s4 1983009808
    %v6652 = vunpack.c.0.s8 %v6651
    %v6653 = vlaneseq
    %v6654 = vshrl.u32 %v6653, 7
    %v6655 = vsub.s32 %v6652, %v6654
    %v6656 = vrot.slane %v6648, %v6655
    %v6658 = vunpack.c.l.s4 1983009808
    %v6659 = vunpack.c.0.s8 %v6658
    %v6660 = vlaneseq
    %v6661 = vshrl.u32 %v6660, 7
    %v6662 = vsub.s32 %v6659, %v6661
    %v6663 = vrot.slane %v6649, %v6662
    %v6664 = vcombine.low %v6634, %v6638
    %v6665 = vcombine.high %v6634, %v6638
    %v6667 = vunpack.c.l.s4 1983009808
    %v6668 = vunpack.c.0.s8 %v6667
    %v6669 = vlaneseq
    %v6670 = vshrl.u32 %v6669, 7
    %v6671 = vsub.s32 %v6668, %v6670
    %v6672 = vrot.slane %v6664, %v6671
    %v6674 = vunpack.c.l.s4 1983009808
    %v6675 = vunpack.c.0.s8 %v6674
    %v6676 = vlaneseq
    %v6677 = vshrl.u32 %v6676, 7
    %v6678 = vsub.s32 %v6675, %v6677
    %v6679 = vrot.slane %v6665, %v6678
    %v6680 = vcombine.low %v6640, %v6644
    %v6681 = vcombine.high %v6640, %v6644
    %v6683 = vunpack.c.l.s4 1983009808
    %v6684 = vunpack.c.0.s8 %v6683
    %v6685 = vlaneseq
    %v6686 = vshrl.u32 %v6685, 7
    %v6687 = vsub.s32 %v6684, %v6686
    %v6688 = vrot.slane %v6680, %v6687
    %v6690 = vunpack.c.l.s4 1983009808
    %v6691 = vunpack.c.0.s8 %v6690
    %v6692 = vlaneseq
    %v6693 = vshrl.u32 %v6692, 7
    %v6694 = vsub.s32 %v6691, %v6693
    %v6695 = vrot.slane %v6681, %v6694
    %v6696 = vcombine.low %v6642, %v6646
    %v6697 = vcombine.high %v6642, %v6646
    %v6699 = vunpack.c.l.s4 1983009808
    %v6700 = vunpack.c.0.s8 %v6699
    %v6701 = vlaneseq
    %v6702 = vshrl.u32 %v6701, 7
    %v6703 = vsub.s32 %v6700, %v6702
    %v6704 = vrot.slane %v6696, %v6703
    %v6706 = vunpack.c.l.s4 1983009808
    %v6707 = vunpack.c.0.s8 %v6706
    %v6708 = vlaneseq
    %v6709 = vshrl.u32 %v6708, 7
    %v6710 = vsub.s32 %v6707, %v6709
    %v6711 = vrot.slane %v6697, %v6710
    %v6712 = vcombine.low %v6656, %v6672
    %v6713 = vcombine.high %v6656, %v6672
    %v6715 = vunpack.c.l.s4 1934713408
    %v6716 = vunpack.c.0.s8 %v6715
    %v6717 = vlaneseq
    %v6718 = vshrl.u32 %v6717, 7
    %v6719 = vsub.s32 %v6716, %v6718
    %v6720 = vrot.slane %v6712, %v6719
    %v6722 = vunpack.c.l.s4 1934713408
    %v6723 = vunpack.c.0.s8 %v6722
    %v6724 = vlaneseq
    %v6725 = vshrl.u32 %v6724, 7
    %v6726 = vsub.s32 %v6723, %v6725
    %v6727 = vrot.slane %v6713, %v6726
    %v6728 = vcombine.low %v6663, %v6679
    %v6729 = vcombine.high %v6663, %v6679
    %v6731 = vunpack.c.l.s4 1934713408
    %v6732 = vunpack.c.0.s8 %v6731
    %v6733 = vlaneseq
    %v6734 = vshrl.u32 %v6733, 7
    %v6735 = vsub.s32 %v6732, %v6734
    %v6736 = vrot.slane %v6728, %v6735
    %v6738 = vunpack.c.l.s4 1934713408
    %v6739 = vunpack.c.0.s8 %v6738
    %v6740 = vlaneseq
    %v6741 = vshrl.u32 %v6740, 7
    %v6742 = vsub.s32 %v6739, %v6741
    %v6743 = vrot.slane %v6729, %v6742
    %v6744 = vcombine.low %v6688, %v6704
    %v6745 = vcombine.high %v6688, %v6704
    %v6747 = vunpack.c.l.s4 1934713408
    %v6748 = vunpack.c.0.s8 %v6747
    %v6749 = vlaneseq
    %v6750 = vshrl.u32 %v6749, 7
    %v6751 = vsub.s32 %v6748, %v6750
    %v6752 = vrot.slane %v6744, %v6751
    %v6754 = vunpack.c.l.s4 1934713408
    %v6755 = vunpack.c.0.s8 %v6754
    %v6756 = vlaneseq
    %v6757 = vshrl.u32 %v6756, 7
    %v6758 = vsub.s32 %v6755, %v6757
    %v6759 = vrot.slane %v6745, %v6758
    %v6760 = vcombine.low %v6695, %v6711
    %v6761 = vcombine.high %v6695, %v6711
    %v6763 = vunpack.c.l.s4 1934713408
    %v6764 = vunpack.c.0.s8 %v6763
    %v6765 = vlaneseq
    %v6766 = vshrl.u32 %v6765, 7
    %v6767 = vsub.s32 %v6764, %v6766
    %v6768 = vrot.slane %v6760, %v6767
    %v6770 = vunpack.c.l.s4 1934713408
    %v6771 = vunpack.c.0.s8 %v6770
    %v6772 = vlaneseq
    %v6773 = vshrl.u32 %v6772, 7
    %v6774 = vsub.s32 %v6771, %v6773
    %v6775 = vrot.slane %v6761, %v6774
    %v6776 = vcombine.low %v6720, %v6752
    %v6777 = vcombine.high %v6720, %v6752
    %v6778 = vcombine.low %v6727, %v6759
    %v6779 = vcombine.high %v6727, %v6759
    %v6780 = vcombine.low %v6736, %v6768
    %v6781 = vcombine.high %v6736, %v6768
    %v6782 = vcombine.low %v6743, %v6775
    %v6783 = vcombine.high %v6743, %v6775
    %v6784 = vcombine.low %v6633, %v6637
    %v6785 = vcombine.high %v6633, %v6637
    %v6787 = vunpack.c.l.s4 1983009808
    %v6788 = vunpack.c.0.s8 %v6787
    %v6789 = vlaneseq
    %v6790 = vshrl.u32 %v6789, 7
    %v6791 = vsub.s32 %v6788, %v6790
    %v6792 = vrot.slane %v6784, %v6791
    %v6794 = vunpack.c.l.s4 1983009808
    %v6795 = vunpack.c.0.s8 %v6794
    %v6796 = vlaneseq
    %v6797 = vshrl.u32 %v6796, 7
    %v6798 = vsub.s32 %v6795, %v6797
    %v6799 = vrot.slane %v6785, %v6798
    %v6800 = vcombine.low %v6635, %v6639
    %v6801 = vcombine.high %v6635, %v6639
    %v6803 = vunpack.c.l.s4 1983009808
    %v6804 = vunpack.c.0.s8 %v6803
    %v6805 = vlaneseq
    %v6806 = vshrl.u32 %v6805, 7
    %v6807 = vsub.s32 %v6804, %v6806
    %v6808 = vrot.slane %v6800, %v6807
    %v6810 = vunpack.c.l.s4 1983009808
    %v6811 = vunpack.c.0.s8 %v6810
    %v6812 = vlaneseq
    %v6813 = vshrl.u32 %v6812, 7
    %v6814 = vsub.s32 %v6811, %v6813
    %v6815 = vrot.slane %v6801, %v6814
    %v6816 = vcombine.low %v6641, %v6645
    %v6817 = vcombine.high %v6641, %v6645
    %v6819 = vunpack.c.l.s4 1983009808
    %v6820 = vunpack.c.0.s8 %v6819
    %v6821 = vlaneseq
    %v6822 = vshrl.u32 %v6821, 7
    %v6823 = vsub.s32 %v6820, %v6822
    %v6824 = vrot.slane %v6816, %v6823
    %v6826 = vunpack.c.l.s4 1983009808
    %v6827 = vunpack.c.0.s8 %v6826
    %v6828 = vlaneseq
    %v6829 = vshrl.u32 %v6828, 7
    %v6830 = vsub.s32 %v6827, %v6829
    %v6831 = vrot.slane %v6817, %v6830
    %v6832 = vcombine.low %v6643, %v6647
    %v6833 = vcombine.high %v6643, %v6647
    %v6835 = vunpack.c.l.s4 1983009808
    %v6836 = vunpack.c.0.s8 %v6835
    %v6837 = vlaneseq
    %v6838 = vshrl.u32 %v6837, 7
    %v6839 = vsub.s32 %v6836, %v6838
    %v6840 = vrot.slane %v6832, %v6839
    %v6842 = vunpack.c.l.s4 1983009808
    %v6843 = vunpack.c.0.s8 %v6842
    %v6844 = vlaneseq
    %v6845 = vshrl.u32 %v6844, 7
    %v6846 = vsub.s32 %v6843, %v6845
    %v6847 = vrot.slane %v6833, %v6846
    %v6848 = vcombine.low %v6792, %v6808
    %v6849 = vcombine.high %v6792, %v6808
    %v6851 = vunpack.c.l.s4 1934713408
    %v6852 = vunpack.c.0.s8 %v6851
    %v6853 = vlaneseq
    %v6854 = vshrl.u32 %v6853, 7
    %v6855 = vsub.s32 %v6852, %v6854
    %v6856 = vrot.slane %v6848, %v6855
    %v6858 = vunpack.c.l.s4 1934713408
    %v6859 = vunpack.c.0.s8 %v6858
    %v6860 = vlaneseq
    %v6861 = vshrl.u32 %v6860, 7
    %v6862 = vsub.s32 %v6859, %v6861
    %v6863 = vrot.slane %v6849, %v6862
    %v6864 = vcombine.low %v6799, %v6815
    %v6865 = vcombine.high %v6799, %v6815
    %v6867 = vunpack.c.l.s4 1934713408
    %v6868 = vunpack.c.0.s8 %v6867
    %v6869 = vlaneseq
    %v6870 = vshrl.u32 %v6869, 7
    %v6871 = vsub.s32 %v6868, %v6870
    %v6872 = vrot.slane %v6864, %v6871
    %v6874 = vunpack.c.l.s4 1934713408
    %v6875 = vunpack.c.0.s8 %v6874
    %v6876 = vlaneseq
    %v6877 = vshrl.u32 %v6876, 7
    %v6878 = vsub.s32 %v6875, %v6877
    %v6879 = vrot.slane %v6865, %v6878
    %v6880 = vcombine.low %v6824, %v6840
    %v6881 = vcombine.high %v6824, %v6840
    %v6883 = vunpack.c.l.s4 1934713408
    %v6884 = vunpack.c.0.s8 %v6883
    %v6885 = vlaneseq
    %v6886 = vshrl.u32 %v6885, 7
    %v6887 = vsub.s32 %v6884, %v6886
    %v6888 = vrot.slane %v6880, %v6887
    %v6890 = vunpack.c.l.s4 1934713408
    %v6891 = vunpack.c.0.s8 %v6890
    %v6892 = vlaneseq
    %v6893 = vshrl.u32 %v6892, 7
    %v6894 = vsub.s32 %v6891, %v6893
    %v6895 = vrot.slane %v6881, %v6894
    %v6896 = vcombine.low %v6831, %v6847
    %v6897 = vcombine.high %v6831, %v6847
    %v6899 = vunpack.c.l.s4 1934713408
    %v6900 = vunpack.c.0.s8 %v6899
    %v6901 = vlaneseq
    %v6902 = vshrl.u32 %v6901, 7
    %v6903 = vsub.s32 %v6900, %v6902
    %v6904 = vrot.slane %v6896, %v6903
    %v6906 = vunpack.c.l.s4 1934713408
    %v6907 = vunpack.c.0.s8 %v6906
    %v6908 = vlaneseq
    %v6909 = vshrl.u32 %v6908, 7
    %v6910 = vsub.s32 %v6907, %v6909
    %v6911 = vrot.slane %v6897, %v6910
    %v6912 = vcombine.low %v6856, %v6888
    %v6913 = vcombine.high %v6856, %v6888
    %v6914 = vcombine.low %v6863, %v6895
    %v6915 = vcombine.high %v6863, %v6895
    %v6916 = vcombine.low %v6872, %v6904
    %v6917 = vcombine.high %v6872, %v6904
    %v6918 = vcombine.low %v6879, %v6911
    %v6919 = vcombine.high %v6879, %v6911
    %6921 = vrot.lane.b32.xlu0 %v6777, 16
    %v6922 = vpop.permute.xlu0 %6921
    %6925 = vrot.lane.b32.xlu0 %v6778, 32
    %v6926 = vpop.permute.xlu0 %6925
    %6929 = vrot.lane.b32.xlu0 %v6779, 48
    %v6930 = vpop.permute.xlu0 %6929
    %6933 = vrot.lane.b32.xlu0 %v6780, 64
    %v6934 = vpop.permute.xlu0 %6933
    %6937 = vrot.lane.b32.xlu0 %v6781, 80
    %v6938 = vpop.permute.xlu0 %6937
    %6941 = vrot.lane.b32.xlu0 %v6782, 96
    %v6942 = vpop.permute.xlu0 %6941
    %6945 = vrot.lane.b32.xlu0 %v6783, 112
    %v6946 = vpop.permute.xlu0 %6945
    %6949 = vrot.lane.b32.xlu0 %v6913, 16
    %v6950 = vpop.permute.xlu0 %6949
    %6953 = vrot.lane.b32.xlu0 %v6914, 32
    %v6954 = vpop.permute.xlu0 %6953
    %6957 = vrot.lane.b32.xlu0 %v6915, 48
    %v6958 = vpop.permute.xlu0 %6957
    %6961 = vrot.lane.b32.xlu0 %v6916, 64
    %v6962 = vpop.permute.xlu0 %6961
    %6965 = vrot.lane.b32.xlu0 %v6917, 80
    %v6966 = vpop.permute.xlu0 %6965
    %6969 = vrot.lane.b32.xlu0 %v6918, 96
    %v6970 = vpop.permute.xlu0 %6969
    %6973 = vrot.lane.b32.xlu0 %v6919, 112
    %v6974 = vpop.permute.xlu0 %6973
    %v6976 = vsel %vm397, %v6776, %v6922
    %v6977 = vsel %vm399, %v6976, %v6926
    %v6978 = vsel %vm401, %v6977, %v6930
    %v6979 = vsel %vm403, %v6978, %v6934
    %v6980 = vsel %vm405, %v6979, %v6938
    %v6981 = vsel %vm407, %v6980, %v6942
    %v6982 = vsel %vm409, %v6981, %v6946
    %v6983 = vsel %vm397, %v6912, %v6950
    %v6984 = vsel %vm399, %v6983, %v6954
    %v6985 = vsel %vm401, %v6984, %v6958
    %v6986 = vsel %vm403, %v6985, %v6962
    %v6987 = vsel %vm405, %v6986, %v6966
    %v6988 = vsel %vm407, %v6987, %v6970
    %v6989 = vsel %vm409, %v6988, %v6974
    %7006 = vrot.lane.b32.xlu0 %v6632, 127
    %v7007 = vpop.permute.xlu0 %7006
    %7008 = vrot.lane.b32.xlu0 %v6633, 127
    %v7009 = vpop.permute.xlu0 %7008
    %7010 = vrot.lane.b32.xlu0 %v6634, 127
    %v7011 = vpop.permute.xlu0 %7010
    %7012 = vrot.lane.b32.xlu0 %v6635, 127
    %v7013 = vpop.permute.xlu0 %7012
    %7014 = vrot.lane.b32.xlu0 %v6636, 127
    %v7015 = vpop.permute.xlu0 %7014
    %7016 = vrot.lane.b32.xlu0 %v6637, 127
    %v7017 = vpop.permute.xlu0 %7016
    %7018 = vrot.lane.b32.xlu0 %v6638, 127
    %v7019 = vpop.permute.xlu0 %7018
    %7020 = vrot.lane.b32.xlu0 %v6639, 127
    %v7021 = vpop.permute.xlu0 %7020
    %7022 = vrot.lane.b32.xlu0 %v6640, 127
    %v7023 = vpop.permute.xlu0 %7022
    %7024 = vrot.lane.b32.xlu0 %v6641, 127
    %v7025 = vpop.permute.xlu0 %7024
    %7026 = vrot.lane.b32.xlu0 %v6642, 127
    %v7027 = vpop.permute.xlu0 %7026
    %7028 = vrot.lane.b32.xlu0 %v6643, 127
    %v7029 = vpop.permute.xlu0 %7028
    %7030 = vrot.lane.b32.xlu0 %v6644, 127
    %v7031 = vpop.permute.xlu0 %7030
    %7032 = vrot.lane.b32.xlu0 %v6645, 127
    %v7033 = vpop.permute.xlu0 %7032
    %7034 = vrot.lane.b32.xlu0 %v6646, 127
    %v7035 = vpop.permute.xlu0 %7034
    %7036 = vrot.lane.b32.xlu0 %v6647, 127
    %v7037 = vpop.permute.xlu0 %7036
    %v7054 = vcombine.low %v7007, %v7015
    %v7055 = vcombine.high %v7007, %v7015
    %v7057 = vunpack.c.l.s4 1983009808
    %v7058 = vunpack.c.0.s8 %v7057
    %v7059 = vlaneseq
    %v7060 = vshrl.u32 %v7059, 7
    %v7061 = vsub.s32 %v7058, %v7060
    %v7062 = vrot.slane %v7054, %v7061
    %v7064 = vunpack.c.l.s4 1983009808
    %v7065 = vunpack.c.0.s8 %v7064
    %v7066 = vlaneseq
    %v7067 = vshrl.u32 %v7066, 7
    %v7068 = vsub.s32 %v7065, %v7067
    %v7069 = vrot.slane %v7055, %v7068
    %v7070 = vcombine.low %v7011, %v7019
    %v7071 = vcombine.high %v7011, %v7019
    %v7073 = vunpack.c.l.s4 1983009808
    %v7074 = vunpack.c.0.s8 %v7073
    %v7075 = vlaneseq
    %v7076 = vshrl.u32 %v7075, 7
    %v7077 = vsub.s32 %v7074, %v7076
    %v7078 = vrot.slane %v7070, %v7077
    %v7080 = vunpack.c.l.s4 1983009808
    %v7081 = vunpack.c.0.s8 %v7080
    %v7082 = vlaneseq
    %v7083 = vshrl.u32 %v7082, 7
    %v7084 = vsub.s32 %v7081, %v7083
    %v7085 = vrot.slane %v7071, %v7084
    %v7086 = vcombine.low %v7023, %v7031
    %v7087 = vcombine.high %v7023, %v7031
    %v7089 = vunpack.c.l.s4 1983009808
    %v7090 = vunpack.c.0.s8 %v7089
    %v7091 = vlaneseq
    %v7092 = vshrl.u32 %v7091, 7
    %v7093 = vsub.s32 %v7090, %v7092
    %v7094 = vrot.slane %v7086, %v7093
    %v7096 = vunpack.c.l.s4 1983009808
    %v7097 = vunpack.c.0.s8 %v7096
    %v7098 = vlaneseq
    %v7099 = vshrl.u32 %v7098, 7
    %v7100 = vsub.s32 %v7097, %v7099
    %v7101 = vrot.slane %v7087, %v7100
    %v7102 = vcombine.low %v7027, %v7035
    %v7103 = vcombine.high %v7027, %v7035
    %v7105 = vunpack.c.l.s4 1983009808
    %v7106 = vunpack.c.0.s8 %v7105
    %v7107 = vlaneseq
    %v7108 = vshrl.u32 %v7107, 7
    %v7109 = vsub.s32 %v7106, %v7108
    %v7110 = vrot.slane %v7102, %v7109
    %v7112 = vunpack.c.l.s4 1983009808
    %v7113 = vunpack.c.0.s8 %v7112
    %v7114 = vlaneseq
    %v7115 = vshrl.u32 %v7114, 7
    %v7116 = vsub.s32 %v7113, %v7115
    %v7117 = vrot.slane %v7103, %v7116
    %v7118 = vcombine.low %v7062, %v7078
    %v7119 = vcombine.high %v7062, %v7078
    %v7121 = vunpack.c.l.s4 1934713408
    %v7122 = vunpack.c.0.s8 %v7121
    %v7123 = vlaneseq
    %v7124 = vshrl.u32 %v7123, 7
    %v7125 = vsub.s32 %v7122, %v7124
    %v7126 = vrot.slane %v7118, %v7125
    %v7128 = vunpack.c.l.s4 1934713408
    %v7129 = vunpack.c.0.s8 %v7128
    %v7130 = vlaneseq
    %v7131 = vshrl.u32 %v7130, 7
    %v7132 = vsub.s32 %v7129, %v7131
    %v7133 = vrot.slane %v7119, %v7132
    %v7134 = vcombine.low %v7069, %v7085
    %v7135 = vcombine.high %v7069, %v7085
    %v7137 = vunpack.c.l.s4 1934713408
    %v7138 = vunpack.c.0.s8 %v7137
    %v7139 = vlaneseq
    %v7140 = vshrl.u32 %v7139, 7
    %v7141 = vsub.s32 %v7138, %v7140
    %v7142 = vrot.slane %v7134, %v7141
    %v7144 = vunpack.c.l.s4 1934713408
    %v7145 = vunpack.c.0.s8 %v7144
    %v7146 = vlaneseq
    %v7147 = vshrl.u32 %v7146, 7
    %v7148 = vsub.s32 %v7145, %v7147
    %v7149 = vrot.slane %v7135, %v7148
    %v7150 = vcombine.low %v7094, %v7110
    %v7151 = vcombine.high %v7094, %v7110
    %v7153 = vunpack.c.l.s4 1934713408
    %v7154 = vunpack.c.0.s8 %v7153
    %v7155 = vlaneseq
    %v7156 = vshrl.u32 %v7155, 7
    %v7157 = vsub.s32 %v7154, %v7156
    %v7158 = vrot.slane %v7150, %v7157
    %v7160 = vunpack.c.l.s4 1934713408
    %v7161 = vunpack.c.0.s8 %v7160
    %v7162 = vlaneseq
    %v7163 = vshrl.u32 %v7162, 7
    %v7164 = vsub.s32 %v7161, %v7163
    %v7165 = vrot.slane %v7151, %v7164
    %v7166 = vcombine.low %v7101, %v7117
    %v7167 = vcombine.high %v7101, %v7117
    %v7169 = vunpack.c.l.s4 1934713408
    %v7170 = vunpack.c.0.s8 %v7169
    %v7171 = vlaneseq
    %v7172 = vshrl.u32 %v7171, 7
    %v7173 = vsub.s32 %v7170, %v7172
    %v7174 = vrot.slane %v7166, %v7173
    %v7176 = vunpack.c.l.s4 1934713408
    %v7177 = vunpack.c.0.s8 %v7176
    %v7178 = vlaneseq
    %v7179 = vshrl.u32 %v7178, 7
    %v7180 = vsub.s32 %v7177, %v7179
    %v7181 = vrot.slane %v7167, %v7180
    %v7182 = vcombine.low %v7126, %v7158
    %v7183 = vcombine.high %v7126, %v7158
    %v7184 = vcombine.low %v7133, %v7165
    %v7185 = vcombine.high %v7133, %v7165
    %v7186 = vcombine.low %v7142, %v7174
    %v7187 = vcombine.high %v7142, %v7174
    %v7188 = vcombine.low %v7149, %v7181
    %v7189 = vcombine.high %v7149, %v7181
    %v7190 = vcombine.low %v7009, %v7017
    %v7191 = vcombine.high %v7009, %v7017
    %v7193 = vunpack.c.l.s4 1983009808
    %v7194 = vunpack.c.0.s8 %v7193
    %v7195 = vlaneseq
    %v7196 = vshrl.u32 %v7195, 7
    %v7197 = vsub.s32 %v7194, %v7196
    %v7198 = vrot.slane %v7190, %v7197
    %v7200 = vunpack.c.l.s4 1983009808
    %v7201 = vunpack.c.0.s8 %v7200
    %v7202 = vlaneseq
    %v7203 = vshrl.u32 %v7202, 7
    %v7204 = vsub.s32 %v7201, %v7203
    %v7205 = vrot.slane %v7191, %v7204
    %v7206 = vcombine.low %v7013, %v7021
    %v7207 = vcombine.high %v7013, %v7021
    %v7209 = vunpack.c.l.s4 1983009808
    %v7210 = vunpack.c.0.s8 %v7209
    %v7211 = vlaneseq
    %v7212 = vshrl.u32 %v7211, 7
    %v7213 = vsub.s32 %v7210, %v7212
    %v7214 = vrot.slane %v7206, %v7213
    %v7216 = vunpack.c.l.s4 1983009808
    %v7217 = vunpack.c.0.s8 %v7216
    %v7218 = vlaneseq
    %v7219 = vshrl.u32 %v7218, 7
    %v7220 = vsub.s32 %v7217, %v7219
    %v7221 = vrot.slane %v7207, %v7220
    %v7222 = vcombine.low %v7025, %v7033
    %v7223 = vcombine.high %v7025, %v7033
    %v7225 = vunpack.c.l.s4 1983009808
    %v7226 = vunpack.c.0.s8 %v7225
    %v7227 = vlaneseq
    %v7228 = vshrl.u32 %v7227, 7
    %v7229 = vsub.s32 %v7226, %v7228
    %v7230 = vrot.slane %v7222, %v7229
    %v7232 = vunpack.c.l.s4 1983009808
    %v7233 = vunpack.c.0.s8 %v7232
    %v7234 = vlaneseq
    %v7235 = vshrl.u32 %v7234, 7
    %v7236 = vsub.s32 %v7233, %v7235
    %v7237 = vrot.slane %v7223, %v7236
    %v7238 = vcombine.low %v7029, %v7037
    %v7239 = vcombine.high %v7029, %v7037
    %v7241 = vunpack.c.l.s4 1983009808
    %v7242 = vunpack.c.0.s8 %v7241
    %v7243 = vlaneseq
    %v7244 = vshrl.u32 %v7243, 7
    %v7245 = vsub.s32 %v7242, %v7244
    %v7246 = vrot.slane %v7238, %v7245
    %v7248 = vunpack.c.l.s4 1983009808
    %v7249 = vunpack.c.0.s8 %v7248
    %v7250 = vlaneseq
    %v7251 = vshrl.u32 %v7250, 7
    %v7252 = vsub.s32 %v7249, %v7251
    %v7253 = vrot.slane %v7239, %v7252
    %v7254 = vcombine.low %v7198, %v7214
    %v7255 = vcombine.high %v7198, %v7214
    %v7257 = vunpack.c.l.s4 1934713408
    %v7258 = vunpack.c.0.s8 %v7257
    %v7259 = vlaneseq
    %v7260 = vshrl.u32 %v7259, 7
    %v7261 = vsub.s32 %v7258, %v7260
    %v7262 = vrot.slane %v7254, %v7261
    %v7264 = vunpack.c.l.s4 1934713408
    %v7265 = vunpack.c.0.s8 %v7264
    %v7266 = vlaneseq
    %v7267 = vshrl.u32 %v7266, 7
    %v7268 = vsub.s32 %v7265, %v7267
    %v7269 = vrot.slane %v7255, %v7268
    %v7270 = vcombine.low %v7205, %v7221
    %v7271 = vcombine.high %v7205, %v7221
    %v7273 = vunpack.c.l.s4 1934713408
    %v7274 = vunpack.c.0.s8 %v7273
    %v7275 = vlaneseq
    %v7276 = vshrl.u32 %v7275, 7
    %v7277 = vsub.s32 %v7274, %v7276
    %v7278 = vrot.slane %v7270, %v7277
    %v7280 = vunpack.c.l.s4 1934713408
    %v7281 = vunpack.c.0.s8 %v7280
    %v7282 = vlaneseq
    %v7283 = vshrl.u32 %v7282, 7
    %v7284 = vsub.s32 %v7281, %v7283
    %v7285 = vrot.slane %v7271, %v7284
    %v7286 = vcombine.low %v7230, %v7246
    %v7287 = vcombine.high %v7230, %v7246
    %v7289 = vunpack.c.l.s4 1934713408
    %v7290 = vunpack.c.0.s8 %v7289
    %v7291 = vlaneseq
    %v7292 = vshrl.u32 %v7291, 7
    %v7293 = vsub.s32 %v7290, %v7292
    %v7294 = vrot.slane %v7286, %v7293
    %v7296 = vunpack.c.l.s4 1934713408
    %v7297 = vunpack.c.0.s8 %v7296
    %v7298 = vlaneseq
    %v7299 = vshrl.u32 %v7298, 7
    %v7300 = vsub.s32 %v7297, %v7299
    %v7301 = vrot.slane %v7287, %v7300
    %v7302 = vcombine.low %v7237, %v7253
    %v7303 = vcombine.high %v7237, %v7253
    %v7305 = vunpack.c.l.s4 1934713408
    %v7306 = vunpack.c.0.s8 %v7305
    %v7307 = vlaneseq
    %v7308 = vshrl.u32 %v7307, 7
    %v7309 = vsub.s32 %v7306, %v7308
    %v7310 = vrot.slane %v7302, %v7309
    %v7312 = vunpack.c.l.s4 1934713408
    %v7313 = vunpack.c.0.s8 %v7312
    %v7314 = vlaneseq
    %v7315 = vshrl.u32 %v7314, 7
    %v7316 = vsub.s32 %v7313, %v7315
    %v7317 = vrot.slane %v7303, %v7316
    %v7318 = vcombine.low %v7262, %v7294
    %v7319 = vcombine.high %v7262, %v7294
    %v7320 = vcombine.low %v7269, %v7301
    %v7321 = vcombine.high %v7269, %v7301
    %v7322 = vcombine.low %v7278, %v7310
    %v7323 = vcombine.high %v7278, %v7310
    %v7324 = vcombine.low %v7285, %v7317
    %v7325 = vcombine.high %v7285, %v7317
    %7327 = vrot.lane.b32.xlu0 %v7183, 16
    %v7328 = vpop.permute.xlu0 %7327
    %7331 = vrot.lane.b32.xlu0 %v7184, 32
    %v7332 = vpop.permute.xlu0 %7331
    %7335 = vrot.lane.b32.xlu0 %v7185, 48
    %v7336 = vpop.permute.xlu0 %7335
    %7339 = vrot.lane.b32.xlu0 %v7186, 64
    %v7340 = vpop.permute.xlu0 %7339
    %7343 = vrot.lane.b32.xlu0 %v7187, 80
    %v7344 = vpop.permute.xlu0 %7343
    %7347 = vrot.lane.b32.xlu0 %v7188, 96
    %v7348 = vpop.permute.xlu0 %7347
    %7351 = vrot.lane.b32.xlu0 %v7189, 112
    %v7352 = vpop.permute.xlu0 %7351
    %7355 = vrot.lane.b32.xlu0 %v7319, 16
    %v7356 = vpop.permute.xlu0 %7355
    %7359 = vrot.lane.b32.xlu0 %v7320, 32
    %v7360 = vpop.permute.xlu0 %7359
    %7363 = vrot.lane.b32.xlu0 %v7321, 48
    %v7364 = vpop.permute.xlu0 %7363
    %7367 = vrot.lane.b32.xlu0 %v7322, 64
    %v7368 = vpop.permute.xlu0 %7367
    %7371 = vrot.lane.b32.xlu0 %v7323, 80
    %v7372 = vpop.permute.xlu0 %7371
    %7375 = vrot.lane.b32.xlu0 %v7324, 96
    %v7376 = vpop.permute.xlu0 %7375
    %7379 = vrot.lane.b32.xlu0 %v7325, 112
    %v7380 = vpop.permute.xlu0 %7379
    %v7382 = vsel %vm397, %v7182, %v7328
    %v7383 = vsel %vm399, %v7382, %v7332
    %v7384 = vsel %vm401, %v7383, %v7336
    %v7385 = vsel %vm403, %v7384, %v7340
    %v7386 = vsel %vm405, %v7385, %v7344
    %v7387 = vsel %vm407, %v7386, %v7348
    %v7388 = vsel %vm409, %v7387, %v7352
    %v7389 = vsel %vm397, %v7318, %v7356
    %v7390 = vsel %vm399, %v7389, %v7360
    %v7391 = vsel %vm401, %v7390, %v7364
    %v7392 = vsel %vm403, %v7391, %v7368
    %v7393 = vsel %vm405, %v7392, %v7372
    %v7394 = vsel %vm407, %v7393, %v7376
    %v7395 = vsel %vm409, %v7394, %v7380
    %7396 = vrot.lane.b32.xlu0 %v6632, 126
    %v7397 = vpop.permute.xlu0 %7396
    %7398 = vrot.lane.b32.xlu0 %v6633, 126
    %v7399 = vpop.permute.xlu0 %7398
    %7400 = vrot.lane.b32.xlu0 %v6634, 126
    %v7401 = vpop.permute.xlu0 %7400
    %7402 = vrot.lane.b32.xlu0 %v6635, 126
    %v7403 = vpop.permute.xlu0 %7402
    %7404 = vrot.lane.b32.xlu0 %v6636, 126
    %v7405 = vpop.permute.xlu0 %7404
    %7406 = vrot.lane.b32.xlu0 %v6637, 126
    %v7407 = vpop.permute.xlu0 %7406
    %7408 = vrot.lane.b32.xlu0 %v6638, 126
    %v7409 = vpop.permute.xlu0 %7408
    %7410 = vrot.lane.b32.xlu0 %v6639, 126
    %v7411 = vpop.permute.xlu0 %7410
    %7412 = vrot.lane.b32.xlu0 %v6640, 126
    %v7413 = vpop.permute.xlu0 %7412
    %7414 = vrot.lane.b32.xlu0 %v6641, 126
    %v7415 = vpop.permute.xlu0 %7414
    %7416 = vrot.lane.b32.xlu0 %v6642, 126
    %v7417 = vpop.permute.xlu0 %7416
    %7418 = vrot.lane.b32.xlu0 %v6643, 126
    %v7419 = vpop.permute.xlu0 %7418
    %7420 = vrot.lane.b32.xlu0 %v6644, 126
    %v7421 = vpop.permute.xlu0 %7420
    %7422 = vrot.lane.b32.xlu0 %v6645, 126
    %v7423 = vpop.permute.xlu0 %7422
    %7424 = vrot.lane.b32.xlu0 %v6646, 126
    %v7425 = vpop.permute.xlu0 %7424
    %7426 = vrot.lane.b32.xlu0 %v6647, 126
    %v7427 = vpop.permute.xlu0 %7426
    %v7444 = vcombine.low %v7397, %v7405
    %v7445 = vcombine.high %v7397, %v7405
    %v7447 = vunpack.c.l.s4 1983009808
    %v7448 = vunpack.c.0.s8 %v7447
    %v7449 = vlaneseq
    %v7450 = vshrl.u32 %v7449, 7
    %v7451 = vsub.s32 %v7448, %v7450
    %v7452 = vrot.slane %v7444, %v7451
    %v7454 = vunpack.c.l.s4 1983009808
    %v7455 = vunpack.c.0.s8 %v7454
    %v7456 = vlaneseq
    %v7457 = vshrl.u32 %v7456, 7
    %v7458 = vsub.s32 %v7455, %v7457
    %v7459 = vrot.slane %v7445, %v7458
    %v7460 = vcombine.low %v7401, %v7409
    %v7461 = vcombine.high %v7401, %v7409
    %v7463 = vunpack.c.l.s4 1983009808
    %v7464 = vunpack.c.0.s8 %v7463
    %v7465 = vlaneseq
    %v7466 = vshrl.u32 %v7465, 7
    %v7467 = vsub.s32 %v7464, %v7466
    %v7468 = vrot.slane %v7460, %v7467
    %v7470 = vunpack.c.l.s4 1983009808
    %v7471 = vunpack.c.0.s8 %v7470
    %v7472 = vlaneseq
    %v7473 = vshrl.u32 %v7472, 7
    %v7474 = vsub.s32 %v7471, %v7473
    %v7475 = vrot.slane %v7461, %v7474
    %v7476 = vcombine.low %v7413, %v7421
    %v7477 = vcombine.high %v7413, %v7421
    %v7479 = vunpack.c.l.s4 1983009808
    %v7480 = vunpack.c.0.s8 %v7479
    %v7481 = vlaneseq
    %v7482 = vshrl.u32 %v7481, 7
    %v7483 = vsub.s32 %v7480, %v7482
    %v7484 = vrot.slane %v7476, %v7483
    %v7486 = vunpack.c.l.s4 1983009808
    %v7487 = vunpack.c.0.s8 %v7486
    %v7488 = vlaneseq
    %v7489 = vshrl.u32 %v7488, 7
    %v7490 = vsub.s32 %v7487, %v7489
    %v7491 = vrot.slane %v7477, %v7490
    %v7492 = vcombine.low %v7417, %v7425
    %v7493 = vcombine.high %v7417, %v7425
    %v7495 = vunpack.c.l.s4 1983009808
    %v7496 = vunpack.c.0.s8 %v7495
    %v7497 = vlaneseq
    %v7498 = vshrl.u32 %v7497, 7
    %v7499 = vsub.s32 %v7496, %v7498
    %v7500 = vrot.slane %v7492, %v7499
    %v7502 = vunpack.c.l.s4 1983009808
    %v7503 = vunpack.c.0.s8 %v7502
    %v7504 = vlaneseq
    %v7505 = vshrl.u32 %v7504, 7
    %v7506 = vsub.s32 %v7503, %v7505
    %v7507 = vrot.slane %v7493, %v7506
    %v7508 = vcombine.low %v7452, %v7468
    %v7509 = vcombine.high %v7452, %v7468
    %v7511 = vunpack.c.l.s4 1934713408
    %v7512 = vunpack.c.0.s8 %v7511
    %v7513 = vlaneseq
    %v7514 = vshrl.u32 %v7513, 7
    %v7515 = vsub.s32 %v7512, %v7514
    %v7516 = vrot.slane %v7508, %v7515
    %v7518 = vunpack.c.l.s4 1934713408
    %v7519 = vunpack.c.0.s8 %v7518
    %v7520 = vlaneseq
    %v7521 = vshrl.u32 %v7520, 7
    %v7522 = vsub.s32 %v7519, %v7521
    %v7523 = vrot.slane %v7509, %v7522
    %v7524 = vcombine.low %v7459, %v7475
    %v7525 = vcombine.high %v7459, %v7475
    %v7527 = vunpack.c.l.s4 1934713408
    %v7528 = vunpack.c.0.s8 %v7527
    %v7529 = vlaneseq
    %v7530 = vshrl.u32 %v7529, 7
    %v7531 = vsub.s32 %v7528, %v7530
    %v7532 = vrot.slane %v7524, %v7531
    %v7534 = vunpack.c.l.s4 1934713408
    %v7535 = vunpack.c.0.s8 %v7534
    %v7536 = vlaneseq
    %v7537 = vshrl.u32 %v7536, 7
    %v7538 = vsub.s32 %v7535, %v7537
    %v7539 = vrot.slane %v7525, %v7538
    %v7540 = vcombine.low %v7484, %v7500
    %v7541 = vcombine.high %v7484, %v7500
    %v7543 = vunpack.c.l.s4 1934713408
    %v7544 = vunpack.c.0.s8 %v7543
    %v7545 = vlaneseq
    %v7546 = vshrl.u32 %v7545, 7
    %v7547 = vsub.s32 %v7544, %v7546
    %v7548 = vrot.slane %v7540, %v7547
    %v7550 = vunpack.c.l.s4 1934713408
    %v7551 = vunpack.c.0.s8 %v7550
    %v7552 = vlaneseq
    %v7553 = vshrl.u32 %v7552, 7
    %v7554 = vsub.s32 %v7551, %v7553
    %v7555 = vrot.slane %v7541, %v7554
    %v7556 = vcombine.low %v7491, %v7507
    %v7557 = vcombine.high %v7491, %v7507
    %v7559 = vunpack.c.l.s4 1934713408
    %v7560 = vunpack.c.0.s8 %v7559
    %v7561 = vlaneseq
    %v7562 = vshrl.u32 %v7561, 7
    %v7563 = vsub.s32 %v7560, %v7562
    %v7564 = vrot.slane %v7556, %v7563
    %v7566 = vunpack.c.l.s4 1934713408
    %v7567 = vunpack.c.0.s8 %v7566
    %v7568 = vlaneseq
    %v7569 = vshrl.u32 %v7568, 7
    %v7570 = vsub.s32 %v7567, %v7569
    %v7571 = vrot.slane %v7557, %v7570
    %v7572 = vcombine.low %v7516, %v7548
    %v7573 = vcombine.high %v7516, %v7548
    %v7574 = vcombine.low %v7523, %v7555
    %v7575 = vcombine.high %v7523, %v7555
    %v7576 = vcombine.low %v7532, %v7564
    %v7577 = vcombine.high %v7532, %v7564
    %v7578 = vcombine.low %v7539, %v7571
    %v7579 = vcombine.high %v7539, %v7571
    %v7580 = vcombine.low %v7399, %v7407
    %v7581 = vcombine.high %v7399, %v7407
    %v7583 = vunpack.c.l.s4 1983009808
    %v7584 = vunpack.c.0.s8 %v7583
    %v7585 = vlaneseq
    %v7586 = vshrl.u32 %v7585, 7
    %v7587 = vsub.s32 %v7584, %v7586
    %v7588 = vrot.slane %v7580, %v7587
    %v7590 = vunpack.c.l.s4 1983009808
    %v7591 = vunpack.c.0.s8 %v7590
    %v7592 = vlaneseq
    %v7593 = vshrl.u32 %v7592, 7
    %v7594 = vsub.s32 %v7591, %v7593
    %v7595 = vrot.slane %v7581, %v7594
    %v7596 = vcombine.low %v7403, %v7411
    %v7597 = vcombine.high %v7403, %v7411
    %v7599 = vunpack.c.l.s4 1983009808
    %v7600 = vunpack.c.0.s8 %v7599
    %v7601 = vlaneseq
    %v7602 = vshrl.u32 %v7601, 7
    %v7603 = vsub.s32 %v7600, %v7602
    %v7604 = vrot.slane %v7596, %v7603
    %v7606 = vunpack.c.l.s4 1983009808
    %v7607 = vunpack.c.0.s8 %v7606
    %v7608 = vlaneseq
    %v7609 = vshrl.u32 %v7608, 7
    %v7610 = vsub.s32 %v7607, %v7609
    %v7611 = vrot.slane %v7597, %v7610
    %v7612 = vcombine.low %v7415, %v7423
    %v7613 = vcombine.high %v7415, %v7423
    %v7615 = vunpack.c.l.s4 1983009808
    %v7616 = vunpack.c.0.s8 %v7615
    %v7617 = vlaneseq
    %v7618 = vshrl.u32 %v7617, 7
    %v7619 = vsub.s32 %v7616, %v7618
    %v7620 = vrot.slane %v7612, %v7619
    %v7622 = vunpack.c.l.s4 1983009808
    %v7623 = vunpack.c.0.s8 %v7622
    %v7624 = vlaneseq
    %v7625 = vshrl.u32 %v7624, 7
    %v7626 = vsub.s32 %v7623, %v7625
    %v7627 = vrot.slane %v7613, %v7626
    %v7628 = vcombine.low %v7419, %v7427
    %v7629 = vcombine.high %v7419, %v7427
    %v7631 = vunpack.c.l.s4 1983009808
    %v7632 = vunpack.c.0.s8 %v7631
    %v7633 = vlaneseq
    %v7634 = vshrl.u32 %v7633, 7
    %v7635 = vsub.s32 %v7632, %v7634
    %v7636 = vrot.slane %v7628, %v7635
    %v7638 = vunpack.c.l.s4 1983009808
    %v7639 = vunpack.c.0.s8 %v7638
    %v7640 = vlaneseq
    %v7641 = vshrl.u32 %v7640, 7
    %v7642 = vsub.s32 %v7639, %v7641
    %v7643 = vrot.slane %v7629, %v7642
    %v7644 = vcombine.low %v7588, %v7604
    %v7645 = vcombine.high %v7588, %v7604
    %v7647 = vunpack.c.l.s4 1934713408
    %v7648 = vunpack.c.0.s8 %v7647
    %v7649 = vlaneseq
    %v7650 = vshrl.u32 %v7649, 7
    %v7651 = vsub.s32 %v7648, %v7650
    %v7652 = vrot.slane %v7644, %v7651
    %v7654 = vunpack.c.l.s4 1934713408
    %v7655 = vunpack.c.0.s8 %v7654
    %v7656 = vlaneseq
    %v7657 = vshrl.u32 %v7656, 7
    %v7658 = vsub.s32 %v7655, %v7657
    %v7659 = vrot.slane %v7645, %v7658
    %v7660 = vcombine.low %v7595, %v7611
    %v7661 = vcombine.high %v7595, %v7611
    %v7663 = vunpack.c.l.s4 1934713408
    %v7664 = vunpack.c.0.s8 %v7663
    %v7665 = vlaneseq
    %v7666 = vshrl.u32 %v7665, 7
    %v7667 = vsub.s32 %v7664, %v7666
    %v7668 = vrot.slane %v7660, %v7667
    %v7670 = vunpack.c.l.s4 1934713408
    %v7671 = vunpack.c.0.s8 %v7670
    %v7672 = vlaneseq
    %v7673 = vshrl.u32 %v7672, 7
    %v7674 = vsub.s32 %v7671, %v7673
    %v7675 = vrot.slane %v7661, %v7674
    %v7676 = vcombine.low %v7620, %v7636
    %v7677 = vcombine.high %v7620, %v7636
    %v7679 = vunpack.c.l.s4 1934713408
    %v7680 = vunpack.c.0.s8 %v7679
    %v7681 = vlaneseq
    %v7682 = vshrl.u32 %v7681, 7
    %v7683 = vsub.s32 %v7680, %v7682
    %v7684 = vrot.slane %v7676, %v7683
    %v7686 = vunpack.c.l.s4 1934713408
    %v7687 = vunpack.c.0.s8 %v7686
    %v7688 = vlaneseq
    %v7689 = vshrl.u32 %v7688, 7
    %v7690 = vsub.s32 %v7687, %v7689
    %v7691 = vrot.slane %v7677, %v7690
    %v7692 = vcombine.low %v7627, %v7643
    %v7693 = vcombine.high %v7627, %v7643
    %v7695 = vunpack.c.l.s4 1934713408
    %v7696 = vunpack.c.0.s8 %v7695
    %v7697 = vlaneseq
    %v7698 = vshrl.u32 %v7697, 7
    %v7699 = vsub.s32 %v7696, %v7698
    %v7700 = vrot.slane %v7692, %v7699
    %v7702 = vunpack.c.l.s4 1934713408
    %v7703 = vunpack.c.0.s8 %v7702
    %v7704 = vlaneseq
    %v7705 = vshrl.u32 %v7704, 7
    %v7706 = vsub.s32 %v7703, %v7705
    %v7707 = vrot.slane %v7693, %v7706
    %v7708 = vcombine.low %v7652, %v7684
    %v7709 = vcombine.high %v7652, %v7684
    %v7710 = vcombine.low %v7659, %v7691
    %v7711 = vcombine.high %v7659, %v7691
    %v7712 = vcombine.low %v7668, %v7700
    %v7713 = vcombine.high %v7668, %v7700
    %v7714 = vcombine.low %v7675, %v7707
    %v7715 = vcombine.high %v7675, %v7707
    %7717 = vrot.lane.b32.xlu0 %v7573, 16
    %v7718 = vpop.permute.xlu0 %7717
    %7721 = vrot.lane.b32.xlu0 %v7574, 32
    %v7722 = vpop.permute.xlu0 %7721
    %7725 = vrot.lane.b32.xlu0 %v7575, 48
    %v7726 = vpop.permute.xlu0 %7725
    %7729 = vrot.lane.b32.xlu0 %v7576, 64
    %v7730 = vpop.permute.xlu0 %7729
    %7733 = vrot.lane.b32.xlu0 %v7577, 80
    %v7734 = vpop.permute.xlu0 %7733
    %7737 = vrot.lane.b32.xlu0 %v7578, 96
    %v7738 = vpop.permute.xlu0 %7737
    %7741 = vrot.lane.b32.xlu0 %v7579, 112
    %v7742 = vpop.permute.xlu0 %7741
    %7745 = vrot.lane.b32.xlu0 %v7709, 16
    %v7746 = vpop.permute.xlu0 %7745
    %7749 = vrot.lane.b32.xlu0 %v7710, 32
    %v7750 = vpop.permute.xlu0 %7749
    %7753 = vrot.lane.b32.xlu0 %v7711, 48
    %v7754 = vpop.permute.xlu0 %7753
    %7757 = vrot.lane.b32.xlu0 %v7712, 64
    %v7758 = vpop.permute.xlu0 %7757
    %7761 = vrot.lane.b32.xlu0 %v7713, 80
    %v7762 = vpop.permute.xlu0 %7761
    %7765 = vrot.lane.b32.xlu0 %v7714, 96
    %v7766 = vpop.permute.xlu0 %7765
    %7769 = vrot.lane.b32.xlu0 %v7715, 112
    %v7770 = vpop.permute.xlu0 %7769
    %v7772 = vsel %vm397, %v7572, %v7718
    %v7773 = vsel %vm399, %v7772, %v7722
    %v7774 = vsel %vm401, %v7773, %v7726
    %v7775 = vsel %vm403, %v7774, %v7730
    %v7776 = vsel %vm405, %v7775, %v7734
    %v7777 = vsel %vm407, %v7776, %v7738
    %v7778 = vsel %vm409, %v7777, %v7742
    %v7779 = vsel %vm397, %v7708, %v7746
    %v7780 = vsel %vm399, %v7779, %v7750
    %v7781 = vsel %vm401, %v7780, %v7754
    %v7782 = vsel %vm403, %v7781, %v7758
    %v7783 = vsel %vm405, %v7782, %v7762
    %v7784 = vsel %vm407, %v7783, %v7766
    %v7785 = vsel %vm409, %v7784, %v7770
    %v7786 = vld [vmem:[#allocation3 + $0x2] sm:$0xff]
    %v7787 = vld [vmem:[#allocation3 + $0xa] sm:$0xff]
    %v7788 = vld [vmem:[#allocation3 + $0x1a] sm:$0xff]
    %v7789 = vld [vmem:[#allocation3 + $0x22] sm:$0xff]
    %v7790 = vld [vmem:[#allocation3 + $0x32] sm:$0xff]
    %v7791 = vld [vmem:[#allocation3 + $0x3a] sm:$0xff]
    %v7792 = vld [vmem:[#allocation3 + $0x4a] sm:$0xff]
    %v7793 = vld [vmem:[#allocation3 + $0x52] sm:$0xff]
    %v7794 = vld [vmem:[#allocation3 + $0x62] sm:$0xff]
    %v7795 = vld [vmem:[#allocation3 + $0x6a] sm:$0xff]
    %v7796 = vld [vmem:[#allocation3 + $0x7a] sm:$0xff]
    %v7797 = vld [vmem:[#allocation3 + $0x82] sm:$0xff]
    %v7798 = vld [vmem:[#allocation3 + $0x92] sm:$0xff]
    %v7799 = vld [vmem:[#allocation3 + $0x9a] sm:$0xff]
    %v7800 = vld [vmem:[#allocation3 + $0xaa] sm:$0xff]
    %v7801 = vld [vmem:[#allocation3 + $0xb2] sm:$0xff]
    %v7802 = vcombine.low %v7786, %v7790
    %v7803 = vcombine.high %v7786, %v7790
    %v7805 = vunpack.c.l.s4 1983009808
    %v7806 = vunpack.c.0.s8 %v7805
    %v7807 = vlaneseq
    %v7808 = vshrl.u32 %v7807, 7
    %v7809 = vsub.s32 %v7806, %v7808
    %v7810 = vrot.slane %v7802, %v7809
    %v7812 = vunpack.c.l.s4 1983009808
    %v7813 = vunpack.c.0.s8 %v7812
    %v7814 = vlaneseq
    %v7815 = vshrl.u32 %v7814, 7
    %v7816 = vsub.s32 %v7813, %v7815
    %v7817 = vrot.slane %v7803, %v7816
    %v7818 = vcombine.low %v7788, %v7792
    %v7819 = vcombine.high %v7788, %v7792
    %v7821 = vunpack.c.l.s4 1983009808
    %v7822 = vunpack.c.0.s8 %v7821
    %v7823 = vlaneseq
    %v7824 = vshrl.u32 %v7823, 7
    %v7825 = vsub.s32 %v7822, %v7824
    %v7826 = vrot.slane %v7818, %v7825
    %v7828 = vunpack.c.l.s4 1983009808
    %v7829 = vunpack.c.0.s8 %v7828
    %v7830 = vlaneseq
    %v7831 = vshrl.u32 %v7830, 7
    %v7832 = vsub.s32 %v7829, %v7831
    %v7833 = vrot.slane %v7819, %v7832
    %v7834 = vcombine.low %v7794, %v7798
    %v7835 = vcombine.high %v7794, %v7798
    %v7837 = vunpack.c.l.s4 1983009808
    %v7838 = vunpack.c.0.s8 %v7837
    %v7839 = vlaneseq
    %v7840 = vshrl.u32 %v7839, 7
    %v7841 = vsub.s32 %v7838, %v7840
    %v7842 = vrot.slane %v7834, %v7841
    %v7844 = vunpack.c.l.s4 1983009808
    %v7845 = vunpack.c.0.s8 %v7844
    %v7846 = vlaneseq
    %v7847 = vshrl.u32 %v7846, 7
    %v7848 = vsub.s32 %v7845, %v7847
    %v7849 = vrot.slane %v7835, %v7848
    %v7850 = vcombine.low %v7796, %v7800
    %v7851 = vcombine.high %v7796, %v7800
    %v7853 = vunpack.c.l.s4 1983009808
    %v7854 = vunpack.c.0.s8 %v7853
    %v7855 = vlaneseq
    %v7856 = vshrl.u32 %v7855, 7
    %v7857 = vsub.s32 %v7854, %v7856
    %v7858 = vrot.slane %v7850, %v7857
    %v7860 = vunpack.c.l.s4 1983009808
    %v7861 = vunpack.c.0.s8 %v7860
    %v7862 = vlaneseq
    %v7863 = vshrl.u32 %v7862, 7
    %v7864 = vsub.s32 %v7861, %v7863
    %v7865 = vrot.slane %v7851, %v7864
    %v7866 = vcombine.low %v7810, %v7826
    %v7867 = vcombine.high %v7810, %v7826
    %v7869 = vunpack.c.l.s4 1934713408
    %v7870 = vunpack.c.0.s8 %v7869
    %v7871 = vlaneseq
    %v7872 = vshrl.u32 %v7871, 7
    %v7873 = vsub.s32 %v7870, %v7872
    %v7874 = vrot.slane %v7866, %v7873
    %v7876 = vunpack.c.l.s4 1934713408
    %v7877 = vunpack.c.0.s8 %v7876
    %v7878 = vlaneseq
    %v7879 = vshrl.u32 %v7878, 7
    %v7880 = vsub.s32 %v7877, %v7879
    %v7881 = vrot.slane %v7867, %v7880
    %v7882 = vcombine.low %v7817, %v7833
    %v7883 = vcombine.high %v7817, %v7833
    %v7885 = vunpack.c.l.s4 1934713408
    %v7886 = vunpack.c.0.s8 %v7885
    %v7887 = vlaneseq
    %v7888 = vshrl.u32 %v7887, 7
    %v7889 = vsub.s32 %v7886, %v7888
    %v7890 = vrot.slane %v7882, %v7889
    %v7892 = vunpack.c.l.s4 1934713408
    %v7893 = vunpack.c.0.s8 %v7892
    %v7894 = vlaneseq
    %v7895 = vshrl.u32 %v7894, 7
    %v7896 = vsub.s32 %v7893, %v7895
    %v7897 = vrot.slane %v7883, %v7896
    %v7898 = vcombine.low %v7842, %v7858
    %v7899 = vcombine.high %v7842, %v7858
    %v7901 = vunpack.c.l.s4 1934713408
    %v7902 = vunpack.c.0.s8 %v7901
    %v7903 = vlaneseq
    %v7904 = vshrl.u32 %v7903, 7
    %v7905 = vsub.s32 %v7902, %v7904
    %v7906 = vrot.slane %v7898, %v7905
    %v7908 = vunpack.c.l.s4 1934713408
    %v7909 = vunpack.c.0.s8 %v7908
    %v7910 = vlaneseq
    %v7911 = vshrl.u32 %v7910, 7
    %v7912 = vsub.s32 %v7909, %v7911
    %v7913 = vrot.slane %v7899, %v7912
    %v7914 = vcombine.low %v7849, %v7865
    %v7915 = vcombine.high %v7849, %v7865
    %v7917 = vunpack.c.l.s4 1934713408
    %v7918 = vunpack.c.0.s8 %v7917
    %v7919 = vlaneseq
    %v7920 = vshrl.u32 %v7919, 7
    %v7921 = vsub.s32 %v7918, %v7920
    %v7922 = vrot.slane %v7914, %v7921
    %v7924 = vunpack.c.l.s4 1934713408
    %v7925 = vunpack.c.0.s8 %v7924
    %v7926 = vlaneseq
    %v7927 = vshrl.u32 %v7926, 7
    %v7928 = vsub.s32 %v7925, %v7927
    %v7929 = vrot.slane %v7915, %v7928
    %v7930 = vcombine.low %v7874, %v7906
    %v7931 = vcombine.high %v7874, %v7906
    %v7932 = vcombine.low %v7881, %v7913
    %v7933 = vcombine.high %v7881, %v7913
    %v7934 = vcombine.low %v7890, %v7922
    %v7935 = vcombine.high %v7890, %v7922
    %v7936 = vcombine.low %v7897, %v7929
    %v7937 = vcombine.high %v7897, %v7929
    %v7938 = vcombine.low %v7787, %v7791
    %v7939 = vcombine.high %v7787, %v7791
    %v7941 = vunpack.c.l.s4 1983009808
    %v7942 = vunpack.c.0.s8 %v7941
    %v7943 = vlaneseq
    %v7944 = vshrl.u32 %v7943, 7
    %v7945 = vsub.s32 %v7942, %v7944
    %v7946 = vrot.slane %v7938, %v7945
    %v7948 = vunpack.c.l.s4 1983009808
    %v7949 = vunpack.c.0.s8 %v7948
    %v7950 = vlaneseq
    %v7951 = vshrl.u32 %v7950, 7
    %v7952 = vsub.s32 %v7949, %v7951
    %v7953 = vrot.slane %v7939, %v7952
    %v7954 = vcombine.low %v7789, %v7793
    %v7955 = vcombine.high %v7789, %v7793
    %v7957 = vunpack.c.l.s4 1983009808
    %v7958 = vunpack.c.0.s8 %v7957
    %v7959 = vlaneseq
    %v7960 = vshrl.u32 %v7959, 7
    %v7961 = vsub.s32 %v7958, %v7960
    %v7962 = vrot.slane %v7954, %v7961
    %v7964 = vunpack.c.l.s4 1983009808
    %v7965 = vunpack.c.0.s8 %v7964
    %v7966 = vlaneseq
    %v7967 = vshrl.u32 %v7966, 7
    %v7968 = vsub.s32 %v7965, %v7967
    %v7969 = vrot.slane %v7955, %v7968
    %v7970 = vcombine.low %v7795, %v7799
    %v7971 = vcombine.high %v7795, %v7799
    %v7973 = vunpack.c.l.s4 1983009808
    %v7974 = vunpack.c.0.s8 %v7973
    %v7975 = vlaneseq
    %v7976 = vshrl.u32 %v7975, 7
    %v7977 = vsub.s32 %v7974, %v7976
    %v7978 = vrot.slane %v7970, %v7977
    %v7980 = vunpack.c.l.s4 1983009808
    %v7981 = vunpack.c.0.s8 %v7980
    %v7982 = vlaneseq
    %v7983 = vshrl.u32 %v7982, 7
    %v7984 = vsub.s32 %v7981, %v7983
    %v7985 = vrot.slane %v7971, %v7984
    %v7986 = vcombine.low %v7797, %v7801
    %v7987 = vcombine.high %v7797, %v7801
    %v7989 = vunpack.c.l.s4 1983009808
    %v7990 = vunpack.c.0.s8 %v7989
    %v7991 = vlaneseq
    %v7992 = vshrl.u32 %v7991, 7
    %v7993 = vsub.s32 %v7990, %v7992
    %v7994 = vrot.slane %v7986, %v7993
    %v7996 = vunpack.c.l.s4 1983009808
    %v7997 = vunpack.c.0.s8 %v7996
    %v7998 = vlaneseq
    %v7999 = vshrl.u32 %v7998, 7
    %v8000 = vsub.s32 %v7997, %v7999
    %v8001 = vrot.slane %v7987, %v8000
    %v8002 = vcombine.low %v7946, %v7962
    %v8003 = vcombine.high %v7946, %v7962
    %v8005 = vunpack.c.l.s4 1934713408
    %v8006 = vunpack.c.0.s8 %v8005
    %v8007 = vlaneseq
    %v8008 = vshrl.u32 %v8007, 7
    %v8009 = vsub.s32 %v8006, %v8008
    %v8010 = vrot.slane %v8002, %v8009
    %v8012 = vunpack.c.l.s4 1934713408
    %v8013 = vunpack.c.0.s8 %v8012
    %v8014 = vlaneseq
    %v8015 = vshrl.u32 %v8014, 7
    %v8016 = vsub.s32 %v8013, %v8015
    %v8017 = vrot.slane %v8003, %v8016
    %v8018 = vcombine.low %v7953, %v7969
    %v8019 = vcombine.high %v7953, %v7969
    %v8021 = vunpack.c.l.s4 1934713408
    %v8022 = vunpack.c.0.s8 %v8021
    %v8023 = vlaneseq
    %v8024 = vshrl.u32 %v8023, 7
    %v8025 = vsub.s32 %v8022, %v8024
    %v8026 = vrot.slane %v8018, %v8025
    %v8028 = vunpack.c.l.s4 1934713408
    %v8029 = vunpack.c.0.s8 %v8028
    %v8030 = vlaneseq
    %v8031 = vshrl.u32 %v8030, 7
    %v8032 = vsub.s32 %v8029, %v8031
    %v8033 = vrot.slane %v8019, %v8032
    %v8034 = vcombine.low %v7978, %v7994
    %v8035 = vcombine.high %v7978, %v7994
    %v8037 = vunpack.c.l.s4 1934713408
    %v8038 = vunpack.c.0.s8 %v8037
    %v8039 = vlaneseq
    %v8040 = vshrl.u32 %v8039, 7
    %v8041 = vsub.s32 %v8038, %v8040
    %v8042 = vrot.slane %v8034, %v8041
    %v8044 = vunpack.c.l.s4 1934713408
    %v8045 = vunpack.c.0.s8 %v8044
    %v8046 = vlaneseq
    %v8047 = vshrl.u32 %v8046, 7
    %v8048 = vsub.s32 %v8045, %v8047
    %v8049 = vrot.slane %v8035, %v8048
    %v8050 = vcombine.low %v7985, %v8001
    %v8051 = vcombine.high %v7985, %v8001
    %v8053 = vunpack.c.l.s4 1934713408
    %v8054 = vunpack.c.0.s8 %v8053
    %v8055 = vlaneseq
    %v8056 = vshrl.u32 %v8055, 7
    %v8057 = vsub.s32 %v8054, %v8056
    %v8058 = vrot.slane %v8050, %v8057
    %v8060 = vunpack.c.l.s4 1934713408
    %v8061 = vunpack.c.0.s8 %v8060
    %v8062 = vlaneseq
    %v8063 = vshrl.u32 %v8062, 7
    %v8064 = vsub.s32 %v8061, %v8063
    %v8065 = vrot.slane %v8051, %v8064
    %v8066 = vcombine.low %v8010, %v8042
    %v8067 = vcombine.high %v8010, %v8042
    %v8068 = vcombine.low %v8017, %v8049
    %v8069 = vcombine.high %v8017, %v8049
    %v8070 = vcombine.low %v8026, %v8058
    %v8071 = vcombine.high %v8026, %v8058
    %v8072 = vcombine.low %v8033, %v8065
    %v8073 = vcombine.high %v8033, %v8065
    %8075 = vrot.lane.b32.xlu0 %v7931, 16
    %v8076 = vpop.permute.xlu0 %8075
    %8079 = vrot.lane.b32.xlu0 %v7932, 32
    %v8080 = vpop.permute.xlu0 %8079
    %8083 = vrot.lane.b32.xlu0 %v7933, 48
    %v8084 = vpop.permute.xlu0 %8083
    %8087 = vrot.lane.b32.xlu0 %v7934, 64
    %v8088 = vpop.permute.xlu0 %8087
    %8091 = vrot.lane.b32.xlu0 %v7935, 80
    %v8092 = vpop.permute.xlu0 %8091
    %8095 = vrot.lane.b32.xlu0 %v7936, 96
    %v8096 = vpop.permute.xlu0 %8095
    %8099 = vrot.lane.b32.xlu0 %v7937, 112
    %v8100 = vpop.permute.xlu0 %8099
    %8103 = vrot.lane.b32.xlu0 %v8067, 16
    %v8104 = vpop.permute.xlu0 %8103
    %8107 = vrot.lane.b32.xlu0 %v8068, 32
    %v8108 = vpop.permute.xlu0 %8107
    %8111 = vrot.lane.b32.xlu0 %v8069, 48
    %v8112 = vpop.permute.xlu0 %8111
    %8115 = vrot.lane.b32.xlu0 %v8070, 64
    %v8116 = vpop.permute.xlu0 %8115
    %8119 = vrot.lane.b32.xlu0 %v8071, 80
    %v8120 = vpop.permute.xlu0 %8119
    %8123 = vrot.lane.b32.xlu0 %v8072, 96
    %v8124 = vpop.permute.xlu0 %8123
    %8127 = vrot.lane.b32.xlu0 %v8073, 112
    %v8128 = vpop.permute.xlu0 %8127
    %v8130 = vsel %vm397, %v7930, %v8076
    %v8131 = vsel %vm399, %v8130, %v8080
    %v8132 = vsel %vm401, %v8131, %v8084
    %v8133 = vsel %vm403, %v8132, %v8088
    %v8134 = vsel %vm405, %v8133, %v8092
    %v8135 = vsel %vm407, %v8134, %v8096
    %v8136 = vsel %vm409, %v8135, %v8100
    %v8137 = vsel %vm397, %v8066, %v8104
    %v8138 = vsel %vm399, %v8137, %v8108
    %v8139 = vsel %vm401, %v8138, %v8112
    %v8140 = vsel %vm403, %v8139, %v8116
    %v8141 = vsel %vm405, %v8140, %v8120
    %v8142 = vsel %vm407, %v8141, %v8124
    %v8143 = vsel %vm409, %v8142, %v8128
    %8160 = vrot.lane.b32.xlu0 %v7786, 127
    %v8161 = vpop.permute.xlu0 %8160
    %8162 = vrot.lane.b32.xlu0 %v7787, 127
    %v8163 = vpop.permute.xlu0 %8162
    %8164 = vrot.lane.b32.xlu0 %v7788, 127
    %v8165 = vpop.permute.xlu0 %8164
    %8166 = vrot.lane.b32.xlu0 %v7789, 127
    %v8167 = vpop.permute.xlu0 %8166
    %8168 = vrot.lane.b32.xlu0 %v7790, 127
    %v8169 = vpop.permute.xlu0 %8168
    %8170 = vrot.lane.b32.xlu0 %v7791, 127
    %v8171 = vpop.permute.xlu0 %8170
    %8172 = vrot.lane.b32.xlu0 %v7792, 127
    %v8173 = vpop.permute.xlu0 %8172
    %8174 = vrot.lane.b32.xlu0 %v7793, 127
    %v8175 = vpop.permute.xlu0 %8174
    %8176 = vrot.lane.b32.xlu0 %v7794, 127
    %v8177 = vpop.permute.xlu0 %8176
    %8178 = vrot.lane.b32.xlu0 %v7795, 127
    %v8179 = vpop.permute.xlu0 %8178
    %8180 = vrot.lane.b32.xlu0 %v7796, 127
    %v8181 = vpop.permute.xlu0 %8180
    %8182 = vrot.lane.b32.xlu0 %v7797, 127
    %v8183 = vpop.permute.xlu0 %8182
    %8184 = vrot.lane.b32.xlu0 %v7798, 127
    %v8185 = vpop.permute.xlu0 %8184
    %8186 = vrot.lane.b32.xlu0 %v7799, 127
    %v8187 = vpop.permute.xlu0 %8186
    %8188 = vrot.lane.b32.xlu0 %v7800, 127
    %v8189 = vpop.permute.xlu0 %8188
    %8190 = vrot.lane.b32.xlu0 %v7801, 127
    %v8191 = vpop.permute.xlu0 %8190
    %v8208 = vcombine.low %v8161, %v8169
    %v8209 = vcombine.high %v8161, %v8169
    %v8211 = vunpack.c.l.s4 1983009808
    %v8212 = vunpack.c.0.s8 %v8211
    %v8213 = vlaneseq
    %v8214 = vshrl.u32 %v8213, 7
    %v8215 = vsub.s32 %v8212, %v8214
    %v8216 = vrot.slane %v8208, %v8215
    %v8218 = vunpack.c.l.s4 1983009808
    %v8219 = vunpack.c.0.s8 %v8218
    %v8220 = vlaneseq
    %v8221 = vshrl.u32 %v8220, 7
    %v8222 = vsub.s32 %v8219, %v8221
    %v8223 = vrot.slane %v8209, %v8222
    %v8224 = vcombine.low %v8165, %v8173
    %v8225 = vcombine.high %v8165, %v8173
    %v8227 = vunpack.c.l.s4 1983009808
    %v8228 = vunpack.c.0.s8 %v8227
    %v8229 = vlaneseq
    %v8230 = vshrl.u32 %v8229, 7
    %v8231 = vsub.s32 %v8228, %v8230
    %v8232 = vrot.slane %v8224, %v8231
    %v8234 = vunpack.c.l.s4 1983009808
    %v8235 = vunpack.c.0.s8 %v8234
    %v8236 = vlaneseq
    %v8237 = vshrl.u32 %v8236, 7
    %v8238 = vsub.s32 %v8235, %v8237
    %v8239 = vrot.slane %v8225, %v8238
    %v8240 = vcombine.low %v8177, %v8185
    %v8241 = vcombine.high %v8177, %v8185
    %v8243 = vunpack.c.l.s4 1983009808
    %v8244 = vunpack.c.0.s8 %v8243
    %v8245 = vlaneseq
    %v8246 = vshrl.u32 %v8245, 7
    %v8247 = vsub.s32 %v8244, %v8246
    %v8248 = vrot.slane %v8240, %v8247
    %v8250 = vunpack.c.l.s4 1983009808
    %v8251 = vunpack.c.0.s8 %v8250
    %v8252 = vlaneseq
    %v8253 = vshrl.u32 %v8252, 7
    %v8254 = vsub.s32 %v8251, %v8253
    %v8255 = vrot.slane %v8241, %v8254
    %v8256 = vcombine.low %v8181, %v8189
    %v8257 = vcombine.high %v8181, %v8189
    %v8259 = vunpack.c.l.s4 1983009808
    %v8260 = vunpack.c.0.s8 %v8259
    %v8261 = vlaneseq
    %v8262 = vshrl.u32 %v8261, 7
    %v8263 = vsub.s32 %v8260, %v8262
    %v8264 = vrot.slane %v8256, %v8263
    %v8266 = vunpack.c.l.s4 1983009808
    %v8267 = vunpack.c.0.s8 %v8266
    %v8268 = vlaneseq
    %v8269 = vshrl.u32 %v8268, 7
    %v8270 = vsub.s32 %v8267, %v8269
    %v8271 = vrot.slane %v8257, %v8270
    %v8272 = vcombine.low %v8216, %v8232
    %v8273 = vcombine.high %v8216, %v8232
    %v8275 = vunpack.c.l.s4 1934713408
    %v8276 = vunpack.c.0.s8 %v8275
    %v8277 = vlaneseq
    %v8278 = vshrl.u32 %v8277, 7
    %v8279 = vsub.s32 %v8276, %v8278
    %v8280 = vrot.slane %v8272, %v8279
    %v8282 = vunpack.c.l.s4 1934713408
    %v8283 = vunpack.c.0.s8 %v8282
    %v8284 = vlaneseq
    %v8285 = vshrl.u32 %v8284, 7
    %v8286 = vsub.s32 %v8283, %v8285
    %v8287 = vrot.slane %v8273, %v8286
    %v8288 = vcombine.low %v8223, %v8239
    %v8289 = vcombine.high %v8223, %v8239
    %v8291 = vunpack.c.l.s4 1934713408
    %v8292 = vunpack.c.0.s8 %v8291
    %v8293 = vlaneseq
    %v8294 = vshrl.u32 %v8293, 7
    %v8295 = vsub.s32 %v8292, %v8294
    %v8296 = vrot.slane %v8288, %v8295
    %v8298 = vunpack.c.l.s4 1934713408
    %v8299 = vunpack.c.0.s8 %v8298
    %v8300 = vlaneseq
    %v8301 = vshrl.u32 %v8300, 7
    %v8302 = vsub.s32 %v8299, %v8301
    %v8303 = vrot.slane %v8289, %v8302
    %v8304 = vcombine.low %v8248, %v8264
    %v8305 = vcombine.high %v8248, %v8264
    %v8307 = vunpack.c.l.s4 1934713408
    %v8308 = vunpack.c.0.s8 %v8307
    %v8309 = vlaneseq
    %v8310 = vshrl.u32 %v8309, 7
    %v8311 = vsub.s32 %v8308, %v8310
    %v8312 = vrot.slane %v8304, %v8311
    %v8314 = vunpack.c.l.s4 1934713408
    %v8315 = vunpack.c.0.s8 %v8314
    %v8316 = vlaneseq
    %v8317 = vshrl.u32 %v8316, 7
    %v8318 = vsub.s32 %v8315, %v8317
    %v8319 = vrot.slane %v8305, %v8318
    %v8320 = vcombine.low %v8255, %v8271
    %v8321 = vcombine.high %v8255, %v8271
    %v8323 = vunpack.c.l.s4 1934713408
    %v8324 = vunpack.c.0.s8 %v8323
    %v8325 = vlaneseq
    %v8326 = vshrl.u32 %v8325, 7
    %v8327 = vsub.s32 %v8324, %v8326
    %v8328 = vrot.slane %v8320, %v8327
    %v8330 = vunpack.c.l.s4 1934713408
    %v8331 = vunpack.c.0.s8 %v8330
    %v8332 = vlaneseq
    %v8333 = vshrl.u32 %v8332, 7
    %v8334 = vsub.s32 %v8331, %v8333
    %v8335 = vrot.slane %v8321, %v8334
    %v8336 = vcombine.low %v8280, %v8312
    %v8337 = vcombine.high %v8280, %v8312
    %v8338 = vcombine.low %v8287, %v8319
    %v8339 = vcombine.high %v8287, %v8319
    %v8340 = vcombine.low %v8296, %v8328
    %v8341 = vcombine.high %v8296, %v8328
    %v8342 = vcombine.low %v8303, %v8335
    %v8343 = vcombine.high %v8303, %v8335
    %v8344 = vcombine.low %v8163, %v8171
    %v8345 = vcombine.high %v8163, %v8171
    %v8347 = vunpack.c.l.s4 1983009808
    %v8348 = vunpack.c.0.s8 %v8347
    %v8349 = vlaneseq
    %v8350 = vshrl.u32 %v8349, 7
    %v8351 = vsub.s32 %v8348, %v8350
    %v8352 = vrot.slane %v8344, %v8351
    %v8354 = vunpack.c.l.s4 1983009808
    %v8355 = vunpack.c.0.s8 %v8354
    %v8356 = vlaneseq
    %v8357 = vshrl.u32 %v8356, 7
    %v8358 = vsub.s32 %v8355, %v8357
    %v8359 = vrot.slane %v8345, %v8358
    %v8360 = vcombine.low %v8167, %v8175
    %v8361 = vcombine.high %v8167, %v8175
    %v8363 = vunpack.c.l.s4 1983009808
    %v8364 = vunpack.c.0.s8 %v8363
    %v8365 = vlaneseq
    %v8366 = vshrl.u32 %v8365, 7
    %v8367 = vsub.s32 %v8364, %v8366
    %v8368 = vrot.slane %v8360, %v8367
    %v8370 = vunpack.c.l.s4 1983009808
    %v8371 = vunpack.c.0.s8 %v8370
    %v8372 = vlaneseq
    %v8373 = vshrl.u32 %v8372, 7
    %v8374 = vsub.s32 %v8371, %v8373
    %v8375 = vrot.slane %v8361, %v8374
    %v8376 = vcombine.low %v8179, %v8187
    %v8377 = vcombine.high %v8179, %v8187
    %v8379 = vunpack.c.l.s4 1983009808
    %v8380 = vunpack.c.0.s8 %v8379
    %v8381 = vlaneseq
    %v8382 = vshrl.u32 %v8381, 7
    %v8383 = vsub.s32 %v8380, %v8382
    %v8384 = vrot.slane %v8376, %v8383
    %v8386 = vunpack.c.l.s4 1983009808
    %v8387 = vunpack.c.0.s8 %v8386
    %v8388 = vlaneseq
    %v8389 = vshrl.u32 %v8388, 7
    %v8390 = vsub.s32 %v8387, %v8389
    %v8391 = vrot.slane %v8377, %v8390
    %v8392 = vcombine.low %v8183, %v8191
    %v8393 = vcombine.high %v8183, %v8191
    %v8395 = vunpack.c.l.s4 1983009808
    %v8396 = vunpack.c.0.s8 %v8395
    %v8397 = vlaneseq
    %v8398 = vshrl.u32 %v8397, 7
    %v8399 = vsub.s32 %v8396, %v8398
    %v8400 = vrot.slane %v8392, %v8399
    %v8402 = vunpack.c.l.s4 1983009808
    %v8403 = vunpack.c.0.s8 %v8402
    %v8404 = vlaneseq
    %v8405 = vshrl.u32 %v8404, 7
    %v8406 = vsub.s32 %v8403, %v8405
    %v8407 = vrot.slane %v8393, %v8406
    %v8408 = vcombine.low %v8352, %v8368
    %v8409 = vcombine.high %v8352, %v8368
    %v8411 = vunpack.c.l.s4 1934713408
    %v8412 = vunpack.c.0.s8 %v8411
    %v8413 = vlaneseq
    %v8414 = vshrl.u32 %v8413, 7
    %v8415 = vsub.s32 %v8412, %v8414
    %v8416 = vrot.slane %v8408, %v8415
    %v8418 = vunpack.c.l.s4 1934713408
    %v8419 = vunpack.c.0.s8 %v8418
    %v8420 = vlaneseq
    %v8421 = vshrl.u32 %v8420, 7
    %v8422 = vsub.s32 %v8419, %v8421
    %v8423 = vrot.slane %v8409, %v8422
    %v8424 = vcombine.low %v8359, %v8375
    %v8425 = vcombine.high %v8359, %v8375
    %v8427 = vunpack.c.l.s4 1934713408
    %v8428 = vunpack.c.0.s8 %v8427
    %v8429 = vlaneseq
    %v8430 = vshrl.u32 %v8429, 7
    %v8431 = vsub.s32 %v8428, %v8430
    %v8432 = vrot.slane %v8424, %v8431
    %v8434 = vunpack.c.l.s4 1934713408
    %v8435 = vunpack.c.0.s8 %v8434
    %v8436 = vlaneseq
    %v8437 = vshrl.u32 %v8436, 7
    %v8438 = vsub.s32 %v8435, %v8437
    %v8439 = vrot.slane %v8425, %v8438
    %v8440 = vcombine.low %v8384, %v8400
    %v8441 = vcombine.high %v8384, %v8400
    %v8443 = vunpack.c.l.s4 1934713408
    %v8444 = vunpack.c.0.s8 %v8443
    %v8445 = vlaneseq
    %v8446 = vshrl.u32 %v8445, 7
    %v8447 = vsub.s32 %v8444, %v8446
    %v8448 = vrot.slane %v8440, %v8447
    %v8450 = vunpack.c.l.s4 1934713408
    %v8451 = vunpack.c.0.s8 %v8450
    %v8452 = vlaneseq
    %v8453 = vshrl.u32 %v8452, 7
    %v8454 = vsub.s32 %v8451, %v8453
    %v8455 = vrot.slane %v8441, %v8454
    %v8456 = vcombine.low %v8391, %v8407
    %v8457 = vcombine.high %v8391, %v8407
    %v8459 = vunpack.c.l.s4 1934713408
    %v8460 = vunpack.c.0.s8 %v8459
    %v8461 = vlaneseq
    %v8462 = vshrl.u32 %v8461, 7
    %v8463 = vsub.s32 %v8460, %v8462
    %v8464 = vrot.slane %v8456, %v8463
    %v8466 = vunpack.c.l.s4 1934713408
    %v8467 = vunpack.c.0.s8 %v8466
    %v8468 = vlaneseq
    %v8469 = vshrl.u32 %v8468, 7
    %v8470 = vsub.s32 %v8467, %v8469
    %v8471 = vrot.slane %v8457, %v8470
    %v8472 = vcombine.low %v8416, %v8448
    %v8473 = vcombine.high %v8416, %v8448
    %v8474 = vcombine.low %v8423, %v8455
    %v8475 = vcombine.high %v8423, %v8455
    %v8476 = vcombine.low %v8432, %v8464
    %v8477 = vcombine.high %v8432, %v8464
    %v8478 = vcombine.low %v8439, %v8471
    %v8479 = vcombine.high %v8439, %v8471
    %8481 = vrot.lane.b32.xlu0 %v8337, 16
    %v8482 = vpop.permute.xlu0 %8481
    %8485 = vrot.lane.b32.xlu0 %v8338, 32
    %v8486 = vpop.permute.xlu0 %8485
    %8489 = vrot.lane.b32.xlu0 %v8339, 48
    %v8490 = vpop.permute.xlu0 %8489
    %8493 = vrot.lane.b32.xlu0 %v8340, 64
    %v8494 = vpop.permute.xlu0 %8493
    %8497 = vrot.lane.b32.xlu0 %v8341, 80
    %v8498 = vpop.permute.xlu0 %8497
    %8501 = vrot.lane.b32.xlu0 %v8342, 96
    %v8502 = vpop.permute.xlu0 %8501
    %8505 = vrot.lane.b32.xlu0 %v8343, 112
    %v8506 = vpop.permute.xlu0 %8505
    %8509 = vrot.lane.b32.xlu0 %v8473, 16
    %v8510 = vpop.permute.xlu0 %8509
    %8513 = vrot.lane.b32.xlu0 %v8474, 32
    %v8514 = vpop.permute.xlu0 %8513
    %8517 = vrot.lane.b32.xlu0 %v8475, 48
    %v8518 = vpop.permute.xlu0 %8517
    %8521 = vrot.lane.b32.xlu0 %v8476, 64
    %v8522 = vpop.permute.xlu0 %8521
    %8525 = vrot.lane.b32.xlu0 %v8477, 80
    %v8526 = vpop.permute.xlu0 %8525
    %8529 = vrot.lane.b32.xlu0 %v8478, 96
    %v8530 = vpop.permute.xlu0 %8529
    %8533 = vrot.lane.b32.xlu0 %v8479, 112
    %v8534 = vpop.permute.xlu0 %8533
    %v8536 = vsel %vm397, %v8336, %v8482
    %v8537 = vsel %vm399, %v8536, %v8486
    %v8538 = vsel %vm401, %v8537, %v8490
    %v8539 = vsel %vm403, %v8538, %v8494
    %v8540 = vsel %vm405, %v8539, %v8498
    %v8541 = vsel %vm407, %v8540, %v8502
    %v8542 = vsel %vm409, %v8541, %v8506
    %v8543 = vsel %vm397, %v8472, %v8510
    %v8544 = vsel %vm399, %v8543, %v8514
    %v8545 = vsel %vm401, %v8544, %v8518
    %v8546 = vsel %vm403, %v8545, %v8522
    %v8547 = vsel %vm405, %v8546, %v8526
    %v8548 = vsel %vm407, %v8547, %v8530
    %v8549 = vsel %vm409, %v8548, %v8534
    %8550 = vrot.lane.b32.xlu0 %v7786, 126
    %v8551 = vpop.permute.xlu0 %8550
    %8552 = vrot.lane.b32.xlu0 %v7787, 126
    %v8553 = vpop.permute.xlu0 %8552
    %8554 = vrot.lane.b32.xlu0 %v7788, 126
    %v8555 = vpop.permute.xlu0 %8554
    %8556 = vrot.lane.b32.xlu0 %v7789, 126
    %v8557 = vpop.permute.xlu0 %8556
    %8558 = vrot.lane.b32.xlu0 %v7790, 126
    %v8559 = vpop.permute.xlu0 %8558
    %8560 = vrot.lane.b32.xlu0 %v7791, 126
    %v8561 = vpop.permute.xlu0 %8560
    %8562 = vrot.lane.b32.xlu0 %v7792, 126
    %v8563 = vpop.permute.xlu0 %8562
    %8564 = vrot.lane.b32.xlu0 %v7793, 126
    %v8565 = vpop.permute.xlu0 %8564
    %8566 = vrot.lane.b32.xlu0 %v7794, 126
    %v8567 = vpop.permute.xlu0 %8566
    %8568 = vrot.lane.b32.xlu0 %v7795, 126
    %v8569 = vpop.permute.xlu0 %8568
    %8570 = vrot.lane.b32.xlu0 %v7796, 126
    %v8571 = vpop.permute.xlu0 %8570
    %8572 = vrot.lane.b32.xlu0 %v7797, 126
    %v8573 = vpop.permute.xlu0 %8572
    %8574 = vrot.lane.b32.xlu0 %v7798, 126
    %v8575 = vpop.permute.xlu0 %8574
    %8576 = vrot.lane.b32.xlu0 %v7799, 126
    %v8577 = vpop.permute.xlu0 %8576
    %8578 = vrot.lane.b32.xlu0 %v7800, 126
    %v8579 = vpop.permute.xlu0 %8578
    %8580 = vrot.lane.b32.xlu0 %v7801, 126
    %v8581 = vpop.permute.xlu0 %8580
    %v8598 = vcombine.low %v8551, %v8559
    %v8599 = vcombine.high %v8551, %v8559
    %v8601 = vunpack.c.l.s4 1983009808
    %v8602 = vunpack.c.0.s8 %v8601
    %v8603 = vlaneseq
    %v8604 = vshrl.u32 %v8603, 7
    %v8605 = vsub.s32 %v8602, %v8604
    %v8606 = vrot.slane %v8598, %v8605
    %v8608 = vunpack.c.l.s4 1983009808
    %v8609 = vunpack.c.0.s8 %v8608
    %v8610 = vlaneseq
    %v8611 = vshrl.u32 %v8610, 7
    %v8612 = vsub.s32 %v8609, %v8611
    %v8613 = vrot.slane %v8599, %v8612
    %v8614 = vcombine.low %v8555, %v8563
    %v8615 = vcombine.high %v8555, %v8563
    %v8617 = vunpack.c.l.s4 1983009808
    %v8618 = vunpack.c.0.s8 %v8617
    %v8619 = vlaneseq
    %v8620 = vshrl.u32 %v8619, 7
    %v8621 = vsub.s32 %v8618, %v8620
    %v8622 = vrot.slane %v8614, %v8621
    %v8624 = vunpack.c.l.s4 1983009808
    %v8625 = vunpack.c.0.s8 %v8624
    %v8626 = vlaneseq
    %v8627 = vshrl.u32 %v8626, 7
    %v8628 = vsub.s32 %v8625, %v8627
    %v8629 = vrot.slane %v8615, %v8628
    %v8630 = vcombine.low %v8567, %v8575
    %v8631 = vcombine.high %v8567, %v8575
    %v8633 = vunpack.c.l.s4 1983009808
    %v8634 = vunpack.c.0.s8 %v8633
    %v8635 = vlaneseq
    %v8636 = vshrl.u32 %v8635, 7
    %v8637 = vsub.s32 %v8634, %v8636
    %v8638 = vrot.slane %v8630, %v8637
    %v8640 = vunpack.c.l.s4 1983009808
    %v8641 = vunpack.c.0.s8 %v8640
    %v8642 = vlaneseq
    %v8643 = vshrl.u32 %v8642, 7
    %v8644 = vsub.s32 %v8641, %v8643
    %v8645 = vrot.slane %v8631, %v8644
    %v8646 = vcombine.low %v8571, %v8579
    %v8647 = vcombine.high %v8571, %v8579
    %v8649 = vunpack.c.l.s4 1983009808
    %v8650 = vunpack.c.0.s8 %v8649
    %v8651 = vlaneseq
    %v8652 = vshrl.u32 %v8651, 7
    %v8653 = vsub.s32 %v8650, %v8652
    %v8654 = vrot.slane %v8646, %v8653
    %v8656 = vunpack.c.l.s4 1983009808
    %v8657 = vunpack.c.0.s8 %v8656
    %v8658 = vlaneseq
    %v8659 = vshrl.u32 %v8658, 7
    %v8660 = vsub.s32 %v8657, %v8659
    %v8661 = vrot.slane %v8647, %v8660
    %v8662 = vcombine.low %v8606, %v8622
    %v8663 = vcombine.high %v8606, %v8622
    %v8665 = vunpack.c.l.s4 1934713408
    %v8666 = vunpack.c.0.s8 %v8665
    %v8667 = vlaneseq
    %v8668 = vshrl.u32 %v8667, 7
    %v8669 = vsub.s32 %v8666, %v8668
    %v8670 = vrot.slane %v8662, %v8669
    %v8672 = vunpack.c.l.s4 1934713408
    %v8673 = vunpack.c.0.s8 %v8672
    %v8674 = vlaneseq
    %v8675 = vshrl.u32 %v8674, 7
    %v8676 = vsub.s32 %v8673, %v8675
    %v8677 = vrot.slane %v8663, %v8676
    %v8678 = vcombine.low %v8613, %v8629
    %v8679 = vcombine.high %v8613, %v8629
    %v8681 = vunpack.c.l.s4 1934713408
    %v8682 = vunpack.c.0.s8 %v8681
    %v8683 = vlaneseq
    %v8684 = vshrl.u32 %v8683, 7
    %v8685 = vsub.s32 %v8682, %v8684
    %v8686 = vrot.slane %v8678, %v8685
    %v8688 = vunpack.c.l.s4 1934713408
    %v8689 = vunpack.c.0.s8 %v8688
    %v8690 = vlaneseq
    %v8691 = vshrl.u32 %v8690, 7
    %v8692 = vsub.s32 %v8689, %v8691
    %v8693 = vrot.slane %v8679, %v8692
    %v8694 = vcombine.low %v8638, %v8654
    %v8695 = vcombine.high %v8638, %v8654
    %v8697 = vunpack.c.l.s4 1934713408
    %v8698 = vunpack.c.0.s8 %v8697
    %v8699 = vlaneseq
    %v8700 = vshrl.u32 %v8699, 7
    %v8701 = vsub.s32 %v8698, %v8700
    %v8702 = vrot.slane %v8694, %v8701
    %v8704 = vunpack.c.l.s4 1934713408
    %v8705 = vunpack.c.0.s8 %v8704
    %v8706 = vlaneseq
    %v8707 = vshrl.u32 %v8706, 7
    %v8708 = vsub.s32 %v8705, %v8707
    %v8709 = vrot.slane %v8695, %v8708
    %v8710 = vcombine.low %v8645, %v8661
    %v8711 = vcombine.high %v8645, %v8661
    %v8713 = vunpack.c.l.s4 1934713408
    %v8714 = vunpack.c.0.s8 %v8713
    %v8715 = vlaneseq
    %v8716 = vshrl.u32 %v8715, 7
    %v8717 = vsub.s32 %v8714, %v8716
    %v8718 = vrot.slane %v8710, %v8717
    %v8720 = vunpack.c.l.s4 1934713408
    %v8721 = vunpack.c.0.s8 %v8720
    %v8722 = vlaneseq
    %v8723 = vshrl.u32 %v8722, 7
    %v8724 = vsub.s32 %v8721, %v8723
    %v8725 = vrot.slane %v8711, %v8724
    %v8726 = vcombine.low %v8670, %v8702
    %v8727 = vcombine.high %v8670, %v8702
    %v8728 = vcombine.low %v8677, %v8709
    %v8729 = vcombine.high %v8677, %v8709
    %v8730 = vcombine.low %v8686, %v8718
    %v8731 = vcombine.high %v8686, %v8718
    %v8732 = vcombine.low %v8693, %v8725
    %v8733 = vcombine.high %v8693, %v8725
    %v8734 = vcombine.low %v8553, %v8561
    %v8735 = vcombine.high %v8553, %v8561
    %v8737 = vunpack.c.l.s4 1983009808
    %v8738 = vunpack.c.0.s8 %v8737
    %v8739 = vlaneseq
    %v8740 = vshrl.u32 %v8739, 7
    %v8741 = vsub.s32 %v8738, %v8740
    %v8742 = vrot.slane %v8734, %v8741
    %v8744 = vunpack.c.l.s4 1983009808
    %v8745 = vunpack.c.0.s8 %v8744
    %v8746 = vlaneseq
    %v8747 = vshrl.u32 %v8746, 7
    %v8748 = vsub.s32 %v8745, %v8747
    %v8749 = vrot.slane %v8735, %v8748
    %v8750 = vcombine.low %v8557, %v8565
    %v8751 = vcombine.high %v8557, %v8565
    %v8753 = vunpack.c.l.s4 1983009808
    %v8754 = vunpack.c.0.s8 %v8753
    %v8755 = vlaneseq
    %v8756 = vshrl.u32 %v8755, 7
    %v8757 = vsub.s32 %v8754, %v8756
    %v8758 = vrot.slane %v8750, %v8757
    %v8760 = vunpack.c.l.s4 1983009808
    %v8761 = vunpack.c.0.s8 %v8760
    %v8762 = vlaneseq
    %v8763 = vshrl.u32 %v8762, 7
    %v8764 = vsub.s32 %v8761, %v8763
    %v8765 = vrot.slane %v8751, %v8764
    %v8766 = vcombine.low %v8569, %v8577
    %v8767 = vcombine.high %v8569, %v8577
    %v8769 = vunpack.c.l.s4 1983009808
    %v8770 = vunpack.c.0.s8 %v8769
    %v8771 = vlaneseq
    %v8772 = vshrl.u32 %v8771, 7
    %v8773 = vsub.s32 %v8770, %v8772
    %v8774 = vrot.slane %v8766, %v8773
    %v8776 = vunpack.c.l.s4 1983009808
    %v8777 = vunpack.c.0.s8 %v8776
    %v8778 = vlaneseq
    %v8779 = vshrl.u32 %v8778, 7
    %v8780 = vsub.s32 %v8777, %v8779
    %v8781 = vrot.slane %v8767, %v8780
    %v8782 = vcombine.low %v8573, %v8581
    %v8783 = vcombine.high %v8573, %v8581
    %v8785 = vunpack.c.l.s4 1983009808
    %v8786 = vunpack.c.0.s8 %v8785
    %v8787 = vlaneseq
    %v8788 = vshrl.u32 %v8787, 7
    %v8789 = vsub.s32 %v8786, %v8788
    %v8790 = vrot.slane %v8782, %v8789
    %v8792 = vunpack.c.l.s4 1983009808
    %v8793 = vunpack.c.0.s8 %v8792
    %v8794 = vlaneseq
    %v8795 = vshrl.u32 %v8794, 7
    %v8796 = vsub.s32 %v8793, %v8795
    %v8797 = vrot.slane %v8783, %v8796
    %v8798 = vcombine.low %v8742, %v8758
    %v8799 = vcombine.high %v8742, %v8758
    %v8801 = vunpack.c.l.s4 1934713408
    %v8802 = vunpack.c.0.s8 %v8801
    %v8803 = vlaneseq
    %v8804 = vshrl.u32 %v8803, 7
    %v8805 = vsub.s32 %v8802, %v8804
    %v8806 = vrot.slane %v8798, %v8805
    %v8808 = vunpack.c.l.s4 1934713408
    %v8809 = vunpack.c.0.s8 %v8808
    %v8810 = vlaneseq
    %v8811 = vshrl.u32 %v8810, 7
    %v8812 = vsub.s32 %v8809, %v8811
    %v8813 = vrot.slane %v8799, %v8812
    %v8814 = vcombine.low %v8749, %v8765
    %v8815 = vcombine.high %v8749, %v8765
    %v8817 = vunpack.c.l.s4 1934713408
    %v8818 = vunpack.c.0.s8 %v8817
    %v8819 = vlaneseq
    %v8820 = vshrl.u32 %v8819, 7
    %v8821 = vsub.s32 %v8818, %v8820
    %v8822 = vrot.slane %v8814, %v8821
    %v8824 = vunpack.c.l.s4 1934713408
    %v8825 = vunpack.c.0.s8 %v8824
    %v8826 = vlaneseq
    %v8827 = vshrl.u32 %v8826, 7
    %v8828 = vsub.s32 %v8825, %v8827
    %v8829 = vrot.slane %v8815, %v8828
    %v8830 = vcombine.low %v8774, %v8790
    %v8831 = vcombine.high %v8774, %v8790
    %v8833 = vunpack.c.l.s4 1934713408
    %v8834 = vunpack.c.0.s8 %v8833
    %v8835 = vlaneseq
    %v8836 = vshrl.u32 %v8835, 7
    %v8837 = vsub.s32 %v8834, %v8836
    %v8838 = vrot.slane %v8830, %v8837
    %v8840 = vunpack.c.l.s4 1934713408
    %v8841 = vunpack.c.0.s8 %v8840
    %v8842 = vlaneseq
    %v8843 = vshrl.u32 %v8842, 7
    %v8844 = vsub.s32 %v8841, %v8843
    %v8845 = vrot.slane %v8831, %v8844
    %v8846 = vcombine.low %v8781, %v8797
    %v8847 = vcombine.high %v8781, %v8797
    %v8849 = vunpack.c.l.s4 1934713408
    %v8850 = vunpack.c.0.s8 %v8849
    %v8851 = vlaneseq
    %v8852 = vshrl.u32 %v8851, 7
    %v8853 = vsub.s32 %v8850, %v8852
    %v8854 = vrot.slane %v8846, %v8853
    %v8856 = vunpack.c.l.s4 1934713408
    %v8857 = vunpack.c.0.s8 %v8856
    %v8858 = vlaneseq
    %v8859 = vshrl.u32 %v8858, 7
    %v8860 = vsub.s32 %v8857, %v8859
    %v8861 = vrot.slane %v8847, %v8860
    %v8862 = vcombine.low %v8806, %v8838
    %v8863 = vcombine.high %v8806, %v8838
    %v8864 = vcombine.low %v8813, %v8845
    %v8865 = vcombine.high %v8813, %v8845
    %v8866 = vcombine.low %v8822, %v8854
    %v8867 = vcombine.high %v8822, %v8854
    %v8868 = vcombine.low %v8829, %v8861
    %v8869 = vcombine.high %v8829, %v8861
    %8871 = vrot.lane.b32.xlu0 %v8727, 16
    %v8872 = vpop.permute.xlu0 %8871
    %8875 = vrot.lane.b32.xlu0 %v8728, 32
    %v8876 = vpop.permute.xlu0 %8875
    %8879 = vrot.lane.b32.xlu0 %v8729, 48
    %v8880 = vpop.permute.xlu0 %8879
    %8883 = vrot.lane.b32.xlu0 %v8730, 64
    %v8884 = vpop.permute.xlu0 %8883
    %8887 = vrot.lane.b32.xlu0 %v8731, 80
    %v8888 = vpop.permute.xlu0 %8887
    %8891 = vrot.lane.b32.xlu0 %v8732, 96
    %v8892 = vpop.permute.xlu0 %8891
    %8895 = vrot.lane.b32.xlu0 %v8733, 112
    %v8896 = vpop.permute.xlu0 %8895
    %8899 = vrot.lane.b32.xlu0 %v8863, 16
    %v8900 = vpop.permute.xlu0 %8899
    %8903 = vrot.lane.b32.xlu0 %v8864, 32
    %v8904 = vpop.permute.xlu0 %8903
    %8907 = vrot.lane.b32.xlu0 %v8865, 48
    %v8908 = vpop.permute.xlu0 %8907
    %8911 = vrot.lane.b32.xlu0 %v8866, 64
    %v8912 = vpop.permute.xlu0 %8911
    %8915 = vrot.lane.b32.xlu0 %v8867, 80
    %v8916 = vpop.permute.xlu0 %8915
    %8919 = vrot.lane.b32.xlu0 %v8868, 96
    %v8920 = vpop.permute.xlu0 %8919
    %8923 = vrot.lane.b32.xlu0 %v8869, 112
    %v8924 = vpop.permute.xlu0 %8923
    %v8926 = vsel %vm397, %v8726, %v8872
    %v8927 = vsel %vm399, %v8926, %v8876
    %v8928 = vsel %vm401, %v8927, %v8880
    %v8929 = vsel %vm403, %v8928, %v8884
    %v8930 = vsel %vm405, %v8929, %v8888
    %v8931 = vsel %vm407, %v8930, %v8892
    %v8932 = vsel %vm409, %v8931, %v8896
    %v8933 = vsel %vm397, %v8862, %v8900
    %v8934 = vsel %vm399, %v8933, %v8904
    %v8935 = vsel %vm401, %v8934, %v8908
    %v8936 = vsel %vm403, %v8935, %v8912
    %v8937 = vsel %vm405, %v8936, %v8916
    %v8938 = vsel %vm407, %v8937, %v8920
    %v8939 = vsel %vm409, %v8938, %v8924
    %vm8940 = vcmask 588800
    %v8942 = vsel %vm8940, %v5220, 0
    %8944 = vmatprep.subr.mxu0 %v5835
    %8945 = vmatpush1.msra.mxu0 %v5828
    %8946 = vmatprep.subr.mxu0 %v6241
    %8947 = vmatpush1.msra.mxu0 %v6234
    %8948 = vmatprep.subr.mxu0 %v6631
    %8949 = vmatpush1.msra.mxu0 %v6624
    %8950 = vmatprep.subr.mxu0 %v6989
    %8951 = vmatpush1.msra.mxu0 %v6982
    %8952 = vmatprep.subr.mxu0 %v7395
    %8953 = vmatpush1.msra.mxu0 %v7388
    %8954 = vmatprep.subr.mxu0 %v7785
    %8955 = vmatpush1.msra.mxu0 %v7778
    %8956 = vmatprep.subr.mxu0 %v8143
    %8957 = vmatpush1.msra.mxu0 %v8136
    %8958 = vmatprep.subr.mxu0 %v8549
    %8959 = vmatpush1.msra.mxu0 %v8542
    %8960 = vmatprep.subr.mxu0 %v8939
    %8961 = vmatpush1.msra.mxu0 %v8932
    %8962 = vmatprep.subr.mxu0 0.0
    %8963 = vmatpush1.msra.mxu0 0.0
    %8964 = vmatprep.subr.mxu0 0.0
    %8965 = vmatpush1.msra.mxu0 0.0
    %8966 = vmatprep.subr.mxu0 0.0
    %8967 = vmatpush1.msra.mxu0 0.0
    %8968 = vmatprep.subr.mxu0 0.0
    %8969 = vmatpush1.msra.mxu0 0.0
    %8970 = vmatprep.subr.mxu0 0.0
    %8971 = vmatpush1.msra.mxu0 0.0
    %8972 = vmatprep.subr.mxu0 0.0
    %8973 = vmatpush1.msra.mxu0 0.0
    %8974 = vmatprep.subr.mxu0 0.0
    %8975 = vmatpush1.msra.mxu0 0.0
    %8976 = vmatprep.subr.mxu0 0.0
    %8977 = vmatpush1.msra.mxu0 0.0
    %8978 = vmatprep.subr.mxu0 0.0
    %8979 = vmatpush1.msra.mxu0 0.0
    %8980 = vmatprep.subr.mxu0 0.0
    %8981 = vmatpush1.msra.mxu0 0.0
    %8982 = vmatprep.subr.mxu0 0.0
    %8983 = vmatpush1.msra.mxu0 0.0
    %8984 = vmatprep.subr.mxu0 0.0
    %8985 = vmatpush1.msra.mxu0 0.0
    %8986 = vmatprep.subr.mxu0 0.0
    %8987 = vmatpush1.msra.mxu0 0.0
    %8988 = vmatprep.subr.mxu0 0.0
    %8989 = vmatpush1.msra.mxu0 0.0
    %8990 = vmatprep.subr.mxu0 0.0
    %8991 = vmatpush1.msra.mxu0 0.0
    %8992 = vmatprep.subr.mxu0 0.0
    %8993 = vmatpush1.msra.mxu0 0.0
    %8994 = vmatprep.subr.mxu0 0.0
    %8995 = vmatpush1.msra.mxu0 0.0
    %8996 = vmatprep.subr.mxu0 0.0
    %8997 = vmatpush1.msra.mxu0 0.0
    %8998 = vmatprep.subr.mxu0 0.0
    %8999 = vmatpush1.msra.mxu0 0.0
    %9000 = vmatprep.subr.mxu0 0.0
    %9001 = vmatpush1.msra.mxu0 0.0
    %9002 = vmatprep.subr.mxu0 0.0
    %9003 = vmatpush1.msra.mxu0 0.0
    %9004 = vmatprep.subr.mxu0 0.0
    %9005 = vmatpush1.msra.mxu0 0.0
    %9006 = vmatprep.subr.mxu0 0.0
    %9007 = vmatpush1.msra.mxu0 0.0
    %9008 = vmatprep.mubr.f32.mxu0 0.0
    %9009 = vmatmul.mubr.f32.gmra.mrb[0].mxu0 %v8942
    %v9010 = vpop.f32.mrb[0].mxu0
    %v9011 = vadd.f32 0.0, %v9010
    %v9012 = vpop.f32.mrb[0].mxu0
    %v9013 = vadd.f32 0.0, %v9012
    %9014 = vdwg.mxu0
    %s9015 = scalar_lea.vmem [#allocation3], 192
    %v9016 = vld [vmem:[%s9015] sm:$0xff]
    %v9017 = vld [vmem:[%s9015 + $0x8] sm:$0xff]
    %v9018 = vld [vmem:[%s9015 + $0x18] sm:$0xff]
    %v9019 = vld [vmem:[%s9015 + $0x20] sm:$0xff]
    %v9020 = vld [vmem:[%s9015 + $0x30] sm:$0xff]
    %v9021 = vld [vmem:[%s9015 + $0x38] sm:$0xff]
    %v9022 = vld [vmem:[%s9015 + $0x48] sm:$0xff]
    %v9023 = vld [vmem:[%s9015 + $0x50] sm:$0xff]
    %v9024 = vld [vmem:[%s9015 + $0x60] sm:$0xff]
    %v9025 = vld [vmem:[%s9015 + $0x68] sm:$0xff]
    %v9026 = vld [vmem:[%s9015 + $0x78] sm:$0xff]
    %v9027 = vld [vmem:[%s9015 + $0x80] sm:$0xff]
    %v9028 = vld [vmem:[%s9015 + $0x90] sm:$0xff]
    %v9029 = vld [vmem:[%s9015 + $0x98] sm:$0xff]
    %v9030 = vld [vmem:[%s9015 + $0xa8] sm:$0xff]
    %v9031 = vld [vmem:[%s9015 + $0xb0] sm:$0xff]
    %v9032 = vcombine.low %v9016, %v9020
    %v9033 = vcombine.high %v9016, %v9020
    %v9035 = vunpack.c.l.s4 1983009808
    %v9036 = vunpack.c.0.s8 %v9035
    %v9037 = vlaneseq
    %v9038 = vshrl.u32 %v9037, 7
    %v9039 = vsub.s32 %v9036, %v9038
    %v9040 = vrot.slane %v9032, %v9039
    %v9042 = vunpack.c.l.s4 1983009808
    %v9043 = vunpack.c.0.s8 %v9042
    %v9044 = vlaneseq
    %v9045 = vshrl.u32 %v9044, 7
    %v9046 = vsub.s32 %v9043, %v9045
    %v9047 = vrot.slane %v9033, %v9046
    %v9048 = vcombine.low %v9018, %v9022
    %v9049 = vcombine.high %v9018, %v9022
    %v9051 = vunpack.c.l.s4 1983009808
    %v9052 = vunpack.c.0.s8 %v9051
    %v9053 = vlaneseq
    %v9054 = vshrl.u32 %v9053, 7
    %v9055 = vsub.s32 %v9052, %v9054
    %v9056 = vrot.slane %v9048, %v9055
    %v9058 = vunpack.c.l.s4 1983009808
    %v9059 = vunpack.c.0.s8 %v9058
    %v9060 = vlaneseq
    %v9061 = vshrl.u32 %v9060, 7
    %v9062 = vsub.s32 %v9059, %v9061
    %v9063 = vrot.slane %v9049, %v9062
    %v9064 = vcombine.low %v9024, %v9028
    %v9065 = vcombine.high %v9024, %v9028
    %v9067 = vunpack.c.l.s4 1983009808
    %v9068 = vunpack.c.0.s8 %v9067
    %v9069 = vlaneseq
    %v9070 = vshrl.u32 %v9069, 7
    %v9071 = vsub.s32 %v9068, %v9070
    %v9072 = vrot.slane %v9064, %v9071
    %v9074 = vunpack.c.l.s4 1983009808
    %v9075 = vunpack.c.0.s8 %v9074
    %v9076 = vlaneseq
    %v9077 = vshrl.u32 %v9076, 7
    %v9078 = vsub.s32 %v9075, %v9077
    %v9079 = vrot.slane %v9065, %v9078
    %v9080 = vcombine.low %v9026, %v9030
    %v9081 = vcombine.high %v9026, %v9030
    %v9083 = vunpack.c.l.s4 1983009808
    %v9084 = vunpack.c.0.s8 %v9083
    %v9085 = vlaneseq
    %v9086 = vshrl.u32 %v9085, 7
    %v9087 = vsub.s32 %v9084, %v9086
    %v9088 = vrot.slane %v9080, %v9087
    %v9090 = vunpack.c.l.s4 1983009808
    %v9091 = vunpack.c.0.s8 %v9090
    %v9092 = vlaneseq
    %v9093 = vshrl.u32 %v9092, 7
    %v9094 = vsub.s32 %v9091, %v9093
    %v9095 = vrot.slane %v9081, %v9094
    %v9096 = vcombine.low %v9040, %v9056
    %v9097 = vcombine.high %v9040, %v9056
    %v9099 = vunpack.c.l.s4 1934713408
    %v9100 = vunpack.c.0.s8 %v9099
    %v9101 = vlaneseq
    %v9102 = vshrl.u32 %v9101, 7
    %v9103 = vsub.s32 %v9100, %v9102
    %v9104 = vrot.slane %v9096, %v9103
    %v9106 = vunpack.c.l.s4 1934713408
    %v9107 = vunpack.c.0.s8 %v9106
    %v9108 = vlaneseq
    %v9109 = vshrl.u32 %v9108, 7
    %v9110 = vsub.s32 %v9107, %v9109
    %v9111 = vrot.slane %v9097, %v9110
    %v9112 = vcombine.low %v9047, %v9063
    %v9113 = vcombine.high %v9047, %v9063
    %v9115 = vunpack.c.l.s4 1934713408
    %v9116 = vunpack.c.0.s8 %v9115
    %v9117 = vlaneseq
    %v9118 = vshrl.u32 %v9117, 7
    %v9119 = vsub.s32 %v9116, %v9118
    %v9120 = vrot.slane %v9112, %v9119
    %v9122 = vunpack.c.l.s4 1934713408
    %v9123 = vunpack.c.0.s8 %v9122
    %v9124 = vlaneseq
    %v9125 = vshrl.u32 %v9124, 7
    %v9126 = vsub.s32 %v9123, %v9125
    %v9127 = vrot.slane %v9113, %v9126
    %v9128 = vcombine.low %v9072, %v9088
    %v9129 = vcombine.high %v9072, %v9088
    %v9131 = vunpack.c.l.s4 1934713408
    %v9132 = vunpack.c.0.s8 %v9131
    %v9133 = vlaneseq
    %v9134 = vshrl.u32 %v9133, 7
    %v9135 = vsub.s32 %v9132, %v9134
    %v9136 = vrot.slane %v9128, %v9135
    %v9138 = vunpack.c.l.s4 1934713408
    %v9139 = vunpack.c.0.s8 %v9138
    %v9140 = vlaneseq
    %v9141 = vshrl.u32 %v9140, 7
    %v9142 = vsub.s32 %v9139, %v9141
    %v9143 = vrot.slane %v9129, %v9142
    %v9144 = vcombine.low %v9079, %v9095
    %v9145 = vcombine.high %v9079, %v9095
    %v9147 = vunpack.c.l.s4 1934713408
    %v9148 = vunpack.c.0.s8 %v9147
    %v9149 = vlaneseq
    %v9150 = vshrl.u32 %v9149, 7
    %v9151 = vsub.s32 %v9148, %v9150
    %v9152 = vrot.slane %v9144, %v9151
    %v9154 = vunpack.c.l.s4 1934713408
    %v9155 = vunpack.c.0.s8 %v9154
    %v9156 = vlaneseq
    %v9157 = vshrl.u32 %v9156, 7
    %v9158 = vsub.s32 %v9155, %v9157
    %v9159 = vrot.slane %v9145, %v9158
    %v9160 = vcombine.low %v9104, %v9136
    %v9161 = vcombine.high %v9104, %v9136
    %v9162 = vcombine.low %v9111, %v9143
    %v9163 = vcombine.high %v9111, %v9143
    %v9164 = vcombine.low %v9120, %v9152
    %v9165 = vcombine.high %v9120, %v9152
    %v9166 = vcombine.low %v9127, %v9159
    %v9167 = vcombine.high %v9127, %v9159
    %v9168 = vcombine.low %v9017, %v9021
    %v9169 = vcombine.high %v9017, %v9021
    %v9171 = vunpack.c.l.s4 1983009808
    %v9172 = vunpack.c.0.s8 %v9171
    %v9173 = vlaneseq
    %v9174 = vshrl.u32 %v9173, 7
    %v9175 = vsub.s32 %v9172, %v9174
    %v9176 = vrot.slane %v9168, %v9175
    %v9178 = vunpack.c.l.s4 1983009808
    %v9179 = vunpack.c.0.s8 %v9178
    %v9180 = vlaneseq
    %v9181 = vshrl.u32 %v9180, 7
    %v9182 = vsub.s32 %v9179, %v9181
    %v9183 = vrot.slane %v9169, %v9182
    %v9184 = vcombine.low %v9019, %v9023
    %v9185 = vcombine.high %v9019, %v9023
    %v9187 = vunpack.c.l.s4 1983009808
    %v9188 = vunpack.c.0.s8 %v9187
    %v9189 = vlaneseq
    %v9190 = vshrl.u32 %v9189, 7
    %v9191 = vsub.s32 %v9188, %v9190
    %v9192 = vrot.slane %v9184, %v9191
    %v9194 = vunpack.c.l.s4 1983009808
    %v9195 = vunpack.c.0.s8 %v9194
    %v9196 = vlaneseq
    %v9197 = vshrl.u32 %v9196, 7
    %v9198 = vsub.s32 %v9195, %v9197
    %v9199 = vrot.slane %v9185, %v9198
    %v9200 = vcombine.low %v9025, %v9029
    %v9201 = vcombine.high %v9025, %v9029
    %v9203 = vunpack.c.l.s4 1983009808
    %v9204 = vunpack.c.0.s8 %v9203
    %v9205 = vlaneseq
    %v9206 = vshrl.u32 %v9205, 7
    %v9207 = vsub.s32 %v9204, %v9206
    %v9208 = vrot.slane %v9200, %v9207
    %v9210 = vunpack.c.l.s4 1983009808
    %v9211 = vunpack.c.0.s8 %v9210
    %v9212 = vlaneseq
    %v9213 = vshrl.u32 %v9212, 7
    %v9214 = vsub.s32 %v9211, %v9213
    %v9215 = vrot.slane %v9201, %v9214
    %v9216 = vcombine.low %v9027, %v9031
    %v9217 = vcombine.high %v9027, %v9031
    %v9219 = vunpack.c.l.s4 1983009808
    %v9220 = vunpack.c.0.s8 %v9219
    %v9221 = vlaneseq
    %v9222 = vshrl.u32 %v9221, 7
    %v9223 = vsub.s32 %v9220, %v9222
    %v9224 = vrot.slane %v9216, %v9223
    %v9226 = vunpack.c.l.s4 1983009808
    %v9227 = vunpack.c.0.s8 %v9226
    %v9228 = vlaneseq
    %v9229 = vshrl.u32 %v9228, 7
    %v9230 = vsub.s32 %v9227, %v9229
    %v9231 = vrot.slane %v9217, %v9230
    %v9232 = vcombine.low %v9176, %v9192
    %v9233 = vcombine.high %v9176, %v9192
    %v9235 = vunpack.c.l.s4 1934713408
    %v9236 = vunpack.c.0.s8 %v9235
    %v9237 = vlaneseq
    %v9238 = vshrl.u32 %v9237, 7
    %v9239 = vsub.s32 %v9236, %v9238
    %v9240 = vrot.slane %v9232, %v9239
    %v9242 = vunpack.c.l.s4 1934713408
    %v9243 = vunpack.c.0.s8 %v9242
    %v9244 = vlaneseq
    %v9245 = vshrl.u32 %v9244, 7
    %v9246 = vsub.s32 %v9243, %v9245
    %v9247 = vrot.slane %v9233, %v9246
    %v9248 = vcombine.low %v9183, %v9199
    %v9249 = vcombine.high %v9183, %v9199
    %v9251 = vunpack.c.l.s4 1934713408
    %v9252 = vunpack.c.0.s8 %v9251
    %v9253 = vlaneseq
    %v9254 = vshrl.u32 %v9253, 7
    %v9255 = vsub.s32 %v9252, %v9254
    %v9256 = vrot.slane %v9248, %v9255
    %v9258 = vunpack.c.l.s4 1934713408
    %v9259 = vunpack.c.0.s8 %v9258
    %v9260 = vlaneseq
    %v9261 = vshrl.u32 %v9260, 7
    %v9262 = vsub.s32 %v9259, %v9261
    %v9263 = vrot.slane %v9249, %v9262
    %v9264 = vcombine.low %v9208, %v9224
    %v9265 = vcombine.high %v9208, %v9224
    %v9267 = vunpack.c.l.s4 1934713408
    %v9268 = vunpack.c.0.s8 %v9267
    %v9269 = vlaneseq
    %v9270 = vshrl.u32 %v9269, 7
    %v9271 = vsub.s32 %v9268, %v9270
    %v9272 = vrot.slane %v9264, %v9271
    %v9274 = vunpack.c.l.s4 1934713408
    %v9275 = vunpack.c.0.s8 %v9274
    %v9276 = vlaneseq
    %v9277 = vshrl.u32 %v9276, 7
    %v9278 = vsub.s32 %v9275, %v9277
    %v9279 = vrot.slane %v9265, %v9278
    %v9280 = vcombine.low %v9215, %v9231
    %v9281 = vcombine.high %v9215, %v9231
    %v9283 = vunpack.c.l.s4 1934713408
    %v9284 = vunpack.c.0.s8 %v9283
    %v9285 = vlaneseq
    %v9286 = vshrl.u32 %v9285, 7
    %v9287 = vsub.s32 %v9284, %v9286
    %v9288 = vrot.slane %v9280, %v9287
    %v9290 = vunpack.c.l.s4 1934713408
    %v9291 = vunpack.c.0.s8 %v9290
    %v9292 = vlaneseq
    %v9293 = vshrl.u32 %v9292, 7
    %v9294 = vsub.s32 %v9291, %v9293
    %v9295 = vrot.slane %v9281, %v9294
    %v9296 = vcombine.low %v9240, %v9272
    %v9297 = vcombine.high %v9240, %v9272
    %v9298 = vcombine.low %v9247, %v9279
    %v9299 = vcombine.high %v9247, %v9279
    %v9300 = vcombine.low %v9256, %v9288
    %v9301 = vcombine.high %v9256, %v9288
    %v9302 = vcombine.low %v9263, %v9295
    %v9303 = vcombine.high %v9263, %v9295
    %9305 = vrot.lane.b32.xlu0 %v9161, 16
    %v9306 = vpop.permute.xlu0 %9305
    %9309 = vrot.lane.b32.xlu0 %v9162, 32
    %v9310 = vpop.permute.xlu0 %9309
    %9313 = vrot.lane.b32.xlu0 %v9163, 48
    %v9314 = vpop.permute.xlu0 %9313
    %9317 = vrot.lane.b32.xlu0 %v9164, 64
    %v9318 = vpop.permute.xlu0 %9317
    %9321 = vrot.lane.b32.xlu0 %v9165, 80
    %v9322 = vpop.permute.xlu0 %9321
    %9325 = vrot.lane.b32.xlu0 %v9166, 96
    %v9326 = vpop.permute.xlu0 %9325
    %9329 = vrot.lane.b32.xlu0 %v9167, 112
    %v9330 = vpop.permute.xlu0 %9329
    %9333 = vrot.lane.b32.xlu0 %v9297, 16
    %v9334 = vpop.permute.xlu0 %9333
    %9337 = vrot.lane.b32.xlu0 %v9298, 32
    %v9338 = vpop.permute.xlu0 %9337
    %9341 = vrot.lane.b32.xlu0 %v9299, 48
    %v9342 = vpop.permute.xlu0 %9341
    %9345 = vrot.lane.b32.xlu0 %v9300, 64
    %v9346 = vpop.permute.xlu0 %9345
    %9349 = vrot.lane.b32.xlu0 %v9301, 80
    %v9350 = vpop.permute.xlu0 %9349
    %9353 = vrot.lane.b32.xlu0 %v9302, 96
    %v9354 = vpop.permute.xlu0 %9353
    %9357 = vrot.lane.b32.xlu0 %v9303, 112
    %v9358 = vpop.permute.xlu0 %9357
    %v9360 = vsel %vm397, %v9160, %v9306
    %v9361 = vsel %vm399, %v9360, %v9310
    %v9362 = vsel %vm401, %v9361, %v9314
    %v9363 = vsel %vm403, %v9362, %v9318
    %v9364 = vsel %vm405, %v9363, %v9322
    %v9365 = vsel %vm407, %v9364, %v9326
    %v9366 = vsel %vm409, %v9365, %v9330
    %v9367 = vsel %vm397, %v9296, %v9334
    %v9368 = vsel %vm399, %v9367, %v9338
    %v9369 = vsel %vm401, %v9368, %v9342
    %v9370 = vsel %vm403, %v9369, %v9346
    %v9371 = vsel %vm405, %v9370, %v9350
    %v9372 = vsel %vm407, %v9371, %v9354
    %v9373 = vsel %vm409, %v9372, %v9358
    %9390 = vrot.lane.b32.xlu0 %v9016, 127
    %v9391 = vpop.permute.xlu0 %9390
    %9392 = vrot.lane.b32.xlu0 %v9017, 127
    %v9393 = vpop.permute.xlu0 %9392
    %9394 = vrot.lane.b32.xlu0 %v9018, 127
    %v9395 = vpop.permute.xlu0 %9394
    %9396 = vrot.lane.b32.xlu0 %v9019, 127
    %v9397 = vpop.permute.xlu0 %9396
    %9398 = vrot.lane.b32.xlu0 %v9020, 127
    %v9399 = vpop.permute.xlu0 %9398
    %9400 = vrot.lane.b32.xlu0 %v9021, 127
    %v9401 = vpop.permute.xlu0 %9400
    %9402 = vrot.lane.b32.xlu0 %v9022, 127
    %v9403 = vpop.permute.xlu0 %9402
    %9404 = vrot.lane.b32.xlu0 %v9023, 127
    %v9405 = vpop.permute.xlu0 %9404
    %9406 = vrot.lane.b32.xlu0 %v9024, 127
    %v9407 = vpop.permute.xlu0 %9406
    %9408 = vrot.lane.b32.xlu0 %v9025, 127
    %v9409 = vpop.permute.xlu0 %9408
    %9410 = vrot.lane.b32.xlu0 %v9026, 127
    %v9411 = vpop.permute.xlu0 %9410
    %9412 = vrot.lane.b32.xlu0 %v9027, 127
    %v9413 = vpop.permute.xlu0 %9412
    %9414 = vrot.lane.b32.xlu0 %v9028, 127
    %v9415 = vpop.permute.xlu0 %9414
    %9416 = vrot.lane.b32.xlu0 %v9029, 127
    %v9417 = vpop.permute.xlu0 %9416
    %9418 = vrot.lane.b32.xlu0 %v9030, 127
    %v9419 = vpop.permute.xlu0 %9418
    %9420 = vrot.lane.b32.xlu0 %v9031, 127
    %v9421 = vpop.permute.xlu0 %9420
    %v9438 = vcombine.low %v9391, %v9399
    %v9439 = vcombine.high %v9391, %v9399
    %v9441 = vunpack.c.l.s4 1983009808
    %v9442 = vunpack.c.0.s8 %v9441
    %v9443 = vlaneseq
    %v9444 = vshrl.u32 %v9443, 7
    %v9445 = vsub.s32 %v9442, %v9444
    %v9446 = vrot.slane %v9438, %v9445
    %v9448 = vunpack.c.l.s4 1983009808
    %v9449 = vunpack.c.0.s8 %v9448
    %v9450 = vlaneseq
    %v9451 = vshrl.u32 %v9450, 7
    %v9452 = vsub.s32 %v9449, %v9451
    %v9453 = vrot.slane %v9439, %v9452
    %v9454 = vcombine.low %v9395, %v9403
    %v9455 = vcombine.high %v9395, %v9403
    %v9457 = vunpack.c.l.s4 1983009808
    %v9458 = vunpack.c.0.s8 %v9457
    %v9459 = vlaneseq
    %v9460 = vshrl.u32 %v9459, 7
    %v9461 = vsub.s32 %v9458, %v9460
    %v9462 = vrot.slane %v9454, %v9461
    %v9464 = vunpack.c.l.s4 1983009808
    %v9465 = vunpack.c.0.s8 %v9464
    %v9466 = vlaneseq
    %v9467 = vshrl.u32 %v9466, 7
    %v9468 = vsub.s32 %v9465, %v9467
    %v9469 = vrot.slane %v9455, %v9468
    %v9470 = vcombine.low %v9407, %v9415
    %v9471 = vcombine.high %v9407, %v9415
    %v9473 = vunpack.c.l.s4 1983009808
    %v9474 = vunpack.c.0.s8 %v9473
    %v9475 = vlaneseq
    %v9476 = vshrl.u32 %v9475, 7
    %v9477 = vsub.s32 %v9474, %v9476
    %v9478 = vrot.slane %v9470, %v9477
    %v9480 = vunpack.c.l.s4 1983009808
    %v9481 = vunpack.c.0.s8 %v9480
    %v9482 = vlaneseq
    %v9483 = vshrl.u32 %v9482, 7
    %v9484 = vsub.s32 %v9481, %v9483
    %v9485 = vrot.slane %v9471, %v9484
    %v9486 = vcombine.low %v9411, %v9419
    %v9487 = vcombine.high %v9411, %v9419
    %v9489 = vunpack.c.l.s4 1983009808
    %v9490 = vunpack.c.0.s8 %v9489
    %v9491 = vlaneseq
    %v9492 = vshrl.u32 %v9491, 7
    %v9493 = vsub.s32 %v9490, %v9492
    %v9494 = vrot.slane %v9486, %v9493
    %v9496 = vunpack.c.l.s4 1983009808
    %v9497 = vunpack.c.0.s8 %v9496
    %v9498 = vlaneseq
    %v9499 = vshrl.u32 %v9498, 7
    %v9500 = vsub.s32 %v9497, %v9499
    %v9501 = vrot.slane %v9487, %v9500
    %v9502 = vcombine.low %v9446, %v9462
    %v9503 = vcombine.high %v9446, %v9462
    %v9505 = vunpack.c.l.s4 1934713408
    %v9506 = vunpack.c.0.s8 %v9505
    %v9507 = vlaneseq
    %v9508 = vshrl.u32 %v9507, 7
    %v9509 = vsub.s32 %v9506, %v9508
    %v9510 = vrot.slane %v9502, %v9509
    %v9512 = vunpack.c.l.s4 1934713408
    %v9513 = vunpack.c.0.s8 %v9512
    %v9514 = vlaneseq
    %v9515 = vshrl.u32 %v9514, 7
    %v9516 = vsub.s32 %v9513, %v9515
    %v9517 = vrot.slane %v9503, %v9516
    %v9518 = vcombine.low %v9453, %v9469
    %v9519 = vcombine.high %v9453, %v9469
    %v9521 = vunpack.c.l.s4 1934713408
    %v9522 = vunpack.c.0.s8 %v9521
    %v9523 = vlaneseq
    %v9524 = vshrl.u32 %v9523, 7
    %v9525 = vsub.s32 %v9522, %v9524
    %v9526 = vrot.slane %v9518, %v9525
    %v9528 = vunpack.c.l.s4 1934713408
    %v9529 = vunpack.c.0.s8 %v9528
    %v9530 = vlaneseq
    %v9531 = vshrl.u32 %v9530, 7
    %v9532 = vsub.s32 %v9529, %v9531
    %v9533 = vrot.slane %v9519, %v9532
    %v9534 = vcombine.low %v9478, %v9494
    %v9535 = vcombine.high %v9478, %v9494
    %v9537 = vunpack.c.l.s4 1934713408
    %v9538 = vunpack.c.0.s8 %v9537
    %v9539 = vlaneseq
    %v9540 = vshrl.u32 %v9539, 7
    %v9541 = vsub.s32 %v9538, %v9540
    %v9542 = vrot.slane %v9534, %v9541
    %v9544 = vunpack.c.l.s4 1934713408
    %v9545 = vunpack.c.0.s8 %v9544
    %v9546 = vlaneseq
    %v9547 = vshrl.u32 %v9546, 7
    %v9548 = vsub.s32 %v9545, %v9547
    %v9549 = vrot.slane %v9535, %v9548
    %v9550 = vcombine.low %v9485, %v9501
    %v9551 = vcombine.high %v9485, %v9501
    %v9553 = vunpack.c.l.s4 1934713408
    %v9554 = vunpack.c.0.s8 %v9553
    %v9555 = vlaneseq
    %v9556 = vshrl.u32 %v9555, 7
    %v9557 = vsub.s32 %v9554, %v9556
    %v9558 = vrot.slane %v9550, %v9557
    %v9560 = vunpack.c.l.s4 1934713408
    %v9561 = vunpack.c.0.s8 %v9560
    %v9562 = vlaneseq
    %v9563 = vshrl.u32 %v9562, 7
    %v9564 = vsub.s32 %v9561, %v9563
    %v9565 = vrot.slane %v9551, %v9564
    %v9566 = vcombine.low %v9510, %v9542
    %v9567 = vcombine.high %v9510, %v9542
    %v9568 = vcombine.low %v9517, %v9549
    %v9569 = vcombine.high %v9517, %v9549
    %v9570 = vcombine.low %v9526, %v9558
    %v9571 = vcombine.high %v9526, %v9558
    %v9572 = vcombine.low %v9533, %v9565
    %v9573 = vcombine.high %v9533, %v9565
    %v9574 = vcombine.low %v9393, %v9401
    %v9575 = vcombine.high %v9393, %v9401
    %v9577 = vunpack.c.l.s4 1983009808
    %v9578 = vunpack.c.0.s8 %v9577
    %v9579 = vlaneseq
    %v9580 = vshrl.u32 %v9579, 7
    %v9581 = vsub.s32 %v9578, %v9580
    %v9582 = vrot.slane %v9574, %v9581
    %v9584 = vunpack.c.l.s4 1983009808
    %v9585 = vunpack.c.0.s8 %v9584
    %v9586 = vlaneseq
    %v9587 = vshrl.u32 %v9586, 7
    %v9588 = vsub.s32 %v9585, %v9587
    %v9589 = vrot.slane %v9575, %v9588
    %v9590 = vcombine.low %v9397, %v9405
    %v9591 = vcombine.high %v9397, %v9405
    %v9593 = vunpack.c.l.s4 1983009808
    %v9594 = vunpack.c.0.s8 %v9593
    %v9595 = vlaneseq
    %v9596 = vshrl.u32 %v9595, 7
    %v9597 = vsub.s32 %v9594, %v9596
    %v9598 = vrot.slane %v9590, %v9597
    %v9600 = vunpack.c.l.s4 1983009808
    %v9601 = vunpack.c.0.s8 %v9600
    %v9602 = vlaneseq
    %v9603 = vshrl.u32 %v9602, 7
    %v9604 = vsub.s32 %v9601, %v9603
    %v9605 = vrot.slane %v9591, %v9604
    %v9606 = vcombine.low %v9409, %v9417
    %v9607 = vcombine.high %v9409, %v9417
    %v9609 = vunpack.c.l.s4 1983009808
    %v9610 = vunpack.c.0.s8 %v9609
    %v9611 = vlaneseq
    %v9612 = vshrl.u32 %v9611, 7
    %v9613 = vsub.s32 %v9610, %v9612
    %v9614 = vrot.slane %v9606, %v9613
    %v9616 = vunpack.c.l.s4 1983009808
    %v9617 = vunpack.c.0.s8 %v9616
    %v9618 = vlaneseq
    %v9619 = vshrl.u32 %v9618, 7
    %v9620 = vsub.s32 %v9617, %v9619
    %v9621 = vrot.slane %v9607, %v9620
    %v9622 = vcombine.low %v9413, %v9421
    %v9623 = vcombine.high %v9413, %v9421
    %v9625 = vunpack.c.l.s4 1983009808
    %v9626 = vunpack.c.0.s8 %v9625
    %v9627 = vlaneseq
    %v9628 = vshrl.u32 %v9627, 7
    %v9629 = vsub.s32 %v9626, %v9628
    %v9630 = vrot.slane %v9622, %v9629
    %v9632 = vunpack.c.l.s4 1983009808
    %v9633 = vunpack.c.0.s8 %v9632
    %v9634 = vlaneseq
    %v9635 = vshrl.u32 %v9634, 7
    %v9636 = vsub.s32 %v9633, %v9635
    %v9637 = vrot.slane %v9623, %v9636
    %v9638 = vcombine.low %v9582, %v9598
    %v9639 = vcombine.high %v9582, %v9598
    %v9641 = vunpack.c.l.s4 1934713408
    %v9642 = vunpack.c.0.s8 %v9641
    %v9643 = vlaneseq
    %v9644 = vshrl.u32 %v9643, 7
    %v9645 = vsub.s32 %v9642, %v9644
    %v9646 = vrot.slane %v9638, %v9645
    %v9648 = vunpack.c.l.s4 1934713408
    %v9649 = vunpack.c.0.s8 %v9648
    %v9650 = vlaneseq
    %v9651 = vshrl.u32 %v9650, 7
    %v9652 = vsub.s32 %v9649, %v9651
    %v9653 = vrot.slane %v9639, %v9652
    %v9654 = vcombine.low %v9589, %v9605
    %v9655 = vcombine.high %v9589, %v9605
    %v9657 = vunpack.c.l.s4 1934713408
    %v9658 = vunpack.c.0.s8 %v9657
    %v9659 = vlaneseq
    %v9660 = vshrl.u32 %v9659, 7
    %v9661 = vsub.s32 %v9658, %v9660
    %v9662 = vrot.slane %v9654, %v9661
    %v9664 = vunpack.c.l.s4 1934713408
    %v9665 = vunpack.c.0.s8 %v9664
    %v9666 = vlaneseq
    %v9667 = vshrl.u32 %v9666, 7
    %v9668 = vsub.s32 %v9665, %v9667
    %v9669 = vrot.slane %v9655, %v9668
    %v9670 = vcombine.low %v9614, %v9630
    %v9671 = vcombine.high %v9614, %v9630
    %v9673 = vunpack.c.l.s4 1934713408
    %v9674 = vunpack.c.0.s8 %v9673
    %v9675 = vlaneseq
    %v9676 = vshrl.u32 %v9675, 7
    %v9677 = vsub.s32 %v9674, %v9676
    %v9678 = vrot.slane %v9670, %v9677
    %v9680 = vunpack.c.l.s4 1934713408
    %v9681 = vunpack.c.0.s8 %v9680
    %v9682 = vlaneseq
    %v9683 = vshrl.u32 %v9682, 7
    %v9684 = vsub.s32 %v9681, %v9683
    %v9685 = vrot.slane %v9671, %v9684
    %v9686 = vcombine.low %v9621, %v9637
    %v9687 = vcombine.high %v9621, %v9637
    %v9689 = vunpack.c.l.s4 1934713408
    %v9690 = vunpack.c.0.s8 %v9689
    %v9691 = vlaneseq
    %v9692 = vshrl.u32 %v9691, 7
    %v9693 = vsub.s32 %v9690, %v9692
    %v9694 = vrot.slane %v9686, %v9693
    %v9696 = vunpack.c.l.s4 1934713408
    %v9697 = vunpack.c.0.s8 %v9696
    %v9698 = vlaneseq
    %v9699 = vshrl.u32 %v9698, 7
    %v9700 = vsub.s32 %v9697, %v9699
    %v9701 = vrot.slane %v9687, %v9700
    %v9702 = vcombine.low %v9646, %v9678
    %v9703 = vcombine.high %v9646, %v9678
    %v9704 = vcombine.low %v9653, %v9685
    %v9705 = vcombine.high %v9653, %v9685
    %v9706 = vcombine.low %v9662, %v9694
    %v9707 = vcombine.high %v9662, %v9694
    %v9708 = vcombine.low %v9669, %v9701
    %v9709 = vcombine.high %v9669, %v9701
    %9711 = vrot.lane.b32.xlu0 %v9567, 16
    %v9712 = vpop.permute.xlu0 %9711
    %9715 = vrot.lane.b32.xlu0 %v9568, 32
    %v9716 = vpop.permute.xlu0 %9715
    %9719 = vrot.lane.b32.xlu0 %v9569, 48
    %v9720 = vpop.permute.xlu0 %9719
    %9723 = vrot.lane.b32.xlu0 %v9570, 64
    %v9724 = vpop.permute.xlu0 %9723
    %9727 = vrot.lane.b32.xlu0 %v9571, 80
    %v9728 = vpop.permute.xlu0 %9727
    %9731 = vrot.lane.b32.xlu0 %v9572, 96
    %v9732 = vpop.permute.xlu0 %9731
    %9735 = vrot.lane.b32.xlu0 %v9573, 112
    %v9736 = vpop.permute.xlu0 %9735
    %9739 = vrot.lane.b32.xlu0 %v9703, 16
    %v9740 = vpop.permute.xlu0 %9739
    %9743 = vrot.lane.b32.xlu0 %v9704, 32
    %v9744 = vpop.permute.xlu0 %9743
    %9747 = vrot.lane.b32.xlu0 %v9705, 48
    %v9748 = vpop.permute.xlu0 %9747
    %9751 = vrot.lane.b32.xlu0 %v9706, 64
    %v9752 = vpop.permute.xlu0 %9751
    %9755 = vrot.lane.b32.xlu0 %v9707, 80
    %v9756 = vpop.permute.xlu0 %9755
    %9759 = vrot.lane.b32.xlu0 %v9708, 96
    %v9760 = vpop.permute.xlu0 %9759
    %9763 = vrot.lane.b32.xlu0 %v9709, 112
    %v9764 = vpop.permute.xlu0 %9763
    %v9766 = vsel %vm397, %v9566, %v9712
    %v9767 = vsel %vm399, %v9766, %v9716
    %v9768 = vsel %vm401, %v9767, %v9720
    %v9769 = vsel %vm403, %v9768, %v9724
    %v9770 = vsel %vm405, %v9769, %v9728
    %v9771 = vsel %vm407, %v9770, %v9732
    %v9772 = vsel %vm409, %v9771, %v9736
    %v9773 = vsel %vm397, %v9702, %v9740
    %v9774 = vsel %vm399, %v9773, %v9744
    %v9775 = vsel %vm401, %v9774, %v9748
    %v9776 = vsel %vm403, %v9775, %v9752
    %v9777 = vsel %vm405, %v9776, %v9756
    %v9778 = vsel %vm407, %v9777, %v9760
    %v9779 = vsel %vm409, %v9778, %v9764
    %9780 = vrot.lane.b32.xlu0 %v9016, 126
    %v9781 = vpop.permute.xlu0 %9780
    %9782 = vrot.lane.b32.xlu0 %v9017, 126
    %v9783 = vpop.permute.xlu0 %9782
    %9784 = vrot.lane.b32.xlu0 %v9018, 126
    %v9785 = vpop.permute.xlu0 %9784
    %9786 = vrot.lane.b32.xlu0 %v9019, 126
    %v9787 = vpop.permute.xlu0 %9786
    %9788 = vrot.lane.b32.xlu0 %v9020, 126
    %v9789 = vpop.permute.xlu0 %9788
    %9790 = vrot.lane.b32.xlu0 %v9021, 126
    %v9791 = vpop.permute.xlu0 %9790
    %9792 = vrot.lane.b32.xlu0 %v9022, 126
    %v9793 = vpop.permute.xlu0 %9792
    %9794 = vrot.lane.b32.xlu0 %v9023, 126
    %v9795 = vpop.permute.xlu0 %9794
    %9796 = vrot.lane.b32.xlu0 %v9024, 126
    %v9797 = vpop.permute.xlu0 %9796
    %9798 = vrot.lane.b32.xlu0 %v9025, 126
    %v9799 = vpop.permute.xlu0 %9798
    %9800 = vrot.lane.b32.xlu0 %v9026, 126
    %v9801 = vpop.permute.xlu0 %9800
    %9802 = vrot.lane.b32.xlu0 %v9027, 126
    %v9803 = vpop.permute.xlu0 %9802
    %9804 = vrot.lane.b32.xlu0 %v9028, 126
    %v9805 = vpop.permute.xlu0 %9804
    %9806 = vrot.lane.b32.xlu0 %v9029, 126
    %v9807 = vpop.permute.xlu0 %9806
    %9808 = vrot.lane.b32.xlu0 %v9030, 126
    %v9809 = vpop.permute.xlu0 %9808
    %9810 = vrot.lane.b32.xlu0 %v9031, 126
    %v9811 = vpop.permute.xlu0 %9810
    %v9828 = vcombine.low %v9781, %v9789
    %v9829 = vcombine.high %v9781, %v9789
    %v9831 = vunpack.c.l.s4 1983009808
    %v9832 = vunpack.c.0.s8 %v9831
    %v9833 = vlaneseq
    %v9834 = vshrl.u32 %v9833, 7
    %v9835 = vsub.s32 %v9832, %v9834
    %v9836 = vrot.slane %v9828, %v9835
    %v9838 = vunpack.c.l.s4 1983009808
    %v9839 = vunpack.c.0.s8 %v9838
    %v9840 = vlaneseq
    %v9841 = vshrl.u32 %v9840, 7
    %v9842 = vsub.s32 %v9839, %v9841
    %v9843 = vrot.slane %v9829, %v9842
    %v9844 = vcombine.low %v9785, %v9793
    %v9845 = vcombine.high %v9785, %v9793
    %v9847 = vunpack.c.l.s4 1983009808
    %v9848 = vunpack.c.0.s8 %v9847
    %v9849 = vlaneseq
    %v9850 = vshrl.u32 %v9849, 7
    %v9851 = vsub.s32 %v9848, %v9850
    %v9852 = vrot.slane %v9844, %v9851
    %v9854 = vunpack.c.l.s4 1983009808
    %v9855 = vunpack.c.0.s8 %v9854
    %v9856 = vlaneseq
    %v9857 = vshrl.u32 %v9856, 7
    %v9858 = vsub.s32 %v9855, %v9857
    %v9859 = vrot.slane %v9845, %v9858
    %v9860 = vcombine.low %v9797, %v9805
    %v9861 = vcombine.high %v9797, %v9805
    %v9863 = vunpack.c.l.s4 1983009808
    %v9864 = vunpack.c.0.s8 %v9863
    %v9865 = vlaneseq
    %v9866 = vshrl.u32 %v9865, 7
    %v9867 = vsub.s32 %v9864, %v9866
    %v9868 = vrot.slane %v9860, %v9867
    %v9870 = vunpack.c.l.s4 1983009808
    %v9871 = vunpack.c.0.s8 %v9870
    %v9872 = vlaneseq
    %v9873 = vshrl.u32 %v9872, 7
    %v9874 = vsub.s32 %v9871, %v9873
    %v9875 = vrot.slane %v9861, %v9874
    %v9876 = vcombine.low %v9801, %v9809
    %v9877 = vcombine.high %v9801, %v9809
    %v9879 = vunpack.c.l.s4 1983009808
    %v9880 = vunpack.c.0.s8 %v9879
    %v9881 = vlaneseq
    %v9882 = vshrl.u32 %v9881, 7
    %v9883 = vsub.s32 %v9880, %v9882
    %v9884 = vrot.slane %v9876, %v9883
    %v9886 = vunpack.c.l.s4 1983009808
    %v9887 = vunpack.c.0.s8 %v9886
    %v9888 = vlaneseq
    %v9889 = vshrl.u32 %v9888, 7
    %v9890 = vsub.s32 %v9887, %v9889
    %v9891 = vrot.slane %v9877, %v9890
    %v9892 = vcombine.low %v9836, %v9852
    %v9893 = vcombine.high %v9836, %v9852
    %v9895 = vunpack.c.l.s4 1934713408
    %v9896 = vunpack.c.0.s8 %v9895
    %v9897 = vlaneseq
    %v9898 = vshrl.u32 %v9897, 7
    %v9899 = vsub.s32 %v9896, %v9898
    %v9900 = vrot.slane %v9892, %v9899
    %v9902 = vunpack.c.l.s4 1934713408
    %v9903 = vunpack.c.0.s8 %v9902
    %v9904 = vlaneseq
    %v9905 = vshrl.u32 %v9904, 7
    %v9906 = vsub.s32 %v9903, %v9905
    %v9907 = vrot.slane %v9893, %v9906
    %v9908 = vcombine.low %v9843, %v9859
    %v9909 = vcombine.high %v9843, %v9859
    %v9911 = vunpack.c.l.s4 1934713408
    %v9912 = vunpack.c.0.s8 %v9911
    %v9913 = vlaneseq
    %v9914 = vshrl.u32 %v9913, 7
    %v9915 = vsub.s32 %v9912, %v9914
    %v9916 = vrot.slane %v9908, %v9915
    %v9918 = vunpack.c.l.s4 1934713408
    %v9919 = vunpack.c.0.s8 %v9918
    %v9920 = vlaneseq
    %v9921 = vshrl.u32 %v9920, 7
    %v9922 = vsub.s32 %v9919, %v9921
    %v9923 = vrot.slane %v9909, %v9922
    %v9924 = vcombine.low %v9868, %v9884
    %v9925 = vcombine.high %v9868, %v9884
    %v9927 = vunpack.c.l.s4 1934713408
    %v9928 = vunpack.c.0.s8 %v9927
    %v9929 = vlaneseq
    %v9930 = vshrl.u32 %v9929, 7
    %v9931 = vsub.s32 %v9928, %v9930
    %v9932 = vrot.slane %v9924, %v9931
    %v9934 = vunpack.c.l.s4 1934713408
    %v9935 = vunpack.c.0.s8 %v9934
    %v9936 = vlaneseq
    %v9937 = vshrl.u32 %v9936, 7
    %v9938 = vsub.s32 %v9935, %v9937
    %v9939 = vrot.slane %v9925, %v9938
    %v9940 = vcombine.low %v9875, %v9891
    %v9941 = vcombine.high %v9875, %v9891
    %v9943 = vunpack.c.l.s4 1934713408
    %v9944 = vunpack.c.0.s8 %v9943
    %v9945 = vlaneseq
    %v9946 = vshrl.u32 %v9945, 7
    %v9947 = vsub.s32 %v9944, %v9946
    %v9948 = vrot.slane %v9940, %v9947
    %v9950 = vunpack.c.l.s4 1934713408
    %v9951 = vunpack.c.0.s8 %v9950
    %v9952 = vlaneseq
    %v9953 = vshrl.u32 %v9952, 7
    %v9954 = vsub.s32 %v9951, %v9953
    %v9955 = vrot.slane %v9941, %v9954
    %v9956 = vcombine.low %v9900, %v9932
    %v9957 = vcombine.high %v9900, %v9932
    %v9958 = vcombine.low %v9907, %v9939
    %v9959 = vcombine.high %v9907, %v9939
    %v9960 = vcombine.low %v9916, %v9948
    %v9961 = vcombine.high %v9916, %v9948
    %v9962 = vcombine.low %v9923, %v9955
    %v9963 = vcombine.high %v9923, %v9955
    %v9964 = vcombine.low %v9783, %v9791
    %v9965 = vcombine.high %v9783, %v9791
    %v9967 = vunpack.c.l.s4 1983009808
    %v9968 = vunpack.c.0.s8 %v9967
    %v9969 = vlaneseq
    %v9970 = vshrl.u32 %v9969, 7
    %v9971 = vsub.s32 %v9968, %v9970
    %v9972 = vrot.slane %v9964, %v9971
    %v9974 = vunpack.c.l.s4 1983009808
    %v9975 = vunpack.c.0.s8 %v9974
    %v9976 = vlaneseq
    %v9977 = vshrl.u32 %v9976, 7
    %v9978 = vsub.s32 %v9975, %v9977
    %v9979 = vrot.slane %v9965, %v9978
    %v9980 = vcombine.low %v9787, %v9795
    %v9981 = vcombine.high %v9787, %v9795
    %v9983 = vunpack.c.l.s4 1983009808
    %v9984 = vunpack.c.0.s8 %v9983
    %v9985 = vlaneseq
    %v9986 = vshrl.u32 %v9985, 7
    %v9987 = vsub.s32 %v9984, %v9986
    %v9988 = vrot.slane %v9980, %v9987
    %v9990 = vunpack.c.l.s4 1983009808
    %v9991 = vunpack.c.0.s8 %v9990
    %v9992 = vlaneseq
    %v9993 = vshrl.u32 %v9992, 7
    %v9994 = vsub.s32 %v9991, %v9993
    %v9995 = vrot.slane %v9981, %v9994
    %v9996 = vcombine.low %v9799, %v9807
    %v9997 = vcombine.high %v9799, %v9807
    %v9999 = vunpack.c.l.s4 1983009808
    %v10000 = vunpack.c.0.s8 %v9999
    %v10001 = vlaneseq
    %v10002 = vshrl.u32 %v10001, 7
    %v10003 = vsub.s32 %v10000, %v10002
    %v10004 = vrot.slane %v9996, %v10003
    %v10006 = vunpack.c.l.s4 1983009808
    %v10007 = vunpack.c.0.s8 %v10006
    %v10008 = vlaneseq
    %v10009 = vshrl.u32 %v10008, 7
    %v10010 = vsub.s32 %v10007, %v10009
    %v10011 = vrot.slane %v9997, %v10010
    %v10012 = vcombine.low %v9803, %v9811
    %v10013 = vcombine.high %v9803, %v9811
    %v10015 = vunpack.c.l.s4 1983009808
    %v10016 = vunpack.c.0.s8 %v10015
    %v10017 = vlaneseq
    %v10018 = vshrl.u32 %v10017, 7
    %v10019 = vsub.s32 %v10016, %v10018
    %v10020 = vrot.slane %v10012, %v10019
    %v10022 = vunpack.c.l.s4 1983009808
    %v10023 = vunpack.c.0.s8 %v10022
    %v10024 = vlaneseq
    %v10025 = vshrl.u32 %v10024, 7
    %v10026 = vsub.s32 %v10023, %v10025
    %v10027 = vrot.slane %v10013, %v10026
    %v10028 = vcombine.low %v9972, %v9988
    %v10029 = vcombine.high %v9972, %v9988
    %v10031 = vunpack.c.l.s4 1934713408
    %v10032 = vunpack.c.0.s8 %v10031
    %v10033 = vlaneseq
    %v10034 = vshrl.u32 %v10033, 7
    %v10035 = vsub.s32 %v10032, %v10034
    %v10036 = vrot.slane %v10028, %v10035
    %v10038 = vunpack.c.l.s4 1934713408
    %v10039 = vunpack.c.0.s8 %v10038
    %v10040 = vlaneseq
    %v10041 = vshrl.u32 %v10040, 7
    %v10042 = vsub.s32 %v10039, %v10041
    %v10043 = vrot.slane %v10029, %v10042
    %v10044 = vcombine.low %v9979, %v9995
    %v10045 = vcombine.high %v9979, %v9995
    %v10047 = vunpack.c.l.s4 1934713408
    %v10048 = vunpack.c.0.s8 %v10047
    %v10049 = vlaneseq
    %v10050 = vshrl.u32 %v10049, 7
    %v10051 = vsub.s32 %v10048, %v10050
    %v10052 = vrot.slane %v10044, %v10051
    %v10054 = vunpack.c.l.s4 1934713408
    %v10055 = vunpack.c.0.s8 %v10054
    %v10056 = vlaneseq
    %v10057 = vshrl.u32 %v10056, 7
    %v10058 = vsub.s32 %v10055, %v10057
    %v10059 = vrot.slane %v10045, %v10058
    %v10060 = vcombine.low %v10004, %v10020
    %v10061 = vcombine.high %v10004, %v10020
    %v10063 = vunpack.c.l.s4 1934713408
    %v10064 = vunpack.c.0.s8 %v10063
    %v10065 = vlaneseq
    %v10066 = vshrl.u32 %v10065, 7
    %v10067 = vsub.s32 %v10064, %v10066
    %v10068 = vrot.slane %v10060, %v10067
    %v10070 = vunpack.c.l.s4 1934713408
    %v10071 = vunpack.c.0.s8 %v10070
    %v10072 = vlaneseq
    %v10073 = vshrl.u32 %v10072, 7
    %v10074 = vsub.s32 %v10071, %v10073
    %v10075 = vrot.slane %v10061, %v10074
    %v10076 = vcombine.low %v10011, %v10027
    %v10077 = vcombine.high %v10011, %v10027
    %v10079 = vunpack.c.l.s4 1934713408
    %v10080 = vunpack.c.0.s8 %v10079
    %v10081 = vlaneseq
    %v10082 = vshrl.u32 %v10081, 7
    %v10083 = vsub.s32 %v10080, %v10082
    %v10084 = vrot.slane %v10076, %v10083
    %v10086 = vunpack.c.l.s4 1934713408
    %v10087 = vunpack.c.0.s8 %v10086
    %v10088 = vlaneseq
    %v10089 = vshrl.u32 %v10088, 7
    %v10090 = vsub.s32 %v10087, %v10089
    %v10091 = vrot.slane %v10077, %v10090
    %v10092 = vcombine.low %v10036, %v10068
    %v10093 = vcombine.high %v10036, %v10068
    %v10094 = vcombine.low %v10043, %v10075
    %v10095 = vcombine.high %v10043, %v10075
    %v10096 = vcombine.low %v10052, %v10084
    %v10097 = vcombine.high %v10052, %v10084
    %v10098 = vcombine.low %v10059, %v10091
    %v10099 = vcombine.high %v10059, %v10091
    %10101 = vrot.lane.b32.xlu0 %v9957, 16
    %v10102 = vpop.permute.xlu0 %10101
    %10105 = vrot.lane.b32.xlu0 %v9958, 32
    %v10106 = vpop.permute.xlu0 %10105
    %10109 = vrot.lane.b32.xlu0 %v9959, 48
    %v10110 = vpop.permute.xlu0 %10109
    %10113 = vrot.lane.b32.xlu0 %v9960, 64
    %v10114 = vpop.permute.xlu0 %10113
    %10117 = vrot.lane.b32.xlu0 %v9961, 80
    %v10118 = vpop.permute.xlu0 %10117
    %10121 = vrot.lane.b32.xlu0 %v9962, 96
    %v10122 = vpop.permute.xlu0 %10121
    %10125 = vrot.lane.b32.xlu0 %v9963, 112
    %v10126 = vpop.permute.xlu0 %10125
    %10129 = vrot.lane.b32.xlu0 %v10093, 16
    %v10130 = vpop.permute.xlu0 %10129
    %10133 = vrot.lane.b32.xlu0 %v10094, 32
    %v10134 = vpop.permute.xlu0 %10133
    %10137 = vrot.lane.b32.xlu0 %v10095, 48
    %v10138 = vpop.permute.xlu0 %10137
    %10141 = vrot.lane.b32.xlu0 %v10096, 64
    %v10142 = vpop.permute.xlu0 %10141
    %10145 = vrot.lane.b32.xlu0 %v10097, 80
    %v10146 = vpop.permute.xlu0 %10145
    %10149 = vrot.lane.b32.xlu0 %v10098, 96
    %v10150 = vpop.permute.xlu0 %10149
    %10153 = vrot.lane.b32.xlu0 %v10099, 112
    %v10154 = vpop.permute.xlu0 %10153
    %v10156 = vsel %vm397, %v9956, %v10102
    %v10157 = vsel %vm399, %v10156, %v10106
    %v10158 = vsel %vm401, %v10157, %v10110
    %v10159 = vsel %vm403, %v10158, %v10114
    %v10160 = vsel %vm405, %v10159, %v10118
    %v10161 = vsel %vm407, %v10160, %v10122
    %v10162 = vsel %vm409, %v10161, %v10126
    %v10163 = vsel %vm397, %v10092, %v10130
    %v10164 = vsel %vm399, %v10163, %v10134
    %v10165 = vsel %vm401, %v10164, %v10138
    %v10166 = vsel %vm403, %v10165, %v10142
    %v10167 = vsel %vm405, %v10166, %v10146
    %v10168 = vsel %vm407, %v10167, %v10150
    %v10169 = vsel %vm409, %v10168, %v10154
    %v10170 = vld [vmem:[%s9015 + $0x1] sm:$0xff]
    %v10171 = vld [vmem:[%s9015 + $0x9] sm:$0xff]
    %v10172 = vld [vmem:[%s9015 + $0x19] sm:$0xff]
    %v10173 = vld [vmem:[%s9015 + $0x21] sm:$0xff]
    %v10174 = vld [vmem:[%s9015 + $0x31] sm:$0xff]
    %v10175 = vld [vmem:[%s9015 + $0x39] sm:$0xff]
    %v10176 = vld [vmem:[%s9015 + $0x49] sm:$0xff]
    %v10177 = vld [vmem:[%s9015 + $0x51] sm:$0xff]
    %v10178 = vld [vmem:[%s9015 + $0x61] sm:$0xff]
    %v10179 = vld [vmem:[%s9015 + $0x69] sm:$0xff]
    %v10180 = vld [vmem:[%s9015 + $0x79] sm:$0xff]
    %v10181 = vld [vmem:[%s9015 + $0x81] sm:$0xff]
    %v10182 = vld [vmem:[%s9015 + $0x91] sm:$0xff]
    %v10183 = vld [vmem:[%s9015 + $0x99] sm:$0xff]
    %v10184 = vld [vmem:[%s9015 + $0xa9] sm:$0xff]
    %v10185 = vld [vmem:[%s9015 + $0xb1] sm:$0xff]
    %v10186 = vcombine.low %v10170, %v10174
    %v10187 = vcombine.high %v10170, %v10174
    %v10189 = vunpack.c.l.s4 1983009808
    %v10190 = vunpack.c.0.s8 %v10189
    %v10191 = vlaneseq
    %v10192 = vshrl.u32 %v10191, 7
    %v10193 = vsub.s32 %v10190, %v10192
    %v10194 = vrot.slane %v10186, %v10193
    %v10196 = vunpack.c.l.s4 1983009808
    %v10197 = vunpack.c.0.s8 %v10196
    %v10198 = vlaneseq
    %v10199 = vshrl.u32 %v10198, 7
    %v10200 = vsub.s32 %v10197, %v10199
    %v10201 = vrot.slane %v10187, %v10200
    %v10202 = vcombine.low %v10172, %v10176
    %v10203 = vcombine.high %v10172, %v10176
    %v10205 = vunpack.c.l.s4 1983009808
    %v10206 = vunpack.c.0.s8 %v10205
    %v10207 = vlaneseq
    %v10208 = vshrl.u32 %v10207, 7
    %v10209 = vsub.s32 %v10206, %v10208
    %v10210 = vrot.slane %v10202, %v10209
    %v10212 = vunpack.c.l.s4 1983009808
    %v10213 = vunpack.c.0.s8 %v10212
    %v10214 = vlaneseq
    %v10215 = vshrl.u32 %v10214, 7
    %v10216 = vsub.s32 %v10213, %v10215
    %v10217 = vrot.slane %v10203, %v10216
    %v10218 = vcombine.low %v10178, %v10182
    %v10219 = vcombine.high %v10178, %v10182
    %v10221 = vunpack.c.l.s4 1983009808
    %v10222 = vunpack.c.0.s8 %v10221
    %v10223 = vlaneseq
    %v10224 = vshrl.u32 %v10223, 7
    %v10225 = vsub.s32 %v10222, %v10224
    %v10226 = vrot.slane %v10218, %v10225
    %v10228 = vunpack.c.l.s4 1983009808
    %v10229 = vunpack.c.0.s8 %v10228
    %v10230 = vlaneseq
    %v10231 = vshrl.u32 %v10230, 7
    %v10232 = vsub.s32 %v10229, %v10231
    %v10233 = vrot.slane %v10219, %v10232
    %v10234 = vcombine.low %v10180, %v10184
    %v10235 = vcombine.high %v10180, %v10184
    %v10237 = vunpack.c.l.s4 1983009808
    %v10238 = vunpack.c.0.s8 %v10237
    %v10239 = vlaneseq
    %v10240 = vshrl.u32 %v10239, 7
    %v10241 = vsub.s32 %v10238, %v10240
    %v10242 = vrot.slane %v10234, %v10241
    %v10244 = vunpack.c.l.s4 1983009808
    %v10245 = vunpack.c.0.s8 %v10244
    %v10246 = vlaneseq
    %v10247 = vshrl.u32 %v10246, 7
    %v10248 = vsub.s32 %v10245, %v10247
    %v10249 = vrot.slane %v10235, %v10248
    %v10250 = vcombine.low %v10194, %v10210
    %v10251 = vcombine.high %v10194, %v10210
    %v10253 = vunpack.c.l.s4 1934713408
    %v10254 = vunpack.c.0.s8 %v10253
    %v10255 = vlaneseq
    %v10256 = vshrl.u32 %v10255, 7
    %v10257 = vsub.s32 %v10254, %v10256
    %v10258 = vrot.slane %v10250, %v10257
    %v10260 = vunpack.c.l.s4 1934713408
    %v10261 = vunpack.c.0.s8 %v10260
    %v10262 = vlaneseq
    %v10263 = vshrl.u32 %v10262, 7
    %v10264 = vsub.s32 %v10261, %v10263
    %v10265 = vrot.slane %v10251, %v10264
    %v10266 = vcombine.low %v10201, %v10217
    %v10267 = vcombine.high %v10201, %v10217
    %v10269 = vunpack.c.l.s4 1934713408
    %v10270 = vunpack.c.0.s8 %v10269
    %v10271 = vlaneseq
    %v10272 = vshrl.u32 %v10271, 7
    %v10273 = vsub.s32 %v10270, %v10272
    %v10274 = vrot.slane %v10266, %v10273
    %v10276 = vunpack.c.l.s4 1934713408
    %v10277 = vunpack.c.0.s8 %v10276
    %v10278 = vlaneseq
    %v10279 = vshrl.u32 %v10278, 7
    %v10280 = vsub.s32 %v10277, %v10279
    %v10281 = vrot.slane %v10267, %v10280
    %v10282 = vcombine.low %v10226, %v10242
    %v10283 = vcombine.high %v10226, %v10242
    %v10285 = vunpack.c.l.s4 1934713408
    %v10286 = vunpack.c.0.s8 %v10285
    %v10287 = vlaneseq
    %v10288 = vshrl.u32 %v10287, 7
    %v10289 = vsub.s32 %v10286, %v10288
    %v10290 = vrot.slane %v10282, %v10289
    %v10292 = vunpack.c.l.s4 1934713408
    %v10293 = vunpack.c.0.s8 %v10292
    %v10294 = vlaneseq
    %v10295 = vshrl.u32 %v10294, 7
    %v10296 = vsub.s32 %v10293, %v10295
    %v10297 = vrot.slane %v10283, %v10296
    %v10298 = vcombine.low %v10233, %v10249
    %v10299 = vcombine.high %v10233, %v10249
    %v10301 = vunpack.c.l.s4 1934713408
    %v10302 = vunpack.c.0.s8 %v10301
    %v10303 = vlaneseq
    %v10304 = vshrl.u32 %v10303, 7
    %v10305 = vsub.s32 %v10302, %v10304
    %v10306 = vrot.slane %v10298, %v10305
    %v10308 = vunpack.c.l.s4 1934713408
    %v10309 = vunpack.c.0.s8 %v10308
    %v10310 = vlaneseq
    %v10311 = vshrl.u32 %v10310, 7
    %v10312 = vsub.s32 %v10309, %v10311
    %v10313 = vrot.slane %v10299, %v10312
    %v10314 = vcombine.low %v10258, %v10290
    %v10315 = vcombine.high %v10258, %v10290
    %v10316 = vcombine.low %v10265, %v10297
    %v10317 = vcombine.high %v10265, %v10297
    %v10318 = vcombine.low %v10274, %v10306
    %v10319 = vcombine.high %v10274, %v10306
    %v10320 = vcombine.low %v10281, %v10313
    %v10321 = vcombine.high %v10281, %v10313
    %v10322 = vcombine.low %v10171, %v10175
    %v10323 = vcombine.high %v10171, %v10175
    %v10325 = vunpack.c.l.s4 1983009808
    %v10326 = vunpack.c.0.s8 %v10325
    %v10327 = vlaneseq
    %v10328 = vshrl.u32 %v10327, 7
    %v10329 = vsub.s32 %v10326, %v10328
    %v10330 = vrot.slane %v10322, %v10329
    %v10332 = vunpack.c.l.s4 1983009808
    %v10333 = vunpack.c.0.s8 %v10332
    %v10334 = vlaneseq
    %v10335 = vshrl.u32 %v10334, 7
    %v10336 = vsub.s32 %v10333, %v10335
    %v10337 = vrot.slane %v10323, %v10336
    %v10338 = vcombine.low %v10173, %v10177
    %v10339 = vcombine.high %v10173, %v10177
    %v10341 = vunpack.c.l.s4 1983009808
    %v10342 = vunpack.c.0.s8 %v10341
    %v10343 = vlaneseq
    %v10344 = vshrl.u32 %v10343, 7
    %v10345 = vsub.s32 %v10342, %v10344
    %v10346 = vrot.slane %v10338, %v10345
    %v10348 = vunpack.c.l.s4 1983009808
    %v10349 = vunpack.c.0.s8 %v10348
    %v10350 = vlaneseq
    %v10351 = vshrl.u32 %v10350, 7
    %v10352 = vsub.s32 %v10349, %v10351
    %v10353 = vrot.slane %v10339, %v10352
    %v10354 = vcombine.low %v10179, %v10183
    %v10355 = vcombine.high %v10179, %v10183
    %v10357 = vunpack.c.l.s4 1983009808
    %v10358 = vunpack.c.0.s8 %v10357
    %v10359 = vlaneseq
    %v10360 = vshrl.u32 %v10359, 7
    %v10361 = vsub.s32 %v10358, %v10360
    %v10362 = vrot.slane %v10354, %v10361
    %v10364 = vunpack.c.l.s4 1983009808
    %v10365 = vunpack.c.0.s8 %v10364
    %v10366 = vlaneseq
    %v10367 = vshrl.u32 %v10366, 7
    %v10368 = vsub.s32 %v10365, %v10367
    %v10369 = vrot.slane %v10355, %v10368
    %v10370 = vcombine.low %v10181, %v10185
    %v10371 = vcombine.high %v10181, %v10185
    %v10373 = vunpack.c.l.s4 1983009808
    %v10374 = vunpack.c.0.s8 %v10373
    %v10375 = vlaneseq
    %v10376 = vshrl.u32 %v10375, 7
    %v10377 = vsub.s32 %v10374, %v10376
    %v10378 = vrot.slane %v10370, %v10377
    %v10380 = vunpack.c.l.s4 1983009808
    %v10381 = vunpack.c.0.s8 %v10380
    %v10382 = vlaneseq
    %v10383 = vshrl.u32 %v10382, 7
    %v10384 = vsub.s32 %v10381, %v10383
    %v10385 = vrot.slane %v10371, %v10384
    %v10386 = vcombine.low %v10330, %v10346
    %v10387 = vcombine.high %v10330, %v10346
    %v10389 = vunpack.c.l.s4 1934713408
    %v10390 = vunpack.c.0.s8 %v10389
    %v10391 = vlaneseq
    %v10392 = vshrl.u32 %v10391, 7
    %v10393 = vsub.s32 %v10390, %v10392
    %v10394 = vrot.slane %v10386, %v10393
    %v10396 = vunpack.c.l.s4 1934713408
    %v10397 = vunpack.c.0.s8 %v10396
    %v10398 = vlaneseq
    %v10399 = vshrl.u32 %v10398, 7
    %v10400 = vsub.s32 %v10397, %v10399
    %v10401 = vrot.slane %v10387, %v10400
    %v10402 = vcombine.low %v10337, %v10353
    %v10403 = vcombine.high %v10337, %v10353
    %v10405 = vunpack.c.l.s4 1934713408
    %v10406 = vunpack.c.0.s8 %v10405
    %v10407 = vlaneseq
    %v10408 = vshrl.u32 %v10407, 7
    %v10409 = vsub.s32 %v10406, %v10408
    %v10410 = vrot.slane %v10402, %v10409
    %v10412 = vunpack.c.l.s4 1934713408
    %v10413 = vunpack.c.0.s8 %v10412
    %v10414 = vlaneseq
    %v10415 = vshrl.u32 %v10414, 7
    %v10416 = vsub.s32 %v10413, %v10415
    %v10417 = vrot.slane %v10403, %v10416
    %v10418 = vcombine.low %v10362, %v10378
    %v10419 = vcombine.high %v10362, %v10378
    %v10421 = vunpack.c.l.s4 1934713408
    %v10422 = vunpack.c.0.s8 %v10421
    %v10423 = vlaneseq
    %v10424 = vshrl.u32 %v10423, 7
    %v10425 = vsub.s32 %v10422, %v10424
    %v10426 = vrot.slane %v10418, %v10425
    %v10428 = vunpack.c.l.s4 1934713408
    %v10429 = vunpack.c.0.s8 %v10428
    %v10430 = vlaneseq
    %v10431 = vshrl.u32 %v10430, 7
    %v10432 = vsub.s32 %v10429, %v10431
    %v10433 = vrot.slane %v10419, %v10432
    %v10434 = vcombine.low %v10369, %v10385
    %v10435 = vcombine.high %v10369, %v10385
    %v10437 = vunpack.c.l.s4 1934713408
    %v10438 = vunpack.c.0.s8 %v10437
    %v10439 = vlaneseq
    %v10440 = vshrl.u32 %v10439, 7
    %v10441 = vsub.s32 %v10438, %v10440
    %v10442 = vrot.slane %v10434, %v10441
    %v10444 = vunpack.c.l.s4 1934713408
    %v10445 = vunpack.c.0.s8 %v10444
    %v10446 = vlaneseq
    %v10447 = vshrl.u32 %v10446, 7
    %v10448 = vsub.s32 %v10445, %v10447
    %v10449 = vrot.slane %v10435, %v10448
    %v10450 = vcombine.low %v10394, %v10426
    %v10451 = vcombine.high %v10394, %v10426
    %v10452 = vcombine.low %v10401, %v10433
    %v10453 = vcombine.high %v10401, %v10433
    %v10454 = vcombine.low %v10410, %v10442
    %v10455 = vcombine.high %v10410, %v10442
    %v10456 = vcombine.low %v10417, %v10449
    %v10457 = vcombine.high %v10417, %v10449
    %10459 = vrot.lane.b32.xlu0 %v10315, 16
    %v10460 = vpop.permute.xlu0 %10459
    %10463 = vrot.lane.b32.xlu0 %v10316, 32
    %v10464 = vpop.permute.xlu0 %10463
    %10467 = vrot.lane.b32.xlu0 %v10317, 48
    %v10468 = vpop.permute.xlu0 %10467
    %10471 = vrot.lane.b32.xlu0 %v10318, 64
    %v10472 = vpop.permute.xlu0 %10471
    %10475 = vrot.lane.b32.xlu0 %v10319, 80
    %v10476 = vpop.permute.xlu0 %10475
    %10479 = vrot.lane.b32.xlu0 %v10320, 96
    %v10480 = vpop.permute.xlu0 %10479
    %10483 = vrot.lane.b32.xlu0 %v10321, 112
    %v10484 = vpop.permute.xlu0 %10483
    %10487 = vrot.lane.b32.xlu0 %v10451, 16
    %v10488 = vpop.permute.xlu0 %10487
    %10491 = vrot.lane.b32.xlu0 %v10452, 32
    %v10492 = vpop.permute.xlu0 %10491
    %10495 = vrot.lane.b32.xlu0 %v10453, 48
    %v10496 = vpop.permute.xlu0 %10495
    %10499 = vrot.lane.b32.xlu0 %v10454, 64
    %v10500 = vpop.permute.xlu0 %10499
    %10503 = vrot.lane.b32.xlu0 %v10455, 80
    %v10504 = vpop.permute.xlu0 %10503
    %10507 = vrot.lane.b32.xlu0 %v10456, 96
    %v10508 = vpop.permute.xlu0 %10507
    %10511 = vrot.lane.b32.xlu0 %v10457, 112
    %v10512 = vpop.permute.xlu0 %10511
    %v10514 = vsel %vm397, %v10314, %v10460
    %v10515 = vsel %vm399, %v10514, %v10464
    %v10516 = vsel %vm401, %v10515, %v10468
    %v10517 = vsel %vm403, %v10516, %v10472
    %v10518 = vsel %vm405, %v10517, %v10476
    %v10519 = vsel %vm407, %v10518, %v10480
    %v10520 = vsel %vm409, %v10519, %v10484
    %v10521 = vsel %vm397, %v10450, %v10488
    %v10522 = vsel %vm399, %v10521, %v10492
    %v10523 = vsel %vm401, %v10522, %v10496
    %v10524 = vsel %vm403, %v10523, %v10500
    %v10525 = vsel %vm405, %v10524, %v10504
    %v10526 = vsel %vm407, %v10525, %v10508
    %v10527 = vsel %vm409, %v10526, %v10512
    %10544 = vrot.lane.b32.xlu0 %v10170, 127
    %v10545 = vpop.permute.xlu0 %10544
    %10546 = vrot.lane.b32.xlu0 %v10171, 127
    %v10547 = vpop.permute.xlu0 %10546
    %10548 = vrot.lane.b32.xlu0 %v10172, 127
    %v10549 = vpop.permute.xlu0 %10548
    %10550 = vrot.lane.b32.xlu0 %v10173, 127
    %v10551 = vpop.permute.xlu0 %10550
    %10552 = vrot.lane.b32.xlu0 %v10174, 127
    %v10553 = vpop.permute.xlu0 %10552
    %10554 = vrot.lane.b32.xlu0 %v10175, 127
    %v10555 = vpop.permute.xlu0 %10554
    %10556 = vrot.lane.b32.xlu0 %v10176, 127
    %v10557 = vpop.permute.xlu0 %10556
    %10558 = vrot.lane.b32.xlu0 %v10177, 127
    %v10559 = vpop.permute.xlu0 %10558
    %10560 = vrot.lane.b32.xlu0 %v10178, 127
    %v10561 = vpop.permute.xlu0 %10560
    %10562 = vrot.lane.b32.xlu0 %v10179, 127
    %v10563 = vpop.permute.xlu0 %10562
    %10564 = vrot.lane.b32.xlu0 %v10180, 127
    %v10565 = vpop.permute.xlu0 %10564
    %10566 = vrot.lane.b32.xlu0 %v10181, 127
    %v10567 = vpop.permute.xlu0 %10566
    %10568 = vrot.lane.b32.xlu0 %v10182, 127
    %v10569 = vpop.permute.xlu0 %10568
    %10570 = vrot.lane.b32.xlu0 %v10183, 127
    %v10571 = vpop.permute.xlu0 %10570
    %10572 = vrot.lane.b32.xlu0 %v10184, 127
    %v10573 = vpop.permute.xlu0 %10572
    %10574 = vrot.lane.b32.xlu0 %v10185, 127
    %v10575 = vpop.permute.xlu0 %10574
    %v10592 = vcombine.low %v10545, %v10553
    %v10593 = vcombine.high %v10545, %v10553
    %v10595 = vunpack.c.l.s4 1983009808
    %v10596 = vunpack.c.0.s8 %v10595
    %v10597 = vlaneseq
    %v10598 = vshrl.u32 %v10597, 7
    %v10599 = vsub.s32 %v10596, %v10598
    %v10600 = vrot.slane %v10592, %v10599
    %v10602 = vunpack.c.l.s4 1983009808
    %v10603 = vunpack.c.0.s8 %v10602
    %v10604 = vlaneseq
    %v10605 = vshrl.u32 %v10604, 7
    %v10606 = vsub.s32 %v10603, %v10605
    %v10607 = vrot.slane %v10593, %v10606
    %v10608 = vcombine.low %v10549, %v10557
    %v10609 = vcombine.high %v10549, %v10557
    %v10611 = vunpack.c.l.s4 1983009808
    %v10612 = vunpack.c.0.s8 %v10611
    %v10613 = vlaneseq
    %v10614 = vshrl.u32 %v10613, 7
    %v10615 = vsub.s32 %v10612, %v10614
    %v10616 = vrot.slane %v10608, %v10615
    %v10618 = vunpack.c.l.s4 1983009808
    %v10619 = vunpack.c.0.s8 %v10618
    %v10620 = vlaneseq
    %v10621 = vshrl.u32 %v10620, 7
    %v10622 = vsub.s32 %v10619, %v10621
    %v10623 = vrot.slane %v10609, %v10622
    %v10624 = vcombine.low %v10561, %v10569
    %v10625 = vcombine.high %v10561, %v10569
    %v10627 = vunpack.c.l.s4 1983009808
    %v10628 = vunpack.c.0.s8 %v10627
    %v10629 = vlaneseq
    %v10630 = vshrl.u32 %v10629, 7
    %v10631 = vsub.s32 %v10628, %v10630
    %v10632 = vrot.slane %v10624, %v10631
    %v10634 = vunpack.c.l.s4 1983009808
    %v10635 = vunpack.c.0.s8 %v10634
    %v10636 = vlaneseq
    %v10637 = vshrl.u32 %v10636, 7
    %v10638 = vsub.s32 %v10635, %v10637
    %v10639 = vrot.slane %v10625, %v10638
    %v10640 = vcombine.low %v10565, %v10573
    %v10641 = vcombine.high %v10565, %v10573
    %v10643 = vunpack.c.l.s4 1983009808
    %v10644 = vunpack.c.0.s8 %v10643
    %v10645 = vlaneseq
    %v10646 = vshrl.u32 %v10645, 7
    %v10647 = vsub.s32 %v10644, %v10646
    %v10648 = vrot.slane %v10640, %v10647
    %v10650 = vunpack.c.l.s4 1983009808
    %v10651 = vunpack.c.0.s8 %v10650
    %v10652 = vlaneseq
    %v10653 = vshrl.u32 %v10652, 7
    %v10654 = vsub.s32 %v10651, %v10653
    %v10655 = vrot.slane %v10641, %v10654
    %v10656 = vcombine.low %v10600, %v10616
    %v10657 = vcombine.high %v10600, %v10616
    %v10659 = vunpack.c.l.s4 1934713408
    %v10660 = vunpack.c.0.s8 %v10659
    %v10661 = vlaneseq
    %v10662 = vshrl.u32 %v10661, 7
    %v10663 = vsub.s32 %v10660, %v10662
    %v10664 = vrot.slane %v10656, %v10663
    %v10666 = vunpack.c.l.s4 1934713408
    %v10667 = vunpack.c.0.s8 %v10666
    %v10668 = vlaneseq
    %v10669 = vshrl.u32 %v10668, 7
    %v10670 = vsub.s32 %v10667, %v10669
    %v10671 = vrot.slane %v10657, %v10670
    %v10672 = vcombine.low %v10607, %v10623
    %v10673 = vcombine.high %v10607, %v10623
    %v10675 = vunpack.c.l.s4 1934713408
    %v10676 = vunpack.c.0.s8 %v10675
    %v10677 = vlaneseq
    %v10678 = vshrl.u32 %v10677, 7
    %v10679 = vsub.s32 %v10676, %v10678
    %v10680 = vrot.slane %v10672, %v10679
    %v10682 = vunpack.c.l.s4 1934713408
    %v10683 = vunpack.c.0.s8 %v10682
    %v10684 = vlaneseq
    %v10685 = vshrl.u32 %v10684, 7
    %v10686 = vsub.s32 %v10683, %v10685
    %v10687 = vrot.slane %v10673, %v10686
    %v10688 = vcombine.low %v10632, %v10648
    %v10689 = vcombine.high %v10632, %v10648
    %v10691 = vunpack.c.l.s4 1934713408
    %v10692 = vunpack.c.0.s8 %v10691
    %v10693 = vlaneseq
    %v10694 = vshrl.u32 %v10693, 7
    %v10695 = vsub.s32 %v10692, %v10694
    %v10696 = vrot.slane %v10688, %v10695
    %v10698 = vunpack.c.l.s4 1934713408
    %v10699 = vunpack.c.0.s8 %v10698
    %v10700 = vlaneseq
    %v10701 = vshrl.u32 %v10700, 7
    %v10702 = vsub.s32 %v10699, %v10701
    %v10703 = vrot.slane %v10689, %v10702
    %v10704 = vcombine.low %v10639, %v10655
    %v10705 = vcombine.high %v10639, %v10655
    %v10707 = vunpack.c.l.s4 1934713408
    %v10708 = vunpack.c.0.s8 %v10707
    %v10709 = vlaneseq
    %v10710 = vshrl.u32 %v10709, 7
    %v10711 = vsub.s32 %v10708, %v10710
    %v10712 = vrot.slane %v10704, %v10711
    %v10714 = vunpack.c.l.s4 1934713408
    %v10715 = vunpack.c.0.s8 %v10714
    %v10716 = vlaneseq
    %v10717 = vshrl.u32 %v10716, 7
    %v10718 = vsub.s32 %v10715, %v10717
    %v10719 = vrot.slane %v10705, %v10718
    %v10720 = vcombine.low %v10664, %v10696
    %v10721 = vcombine.high %v10664, %v10696
    %v10722 = vcombine.low %v10671, %v10703
    %v10723 = vcombine.high %v10671, %v10703
    %v10724 = vcombine.low %v10680, %v10712
    %v10725 = vcombine.high %v10680, %v10712
    %v10726 = vcombine.low %v10687, %v10719
    %v10727 = vcombine.high %v10687, %v10719
    %v10728 = vcombine.low %v10547, %v10555
    %v10729 = vcombine.high %v10547, %v10555
    %v10731 = vunpack.c.l.s4 1983009808
    %v10732 = vunpack.c.0.s8 %v10731
    %v10733 = vlaneseq
    %v10734 = vshrl.u32 %v10733, 7
    %v10735 = vsub.s32 %v10732, %v10734
    %v10736 = vrot.slane %v10728, %v10735
    %v10738 = vunpack.c.l.s4 1983009808
    %v10739 = vunpack.c.0.s8 %v10738
    %v10740 = vlaneseq
    %v10741 = vshrl.u32 %v10740, 7
    %v10742 = vsub.s32 %v10739, %v10741
    %v10743 = vrot.slane %v10729, %v10742
    %v10744 = vcombine.low %v10551, %v10559
    %v10745 = vcombine.high %v10551, %v10559
    %v10747 = vunpack.c.l.s4 1983009808
    %v10748 = vunpack.c.0.s8 %v10747
    %v10749 = vlaneseq
    %v10750 = vshrl.u32 %v10749, 7
    %v10751 = vsub.s32 %v10748, %v10750
    %v10752 = vrot.slane %v10744, %v10751
    %v10754 = vunpack.c.l.s4 1983009808
    %v10755 = vunpack.c.0.s8 %v10754
    %v10756 = vlaneseq
    %v10757 = vshrl.u32 %v10756, 7
    %v10758 = vsub.s32 %v10755, %v10757
    %v10759 = vrot.slane %v10745, %v10758
    %v10760 = vcombine.low %v10563, %v10571
    %v10761 = vcombine.high %v10563, %v10571
    %v10763 = vunpack.c.l.s4 1983009808
    %v10764 = vunpack.c.0.s8 %v10763
    %v10765 = vlaneseq
    %v10766 = vshrl.u32 %v10765, 7
    %v10767 = vsub.s32 %v10764, %v10766
    %v10768 = vrot.slane %v10760, %v10767
    %v10770 = vunpack.c.l.s4 1983009808
    %v10771 = vunpack.c.0.s8 %v10770
    %v10772 = vlaneseq
    %v10773 = vshrl.u32 %v10772, 7
    %v10774 = vsub.s32 %v10771, %v10773
    %v10775 = vrot.slane %v10761, %v10774
    %v10776 = vcombine.low %v10567, %v10575
    %v10777 = vcombine.high %v10567, %v10575
    %v10779 = vunpack.c.l.s4 1983009808
    %v10780 = vunpack.c.0.s8 %v10779
    %v10781 = vlaneseq
    %v10782 = vshrl.u32 %v10781, 7
    %v10783 = vsub.s32 %v10780, %v10782
    %v10784 = vrot.slane %v10776, %v10783
    %v10786 = vunpack.c.l.s4 1983009808
    %v10787 = vunpack.c.0.s8 %v10786
    %v10788 = vlaneseq
    %v10789 = vshrl.u32 %v10788, 7
    %v10790 = vsub.s32 %v10787, %v10789
    %v10791 = vrot.slane %v10777, %v10790
    %v10792 = vcombine.low %v10736, %v10752
    %v10793 = vcombine.high %v10736, %v10752
    %v10795 = vunpack.c.l.s4 1934713408
    %v10796 = vunpack.c.0.s8 %v10795
    %v10797 = vlaneseq
    %v10798 = vshrl.u32 %v10797, 7
    %v10799 = vsub.s32 %v10796, %v10798
    %v10800 = vrot.slane %v10792, %v10799
    %v10802 = vunpack.c.l.s4 1934713408
    %v10803 = vunpack.c.0.s8 %v10802
    %v10804 = vlaneseq
    %v10805 = vshrl.u32 %v10804, 7
    %v10806 = vsub.s32 %v10803, %v10805
    %v10807 = vrot.slane %v10793, %v10806
    %v10808 = vcombine.low %v10743, %v10759
    %v10809 = vcombine.high %v10743, %v10759
    %v10811 = vunpack.c.l.s4 1934713408
    %v10812 = vunpack.c.0.s8 %v10811
    %v10813 = vlaneseq
    %v10814 = vshrl.u32 %v10813, 7
    %v10815 = vsub.s32 %v10812, %v10814
    %v10816 = vrot.slane %v10808, %v10815
    %v10818 = vunpack.c.l.s4 1934713408
    %v10819 = vunpack.c.0.s8 %v10818
    %v10820 = vlaneseq
    %v10821 = vshrl.u32 %v10820, 7
    %v10822 = vsub.s32 %v10819, %v10821
    %v10823 = vrot.slane %v10809, %v10822
    %v10824 = vcombine.low %v10768, %v10784
    %v10825 = vcombine.high %v10768, %v10784
    %v10827 = vunpack.c.l.s4 1934713408
    %v10828 = vunpack.c.0.s8 %v10827
    %v10829 = vlaneseq
    %v10830 = vshrl.u32 %v10829, 7
    %v10831 = vsub.s32 %v10828, %v10830
    %v10832 = vrot.slane %v10824, %v10831
    %v10834 = vunpack.c.l.s4 1934713408
    %v10835 = vunpack.c.0.s8 %v10834
    %v10836 = vlaneseq
    %v10837 = vshrl.u32 %v10836, 7
    %v10838 = vsub.s32 %v10835, %v10837
    %v10839 = vrot.slane %v10825, %v10838
    %v10840 = vcombine.low %v10775, %v10791
    %v10841 = vcombine.high %v10775, %v10791
    %v10843 = vunpack.c.l.s4 1934713408
    %v10844 = vunpack.c.0.s8 %v10843
    %v10845 = vlaneseq
    %v10846 = vshrl.u32 %v10845, 7
    %v10847 = vsub.s32 %v10844, %v10846
    %v10848 = vrot.slane %v10840, %v10847
    %v10850 = vunpack.c.l.s4 1934713408
    %v10851 = vunpack.c.0.s8 %v10850
    %v10852 = vlaneseq
    %v10853 = vshrl.u32 %v10852, 7
    %v10854 = vsub.s32 %v10851, %v10853
    %v10855 = vrot.slane %v10841, %v10854
    %v10856 = vcombine.low %v10800, %v10832
    %v10857 = vcombine.high %v10800, %v10832
    %v10858 = vcombine.low %v10807, %v10839
    %v10859 = vcombine.high %v10807, %v10839
    %v10860 = vcombine.low %v10816, %v10848
    %v10861 = vcombine.high %v10816, %v10848
    %v10862 = vcombine.low %v10823, %v10855
    %v10863 = vcombine.high %v10823, %v10855
    %10865 = vrot.lane.b32.xlu0 %v10721, 16
    %v10866 = vpop.permute.xlu0 %10865
    %10869 = vrot.lane.b32.xlu0 %v10722, 32
    %v10870 = vpop.permute.xlu0 %10869
    %10873 = vrot.lane.b32.xlu0 %v10723, 48
    %v10874 = vpop.permute.xlu0 %10873
    %10877 = vrot.lane.b32.xlu0 %v10724, 64
    %v10878 = vpop.permute.xlu0 %10877
    %10881 = vrot.lane.b32.xlu0 %v10725, 80
    %v10882 = vpop.permute.xlu0 %10881
    %10885 = vrot.lane.b32.xlu0 %v10726, 96
    %v10886 = vpop.permute.xlu0 %10885
    %10889 = vrot.lane.b32.xlu0 %v10727, 112
    %v10890 = vpop.permute.xlu0 %10889
    %10893 = vrot.lane.b32.xlu0 %v10857, 16
    %v10894 = vpop.permute.xlu0 %10893
    %10897 = vrot.lane.b32.xlu0 %v10858, 32
    %v10898 = vpop.permute.xlu0 %10897
    %10901 = vrot.lane.b32.xlu0 %v10859, 48
    %v10902 = vpop.permute.xlu0 %10901
    %10905 = vrot.lane.b32.xlu0 %v10860, 64
    %v10906 = vpop.permute.xlu0 %10905
    %10909 = vrot.lane.b32.xlu0 %v10861, 80
    %v10910 = vpop.permute.xlu0 %10909
    %10913 = vrot.lane.b32.xlu0 %v10862, 96
    %v10914 = vpop.permute.xlu0 %10913
    %10917 = vrot.lane.b32.xlu0 %v10863, 112
    %v10918 = vpop.permute.xlu0 %10917
    %v10920 = vsel %vm397, %v10720, %v10866
    %v10921 = vsel %vm399, %v10920, %v10870
    %v10922 = vsel %vm401, %v10921, %v10874
    %v10923 = vsel %vm403, %v10922, %v10878
    %v10924 = vsel %vm405, %v10923, %v10882
    %v10925 = vsel %vm407, %v10924, %v10886
    %v10926 = vsel %vm409, %v10925, %v10890
    %v10927 = vsel %vm397, %v10856, %v10894
    %v10928 = vsel %vm399, %v10927, %v10898
    %v10929 = vsel %vm401, %v10928, %v10902
    %v10930 = vsel %vm403, %v10929, %v10906
    %v10931 = vsel %vm405, %v10930, %v10910
    %v10932 = vsel %vm407, %v10931, %v10914
    %v10933 = vsel %vm409, %v10932, %v10918
    %10934 = vrot.lane.b32.xlu0 %v10170, 126
    %v10935 = vpop.permute.xlu0 %10934
    %10936 = vrot.lane.b32.xlu0 %v10171, 126
    %v10937 = vpop.permute.xlu0 %10936
    %10938 = vrot.lane.b32.xlu0 %v10172, 126
    %v10939 = vpop.permute.xlu0 %10938
    %10940 = vrot.lane.b32.xlu0 %v10173, 126
    %v10941 = vpop.permute.xlu0 %10940
    %10942 = vrot.lane.b32.xlu0 %v10174, 126
    %v10943 = vpop.permute.xlu0 %10942
    %10944 = vrot.lane.b32.xlu0 %v10175, 126
    %v10945 = vpop.permute.xlu0 %10944
    %10946 = vrot.lane.b32.xlu0 %v10176, 126
    %v10947 = vpop.permute.xlu0 %10946
    %10948 = vrot.lane.b32.xlu0 %v10177, 126
    %v10949 = vpop.permute.xlu0 %10948
    %10950 = vrot.lane.b32.xlu0 %v10178, 126
    %v10951 = vpop.permute.xlu0 %10950
    %10952 = vrot.lane.b32.xlu0 %v10179, 126
    %v10953 = vpop.permute.xlu0 %10952
    %10954 = vrot.lane.b32.xlu0 %v10180, 126
    %v10955 = vpop.permute.xlu0 %10954
    %10956 = vrot.lane.b32.xlu0 %v10181, 126
    %v10957 = vpop.permute.xlu0 %10956
    %10958 = vrot.lane.b32.xlu0 %v10182, 126
    %v10959 = vpop.permute.xlu0 %10958
    %10960 = vrot.lane.b32.xlu0 %v10183, 126
    %v10961 = vpop.permute.xlu0 %10960
    %10962 = vrot.lane.b32.xlu0 %v10184, 126
    %v10963 = vpop.permute.xlu0 %10962
    %10964 = vrot.lane.b32.xlu0 %v10185, 126
    %v10965 = vpop.permute.xlu0 %10964
    %v10982 = vcombine.low %v10935, %v10943
    %v10983 = vcombine.high %v10935, %v10943
    %v10985 = vunpack.c.l.s4 1983009808
    %v10986 = vunpack.c.0.s8 %v10985
    %v10987 = vlaneseq
    %v10988 = vshrl.u32 %v10987, 7
    %v10989 = vsub.s32 %v10986, %v10988
    %v10990 = vrot.slane %v10982, %v10989
    %v10992 = vunpack.c.l.s4 1983009808
    %v10993 = vunpack.c.0.s8 %v10992
    %v10994 = vlaneseq
    %v10995 = vshrl.u32 %v10994, 7
    %v10996 = vsub.s32 %v10993, %v10995
    %v10997 = vrot.slane %v10983, %v10996
    %v10998 = vcombine.low %v10939, %v10947
    %v10999 = vcombine.high %v10939, %v10947
    %v11001 = vunpack.c.l.s4 1983009808
    %v11002 = vunpack.c.0.s8 %v11001
    %v11003 = vlaneseq
    %v11004 = vshrl.u32 %v11003, 7
    %v11005 = vsub.s32 %v11002, %v11004
    %v11006 = vrot.slane %v10998, %v11005
    %v11008 = vunpack.c.l.s4 1983009808
    %v11009 = vunpack.c.0.s8 %v11008
    %v11010 = vlaneseq
    %v11011 = vshrl.u32 %v11010, 7
    %v11012 = vsub.s32 %v11009, %v11011
    %v11013 = vrot.slane %v10999, %v11012
    %v11014 = vcombine.low %v10951, %v10959
    %v11015 = vcombine.high %v10951, %v10959
    %v11017 = vunpack.c.l.s4 1983009808
    %v11018 = vunpack.c.0.s8 %v11017
    %v11019 = vlaneseq
    %v11020 = vshrl.u32 %v11019, 7
    %v11021 = vsub.s32 %v11018, %v11020
    %v11022 = vrot.slane %v11014, %v11021
    %v11024 = vunpack.c.l.s4 1983009808
    %v11025 = vunpack.c.0.s8 %v11024
    %v11026 = vlaneseq
    %v11027 = vshrl.u32 %v11026, 7
    %v11028 = vsub.s32 %v11025, %v11027
    %v11029 = vrot.slane %v11015, %v11028
    %v11030 = vcombine.low %v10955, %v10963
    %v11031 = vcombine.high %v10955, %v10963
    %v11033 = vunpack.c.l.s4 1983009808
    %v11034 = vunpack.c.0.s8 %v11033
    %v11035 = vlaneseq
    %v11036 = vshrl.u32 %v11035, 7
    %v11037 = vsub.s32 %v11034, %v11036
    %v11038 = vrot.slane %v11030, %v11037
    %v11040 = vunpack.c.l.s4 1983009808
    %v11041 = vunpack.c.0.s8 %v11040
    %v11042 = vlaneseq
    %v11043 = vshrl.u32 %v11042, 7
    %v11044 = vsub.s32 %v11041, %v11043
    %v11045 = vrot.slane %v11031, %v11044
    %v11046 = vcombine.low %v10990, %v11006
    %v11047 = vcombine.high %v10990, %v11006
    %v11049 = vunpack.c.l.s4 1934713408
    %v11050 = vunpack.c.0.s8 %v11049
    %v11051 = vlaneseq
    %v11052 = vshrl.u32 %v11051, 7
    %v11053 = vsub.s32 %v11050, %v11052
    %v11054 = vrot.slane %v11046, %v11053
    %v11056 = vunpack.c.l.s4 1934713408
    %v11057 = vunpack.c.0.s8 %v11056
    %v11058 = vlaneseq
    %v11059 = vshrl.u32 %v11058, 7
    %v11060 = vsub.s32 %v11057, %v11059
    %v11061 = vrot.slane %v11047, %v11060
    %v11062 = vcombine.low %v10997, %v11013
    %v11063 = vcombine.high %v10997, %v11013
    %v11065 = vunpack.c.l.s4 1934713408
    %v11066 = vunpack.c.0.s8 %v11065
    %v11067 = vlaneseq
    %v11068 = vshrl.u32 %v11067, 7
    %v11069 = vsub.s32 %v11066, %v11068
    %v11070 = vrot.slane %v11062, %v11069
    %v11072 = vunpack.c.l.s4 1934713408
    %v11073 = vunpack.c.0.s8 %v11072
    %v11074 = vlaneseq
    %v11075 = vshrl.u32 %v11074, 7
    %v11076 = vsub.s32 %v11073, %v11075
    %v11077 = vrot.slane %v11063, %v11076
    %v11078 = vcombine.low %v11022, %v11038
    %v11079 = vcombine.high %v11022, %v11038
    %v11081 = vunpack.c.l.s4 1934713408
    %v11082 = vunpack.c.0.s8 %v11081
    %v11083 = vlaneseq
    %v11084 = vshrl.u32 %v11083, 7
    %v11085 = vsub.s32 %v11082, %v11084
    %v11086 = vrot.slane %v11078, %v11085
    %v11088 = vunpack.c.l.s4 1934713408
    %v11089 = vunpack.c.0.s8 %v11088
    %v11090 = vlaneseq
    %v11091 = vshrl.u32 %v11090, 7
    %v11092 = vsub.s32 %v11089, %v11091
    %v11093 = vrot.slane %v11079, %v11092
    %v11094 = vcombine.low %v11029, %v11045
    %v11095 = vcombine.high %v11029, %v11045
    %v11097 = vunpack.c.l.s4 1934713408
    %v11098 = vunpack.c.0.s8 %v11097
    %v11099 = vlaneseq
    %v11100 = vshrl.u32 %v11099, 7
    %v11101 = vsub.s32 %v11098, %v11100
    %v11102 = vrot.slane %v11094, %v11101
    %v11104 = vunpack.c.l.s4 1934713408
    %v11105 = vunpack.c.0.s8 %v11104
    %v11106 = vlaneseq
    %v11107 = vshrl.u32 %v11106, 7
    %v11108 = vsub.s32 %v11105, %v11107
    %v11109 = vrot.slane %v11095, %v11108
    %v11110 = vcombine.low %v11054, %v11086
    %v11111 = vcombine.high %v11054, %v11086
    %v11112 = vcombine.low %v11061, %v11093
    %v11113 = vcombine.high %v11061, %v11093
    %v11114 = vcombine.low %v11070, %v11102
    %v11115 = vcombine.high %v11070, %v11102
    %v11116 = vcombine.low %v11077, %v11109
    %v11117 = vcombine.high %v11077, %v11109
    %v11118 = vcombine.low %v10937, %v10945
    %v11119 = vcombine.high %v10937, %v10945
    %v11121 = vunpack.c.l.s4 1983009808
    %v11122 = vunpack.c.0.s8 %v11121
    %v11123 = vlaneseq
    %v11124 = vshrl.u32 %v11123, 7
    %v11125 = vsub.s32 %v11122, %v11124
    %v11126 = vrot.slane %v11118, %v11125
    %v11128 = vunpack.c.l.s4 1983009808
    %v11129 = vunpack.c.0.s8 %v11128
    %v11130 = vlaneseq
    %v11131 = vshrl.u32 %v11130, 7
    %v11132 = vsub.s32 %v11129, %v11131
    %v11133 = vrot.slane %v11119, %v11132
    %v11134 = vcombine.low %v10941, %v10949
    %v11135 = vcombine.high %v10941, %v10949
    %v11137 = vunpack.c.l.s4 1983009808
    %v11138 = vunpack.c.0.s8 %v11137
    %v11139 = vlaneseq
    %v11140 = vshrl.u32 %v11139, 7
    %v11141 = vsub.s32 %v11138, %v11140
    %v11142 = vrot.slane %v11134, %v11141
    %v11144 = vunpack.c.l.s4 1983009808
    %v11145 = vunpack.c.0.s8 %v11144
    %v11146 = vlaneseq
    %v11147 = vshrl.u32 %v11146, 7
    %v11148 = vsub.s32 %v11145, %v11147
    %v11149 = vrot.slane %v11135, %v11148
    %v11150 = vcombine.low %v10953, %v10961
    %v11151 = vcombine.high %v10953, %v10961
    %v11153 = vunpack.c.l.s4 1983009808
    %v11154 = vunpack.c.0.s8 %v11153
    %v11155 = vlaneseq
    %v11156 = vshrl.u32 %v11155, 7
    %v11157 = vsub.s32 %v11154, %v11156
    %v11158 = vrot.slane %v11150, %v11157
    %v11160 = vunpack.c.l.s4 1983009808
    %v11161 = vunpack.c.0.s8 %v11160
    %v11162 = vlaneseq
    %v11163 = vshrl.u32 %v11162, 7
    %v11164 = vsub.s32 %v11161, %v11163
    %v11165 = vrot.slane %v11151, %v11164
    %v11166 = vcombine.low %v10957, %v10965
    %v11167 = vcombine.high %v10957, %v10965
    %v11169 = vunpack.c.l.s4 1983009808
    %v11170 = vunpack.c.0.s8 %v11169
    %v11171 = vlaneseq
    %v11172 = vshrl.u32 %v11171, 7
    %v11173 = vsub.s32 %v11170, %v11172
    %v11174 = vrot.slane %v11166, %v11173
    %v11176 = vunpack.c.l.s4 1983009808
    %v11177 = vunpack.c.0.s8 %v11176
    %v11178 = vlaneseq
    %v11179 = vshrl.u32 %v11178, 7
    %v11180 = vsub.s32 %v11177, %v11179
    %v11181 = vrot.slane %v11167, %v11180
    %v11182 = vcombine.low %v11126, %v11142
    %v11183 = vcombine.high %v11126, %v11142
    %v11185 = vunpack.c.l.s4 1934713408
    %v11186 = vunpack.c.0.s8 %v11185
    %v11187 = vlaneseq
    %v11188 = vshrl.u32 %v11187, 7
    %v11189 = vsub.s32 %v11186, %v11188
    %v11190 = vrot.slane %v11182, %v11189
    %v11192 = vunpack.c.l.s4 1934713408
    %v11193 = vunpack.c.0.s8 %v11192
    %v11194 = vlaneseq
    %v11195 = vshrl.u32 %v11194, 7
    %v11196 = vsub.s32 %v11193, %v11195
    %v11197 = vrot.slane %v11183, %v11196
    %v11198 = vcombine.low %v11133, %v11149
    %v11199 = vcombine.high %v11133, %v11149
    %v11201 = vunpack.c.l.s4 1934713408
    %v11202 = vunpack.c.0.s8 %v11201
    %v11203 = vlaneseq
    %v11204 = vshrl.u32 %v11203, 7
    %v11205 = vsub.s32 %v11202, %v11204
    %v11206 = vrot.slane %v11198, %v11205
    %v11208 = vunpack.c.l.s4 1934713408
    %v11209 = vunpack.c.0.s8 %v11208
    %v11210 = vlaneseq
    %v11211 = vshrl.u32 %v11210, 7
    %v11212 = vsub.s32 %v11209, %v11211
    %v11213 = vrot.slane %v11199, %v11212
    %v11214 = vcombine.low %v11158, %v11174
    %v11215 = vcombine.high %v11158, %v11174
    %v11217 = vunpack.c.l.s4 1934713408
    %v11218 = vunpack.c.0.s8 %v11217
    %v11219 = vlaneseq
    %v11220 = vshrl.u32 %v11219, 7
    %v11221 = vsub.s32 %v11218, %v11220
    %v11222 = vrot.slane %v11214, %v11221
    %v11224 = vunpack.c.l.s4 1934713408
    %v11225 = vunpack.c.0.s8 %v11224
    %v11226 = vlaneseq
    %v11227 = vshrl.u32 %v11226, 7
    %v11228 = vsub.s32 %v11225, %v11227
    %v11229 = vrot.slane %v11215, %v11228
    %v11230 = vcombine.low %v11165, %v11181
    %v11231 = vcombine.high %v11165, %v11181
    %v11233 = vunpack.c.l.s4 1934713408
    %v11234 = vunpack.c.0.s8 %v11233
    %v11235 = vlaneseq
    %v11236 = vshrl.u32 %v11235, 7
    %v11237 = vsub.s32 %v11234, %v11236
    %v11238 = vrot.slane %v11230, %v11237
    %v11240 = vunpack.c.l.s4 1934713408
    %v11241 = vunpack.c.0.s8 %v11240
    %v11242 = vlaneseq
    %v11243 = vshrl.u32 %v11242, 7
    %v11244 = vsub.s32 %v11241, %v11243
    %v11245 = vrot.slane %v11231, %v11244
    %v11246 = vcombine.low %v11190, %v11222
    %v11247 = vcombine.high %v11190, %v11222
    %v11248 = vcombine.low %v11197, %v11229
    %v11249 = vcombine.high %v11197, %v11229
    %v11250 = vcombine.low %v11206, %v11238
    %v11251 = vcombine.high %v11206, %v11238
    %v11252 = vcombine.low %v11213, %v11245
    %v11253 = vcombine.high %v11213, %v11245
    %11255 = vrot.lane.b32.xlu0 %v11111, 16
    %v11256 = vpop.permute.xlu0 %11255
    %11259 = vrot.lane.b32.xlu0 %v11112, 32
    %v11260 = vpop.permute.xlu0 %11259
    %11263 = vrot.lane.b32.xlu0 %v11113, 48
    %v11264 = vpop.permute.xlu0 %11263
    %11267 = vrot.lane.b32.xlu0 %v11114, 64
    %v11268 = vpop.permute.xlu0 %11267
    %11271 = vrot.lane.b32.xlu0 %v11115, 80
    %v11272 = vpop.permute.xlu0 %11271
    %11275 = vrot.lane.b32.xlu0 %v11116, 96
    %v11276 = vpop.permute.xlu0 %11275
    %11279 = vrot.lane.b32.xlu0 %v11117, 112
    %v11280 = vpop.permute.xlu0 %11279
    %11283 = vrot.lane.b32.xlu0 %v11247, 16
    %v11284 = vpop.permute.xlu0 %11283
    %11287 = vrot.lane.b32.xlu0 %v11248, 32
    %v11288 = vpop.permute.xlu0 %11287
    %11291 = vrot.lane.b32.xlu0 %v11249, 48
    %v11292 = vpop.permute.xlu0 %11291
    %11295 = vrot.lane.b32.xlu0 %v11250, 64
    %v11296 = vpop.permute.xlu0 %11295
    %11299 = vrot.lane.b32.xlu0 %v11251, 80
    %v11300 = vpop.permute.xlu0 %11299
    %11303 = vrot.lane.b32.xlu0 %v11252, 96
    %v11304 = vpop.permute.xlu0 %11303
    %11307 = vrot.lane.b32.xlu0 %v11253, 112
    %v11308 = vpop.permute.xlu0 %11307
    %v11310 = vsel %vm397, %v11110, %v11256
    %v11311 = vsel %vm399, %v11310, %v11260
    %v11312 = vsel %vm401, %v11311, %v11264
    %v11313 = vsel %vm403, %v11312, %v11268
    %v11314 = vsel %vm405, %v11313, %v11272
    %v11315 = vsel %vm407, %v11314, %v11276
    %v11316 = vsel %vm409, %v11315, %v11280
    %v11317 = vsel %vm397, %v11246, %v11284
    %v11318 = vsel %vm399, %v11317, %v11288
    %v11319 = vsel %vm401, %v11318, %v11292
    %v11320 = vsel %vm403, %v11319, %v11296
    %v11321 = vsel %vm405, %v11320, %v11300
    %v11322 = vsel %vm407, %v11321, %v11304
    %v11323 = vsel %vm409, %v11322, %v11308
    %v11324 = vld [vmem:[%s9015 + $0x2] sm:$0xff]
    %v11325 = vld [vmem:[%s9015 + $0xa] sm:$0xff]
    %v11326 = vld [vmem:[%s9015 + $0x1a] sm:$0xff]
    %v11327 = vld [vmem:[%s9015 + $0x22] sm:$0xff]
    %v11328 = vld [vmem:[%s9015 + $0x32] sm:$0xff]
    %v11329 = vld [vmem:[%s9015 + $0x3a] sm:$0xff]
    %v11330 = vld [vmem:[%s9015 + $0x4a] sm:$0xff]
    %v11331 = vld [vmem:[%s9015 + $0x52] sm:$0xff]
    %v11332 = vld [vmem:[%s9015 + $0x62] sm:$0xff]
    %v11333 = vld [vmem:[%s9015 + $0x6a] sm:$0xff]
    %v11334 = vld [vmem:[%s9015 + $0x7a] sm:$0xff]
    %v11335 = vld [vmem:[%s9015 + $0x82] sm:$0xff]
    %v11336 = vld [vmem:[%s9015 + $0x92] sm:$0xff]
    %v11337 = vld [vmem:[%s9015 + $0x9a] sm:$0xff]
    %v11338 = vld [vmem:[%s9015 + $0xaa] sm:$0xff]
    %v11339 = vld [vmem:[%s9015 + $0xb2] sm:$0xff]
    %v11340 = vcombine.low %v11324, %v11328
    %v11341 = vcombine.high %v11324, %v11328
    %v11343 = vunpack.c.l.s4 1983009808
    %v11344 = vunpack.c.0.s8 %v11343
    %v11345 = vlaneseq
    %v11346 = vshrl.u32 %v11345, 7
    %v11347 = vsub.s32 %v11344, %v11346
    %v11348 = vrot.slane %v11340, %v11347
    %v11350 = vunpack.c.l.s4 1983009808
    %v11351 = vunpack.c.0.s8 %v11350
    %v11352 = vlaneseq
    %v11353 = vshrl.u32 %v11352, 7
    %v11354 = vsub.s32 %v11351, %v11353
    %v11355 = vrot.slane %v11341, %v11354
    %v11356 = vcombine.low %v11326, %v11330
    %v11357 = vcombine.high %v11326, %v11330
    %v11359 = vunpack.c.l.s4 1983009808
    %v11360 = vunpack.c.0.s8 %v11359
    %v11361 = vlaneseq
    %v11362 = vshrl.u32 %v11361, 7
    %v11363 = vsub.s32 %v11360, %v11362
    %v11364 = vrot.slane %v11356, %v11363
    %v11366 = vunpack.c.l.s4 1983009808
    %v11367 = vunpack.c.0.s8 %v11366
    %v11368 = vlaneseq
    %v11369 = vshrl.u32 %v11368, 7
    %v11370 = vsub.s32 %v11367, %v11369
    %v11371 = vrot.slane %v11357, %v11370
    %v11372 = vcombine.low %v11332, %v11336
    %v11373 = vcombine.high %v11332, %v11336
    %v11375 = vunpack.c.l.s4 1983009808
    %v11376 = vunpack.c.0.s8 %v11375
    %v11377 = vlaneseq
    %v11378 = vshrl.u32 %v11377, 7
    %v11379 = vsub.s32 %v11376, %v11378
    %v11380 = vrot.slane %v11372, %v11379
    %v11382 = vunpack.c.l.s4 1983009808
    %v11383 = vunpack.c.0.s8 %v11382
    %v11384 = vlaneseq
    %v11385 = vshrl.u32 %v11384, 7
    %v11386 = vsub.s32 %v11383, %v11385
    %v11387 = vrot.slane %v11373, %v11386
    %v11388 = vcombine.low %v11334, %v11338
    %v11389 = vcombine.high %v11334, %v11338
    %v11391 = vunpack.c.l.s4 1983009808
    %v11392 = vunpack.c.0.s8 %v11391
    %v11393 = vlaneseq
    %v11394 = vshrl.u32 %v11393, 7
    %v11395 = vsub.s32 %v11392, %v11394
    %v11396 = vrot.slane %v11388, %v11395
    %v11398 = vunpack.c.l.s4 1983009808
    %v11399 = vunpack.c.0.s8 %v11398
    %v11400 = vlaneseq
    %v11401 = vshrl.u32 %v11400, 7
    %v11402 = vsub.s32 %v11399, %v11401
    %v11403 = vrot.slane %v11389, %v11402
    %v11404 = vcombine.low %v11348, %v11364
    %v11405 = vcombine.high %v11348, %v11364
    %v11407 = vunpack.c.l.s4 1934713408
    %v11408 = vunpack.c.0.s8 %v11407
    %v11409 = vlaneseq
    %v11410 = vshrl.u32 %v11409, 7
    %v11411 = vsub.s32 %v11408, %v11410
    %v11412 = vrot.slane %v11404, %v11411
    %v11414 = vunpack.c.l.s4 1934713408
    %v11415 = vunpack.c.0.s8 %v11414
    %v11416 = vlaneseq
    %v11417 = vshrl.u32 %v11416, 7
    %v11418 = vsub.s32 %v11415, %v11417
    %v11419 = vrot.slane %v11405, %v11418
    %v11420 = vcombine.low %v11355, %v11371
    %v11421 = vcombine.high %v11355, %v11371
    %v11423 = vunpack.c.l.s4 1934713408
    %v11424 = vunpack.c.0.s8 %v11423
    %v11425 = vlaneseq
    %v11426 = vshrl.u32 %v11425, 7
    %v11427 = vsub.s32 %v11424, %v11426
    %v11428 = vrot.slane %v11420, %v11427
    %v11430 = vunpack.c.l.s4 1934713408
    %v11431 = vunpack.c.0.s8 %v11430
    %v11432 = vlaneseq
    %v11433 = vshrl.u32 %v11432, 7
    %v11434 = vsub.s32 %v11431, %v11433
    %v11435 = vrot.slane %v11421, %v11434
    %v11436 = vcombine.low %v11380, %v11396
    %v11437 = vcombine.high %v11380, %v11396
    %v11439 = vunpack.c.l.s4 1934713408
    %v11440 = vunpack.c.0.s8 %v11439
    %v11441 = vlaneseq
    %v11442 = vshrl.u32 %v11441, 7
    %v11443 = vsub.s32 %v11440, %v11442
    %v11444 = vrot.slane %v11436, %v11443
    %v11446 = vunpack.c.l.s4 1934713408
    %v11447 = vunpack.c.0.s8 %v11446
    %v11448 = vlaneseq
    %v11449 = vshrl.u32 %v11448, 7
    %v11450 = vsub.s32 %v11447, %v11449
    %v11451 = vrot.slane %v11437, %v11450
    %v11452 = vcombine.low %v11387, %v11403
    %v11453 = vcombine.high %v11387, %v11403
    %v11455 = vunpack.c.l.s4 1934713408
    %v11456 = vunpack.c.0.s8 %v11455
    %v11457 = vlaneseq
    %v11458 = vshrl.u32 %v11457, 7
    %v11459 = vsub.s32 %v11456, %v11458
    %v11460 = vrot.slane %v11452, %v11459
    %v11462 = vunpack.c.l.s4 1934713408
    %v11463 = vunpack.c.0.s8 %v11462
    %v11464 = vlaneseq
    %v11465 = vshrl.u32 %v11464, 7
    %v11466 = vsub.s32 %v11463, %v11465
    %v11467 = vrot.slane %v11453, %v11466
    %v11468 = vcombine.low %v11412, %v11444
    %v11469 = vcombine.high %v11412, %v11444
    %v11470 = vcombine.low %v11419, %v11451
    %v11471 = vcombine.high %v11419, %v11451
    %v11472 = vcombine.low %v11428, %v11460
    %v11473 = vcombine.high %v11428, %v11460
    %v11474 = vcombine.low %v11435, %v11467
    %v11475 = vcombine.high %v11435, %v11467
    %v11476 = vcombine.low %v11325, %v11329
    %v11477 = vcombine.high %v11325, %v11329
    %v11479 = vunpack.c.l.s4 1983009808
    %v11480 = vunpack.c.0.s8 %v11479
    %v11481 = vlaneseq
    %v11482 = vshrl.u32 %v11481, 7
    %v11483 = vsub.s32 %v11480, %v11482
    %v11484 = vrot.slane %v11476, %v11483
    %v11486 = vunpack.c.l.s4 1983009808
    %v11487 = vunpack.c.0.s8 %v11486
    %v11488 = vlaneseq
    %v11489 = vshrl.u32 %v11488, 7
    %v11490 = vsub.s32 %v11487, %v11489
    %v11491 = vrot.slane %v11477, %v11490
    %v11492 = vcombine.low %v11327, %v11331
    %v11493 = vcombine.high %v11327, %v11331
    %v11495 = vunpack.c.l.s4 1983009808
    %v11496 = vunpack.c.0.s8 %v11495
    %v11497 = vlaneseq
    %v11498 = vshrl.u32 %v11497, 7
    %v11499 = vsub.s32 %v11496, %v11498
    %v11500 = vrot.slane %v11492, %v11499
    %v11502 = vunpack.c.l.s4 1983009808
    %v11503 = vunpack.c.0.s8 %v11502
    %v11504 = vlaneseq
    %v11505 = vshrl.u32 %v11504, 7
    %v11506 = vsub.s32 %v11503, %v11505
    %v11507 = vrot.slane %v11493, %v11506
    %v11508 = vcombine.low %v11333, %v11337
    %v11509 = vcombine.high %v11333, %v11337
    %v11511 = vunpack.c.l.s4 1983009808
    %v11512 = vunpack.c.0.s8 %v11511
    %v11513 = vlaneseq
    %v11514 = vshrl.u32 %v11513, 7
    %v11515 = vsub.s32 %v11512, %v11514
    %v11516 = vrot.slane %v11508, %v11515
    %v11518 = vunpack.c.l.s4 1983009808
    %v11519 = vunpack.c.0.s8 %v11518
    %v11520 = vlaneseq
    %v11521 = vshrl.u32 %v11520, 7
    %v11522 = vsub.s32 %v11519, %v11521
    %v11523 = vrot.slane %v11509, %v11522
    %v11524 = vcombine.low %v11335, %v11339
    %v11525 = vcombine.high %v11335, %v11339
    %v11527 = vunpack.c.l.s4 1983009808
    %v11528 = vunpack.c.0.s8 %v11527
    %v11529 = vlaneseq
    %v11530 = vshrl.u32 %v11529, 7
    %v11531 = vsub.s32 %v11528, %v11530
    %v11532 = vrot.slane %v11524, %v11531
    %v11534 = vunpack.c.l.s4 1983009808
    %v11535 = vunpack.c.0.s8 %v11534
    %v11536 = vlaneseq
    %v11537 = vshrl.u32 %v11536, 7
    %v11538 = vsub.s32 %v11535, %v11537
    %v11539 = vrot.slane %v11525, %v11538
    %v11540 = vcombine.low %v11484, %v11500
    %v11541 = vcombine.high %v11484, %v11500
    %v11543 = vunpack.c.l.s4 1934713408
    %v11544 = vunpack.c.0.s8 %v11543
    %v11545 = vlaneseq
    %v11546 = vshrl.u32 %v11545, 7
    %v11547 = vsub.s32 %v11544, %v11546
    %v11548 = vrot.slane %v11540, %v11547
    %v11550 = vunpack.c.l.s4 1934713408
    %v11551 = vunpack.c.0.s8 %v11550
    %v11552 = vlaneseq
    %v11553 = vshrl.u32 %v11552, 7
    %v11554 = vsub.s32 %v11551, %v11553
    %v11555 = vrot.slane %v11541, %v11554
    %v11556 = vcombine.low %v11491, %v11507
    %v11557 = vcombine.high %v11491, %v11507
    %v11559 = vunpack.c.l.s4 1934713408
    %v11560 = vunpack.c.0.s8 %v11559
    %v11561 = vlaneseq
    %v11562 = vshrl.u32 %v11561, 7
    %v11563 = vsub.s32 %v11560, %v11562
    %v11564 = vrot.slane %v11556, %v11563
    %v11566 = vunpack.c.l.s4 1934713408
    %v11567 = vunpack.c.0.s8 %v11566
    %v11568 = vlaneseq
    %v11569 = vshrl.u32 %v11568, 7
    %v11570 = vsub.s32 %v11567, %v11569
    %v11571 = vrot.slane %v11557, %v11570
    %v11572 = vcombine.low %v11516, %v11532
    %v11573 = vcombine.high %v11516, %v11532
    %v11575 = vunpack.c.l.s4 1934713408
    %v11576 = vunpack.c.0.s8 %v11575
    %v11577 = vlaneseq
    %v11578 = vshrl.u32 %v11577, 7
    %v11579 = vsub.s32 %v11576, %v11578
    %v11580 = vrot.slane %v11572, %v11579
    %v11582 = vunpack.c.l.s4 1934713408
    %v11583 = vunpack.c.0.s8 %v11582
    %v11584 = vlaneseq
    %v11585 = vshrl.u32 %v11584, 7
    %v11586 = vsub.s32 %v11583, %v11585
    %v11587 = vrot.slane %v11573, %v11586
    %v11588 = vcombine.low %v11523, %v11539
    %v11589 = vcombine.high %v11523, %v11539
    %v11591 = vunpack.c.l.s4 1934713408
    %v11592 = vunpack.c.0.s8 %v11591
    %v11593 = vlaneseq
    %v11594 = vshrl.u32 %v11593, 7
    %v11595 = vsub.s32 %v11592, %v11594
    %v11596 = vrot.slane %v11588, %v11595
    %v11598 = vunpack.c.l.s4 1934713408
    %v11599 = vunpack.c.0.s8 %v11598
    %v11600 = vlaneseq
    %v11601 = vshrl.u32 %v11600, 7
    %v11602 = vsub.s32 %v11599, %v11601
    %v11603 = vrot.slane %v11589, %v11602
    %v11604 = vcombine.low %v11548, %v11580
    %v11605 = vcombine.high %v11548, %v11580
    %v11606 = vcombine.low %v11555, %v11587
    %v11607 = vcombine.high %v11555, %v11587
    %v11608 = vcombine.low %v11564, %v11596
    %v11609 = vcombine.high %v11564, %v11596
    %v11610 = vcombine.low %v11571, %v11603
    %v11611 = vcombine.high %v11571, %v11603
    %11613 = vrot.lane.b32.xlu0 %v11469, 16
    %v11614 = vpop.permute.xlu0 %11613
    %11617 = vrot.lane.b32.xlu0 %v11470, 32
    %v11618 = vpop.permute.xlu0 %11617
    %11621 = vrot.lane.b32.xlu0 %v11471, 48
    %v11622 = vpop.permute.xlu0 %11621
    %11625 = vrot.lane.b32.xlu0 %v11472, 64
    %v11626 = vpop.permute.xlu0 %11625
    %11629 = vrot.lane.b32.xlu0 %v11473, 80
    %v11630 = vpop.permute.xlu0 %11629
    %11633 = vrot.lane.b32.xlu0 %v11474, 96
    %v11634 = vpop.permute.xlu0 %11633
    %11637 = vrot.lane.b32.xlu0 %v11475, 112
    %v11638 = vpop.permute.xlu0 %11637
    %11641 = vrot.lane.b32.xlu0 %v11605, 16
    %v11642 = vpop.permute.xlu0 %11641
    %11645 = vrot.lane.b32.xlu0 %v11606, 32
    %v11646 = vpop.permute.xlu0 %11645
    %11649 = vrot.lane.b32.xlu0 %v11607, 48
    %v11650 = vpop.permute.xlu0 %11649
    %11653 = vrot.lane.b32.xlu0 %v11608, 64
    %v11654 = vpop.permute.xlu0 %11653
    %11657 = vrot.lane.b32.xlu0 %v11609, 80
    %v11658 = vpop.permute.xlu0 %11657
    %11661 = vrot.lane.b32.xlu0 %v11610, 96
    %v11662 = vpop.permute.xlu0 %11661
    %11665 = vrot.lane.b32.xlu0 %v11611, 112
    %v11666 = vpop.permute.xlu0 %11665
    %v11668 = vsel %vm397, %v11468, %v11614
    %v11669 = vsel %vm399, %v11668, %v11618
    %v11670 = vsel %vm401, %v11669, %v11622
    %v11671 = vsel %vm403, %v11670, %v11626
    %v11672 = vsel %vm405, %v11671, %v11630
    %v11673 = vsel %vm407, %v11672, %v11634
    %v11674 = vsel %vm409, %v11673, %v11638
    %v11675 = vsel %vm397, %v11604, %v11642
    %v11676 = vsel %vm399, %v11675, %v11646
    %v11677 = vsel %vm401, %v11676, %v11650
    %v11678 = vsel %vm403, %v11677, %v11654
    %v11679 = vsel %vm405, %v11678, %v11658
    %v11680 = vsel %vm407, %v11679, %v11662
    %v11681 = vsel %vm409, %v11680, %v11666
    %11698 = vrot.lane.b32.xlu0 %v11324, 127
    %v11699 = vpop.permute.xlu0 %11698
    %11700 = vrot.lane.b32.xlu0 %v11325, 127
    %v11701 = vpop.permute.xlu0 %11700
    %11702 = vrot.lane.b32.xlu0 %v11326, 127
    %v11703 = vpop.permute.xlu0 %11702
    %11704 = vrot.lane.b32.xlu0 %v11327, 127
    %v11705 = vpop.permute.xlu0 %11704
    %11706 = vrot.lane.b32.xlu0 %v11328, 127
    %v11707 = vpop.permute.xlu0 %11706
    %11708 = vrot.lane.b32.xlu0 %v11329, 127
    %v11709 = vpop.permute.xlu0 %11708
    %11710 = vrot.lane.b32.xlu0 %v11330, 127
    %v11711 = vpop.permute.xlu0 %11710
    %11712 = vrot.lane.b32.xlu0 %v11331, 127
    %v11713 = vpop.permute.xlu0 %11712
    %11714 = vrot.lane.b32.xlu0 %v11332, 127
    %v11715 = vpop.permute.xlu0 %11714
    %11716 = vrot.lane.b32.xlu0 %v11333, 127
    %v11717 = vpop.permute.xlu0 %11716
    %11718 = vrot.lane.b32.xlu0 %v11334, 127
    %v11719 = vpop.permute.xlu0 %11718
    %11720 = vrot.lane.b32.xlu0 %v11335, 127
    %v11721 = vpop.permute.xlu0 %11720
    %11722 = vrot.lane.b32.xlu0 %v11336, 127
    %v11723 = vpop.permute.xlu0 %11722
    %11724 = vrot.lane.b32.xlu0 %v11337, 127
    %v11725 = vpop.permute.xlu0 %11724
    %11726 = vrot.lane.b32.xlu0 %v11338, 127
    %v11727 = vpop.permute.xlu0 %11726
    %11728 = vrot.lane.b32.xlu0 %v11339, 127
    %v11729 = vpop.permute.xlu0 %11728
    %v11746 = vcombine.low %v11699, %v11707
    %v11747 = vcombine.high %v11699, %v11707
    %v11749 = vunpack.c.l.s4 1983009808
    %v11750 = vunpack.c.0.s8 %v11749
    %v11751 = vlaneseq
    %v11752 = vshrl.u32 %v11751, 7
    %v11753 = vsub.s32 %v11750, %v11752
    %v11754 = vrot.slane %v11746, %v11753
    %v11756 = vunpack.c.l.s4 1983009808
    %v11757 = vunpack.c.0.s8 %v11756
    %v11758 = vlaneseq
    %v11759 = vshrl.u32 %v11758, 7
    %v11760 = vsub.s32 %v11757, %v11759
    %v11761 = vrot.slane %v11747, %v11760
    %v11762 = vcombine.low %v11703, %v11711
    %v11763 = vcombine.high %v11703, %v11711
    %v11765 = vunpack.c.l.s4 1983009808
    %v11766 = vunpack.c.0.s8 %v11765
    %v11767 = vlaneseq
    %v11768 = vshrl.u32 %v11767, 7
    %v11769 = vsub.s32 %v11766, %v11768
    %v11770 = vrot.slane %v11762, %v11769
    %v11772 = vunpack.c.l.s4 1983009808
    %v11773 = vunpack.c.0.s8 %v11772
    %v11774 = vlaneseq
    %v11775 = vshrl.u32 %v11774, 7
    %v11776 = vsub.s32 %v11773, %v11775
    %v11777 = vrot.slane %v11763, %v11776
    %v11778 = vcombine.low %v11715, %v11723
    %v11779 = vcombine.high %v11715, %v11723
    %v11781 = vunpack.c.l.s4 1983009808
    %v11782 = vunpack.c.0.s8 %v11781
    %v11783 = vlaneseq
    %v11784 = vshrl.u32 %v11783, 7
    %v11785 = vsub.s32 %v11782, %v11784
    %v11786 = vrot.slane %v11778, %v11785
    %v11788 = vunpack.c.l.s4 1983009808
    %v11789 = vunpack.c.0.s8 %v11788
    %v11790 = vlaneseq
    %v11791 = vshrl.u32 %v11790, 7
    %v11792 = vsub.s32 %v11789, %v11791
    %v11793 = vrot.slane %v11779, %v11792
    %v11794 = vcombine.low %v11719, %v11727
    %v11795 = vcombine.high %v11719, %v11727
    %v11797 = vunpack.c.l.s4 1983009808
    %v11798 = vunpack.c.0.s8 %v11797
    %v11799 = vlaneseq
    %v11800 = vshrl.u32 %v11799, 7
    %v11801 = vsub.s32 %v11798, %v11800
    %v11802 = vrot.slane %v11794, %v11801
    %v11804 = vunpack.c.l.s4 1983009808
    %v11805 = vunpack.c.0.s8 %v11804
    %v11806 = vlaneseq
    %v11807 = vshrl.u32 %v11806, 7
    %v11808 = vsub.s32 %v11805, %v11807
    %v11809 = vrot.slane %v11795, %v11808
    %v11810 = vcombine.low %v11754, %v11770
    %v11811 = vcombine.high %v11754, %v11770
    %v11813 = vunpack.c.l.s4 1934713408
    %v11814 = vunpack.c.0.s8 %v11813
    %v11815 = vlaneseq
    %v11816 = vshrl.u32 %v11815, 7
    %v11817 = vsub.s32 %v11814, %v11816
    %v11818 = vrot.slane %v11810, %v11817
    %v11820 = vunpack.c.l.s4 1934713408
    %v11821 = vunpack.c.0.s8 %v11820
    %v11822 = vlaneseq
    %v11823 = vshrl.u32 %v11822, 7
    %v11824 = vsub.s32 %v11821, %v11823
    %v11825 = vrot.slane %v11811, %v11824
    %v11826 = vcombine.low %v11761, %v11777
    %v11827 = vcombine.high %v11761, %v11777
    %v11829 = vunpack.c.l.s4 1934713408
    %v11830 = vunpack.c.0.s8 %v11829
    %v11831 = vlaneseq
    %v11832 = vshrl.u32 %v11831, 7
    %v11833 = vsub.s32 %v11830, %v11832
    %v11834 = vrot.slane %v11826, %v11833
    %v11836 = vunpack.c.l.s4 1934713408
    %v11837 = vunpack.c.0.s8 %v11836
    %v11838 = vlaneseq
    %v11839 = vshrl.u32 %v11838, 7
    %v11840 = vsub.s32 %v11837, %v11839
    %v11841 = vrot.slane %v11827, %v11840
    %v11842 = vcombine.low %v11786, %v11802
    %v11843 = vcombine.high %v11786, %v11802
    %v11845 = vunpack.c.l.s4 1934713408
    %v11846 = vunpack.c.0.s8 %v11845
    %v11847 = vlaneseq
    %v11848 = vshrl.u32 %v11847, 7
    %v11849 = vsub.s32 %v11846, %v11848
    %v11850 = vrot.slane %v11842, %v11849
    %v11852 = vunpack.c.l.s4 1934713408
    %v11853 = vunpack.c.0.s8 %v11852
    %v11854 = vlaneseq
    %v11855 = vshrl.u32 %v11854, 7
    %v11856 = vsub.s32 %v11853, %v11855
    %v11857 = vrot.slane %v11843, %v11856
    %v11858 = vcombine.low %v11793, %v11809
    %v11859 = vcombine.high %v11793, %v11809
    %v11861 = vunpack.c.l.s4 1934713408
    %v11862 = vunpack.c.0.s8 %v11861
    %v11863 = vlaneseq
    %v11864 = vshrl.u32 %v11863, 7
    %v11865 = vsub.s32 %v11862, %v11864
    %v11866 = vrot.slane %v11858, %v11865
    %v11868 = vunpack.c.l.s4 1934713408
    %v11869 = vunpack.c.0.s8 %v11868
    %v11870 = vlaneseq
    %v11871 = vshrl.u32 %v11870, 7
    %v11872 = vsub.s32 %v11869, %v11871
    %v11873 = vrot.slane %v11859, %v11872
    %v11874 = vcombine.low %v11818, %v11850
    %v11875 = vcombine.high %v11818, %v11850
    %v11876 = vcombine.low %v11825, %v11857
    %v11877 = vcombine.high %v11825, %v11857
    %v11878 = vcombine.low %v11834, %v11866
    %v11879 = vcombine.high %v11834, %v11866
    %v11880 = vcombine.low %v11841, %v11873
    %v11881 = vcombine.high %v11841, %v11873
    %v11882 = vcombine.low %v11701, %v11709
    %v11883 = vcombine.high %v11701, %v11709
    %v11885 = vunpack.c.l.s4 1983009808
    %v11886 = vunpack.c.0.s8 %v11885
    %v11887 = vlaneseq
    %v11888 = vshrl.u32 %v11887, 7
    %v11889 = vsub.s32 %v11886, %v11888
    %v11890 = vrot.slane %v11882, %v11889
    %v11892 = vunpack.c.l.s4 1983009808
    %v11893 = vunpack.c.0.s8 %v11892
    %v11894 = vlaneseq
    %v11895 = vshrl.u32 %v11894, 7
    %v11896 = vsub.s32 %v11893, %v11895
    %v11897 = vrot.slane %v11883, %v11896
    %v11898 = vcombine.low %v11705, %v11713
    %v11899 = vcombine.high %v11705, %v11713
    %v11901 = vunpack.c.l.s4 1983009808
    %v11902 = vunpack.c.0.s8 %v11901
    %v11903 = vlaneseq
    %v11904 = vshrl.u32 %v11903, 7
    %v11905 = vsub.s32 %v11902, %v11904
    %v11906 = vrot.slane %v11898, %v11905
    %v11908 = vunpack.c.l.s4 1983009808
    %v11909 = vunpack.c.0.s8 %v11908
    %v11910 = vlaneseq
    %v11911 = vshrl.u32 %v11910, 7
    %v11912 = vsub.s32 %v11909, %v11911
    %v11913 = vrot.slane %v11899, %v11912
    %v11914 = vcombine.low %v11717, %v11725
    %v11915 = vcombine.high %v11717, %v11725
    %v11917 = vunpack.c.l.s4 1983009808
    %v11918 = vunpack.c.0.s8 %v11917
    %v11919 = vlaneseq
    %v11920 = vshrl.u32 %v11919, 7
    %v11921 = vsub.s32 %v11918, %v11920
    %v11922 = vrot.slane %v11914, %v11921
    %v11924 = vunpack.c.l.s4 1983009808
    %v11925 = vunpack.c.0.s8 %v11924
    %v11926 = vlaneseq
    %v11927 = vshrl.u32 %v11926, 7
    %v11928 = vsub.s32 %v11925, %v11927
    %v11929 = vrot.slane %v11915, %v11928
    %v11930 = vcombine.low %v11721, %v11729
    %v11931 = vcombine.high %v11721, %v11729
    %v11933 = vunpack.c.l.s4 1983009808
    %v11934 = vunpack.c.0.s8 %v11933
    %v11935 = vlaneseq
    %v11936 = vshrl.u32 %v11935, 7
    %v11937 = vsub.s32 %v11934, %v11936
    %v11938 = vrot.slane %v11930, %v11937
    %v11940 = vunpack.c.l.s4 1983009808
    %v11941 = vunpack.c.0.s8 %v11940
    %v11942 = vlaneseq
    %v11943 = vshrl.u32 %v11942, 7
    %v11944 = vsub.s32 %v11941, %v11943
    %v11945 = vrot.slane %v11931, %v11944
    %v11946 = vcombine.low %v11890, %v11906
    %v11947 = vcombine.high %v11890, %v11906
    %v11949 = vunpack.c.l.s4 1934713408
    %v11950 = vunpack.c.0.s8 %v11949
    %v11951 = vlaneseq
    %v11952 = vshrl.u32 %v11951, 7
    %v11953 = vsub.s32 %v11950, %v11952
    %v11954 = vrot.slane %v11946, %v11953
    %v11956 = vunpack.c.l.s4 1934713408
    %v11957 = vunpack.c.0.s8 %v11956
    %v11958 = vlaneseq
    %v11959 = vshrl.u32 %v11958, 7
    %v11960 = vsub.s32 %v11957, %v11959
    %v11961 = vrot.slane %v11947, %v11960
    %v11962 = vcombine.low %v11897, %v11913
    %v11963 = vcombine.high %v11897, %v11913
    %v11965 = vunpack.c.l.s4 1934713408
    %v11966 = vunpack.c.0.s8 %v11965
    %v11967 = vlaneseq
    %v11968 = vshrl.u32 %v11967, 7
    %v11969 = vsub.s32 %v11966, %v11968
    %v11970 = vrot.slane %v11962, %v11969
    %v11972 = vunpack.c.l.s4 1934713408
    %v11973 = vunpack.c.0.s8 %v11972
    %v11974 = vlaneseq
    %v11975 = vshrl.u32 %v11974, 7
    %v11976 = vsub.s32 %v11973, %v11975
    %v11977 = vrot.slane %v11963, %v11976
    %v11978 = vcombine.low %v11922, %v11938
    %v11979 = vcombine.high %v11922, %v11938
    %v11981 = vunpack.c.l.s4 1934713408
    %v11982 = vunpack.c.0.s8 %v11981
    %v11983 = vlaneseq
    %v11984 = vshrl.u32 %v11983, 7
    %v11985 = vsub.s32 %v11982, %v11984
    %v11986 = vrot.slane %v11978, %v11985
    %v11988 = vunpack.c.l.s4 1934713408
    %v11989 = vunpack.c.0.s8 %v11988
    %v11990 = vlaneseq
    %v11991 = vshrl.u32 %v11990, 7
    %v11992 = vsub.s32 %v11989, %v11991
    %v11993 = vrot.slane %v11979, %v11992
    %v11994 = vcombine.low %v11929, %v11945
    %v11995 = vcombine.high %v11929, %v11945
    %v11997 = vunpack.c.l.s4 1934713408
    %v11998 = vunpack.c.0.s8 %v11997
    %v11999 = vlaneseq
    %v12000 = vshrl.u32 %v11999, 7
    %v12001 = vsub.s32 %v11998, %v12000
    %v12002 = vrot.slane %v11994, %v12001
    %v12004 = vunpack.c.l.s4 1934713408
    %v12005 = vunpack.c.0.s8 %v12004
    %v12006 = vlaneseq
    %v12007 = vshrl.u32 %v12006, 7
    %v12008 = vsub.s32 %v12005, %v12007
    %v12009 = vrot.slane %v11995, %v12008
    %v12010 = vcombine.low %v11954, %v11986
    %v12011 = vcombine.high %v11954, %v11986
    %v12012 = vcombine.low %v11961, %v11993
    %v12013 = vcombine.high %v11961, %v11993
    %v12014 = vcombine.low %v11970, %v12002
    %v12015 = vcombine.high %v11970, %v12002
    %v12016 = vcombine.low %v11977, %v12009
    %v12017 = vcombine.high %v11977, %v12009
    %12019 = vrot.lane.b32.xlu0 %v11875, 16
    %v12020 = vpop.permute.xlu0 %12019
    %12023 = vrot.lane.b32.xlu0 %v11876, 32
    %v12024 = vpop.permute.xlu0 %12023
    %12027 = vrot.lane.b32.xlu0 %v11877, 48
    %v12028 = vpop.permute.xlu0 %12027
    %12031 = vrot.lane.b32.xlu0 %v11878, 64
    %v12032 = vpop.permute.xlu0 %12031
    %12035 = vrot.lane.b32.xlu0 %v11879, 80
    %v12036 = vpop.permute.xlu0 %12035
    %12039 = vrot.lane.b32.xlu0 %v11880, 96
    %v12040 = vpop.permute.xlu0 %12039
    %12043 = vrot.lane.b32.xlu0 %v11881, 112
    %v12044 = vpop.permute.xlu0 %12043
    %12047 = vrot.lane.b32.xlu0 %v12011, 16
    %v12048 = vpop.permute.xlu0 %12047
    %12051 = vrot.lane.b32.xlu0 %v12012, 32
    %v12052 = vpop.permute.xlu0 %12051
    %12055 = vrot.lane.b32.xlu0 %v12013, 48
    %v12056 = vpop.permute.xlu0 %12055
    %12059 = vrot.lane.b32.xlu0 %v12014, 64
    %v12060 = vpop.permute.xlu0 %12059
    %12063 = vrot.lane.b32.xlu0 %v12015, 80
    %v12064 = vpop.permute.xlu0 %12063
    %12067 = vrot.lane.b32.xlu0 %v12016, 96
    %v12068 = vpop.permute.xlu0 %12067
    %12071 = vrot.lane.b32.xlu0 %v12017, 112
    %v12072 = vpop.permute.xlu0 %12071
    %v12074 = vsel %vm397, %v11874, %v12020
    %v12075 = vsel %vm399, %v12074, %v12024
    %v12076 = vsel %vm401, %v12075, %v12028
    %v12077 = vsel %vm403, %v12076, %v12032
    %v12078 = vsel %vm405, %v12077, %v12036
    %v12079 = vsel %vm407, %v12078, %v12040
    %v12080 = vsel %vm409, %v12079, %v12044
    %v12081 = vsel %vm397, %v12010, %v12048
    %v12082 = vsel %vm399, %v12081, %v12052
    %v12083 = vsel %vm401, %v12082, %v12056
    %v12084 = vsel %vm403, %v12083, %v12060
    %v12085 = vsel %vm405, %v12084, %v12064
    %v12086 = vsel %vm407, %v12085, %v12068
    %v12087 = vsel %vm409, %v12086, %v12072
    %12088 = vrot.lane.b32.xlu0 %v11324, 126
    %v12089 = vpop.permute.xlu0 %12088
    %12090 = vrot.lane.b32.xlu0 %v11325, 126
    %v12091 = vpop.permute.xlu0 %12090
    %12092 = vrot.lane.b32.xlu0 %v11326, 126
    %v12093 = vpop.permute.xlu0 %12092
    %12094 = vrot.lane.b32.xlu0 %v11327, 126
    %v12095 = vpop.permute.xlu0 %12094
    %12096 = vrot.lane.b32.xlu0 %v11328, 126
    %v12097 = vpop.permute.xlu0 %12096
    %12098 = vrot.lane.b32.xlu0 %v11329, 126
    %v12099 = vpop.permute.xlu0 %12098
    %12100 = vrot.lane.b32.xlu0 %v11330, 126
    %v12101 = vpop.permute.xlu0 %12100
    %12102 = vrot.lane.b32.xlu0 %v11331, 126
    %v12103 = vpop.permute.xlu0 %12102
    %12104 = vrot.lane.b32.xlu0 %v11332, 126
    %v12105 = vpop.permute.xlu0 %12104
    %12106 = vrot.lane.b32.xlu0 %v11333, 126
    %v12107 = vpop.permute.xlu0 %12106
    %12108 = vrot.lane.b32.xlu0 %v11334, 126
    %v12109 = vpop.permute.xlu0 %12108
    %12110 = vrot.lane.b32.xlu0 %v11335, 126
    %v12111 = vpop.permute.xlu0 %12110
    %12112 = vrot.lane.b32.xlu0 %v11336, 126
    %v12113 = vpop.permute.xlu0 %12112
    %12114 = vrot.lane.b32.xlu0 %v11337, 126
    %v12115 = vpop.permute.xlu0 %12114
    %12116 = vrot.lane.b32.xlu0 %v11338, 126
    %v12117 = vpop.permute.xlu0 %12116
    %12118 = vrot.lane.b32.xlu0 %v11339, 126
    %v12119 = vpop.permute.xlu0 %12118
    %v12136 = vcombine.low %v12089, %v12097
    %v12137 = vcombine.high %v12089, %v12097
    %v12139 = vunpack.c.l.s4 1983009808
    %v12140 = vunpack.c.0.s8 %v12139
    %v12141 = vlaneseq
    %v12142 = vshrl.u32 %v12141, 7
    %v12143 = vsub.s32 %v12140, %v12142
    %v12144 = vrot.slane %v12136, %v12143
    %v12146 = vunpack.c.l.s4 1983009808
    %v12147 = vunpack.c.0.s8 %v12146
    %v12148 = vlaneseq
    %v12149 = vshrl.u32 %v12148, 7
    %v12150 = vsub.s32 %v12147, %v12149
    %v12151 = vrot.slane %v12137, %v12150
    %v12152 = vcombine.low %v12093, %v12101
    %v12153 = vcombine.high %v12093, %v12101
    %v12155 = vunpack.c.l.s4 1983009808
    %v12156 = vunpack.c.0.s8 %v12155
    %v12157 = vlaneseq
    %v12158 = vshrl.u32 %v12157, 7
    %v12159 = vsub.s32 %v12156, %v12158
    %v12160 = vrot.slane %v12152, %v12159
    %v12162 = vunpack.c.l.s4 1983009808
    %v12163 = vunpack.c.0.s8 %v12162
    %v12164 = vlaneseq
    %v12165 = vshrl.u32 %v12164, 7
    %v12166 = vsub.s32 %v12163, %v12165
    %v12167 = vrot.slane %v12153, %v12166
    %v12168 = vcombine.low %v12105, %v12113
    %v12169 = vcombine.high %v12105, %v12113
    %v12171 = vunpack.c.l.s4 1983009808
    %v12172 = vunpack.c.0.s8 %v12171
    %v12173 = vlaneseq
    %v12174 = vshrl.u32 %v12173, 7
    %v12175 = vsub.s32 %v12172, %v12174
    %v12176 = vrot.slane %v12168, %v12175
    %v12178 = vunpack.c.l.s4 1983009808
    %v12179 = vunpack.c.0.s8 %v12178
    %v12180 = vlaneseq
    %v12181 = vshrl.u32 %v12180, 7
    %v12182 = vsub.s32 %v12179, %v12181
    %v12183 = vrot.slane %v12169, %v12182
    %v12184 = vcombine.low %v12109, %v12117
    %v12185 = vcombine.high %v12109, %v12117
    %v12187 = vunpack.c.l.s4 1983009808
    %v12188 = vunpack.c.0.s8 %v12187
    %v12189 = vlaneseq
    %v12190 = vshrl.u32 %v12189, 7
    %v12191 = vsub.s32 %v12188, %v12190
    %v12192 = vrot.slane %v12184, %v12191
    %v12194 = vunpack.c.l.s4 1983009808
    %v12195 = vunpack.c.0.s8 %v12194
    %v12196 = vlaneseq
    %v12197 = vshrl.u32 %v12196, 7
    %v12198 = vsub.s32 %v12195, %v12197
    %v12199 = vrot.slane %v12185, %v12198
    %v12200 = vcombine.low %v12144, %v12160
    %v12201 = vcombine.high %v12144, %v12160
    %v12203 = vunpack.c.l.s4 1934713408
    %v12204 = vunpack.c.0.s8 %v12203
    %v12205 = vlaneseq
    %v12206 = vshrl.u32 %v12205, 7
    %v12207 = vsub.s32 %v12204, %v12206
    %v12208 = vrot.slane %v12200, %v12207
    %v12210 = vunpack.c.l.s4 1934713408
    %v12211 = vunpack.c.0.s8 %v12210
    %v12212 = vlaneseq
    %v12213 = vshrl.u32 %v12212, 7
    %v12214 = vsub.s32 %v12211, %v12213
    %v12215 = vrot.slane %v12201, %v12214
    %v12216 = vcombine.low %v12151, %v12167
    %v12217 = vcombine.high %v12151, %v12167
    %v12219 = vunpack.c.l.s4 1934713408
    %v12220 = vunpack.c.0.s8 %v12219
    %v12221 = vlaneseq
    %v12222 = vshrl.u32 %v12221, 7
    %v12223 = vsub.s32 %v12220, %v12222
    %v12224 = vrot.slane %v12216, %v12223
    %v12226 = vunpack.c.l.s4 1934713408
    %v12227 = vunpack.c.0.s8 %v12226
    %v12228 = vlaneseq
    %v12229 = vshrl.u32 %v12228, 7
    %v12230 = vsub.s32 %v12227, %v12229
    %v12231 = vrot.slane %v12217, %v12230
    %v12232 = vcombine.low %v12176, %v12192
    %v12233 = vcombine.high %v12176, %v12192
    %v12235 = vunpack.c.l.s4 1934713408
    %v12236 = vunpack.c.0.s8 %v12235
    %v12237 = vlaneseq
    %v12238 = vshrl.u32 %v12237, 7
    %v12239 = vsub.s32 %v12236, %v12238
    %v12240 = vrot.slane %v12232, %v12239
    %v12242 = vunpack.c.l.s4 1934713408
    %v12243 = vunpack.c.0.s8 %v12242
    %v12244 = vlaneseq
    %v12245 = vshrl.u32 %v12244, 7
    %v12246 = vsub.s32 %v12243, %v12245
    %v12247 = vrot.slane %v12233, %v12246
    %v12248 = vcombine.low %v12183, %v12199
    %v12249 = vcombine.high %v12183, %v12199
    %v12251 = vunpack.c.l.s4 1934713408
    %v12252 = vunpack.c.0.s8 %v12251
    %v12253 = vlaneseq
    %v12254 = vshrl.u32 %v12253, 7
    %v12255 = vsub.s32 %v12252, %v12254
    %v12256 = vrot.slane %v12248, %v12255
    %v12258 = vunpack.c.l.s4 1934713408
    %v12259 = vunpack.c.0.s8 %v12258
    %v12260 = vlaneseq
    %v12261 = vshrl.u32 %v12260, 7
    %v12262 = vsub.s32 %v12259, %v12261
    %v12263 = vrot.slane %v12249, %v12262
    %v12264 = vcombine.low %v12208, %v12240
    %v12265 = vcombine.high %v12208, %v12240
    %v12266 = vcombine.low %v12215, %v12247
    %v12267 = vcombine.high %v12215, %v12247
    %v12268 = vcombine.low %v12224, %v12256
    %v12269 = vcombine.high %v12224, %v12256
    %v12270 = vcombine.low %v12231, %v12263
    %v12271 = vcombine.high %v12231, %v12263
    %v12272 = vcombine.low %v12091, %v12099
    %v12273 = vcombine.high %v12091, %v12099
    %v12275 = vunpack.c.l.s4 1983009808
    %v12276 = vunpack.c.0.s8 %v12275
    %v12277 = vlaneseq
    %v12278 = vshrl.u32 %v12277, 7
    %v12279 = vsub.s32 %v12276, %v12278
    %v12280 = vrot.slane %v12272, %v12279
    %v12282 = vunpack.c.l.s4 1983009808
    %v12283 = vunpack.c.0.s8 %v12282
    %v12284 = vlaneseq
    %v12285 = vshrl.u32 %v12284, 7
    %v12286 = vsub.s32 %v12283, %v12285
    %v12287 = vrot.slane %v12273, %v12286
    %v12288 = vcombine.low %v12095, %v12103
    %v12289 = vcombine.high %v12095, %v12103
    %v12291 = vunpack.c.l.s4 1983009808
    %v12292 = vunpack.c.0.s8 %v12291
    %v12293 = vlaneseq
    %v12294 = vshrl.u32 %v12293, 7
    %v12295 = vsub.s32 %v12292, %v12294
    %v12296 = vrot.slane %v12288, %v12295
    %v12298 = vunpack.c.l.s4 1983009808
    %v12299 = vunpack.c.0.s8 %v12298
    %v12300 = vlaneseq
    %v12301 = vshrl.u32 %v12300, 7
    %v12302 = vsub.s32 %v12299, %v12301
    %v12303 = vrot.slane %v12289, %v12302
    %v12304 = vcombine.low %v12107, %v12115
    %v12305 = vcombine.high %v12107, %v12115
    %v12307 = vunpack.c.l.s4 1983009808
    %v12308 = vunpack.c.0.s8 %v12307
    %v12309 = vlaneseq
    %v12310 = vshrl.u32 %v12309, 7
    %v12311 = vsub.s32 %v12308, %v12310
    %v12312 = vrot.slane %v12304, %v12311
    %v12314 = vunpack.c.l.s4 1983009808
    %v12315 = vunpack.c.0.s8 %v12314
    %v12316 = vlaneseq
    %v12317 = vshrl.u32 %v12316, 7
    %v12318 = vsub.s32 %v12315, %v12317
    %v12319 = vrot.slane %v12305, %v12318
    %v12320 = vcombine.low %v12111, %v12119
    %v12321 = vcombine.high %v12111, %v12119
    %v12323 = vunpack.c.l.s4 1983009808
    %v12324 = vunpack.c.0.s8 %v12323
    %v12325 = vlaneseq
    %v12326 = vshrl.u32 %v12325, 7
    %v12327 = vsub.s32 %v12324, %v12326
    %v12328 = vrot.slane %v12320, %v12327
    %v12330 = vunpack.c.l.s4 1983009808
    %v12331 = vunpack.c.0.s8 %v12330
    %v12332 = vlaneseq
    %v12333 = vshrl.u32 %v12332, 7
    %v12334 = vsub.s32 %v12331, %v12333
    %v12335 = vrot.slane %v12321, %v12334
    %v12336 = vcombine.low %v12280, %v12296
    %v12337 = vcombine.high %v12280, %v12296
    %v12339 = vunpack.c.l.s4 1934713408
    %v12340 = vunpack.c.0.s8 %v12339
    %v12341 = vlaneseq
    %v12342 = vshrl.u32 %v12341, 7
    %v12343 = vsub.s32 %v12340, %v12342
    %v12344 = vrot.slane %v12336, %v12343
    %v12346 = vunpack.c.l.s4 1934713408
    %v12347 = vunpack.c.0.s8 %v12346
    %v12348 = vlaneseq
    %v12349 = vshrl.u32 %v12348, 7
    %v12350 = vsub.s32 %v12347, %v12349
    %v12351 = vrot.slane %v12337, %v12350
    %v12352 = vcombine.low %v12287, %v12303
    %v12353 = vcombine.high %v12287, %v12303
    %v12355 = vunpack.c.l.s4 1934713408
    %v12356 = vunpack.c.0.s8 %v12355
    %v12357 = vlaneseq
    %v12358 = vshrl.u32 %v12357, 7
    %v12359 = vsub.s32 %v12356, %v12358
    %v12360 = vrot.slane %v12352, %v12359
    %v12362 = vunpack.c.l.s4 1934713408
    %v12363 = vunpack.c.0.s8 %v12362
    %v12364 = vlaneseq
    %v12365 = vshrl.u32 %v12364, 7
    %v12366 = vsub.s32 %v12363, %v12365
    %v12367 = vrot.slane %v12353, %v12366
    %v12368 = vcombine.low %v12312, %v12328
    %v12369 = vcombine.high %v12312, %v12328
    %v12371 = vunpack.c.l.s4 1934713408
    %v12372 = vunpack.c.0.s8 %v12371
    %v12373 = vlaneseq
    %v12374 = vshrl.u32 %v12373, 7
    %v12375 = vsub.s32 %v12372, %v12374
    %v12376 = vrot.slane %v12368, %v12375
    %v12378 = vunpack.c.l.s4 1934713408
    %v12379 = vunpack.c.0.s8 %v12378
    %v12380 = vlaneseq
    %v12381 = vshrl.u32 %v12380, 7
    %v12382 = vsub.s32 %v12379, %v12381
    %v12383 = vrot.slane %v12369, %v12382
    %v12384 = vcombine.low %v12319, %v12335
    %v12385 = vcombine.high %v12319, %v12335
    %v12387 = vunpack.c.l.s4 1934713408
    %v12388 = vunpack.c.0.s8 %v12387
    %v12389 = vlaneseq
    %v12390 = vshrl.u32 %v12389, 7
    %v12391 = vsub.s32 %v12388, %v12390
    %v12392 = vrot.slane %v12384, %v12391
    %v12394 = vunpack.c.l.s4 1934713408
    %v12395 = vunpack.c.0.s8 %v12394
    %v12396 = vlaneseq
    %v12397 = vshrl.u32 %v12396, 7
    %v12398 = vsub.s32 %v12395, %v12397
    %v12399 = vrot.slane %v12385, %v12398
    %v12400 = vcombine.low %v12344, %v12376
    %v12401 = vcombine.high %v12344, %v12376
    %v12402 = vcombine.low %v12351, %v12383
    %v12403 = vcombine.high %v12351, %v12383
    %v12404 = vcombine.low %v12360, %v12392
    %v12405 = vcombine.high %v12360, %v12392
    %v12406 = vcombine.low %v12367, %v12399
    %v12407 = vcombine.high %v12367, %v12399
    %12409 = vrot.lane.b32.xlu0 %v12265, 16
    %v12410 = vpop.permute.xlu0 %12409
    %12413 = vrot.lane.b32.xlu0 %v12266, 32
    %v12414 = vpop.permute.xlu0 %12413
    %12417 = vrot.lane.b32.xlu0 %v12267, 48
    %v12418 = vpop.permute.xlu0 %12417
    %12421 = vrot.lane.b32.xlu0 %v12268, 64
    %v12422 = vpop.permute.xlu0 %12421
    %12425 = vrot.lane.b32.xlu0 %v12269, 80
    %v12426 = vpop.permute.xlu0 %12425
    %12429 = vrot.lane.b32.xlu0 %v12270, 96
    %v12430 = vpop.permute.xlu0 %12429
    %12433 = vrot.lane.b32.xlu0 %v12271, 112
    %v12434 = vpop.permute.xlu0 %12433
    %12437 = vrot.lane.b32.xlu0 %v12401, 16
    %v12438 = vpop.permute.xlu0 %12437
    %12441 = vrot.lane.b32.xlu0 %v12402, 32
    %v12442 = vpop.permute.xlu0 %12441
    %12445 = vrot.lane.b32.xlu0 %v12403, 48
    %v12446 = vpop.permute.xlu0 %12445
    %12449 = vrot.lane.b32.xlu0 %v12404, 64
    %v12450 = vpop.permute.xlu0 %12449
    %12453 = vrot.lane.b32.xlu0 %v12405, 80
    %v12454 = vpop.permute.xlu0 %12453
    %12457 = vrot.lane.b32.xlu0 %v12406, 96
    %v12458 = vpop.permute.xlu0 %12457
    %12461 = vrot.lane.b32.xlu0 %v12407, 112
    %v12462 = vpop.permute.xlu0 %12461
    %v12464 = vsel %vm397, %v12264, %v12410
    %v12465 = vsel %vm399, %v12464, %v12414
    %v12466 = vsel %vm401, %v12465, %v12418
    %v12467 = vsel %vm403, %v12466, %v12422
    %v12468 = vsel %vm405, %v12467, %v12426
    %v12469 = vsel %vm407, %v12468, %v12430
    %v12470 = vsel %vm409, %v12469, %v12434
    %v12471 = vsel %vm397, %v12400, %v12438
    %v12472 = vsel %vm399, %v12471, %v12442
    %v12473 = vsel %vm401, %v12472, %v12446
    %v12474 = vsel %vm403, %v12473, %v12450
    %v12475 = vsel %vm405, %v12474, %v12454
    %v12476 = vsel %vm407, %v12475, %v12458
    %v12477 = vsel %vm409, %v12476, %v12462
    %12478 = vmatprep.subr.mxu0 %v9373
    %12479 = vmatpush1.msra.mxu0 %v9366
    %12480 = vmatprep.subr.mxu0 %v9779
    %12481 = vmatpush1.msra.mxu0 %v9772
    %12482 = vmatprep.subr.mxu0 %v10169
    %12483 = vmatpush1.msra.mxu0 %v10162
    %12484 = vmatprep.subr.mxu0 %v10527
    %12485 = vmatpush1.msra.mxu0 %v10520
    %12486 = vmatprep.subr.mxu0 %v10933
    %12487 = vmatpush1.msra.mxu0 %v10926
    %12488 = vmatprep.subr.mxu0 %v11323
    %12489 = vmatpush1.msra.mxu0 %v11316
    %12490 = vmatprep.subr.mxu0 %v11681
    %12491 = vmatpush1.msra.mxu0 %v11674
    %12492 = vmatprep.subr.mxu0 %v12087
    %12493 = vmatpush1.msra.mxu0 %v12080
    %12494 = vmatprep.subr.mxu0 %v12477
    %12495 = vmatpush1.msra.mxu0 %v12470
    %12496 = vmatprep.subr.mxu0 0.0
    %12497 = vmatpush1.msra.mxu0 0.0
    %12498 = vmatprep.subr.mxu0 0.0
    %12499 = vmatpush1.msra.mxu0 0.0
    %12500 = vmatprep.subr.mxu0 0.0
    %12501 = vmatpush1.msra.mxu0 0.0
    %12502 = vmatprep.subr.mxu0 0.0
    %12503 = vmatpush1.msra.mxu0 0.0
    %12504 = vmatprep.subr.mxu0 0.0
    %12505 = vmatpush1.msra.mxu0 0.0
    %12506 = vmatprep.subr.mxu0 0.0
    %12507 = vmatpush1.msra.mxu0 0.0
    %12508 = vmatprep.subr.mxu0 0.0
    %12509 = vmatpush1.msra.mxu0 0.0
    %12510 = vmatprep.subr.mxu0 0.0
    %12511 = vmatpush1.msra.mxu0 0.0
    %12512 = vmatprep.subr.mxu0 0.0
    %12513 = vmatpush1.msra.mxu0 0.0
    %12514 = vmatprep.subr.mxu0 0.0
    %12515 = vmatpush1.msra.mxu0 0.0
    %12516 = vmatprep.subr.mxu0 0.0
    %12517 = vmatpush1.msra.mxu0 0.0
    %12518 = vmatprep.subr.mxu0 0.0
    %12519 = vmatpush1.msra.mxu0 0.0
    %12520 = vmatprep.subr.mxu0 0.0
    %12521 = vmatpush1.msra.mxu0 0.0
    %12522 = vmatprep.subr.mxu0 0.0
    %12523 = vmatpush1.msra.mxu0 0.0
    %12524 = vmatprep.subr.mxu0 0.0
    %12525 = vmatpush1.msra.mxu0 0.0
    %12526 = vmatprep.subr.mxu0 0.0
    %12527 = vmatpush1.msra.mxu0 0.0
    %12528 = vmatprep.subr.mxu0 0.0
    %12529 = vmatpush1.msra.mxu0 0.0
    %12530 = vmatprep.subr.mxu0 0.0
    %12531 = vmatpush1.msra.mxu0 0.0
    %12532 = vmatprep.subr.mxu0 0.0
    %12533 = vmatpush1.msra.mxu0 0.0
    %12534 = vmatprep.subr.mxu0 0.0
    %12535 = vmatpush1.msra.mxu0 0.0
    %12536 = vmatprep.subr.mxu0 0.0
    %12537 = vmatpush1.msra.mxu0 0.0
    %12538 = vmatprep.subr.mxu0 0.0
    %12539 = vmatpush1.msra.mxu0 0.0
    %12540 = vmatprep.subr.mxu0 0.0
    %12541 = vmatpush1.msra.mxu0 0.0
    %12542 = vmatprep.mubr.f32.mxu0 0.0
    %12543 = vmatmul.mubr.f32.gmra.mrb[0].mxu0 %v8942
    %v12544 = vpop.f32.mrb[0].mxu0
    %v12545 = vadd.f32 0.0, %v12544
    %v12546 = vpop.f32.mrb[0].mxu0
    %v12547 = vadd.f32 0.0, %v12546
    %12548 = vdwg.mxu0
    %12550 = vset.pattern.permute.xlu0 0
    %12551 = vperm.xlu0 %12550, %v5221
    %v12552 = vpop.permute.xlu0 %12551
    %v12554 = vadd.f32 %v9011, %v12552
    %v12555 = vadd.f32 %v9013, %v12552
    %v12556 = vadd.f32 %v12545, %v12552
    %v12557 = vadd.f32 %v12547, %v12552
    %v12558 = vmax.f32 %v12554, 0.0
    %v12559 = vmax.f32 %v12555, 0.0
    %v12560 = vmax.f32 %v12556, 0.0
    %v12561 = vmax.f32 %v12557, 0.0
    %v12562 = vld [vmem:[%s7] sm:$0xff]
    %v12563 = vld [vmem:[%s8] sm:$0xff]
    %v12564 = vadd.f32 %v12558, %v12559
    %12565 = vadd.xlane.f32.xlu0 %v12564
    %v12566 = vpop.xlane.xlu0 %12565
    %v12567 = vadd.f32 %v12560, %v12561
    %12568 = vadd.xlane.f32.xlu0 %v12567
    %v12569 = vpop.xlane.xlu0 %12568
    %v12570 = vmul.f32 %v12566, %v4541
    %v12571 = vmul.f32 %v12569, %v4541
    %v12572 = vadd.f32 %v12570, %v12571
    %v12573 = vmul.f32 %v12572, %v4545
    %v12574 = vsub.f32 %v12558, %v12573
    %v12575 = vsub.f32 %v12559, %v12573
    %v12576 = vsub.f32 %v12560, %v12573
    %v12577 = vsub.f32 %v12561, %v12573
    %v12578 = vmul.f32 %v12574, %v12574
    %v12579 = vmul.f32 %v12575, %v12575
    %v12580 = vmul.f32 %v12576, %v12576
    %v12581 = vmul.f32 %v12577, %v12577
    %v12582 = vadd.f32 %v12578, %v12579
    %12583 = vadd.xlane.f32.xlu0 %v12582
    %v12584 = vpop.xlane.xlu0 %12583
    %v12585 = vadd.f32 %v12580, %v12581
    %12586 = vadd.xlane.f32.xlu0 %v12585
    %v12587 = vpop.xlane.xlu0 %12586
    %v12588 = vmul.f32 %v12584, %v4541
    %v12589 = vmul.f32 %v12587, %v4541
    %v12590 = vadd.f32 %v12588, %v12589
    %v12591 = vmul.f32 %v12590, %v4545
    %v12592 = vadd.f32 %v12591, 1e-05
    %v12593 = vrsqrt.pop %v12592
    %v12594 = vmul.f32 %v12562, %v12593
    %v12595 = vmul.f32 %v12573, %v12594
    %v12596 = vsub.f32 %v12563, %v12595
    %12598 = vset.pattern.permute.xlu0 0
    %12599 = vperm.xlu0 %12598, %v12594
    %v12600 = vpop.permute.xlu0 %12599
    %v12602 = vmul.f32 %v12558, %v12600
    %v12603 = vmul.f32 %v12559, %v12600
    %v12604 = vmul.f32 %v12560, %v12600
    %v12605 = vmul.f32 %v12561, %v12600
    %12607 = vset.pattern.permute.xlu0 0
    %12608 = vperm.xlu0 %12607, %v12596
    %v12609 = vpop.permute.xlu0 %12608
    %v12611 = vadd.f32 %v12602, %v12609
    %v12612 = vadd.f32 %v12603, %v12609
    %v12613 = vadd.f32 %v12604, %v12609
    %v12614 = vadd.f32 %v12605, %v12609
    %12615 = vst [vmem:[#allocation7] sm:$0xff] %v12611
    %12616 = vst [vmem:[#allocation7 + $0x8] sm:$0xff] %v12612
    %12617 = vst [vmem:[#allocation7 + $0x10] sm:$0xff] %v12613
    %12618 = vst [vmem:[#allocation7 + $0x18] sm:$0xff] %v12614
    // Predicated region
    $region42: #{tpu_custom_call.1} parent=1 // pred_check
      _
    $region43: #{tpu_custom_call.1} parent=1 // pred_check_branch
      %12620 = sbr.rel (0) target = $region45
    $region44: #{tpu_custom_call.1} parent=1 // pred_region
      %s12622 = ssub.s32 512, 512
      %12623 = vsyncadd [#allocation6], %s12622
      %s12624 = sshll.u32 [#allocation7], 4
      %s12625 = int_to_ptr.vmem [resolvable:$true] %s12624
      %12630 = dma.vmem_to_hbm [thread:$0]  %s12625, 512, %s9, [#allocation6], 256, 256, 16
    $region45: #{tpu_custom_call.1} parent=1 // pred_fallthru
      _
    // Predicated region
    $region46: #{tpu_custom_call.1} parent=1 // pred_check
      _
    $region47: #{tpu_custom_call.1} parent=1 // pred_check_branch
      %12632 = sbr.rel (0) target = $region49
    $region48: #{tpu_custom_call.1} parent=1 // pred_region
      %12633 = dma.done [#allocation6], 512
    $region49: #{tpu_custom_call.1} parent=1 // pred_fallthru
      _
    %12634 = vsyncpa [#allocation5], 1
    %12635 = vsyncpa [#allocation6], 1

</llo_original>
